<compile_context>
chip_gen: v7x
topology: tpu7x:2x2x1
jax: 0.10.0
libtpu: 0.0.40
codegen_flags: <defaults>
</compile_context>

<pallas_src>
import math
import numpy as np
import jax
import jax.numpy as jnp
from jax.experimental import pallas as pl
from jax.experimental.pallas import tpu as pltpu

# ---------------- model hyper-parameters (PyTorch defaults, truncate_columns=False) --
N = 2           # batch
H = 522         # essay length (smallest H giving exactly final_pool rows pre-adaptive)
W_IN = 5        # initial_columns
C1, C2 = 8, 10
T_SEQ = 20      # final_pool
HID = 64        # lstm_hidden
MID = 70
KH, KW = 5, 5
PAD = 1
POOL = 5

HP, WP = H + 2 * PAD, W_IN + 2 * PAD          # 524, 7
WOUT = W_IN + 2 * PAD - KW + 1                # 3
H1C = HP - KH + 1                             # 520  conv1 out rows
H1P = H1C // POOL                             # 104  after MaxPool(5,1)
H2C = H1P - KH + 1                            # 100  conv2 out rows
H2P = H2C // POOL                             # 20   after MaxPool(5,1)
assert H2P % T_SEQ == 0, "only uniform adaptive-pool bins implemented"
# TODO(synk): AdaptiveMaxPool2d with non-uniform bins (H2P % final_pool != 0) is not implemented.
ADPT_K = H2P // T_SEQ                         # 1  (row stage of adaptive pool is identity)

LANES1 = WOUT * C1                            # 24
LANES2 = WOUT * C2                            # 30

# BatchNorm2d(1) parameters (inference mode, running statistics)
# TODO(synk): training-mode batch statistics of BatchNorm2d are not implemented.
BN_GAMMA, BN_BETA, BN_MEAN, BN_VAR, BN_EPS = 0.8, 0.15, 0.1, 1.4, 1e-5


def _sigmoid(z):
    # exp already runs on the EUP; approx reciprocal keeps the divide off the VPU.
    return pl.reciprocal(1.0 + jnp.exp(-z), approx=True)


# ------------------------------- fused kernel ----------------------------------------
def fused_kernel(x_ref, bn_ref, a_ref, b1_ref, blk_ref, b2_ref,
                 wih_ref, whh_ref, lb_ref, l1_ref, l1b_ref, l2_ref, l2b_ref,
                 out_ref, acc1_scr, acc2_scr):
    # x_ref: (1, HP, WP) padded single-channel sample (pad value chosen so BN(pad)==0)
    x = x_ref[0] * bn_ref[:, 0:1] + bn_ref[:, 1:2]                 # BatchNorm2d affine

    # ---- Conv2d(1, C1, (5,5), padding=1): banded matmul per row-shift, lanes=w*C1+c
    acc1 = jnp.zeros((H1C, LANES1), jnp.float32) + b1_ref[...]
    for kh in range(KH):
        acc1 = acc1 + jnp.dot(x[kh:kh + H1C, :], a_ref[kh],
                              preferred_element_type=jnp.float32)
    acc1_scr[...] = acc1                                           # (520, 24)

    # ---- MaxPool2d((5,1)) stride==kernel: max over 5 sublane-strided row sets; ReLU
    p1 = acc1_scr[pl.ds(0, H1P, stride=POOL), :]
    for q in range(1, POOL):
        p1 = jnp.maximum(p1, acc1_scr[pl.ds(q, H1P, stride=POOL), :])
    p1 = jnp.maximum(p1, 0.0)                                      # (104, 24)

    # ---- Conv2d(C1, C2, (5,1)): block-diagonal (per width) matmul per row-shift
    acc2 = jnp.zeros((H2C, LANES2), jnp.float32) + b2_ref[...]
    for kh in range(KH):
        acc2 = acc2 + jnp.dot(p1[kh:kh + H2C, :], blk_ref[kh],
                              preferred_element_type=jnp.float32)
    acc2_scr[...] = acc2                                           # (100, 30)

    # ---- MaxPool2d((5,1)) + ReLU
    p2 = acc2_scr[pl.ds(0, H2P, stride=POOL), :]
    for q in range(1, POOL):
        p2 = jnp.maximum(p2, acc2_scr[pl.ds(q, H2P, stride=POOL), :])
    p2 = jnp.maximum(p2, 0.0)                                      # (20, 30)

    # ---- AdaptiveMaxPool2d((T_SEQ, 1)): ADPT_K == 1 -> only the width max remains
    feat = p2[:, 0:C2]
    for w in range(1, WOUT):
        feat = jnp.maximum(feat, p2[:, w * C2:(w + 1) * C2])       # (20, 10)

    # ---- LSTM(C2 -> HID): input projection hoisted, recurrence fully unrolled -------
    gates_x = (jnp.dot(feat, wih_ref[...], preferred_element_type=jnp.float32)
               + lb_ref[...])                                      # (20, 4*HID)
    h = jnp.zeros((1, HID), jnp.float32)
    c = jnp.zeros((1, HID), jnp.float32)
    acc_mid = jnp.zeros((1, MID), jnp.float32)    # Flatten + Linear(T*HID,70) folded in
    for t in range(T_SEQ):                        # static T -> fully unrolled
        g = gates_x[t:t + 1, :] + jnp.dot(h, whh_ref[...],
                                          preferred_element_type=jnp.float32)
        i_g = _sigmoid(g[:, 0 * HID:1 * HID])     # PyTorch gate order [i, f, g, o]
        f_g = _sigmoid(g[:, 1 * HID:2 * HID])
        g_g = jnp.tanh(g[:, 2 * HID:3 * HID])
        o_g = _sigmoid(g[:, 3 * HID:4 * HID])
        c = f_g * c + i_g * g_g
        h = o_g * jnp.tanh(c)
        acc_mid = acc_mid + jnp.dot(h, l1_ref[t * HID:(t + 1) * HID, :],
                                    preferred_element_type=jnp.float32)

    # ---- MLP head: ReLU -> Linear(MID, 1) -------------------------------------------
    hmid = jnp.maximum(acc_mid + l1b_ref[...], 0.0)                # (1, 70)
    out_ref[0] = (jnp.dot(hmid, l2_ref[...], preferred_element_type=jnp.float32)
                  + l2b_ref[...])                                  # (1, 1)


# ------------------------------- pallas_call wrapper ---------------------------------
def convlstm_pallas(xpad, p):
    n = xpad.shape[0]
    out = pl.pallas_call(
        fused_kernel,
        out_shape=jax.ShapeDtypeStruct((n, 1, 1), jnp.float32),
        grid=(n,),
        in_specs=[
            pl.BlockSpec((1, HP, WP), lambda i: (i, 0, 0)),          # per-sample input
            pl.BlockSpec((1, 2), lambda i: (0, 0)),                  # BN affine
            pl.BlockSpec((KH, WP, LANES1), lambda i: (0, 0, 0)),     # conv1 banded
            pl.BlockSpec((1, LANES1), lambda i: (0, 0)),             # conv1 bias
            pl.BlockSpec((KH, LANES1, LANES2), lambda i: (0, 0, 0)), # conv2 block-diag
            pl.BlockSpec((1, LANES2), lambda i: (0, 0)),             # conv2 bias
            pl.BlockSpec((C2, 4 * HID), lambda i: (0, 0)),           # W_ih^T
            pl.BlockSpec((HID, 4 * HID), lambda i: (0, 0)),          # W_hh^T
            pl.BlockSpec((1, 4 * HID), lambda i: (0, 0)),            # b_ih + b_hh
            pl.BlockSpec((T_SEQ * HID, MID), lambda i: (0, 0)),      # Linear1 W^T
            pl.BlockSpec((1, MID), lambda i: (0, 0)),                # Linear1 b
            pl.BlockSpec((MID, 1), lambda i: (0, 0)),                # Linear2 W^T
            pl.BlockSpec((1, 1), lambda i: (0, 0)),                  # Linear2 b
        ],
        out_specs=pl.BlockSpec((1, 1, 1), lambda i: (i, 0, 0)),
        scratch_shapes=[pltpu.VMEM((H1C, LANES1), jnp.float32),
                        pltpu.VMEM((H2C, LANES2), jnp.float32)],
        compiler_params=pltpu.CompilerParams(
            dimension_semantics=("parallel",)),                      # v7x: 1 sample/core
    )(xpad, p["bn_affine"], p["a_band"], p["b1p"], p["b_blk"], p["b2p"],
      p["wih_t"], p["whh_t"], p["lstm_b"], p["l1_t"], p["l1_b"], p["l2_t"], p["l2_b"])
    return out.reshape(n, 1)


# ------------------------------- parameters & glue -----------------------------------
def build_params(key):
    ks = jax.random.split(key, 12)
    w1 = jax.random.normal(ks[0], (C1, KH, KW), jnp.float32) * 0.05   # Conv2d(1,c1,(5,5))
    b1 = jax.random.normal(ks[1], (C1,), jnp.float32) * 0.05
    w2 = jax.random.normal(ks[2], (C2, C1, KH), jnp.float32) * 0.05   # Conv2d(c1,c2,(5,1))
    b2 = jax.random.normal(ks[3], (C2,), jnp.float32) * 0.05
    w_ih = jax.random.normal(ks[4], (4 * HID, C2), jnp.float32) * 0.1
    w_hh = jax.random.normal(ks[5], (4 * HID, HID), jnp.float32) * 0.1
    b_ih = jax.random.normal(ks[6], (4 * HID,), jnp.float32) * 0.1
    b_hh = jax.random.normal(ks[7], (4 * HID,), jnp.float32) * 0.1
    l1_w = jax.random.normal(ks[8], (MID, T_SEQ * HID), jnp.float32) * 0.03
    l1_b = jax.random.normal(ks[9], (MID,), jnp.float32) * 0.03
    l2_w = jax.random.normal(ks[10], (1, MID), jnp.float32) * 0.1
    l2_b = jax.random.normal(ks[11], (1,), jnp.float32) * 0.1

    w1_np, b1_np = np.asarray(w1), np.asarray(b1)
    w2_np, b2_np = np.asarray(w2), np.asarray(b2)

    # conv1 as banded matrices: A[kh][j, w*C1+c] = w1[c, kh, j-w]  (0 <= j-w < KW)
    a_band = np.zeros((KH, WP, LANES1), np.float32)
    for kh in range(KH):
        for w in range(WOUT):
            for kw in range(KW):
                a_band[kh, w + kw, w * C1:(w + 1) * C1] = w1_np[:, kh, kw]

    # conv2 as block-diagonal matrices: B[kh][w*C1+c1, w*C2+c2] = w2[c2, c1, kh]
    b_blk = np.zeros((KH, LANES1, LANES2), np.float32)
    for kh in range(KH):
        for w in range(WOUT):
            b_blk[kh, w * C1:(w + 1) * C1, w * C2:(w + 1) * C2] = w2_np[:, :, kh].T

    # BatchNorm folded to y = s*x + t applied in-kernel; zero-padding of the BN output
    # is reproduced by padding the raw input with p0 s.t. s*p0 + t == 0.
    bn_s = BN_GAMMA / math.sqrt(BN_VAR + BN_EPS)
    bn_t = BN_BETA - bn_s * BN_MEAN
    pad_val = -bn_t / bn_s

    return {
        "bn_affine": jnp.asarray(np.array([[bn_s, bn_t]], np.float32)),
        "pad_val": jnp.float32(pad_val),
        "a_band": jnp.asarray(a_band),
        "b1p": jnp.asarray(np.tile(b1_np, WOUT)[None, :]),
        "b_blk": jnp.asarray(b_blk),
        "b2p": jnp.asarray(np.tile(b2_np, WOUT)[None, :]),
        "wih_t": jnp.transpose(w_ih),                      # (C2, 4*HID)
        "whh_t": jnp.transpose(w_hh),                      # (HID, 4*HID)
        "lstm_b": (b_ih + b_hh)[None, :],                  # (1, 4*HID)
        "l1_t": jnp.transpose(l1_w),                       # (1280, 70)
        "l1_b": l1_b[None, :],                             # (1, 70)
        "l2_t": jnp.transpose(l2_w),                       # (70, 1)
        "l2_b": l2_b[None, :],                             # (1, 1)
    }


def convlstm_forward(x, params):
    # x: (N, 1, H, W) -- NCHW, single channel (as produced by preprocess_fn)
    x2d = x[:, 0, :, :]                                                 # (N, H, W)
    xpad = jnp.pad(x2d, ((0, 0), (PAD, PAD), (PAD, PAD)),
                   constant_values=params["pad_val"])                   # BN(pad)=0
    return convlstm_pallas(xpad, params)                                # (N, 1)


# ------------------------------------ main --------------------------------------------
if __name__ == "__main__":
    kp, kx = jax.random.split(jax.random.PRNGKey(0))
    params = build_params(kp)
    x = jax.random.normal(kx, (N, 1, H, W_IN), jnp.float32)

    fwd = jax.jit(convlstm_forward)
    y = jax.block_until_ready(fwd(x, params))

    assert y.shape == (N, 1), y.shape
    assert bool(jnp.all(jnp.isfinite(y)))
    print("KERNEL_OK")
</pallas_src>

<mosaic_0001>
module attributes {stable_mosaic.version = 11 : i64} {
  func.func @fused_kernel(%arg0: i32, %arg1: memref<1x524x7xf32, #tpu.memory_space<vmem>>, %arg2: memref<1x2xf32, #tpu.memory_space<vmem>>, %arg3: memref<5x7x24xf32, #tpu.memory_space<vmem>>, %arg4: memref<1x24xf32, #tpu.memory_space<vmem>>, %arg5: memref<5x24x30xf32, #tpu.memory_space<vmem>>, %arg6: memref<1x30xf32, #tpu.memory_space<vmem>>, %arg7: memref<10x256xf32, #tpu.memory_space<vmem>>, %arg8: memref<64x256xf32, #tpu.memory_space<vmem>>, %arg9: memref<1x256xf32, #tpu.memory_space<vmem>>, %arg10: memref<1280x70xf32, #tpu.memory_space<vmem>>, %arg11: memref<1x70xf32, #tpu.memory_space<vmem>>, %arg12: memref<70x1xf32, #tpu.memory_space<vmem>>, %arg13: memref<1x1xf32, #tpu.memory_space<vmem>>, %arg14: memref<1x1x1xf32, #tpu.memory_space<vmem>>, %arg15: memref<520x24xf32, #tpu.memory_space<vmem>>, %arg16: memref<100x30xf32, #tpu.memory_space<vmem>>) attributes {dimension_semantics = [#tpu.dimension_semantics<parallel>], iteration_bounds = array<i64: 2>, scalar_prefetch = 0 : i64, scratch_operands = 2 : i64, tpu.core_type = #tpu.core_type<tc>, window_params = [{transform_indices = @transform_0, window_bounds = array<i64: 1, 524, 7>}, {pipeline_mode = #tpu.pipeline_mode<synchronous>, transform_indices = @transform_1, window_bounds = array<i64: 1, 2>}, {pipeline_mode = #tpu.pipeline_mode<synchronous>, transform_indices = @transform_2, window_bounds = array<i64: 5, 7, 24>}, {pipeline_mode = #tpu.pipeline_mode<synchronous>, transform_indices = @transform_3, window_bounds = array<i64: 1, 24>}, {pipeline_mode = #tpu.pipeline_mode<synchronous>, transform_indices = @transform_4, window_bounds = array<i64: 5, 24, 30>}, {pipeline_mode = #tpu.pipeline_mode<synchronous>, transform_indices = @transform_5, window_bounds = array<i64: 1, 30>}, {pipeline_mode = #tpu.pipeline_mode<synchronous>, transform_indices = @transform_6, window_bounds = array<i64: 10, 256>}, {pipeline_mode = #tpu.pipeline_mode<synchronous>, transform_indices = @transform_7, window_bounds = array<i64: 64, 256>}, {pipeline_mode = #tpu.pipeline_mode<synchronous>, transform_indices = @transform_8, window_bounds = array<i64: 1, 256>}, {pipeline_mode = #tpu.pipeline_mode<synchronous>, transform_indices = @transform_9, window_bounds = array<i64: 1280, 70>}, {pipeline_mode = #tpu.pipeline_mode<synchronous>, transform_indices = @transform_10, window_bounds = array<i64: 1, 70>}, {pipeline_mode = #tpu.pipeline_mode<synchronous>, transform_indices = @transform_11, window_bounds = array<i64: 70, 1>}, {pipeline_mode = #tpu.pipeline_mode<synchronous>, transform_indices = @transform_12, window_bounds = array<i64: 1, 1>}, {transform_indices = @transform_13, window_bounds = array<i64: 1, 1, 1>}]} {
    %c0 = arith.constant 0 : index
    %c0_0 = arith.constant 0 : index
    %c0_1 = arith.constant 0 : index
    %0 = vector.load %arg1[%c0, %c0_0, %c0_1] : memref<1x524x7xf32, #tpu.memory_space<vmem>>, vector<1x524x7xf32>
    %1 = vector.shape_cast %0 : vector<1x524x7xf32> to vector<524x7xf32>
    %c0_2 = arith.constant 0 : index
    %c0_3 = arith.constant 0 : index
    %2 = vector.load %arg2[%c0_2, %c0_3] : memref<1x2xf32, #tpu.memory_space<vmem>>, vector<1x1xf32>
    %3 = vector.broadcast %2 : vector<1x1xf32> to vector<524x7xf32>
    %4 = arith.mulf %1, %3 : vector<524x7xf32>
    %c0_4 = arith.constant 0 : index
    %c1 = arith.constant 1 : index
    %5 = vector.load %arg2[%c0_4, %c1] : memref<1x2xf32, #tpu.memory_space<vmem>>, vector<1x1xf32>
    %6 = vector.broadcast %5 : vector<1x1xf32> to vector<524x7xf32>
    %7 = arith.addf %4, %6 : vector<524x7xf32>
    %cst = arith.constant 0.000000e+00 : f32
    %8 = vector.broadcast %cst : f32 to vector<520x24xf32>
    %c0_5 = arith.constant 0 : index
    %c0_6 = arith.constant 0 : index
    %9 = vector.load %arg4[%c0_5, %c0_6] : memref<1x24xf32, #tpu.memory_space<vmem>>, vector<1x24xf32>
    %10 = vector.broadcast %9 : vector<1x24xf32> to vector<520x24xf32>
    %11 = arith.addf %8, %10 : vector<520x24xf32>
    %12 = vector.extract_strided_slice %7 {offsets = [0, 0], sizes = [520, 7], strides = [1, 1]} : vector<524x7xf32> to vector<520x7xf32>
    %c0_7 = arith.constant 0 : index
    %c0_8 = arith.constant 0 : index
    %c0_9 = arith.constant 0 : index
    %13 = vector.load %arg3[%c0_7, %c0_8, %c0_9] : memref<5x7x24xf32, #tpu.memory_space<vmem>>, vector<1x7x24xf32>
    %14 = vector.shape_cast %13 : vector<1x7x24xf32> to vector<7x24xf32>
    %cst_10 = arith.constant dense<0.000000e+00> : vector<520x24xf32>
    %15 = tpu.matmul %12, %14, %cst_10 {dimension_numbers = #tpu.dot_dimension_numbers<[1], [0], [0], [1], [0, 0, 1, 1], [], []>} : vector<520x7xf32>, vector<7x24xf32>, vector<520x24xf32> -> vector<520x24xf32>
    %16 = arith.addf %11, %15 : vector<520x24xf32>
    %17 = vector.extract_strided_slice %7 {offsets = [1, 0], sizes = [520, 7], strides = [1, 1]} : vector<524x7xf32> to vector<520x7xf32>
    %c1_11 = arith.constant 1 : index
    %c0_12 = arith.constant 0 : index
    %c0_13 = arith.constant 0 : index
    %18 = vector.load %arg3[%c1_11, %c0_12, %c0_13] : memref<5x7x24xf32, #tpu.memory_space<vmem>>, vector<1x7x24xf32>
    %19 = vector.shape_cast %18 : vector<1x7x24xf32> to vector<7x24xf32>
    %cst_14 = arith.constant dense<0.000000e+00> : vector<520x24xf32>
    %20 = tpu.matmul %17, %19, %cst_14 {dimension_numbers = #tpu.dot_dimension_numbers<[1], [0], [0], [1], [0, 0, 1, 1], [], []>} : vector<520x7xf32>, vector<7x24xf32>, vector<520x24xf32> -> vector<520x24xf32>
    %21 = arith.addf %16, %20 : vector<520x24xf32>
    %22 = vector.extract_strided_slice %7 {offsets = [2, 0], sizes = [520, 7], strides = [1, 1]} : vector<524x7xf32> to vector<520x7xf32>
    %c2 = arith.constant 2 : index
    %c0_15 = arith.constant 0 : index
    %c0_16 = arith.constant 0 : index
    %23 = vector.load %arg3[%c2, %c0_15, %c0_16] : memref<5x7x24xf32, #tpu.memory_space<vmem>>, vector<1x7x24xf32>
    %24 = vector.shape_cast %23 : vector<1x7x24xf32> to vector<7x24xf32>
    %cst_17 = arith.constant dense<0.000000e+00> : vector<520x24xf32>
    %25 = tpu.matmul %22, %24, %cst_17 {dimension_numbers = #tpu.dot_dimension_numbers<[1], [0], [0], [1], [0, 0, 1, 1], [], []>} : vector<520x7xf32>, vector<7x24xf32>, vector<520x24xf32> -> vector<520x24xf32>
    %26 = arith.addf %21, %25 : vector<520x24xf32>
    %27 = vector.extract_strided_slice %7 {offsets = [3, 0], sizes = [520, 7], strides = [1, 1]} : vector<524x7xf32> to vector<520x7xf32>
    %c3 = arith.constant 3 : index
    %c0_18 = arith.constant 0 : index
    %c0_19 = arith.constant 0 : index
    %28 = vector.load %arg3[%c3, %c0_18, %c0_19] : memref<5x7x24xf32, #tpu.memory_space<vmem>>, vector<1x7x24xf32>
    %29 = vector.shape_cast %28 : vector<1x7x24xf32> to vector<7x24xf32>
    %cst_20 = arith.constant dense<0.000000e+00> : vector<520x24xf32>
    %30 = tpu.matmul %27, %29, %cst_20 {dimension_numbers = #tpu.dot_dimension_numbers<[1], [0], [0], [1], [0, 0, 1, 1], [], []>} : vector<520x7xf32>, vector<7x24xf32>, vector<520x24xf32> -> vector<520x24xf32>
    %31 = arith.addf %26, %30 : vector<520x24xf32>
    %32 = vector.extract_strided_slice %7 {offsets = [4, 0], sizes = [520, 7], strides = [1, 1]} : vector<524x7xf32> to vector<520x7xf32>
    %c4 = arith.constant 4 : index
    %c0_21 = arith.constant 0 : index
    %c0_22 = arith.constant 0 : index
    %33 = vector.load %arg3[%c4, %c0_21, %c0_22] : memref<5x7x24xf32, #tpu.memory_space<vmem>>, vector<1x7x24xf32>
    %34 = vector.shape_cast %33 : vector<1x7x24xf32> to vector<7x24xf32>
    %cst_23 = arith.constant dense<0.000000e+00> : vector<520x24xf32>
    %35 = tpu.matmul %32, %34, %cst_23 {dimension_numbers = #tpu.dot_dimension_numbers<[1], [0], [0], [1], [0, 0, 1, 1], [], []>} : vector<520x7xf32>, vector<7x24xf32>, vector<520x24xf32> -> vector<520x24xf32>
    %36 = arith.addf %31, %35 : vector<520x24xf32>
    %c0_24 = arith.constant 0 : index
    %c0_25 = arith.constant 0 : index
    %37 = vector.load %arg15[%c0_24, %c0_25] : memref<520x24xf32, #tpu.memory_space<vmem>>, vector<520x24xf32>
    tpu.vector_store %arg15[%c0_24, %c0_25], %36 {strides = array<i32>} : memref<520x24xf32, #tpu.memory_space<vmem>>, vector<520x24xf32>,
    %c0_26 = arith.constant 0 : index
    %c0_27 = arith.constant 0 : index
    %38 = tpu.strided_load %arg15[%c0_26, %c0_27] {strides = array<i32: 5, 1>} : memref<520x24xf32, #tpu.memory_space<vmem>>, vector<104x24xf32>
    %c1_28 = arith.constant 1 : index
    %c0_29 = arith.constant 0 : index
    %39 = tpu.strided_load %arg15[%c1_28, %c0_29] {strides = array<i32: 5, 1>} : memref<520x24xf32, #tpu.memory_space<vmem>>, vector<104x24xf32>
    %40 = arith.maximumf %38, %39 : vector<104x24xf32>
    %c2_30 = arith.constant 2 : index
    %c0_31 = arith.constant 0 : index
    %41 = tpu.strided_load %arg15[%c2_30, %c0_31] {strides = array<i32: 5, 1>} : memref<520x24xf32, #tpu.memory_space<vmem>>, vector<104x24xf32>
    %42 = arith.maximumf %40, %41 : vector<104x24xf32>
    %c3_32 = arith.constant 3 : index
    %c0_33 = arith.constant 0 : index
    %43 = tpu.strided_load %arg15[%c3_32, %c0_33] {strides = array<i32: 5, 1>} : memref<520x24xf32, #tpu.memory_space<vmem>>, vector<104x24xf32>
    %44 = arith.maximumf %42, %43 : vector<104x24xf32>
    %c4_34 = arith.constant 4 : index
    %c0_35 = arith.constant 0 : index
    %45 = tpu.strided_load %arg15[%c4_34, %c0_35] {strides = array<i32: 5, 1>} : memref<520x24xf32, #tpu.memory_space<vmem>>, vector<104x24xf32>
    %46 = arith.maximumf %44, %45 : vector<104x24xf32>
    %cst_36 = arith.constant 0.000000e+00 : f32
    %47 = vector.broadcast %cst_36 : f32 to vector<104x24xf32>
    %48 = arith.maximumf %46, %47 : vector<104x24xf32>
    %cst_37 = arith.constant 0.000000e+00 : f32
    %49 = vector.broadcast %cst_37 : f32 to vector<100x30xf32>
    %c0_38 = arith.constant 0 : index
    %c0_39 = arith.constant 0 : index
    %50 = vector.load %arg6[%c0_38, %c0_39] : memref<1x30xf32, #tpu.memory_space<vmem>>, vector<1x30xf32>
    %51 = vector.broadcast %50 : vector<1x30xf32> to vector<100x30xf32>
    %52 = arith.addf %49, %51 : vector<100x30xf32>
    %53 = vector.extract_strided_slice %48 {offsets = [0, 0], sizes = [100, 24], strides = [1, 1]} : vector<104x24xf32> to vector<100x24xf32>
    %c0_40 = arith.constant 0 : index
    %c0_41 = arith.constant 0 : index
    %c0_42 = arith.constant 0 : index
    %54 = vector.load %arg5[%c0_40, %c0_41, %c0_42] : memref<5x24x30xf32, #tpu.memory_space<vmem>>, vector<1x24x30xf32>
    %55 = vector.shape_cast %54 : vector<1x24x30xf32> to vector<24x30xf32>
    %cst_43 = arith.constant dense<0.000000e+00> : vector<100x30xf32>
    %56 = tpu.matmul %53, %55, %cst_43 {dimension_numbers = #tpu.dot_dimension_numbers<[1], [0], [0], [1], [0, 0, 1, 1], [], []>} : vector<100x24xf32>, vector<24x30xf32>, vector<100x30xf32> -> vector<100x30xf32>
    %57 = arith.addf %52, %56 : vector<100x30xf32>
    %58 = vector.extract_strided_slice %48 {offsets = [1, 0], sizes = [100, 24], strides = [1, 1]} : vector<104x24xf32> to vector<100x24xf32>
    %c1_44 = arith.constant 1 : index
    %c0_45 = arith.constant 0 : index
    %c0_46 = arith.constant 0 : index
    %59 = vector.load %arg5[%c1_44, %c0_45, %c0_46] : memref<5x24x30xf32, #tpu.memory_space<vmem>>, vector<1x24x30xf32>
    %60 = vector.shape_cast %59 : vector<1x24x30xf32> to vector<24x30xf32>
    %cst_47 = arith.constant dense<0.000000e+00> : vector<100x30xf32>
    %61 = tpu.matmul %58, %60, %cst_47 {dimension_numbers = #tpu.dot_dimension_numbers<[1], [0], [0], [1], [0, 0, 1, 1], [], []>} : vector<100x24xf32>, vector<24x30xf32>, vector<100x30xf32> -> vector<100x30xf32>
    %62 = arith.addf %57, %61 : vector<100x30xf32>
    %63 = vector.extract_strided_slice %48 {offsets = [2, 0], sizes = [100, 24], strides = [1, 1]} : vector<104x24xf32> to vector<100x24xf32>
    %c2_48 = arith.constant 2 : index
    %c0_49 = arith.constant 0 : index
    %c0_50 = arith.constant 0 : index
    %64 = vector.load %arg5[%c2_48, %c0_49, %c0_50] : memref<5x24x30xf32, #tpu.memory_space<vmem>>, vector<1x24x30xf32>
    %65 = vector.shape_cast %64 : vector<1x24x30xf32> to vector<24x30xf32>
    %cst_51 = arith.constant dense<0.000000e+00> : vector<100x30xf32>
    %66 = tpu.matmul %63, %65, %cst_51 {dimension_numbers = #tpu.dot_dimension_numbers<[1], [0], [0], [1], [0, 0, 1, 1], [], []>} : vector<100x24xf32>, vector<24x30xf32>, vector<100x30xf32> -> vector<100x30xf32>
    %67 = arith.addf %62, %66 : vector<100x30xf32>
    %68 = vector.extract_strided_slice %48 {offsets = [3, 0], sizes = [100, 24], strides = [1, 1]} : vector<104x24xf32> to vector<100x24xf32>
    %c3_52 = arith.constant 3 : index
    %c0_53 = arith.constant 0 : index
    %c0_54 = arith.constant 0 : index
    %69 = vector.load %arg5[%c3_52, %c0_53, %c0_54] : memref<5x24x30xf32, #tpu.memory_space<vmem>>, vector<1x24x30xf32>
    %70 = vector.shape_cast %69 : vector<1x24x30xf32> to vector<24x30xf32>
    %cst_55 = arith.constant dense<0.000000e+00> : vector<100x30xf32>
    %71 = tpu.matmul %68, %70, %cst_55 {dimension_numbers = #tpu.dot_dimension_numbers<[1], [0], [0], [1], [0, 0, 1, 1], [], []>} : vector<100x24xf32>, vector<24x30xf32>, vector<100x30xf32> -> vector<100x30xf32>
    %72 = arith.addf %67, %71 : vector<100x30xf32>
    %73 = vector.extract_strided_slice %48 {offsets = [4, 0], sizes = [100, 24], strides = [1, 1]} : vector<104x24xf32> to vector<100x24xf32>
    %c4_56 = arith.constant 4 : index
    %c0_57 = arith.constant 0 : index
    %c0_58 = arith.constant 0 : index
    %74 = vector.load %arg5[%c4_56, %c0_57, %c0_58] : memref<5x24x30xf32, #tpu.memory_space<vmem>>, vector<1x24x30xf32>
    %75 = vector.shape_cast %74 : vector<1x24x30xf32> to vector<24x30xf32>
    %cst_59 = arith.constant dense<0.000000e+00> : vector<100x30xf32>
    %76 = tpu.matmul %73, %75, %cst_59 {dimension_numbers = #tpu.dot_dimension_numbers<[1], [0], [0], [1], [0, 0, 1, 1], [], []>} : vector<100x24xf32>, vector<24x30xf32>, vector<100x30xf32> -> vector<100x30xf32>
    %77 = arith.addf %72, %76 : vector<100x30xf32>
    %c0_60 = arith.constant 0 : index
    %c0_61 = arith.constant 0 : index
    %78 = vector.load %arg16[%c0_60, %c0_61] : memref<100x30xf32, #tpu.memory_space<vmem>>, vector<100x30xf32>
    tpu.vector_store %arg16[%c0_60, %c0_61], %77 {strides = array<i32>} : memref<100x30xf32, #tpu.memory_space<vmem>>, vector<100x30xf32>,
    %c0_62 = arith.constant 0 : index
    %c0_63 = arith.constant 0 : index
    %79 = tpu.strided_load %arg16[%c0_62, %c0_63] {strides = array<i32: 5, 1>} : memref<100x30xf32, #tpu.memory_space<vmem>>, vector<20x30xf32>
    %c1_64 = arith.constant 1 : index
    %c0_65 = arith.constant 0 : index
    %80 = tpu.strided_load %arg16[%c1_64, %c0_65] {strides = array<i32: 5, 1>} : memref<100x30xf32, #tpu.memory_space<vmem>>, vector<20x30xf32>
    %81 = arith.maximumf %79, %80 : vector<20x30xf32>
    %c2_66 = arith.constant 2 : index
    %c0_67 = arith.constant 0 : index
    %82 = tpu.strided_load %arg16[%c2_66, %c0_67] {strides = array<i32: 5, 1>} : memref<100x30xf32, #tpu.memory_space<vmem>>, vector<20x30xf32>
    %83 = arith.maximumf %81, %82 : vector<20x30xf32>
    %c3_68 = arith.constant 3 : index
    %c0_69 = arith.constant 0 : index
    %84 = tpu.strided_load %arg16[%c3_68, %c0_69] {strides = array<i32: 5, 1>} : memref<100x30xf32, #tpu.memory_space<vmem>>, vector<20x30xf32>
    %85 = arith.maximumf %83, %84 : vector<20x30xf32>
    %c4_70 = arith.constant 4 : index
    %c0_71 = arith.constant 0 : index
    %86 = tpu.strided_load %arg16[%c4_70, %c0_71] {strides = array<i32: 5, 1>} : memref<100x30xf32, #tpu.memory_space<vmem>>, vector<20x30xf32>
    %87 = arith.maximumf %85, %86 : vector<20x30xf32>
    %cst_72 = arith.constant 0.000000e+00 : f32
    %88 = vector.broadcast %cst_72 : f32 to vector<20x30xf32>
    %89 = arith.maximumf %87, %88 : vector<20x30xf32>
    %90 = vector.extract_strided_slice %89 {offsets = [0, 0], sizes = [20, 10], strides = [1, 1]} : vector<20x30xf32> to vector<20x10xf32>
    %91 = vector.extract_strided_slice %89 {offsets = [0, 10], sizes = [20, 10], strides = [1, 1]} : vector<20x30xf32> to vector<20x10xf32>
    %92 = arith.maximumf %90, %91 : vector<20x10xf32>
    %93 = vector.extract_strided_slice %89 {offsets = [0, 20], sizes = [20, 10], strides = [1, 1]} : vector<20x30xf32> to vector<20x10xf32>
    %94 = arith.maximumf %92, %93 : vector<20x10xf32>
    %c0_73 = arith.constant 0 : index
    %c0_74 = arith.constant 0 : index
    %95 = vector.load %arg7[%c0_73, %c0_74] : memref<10x256xf32, #tpu.memory_space<vmem>>, vector<10x256xf32>
    %cst_75 = arith.constant dense<0.000000e+00> : vector<20x256xf32>
    %96 = tpu.matmul %94, %95, %cst_75 {dimension_numbers = #tpu.dot_dimension_numbers<[1], [0], [0], [1], [0, 0, 1, 1], [], []>} : vector<20x10xf32>, vector<10x256xf32>, vector<20x256xf32> -> vector<20x256xf32>
    %c0_76 = arith.constant 0 : index
    %c0_77 = arith.constant 0 : index
    %97 = vector.load %arg9[%c0_76, %c0_77] : memref<1x256xf32, #tpu.memory_space<vmem>>, vector<1x256xf32>
    %98 = vector.broadcast %97 : vector<1x256xf32> to vector<20x256xf32>
    %99 = arith.addf %96, %98 : vector<20x256xf32>
    %cst_78 = arith.constant 0.000000e+00 : f32
    %100 = vector.broadcast %cst_78 : f32 to vector<1x64xf32>
    %cst_79 = arith.constant 0.000000e+00 : f32
    %101 = vector.broadcast %cst_79 : f32 to vector<1x64xf32>
    %cst_80 = arith.constant 0.000000e+00 : f32
    %102 = vector.broadcast %cst_80 : f32 to vector<1x70xf32>
    %103 = vector.extract_strided_slice %99 {offsets = [0, 0], sizes = [1, 256], strides = [1, 1]} : vector<20x256xf32> to vector<1x256xf32>
    %c0_81 = arith.constant 0 : index
    %c0_82 = arith.constant 0 : index
    %104 = vector.load %arg8[%c0_81, %c0_82] : memref<64x256xf32, #tpu.memory_space<vmem>>, vector<64x256xf32>
    %cst_83 = arith.constant dense<0.000000e+00> : vector<1x256xf32>
    %105 = tpu.matmul %100, %104, %cst_83 {dimension_numbers = #tpu.dot_dimension_numbers<[1], [0], [0], [1], [0, 0, 1, 1], [], []>} : vector<1x64xf32>, vector<64x256xf32>, vector<1x256xf32> -> vector<1x256xf32>
    %106 = arith.addf %103, %105 : vector<1x256xf32>
    %107 = vector.extract_strided_slice %106 {offsets = [0, 0], sizes = [1, 64], strides = [1, 1]} : vector<1x256xf32> to vector<1x64xf32>
    %cst_84 = arith.constant 0.000000e+00 : f32
    %108 = vector.broadcast %cst_84 : f32 to vector<1x64xf32>
    %109 = arith.subf %108, %107 : vector<1x64xf32>
    %110 = math.exp %109 : vector<1x64xf32>
    %cst_85 = arith.constant 1.000000e+00 : f32
    %111 = vector.broadcast %cst_85 : f32 to vector<1x64xf32>
    %112 = arith.addf %111, %110 : vector<1x64xf32>
    %113 = tpu.reciprocal %112 {approx = true} : vector<1x64xf32> -> vector<1x64xf32>
    %114 = vector.extract_strided_slice %106 {offsets = [0, 64], sizes = [1, 64], strides = [1, 1]} : vector<1x256xf32> to vector<1x64xf32>
    %cst_86 = arith.constant 0.000000e+00 : f32
    %115 = vector.broadcast %cst_86 : f32 to vector<1x64xf32>
    %116 = arith.subf %115, %114 : vector<1x64xf32>
    %117 = math.exp %116 : vector<1x64xf32>
    %cst_87 = arith.constant 1.000000e+00 : f32
    %118 = vector.broadcast %cst_87 : f32 to vector<1x64xf32>
    %119 = arith.addf %118, %117 : vector<1x64xf32>
    %120 = tpu.reciprocal %119 {approx = true} : vector<1x64xf32> -> vector<1x64xf32>
    %121 = vector.extract_strided_slice %106 {offsets = [0, 128], sizes = [1, 64], strides = [1, 1]} : vector<1x256xf32> to vector<1x64xf32>
    %122 = math.tanh %121 : vector<1x64xf32>
    %123 = vector.extract_strided_slice %106 {offsets = [0, 192], sizes = [1, 64], strides = [1, 1]} : vector<1x256xf32> to vector<1x64xf32>
    %cst_88 = arith.constant 0.000000e+00 : f32
    %124 = vector.broadcast %cst_88 : f32 to vector<1x64xf32>
    %125 = arith.subf %124, %123 : vector<1x64xf32>
    %126 = math.exp %125 : vector<1x64xf32>
    %cst_89 = arith.constant 1.000000e+00 : f32
    %127 = vector.broadcast %cst_89 : f32 to vector<1x64xf32>
    %128 = arith.addf %127, %126 : vector<1x64xf32>
    %129 = tpu.reciprocal %128 {approx = true} : vector<1x64xf32> -> vector<1x64xf32>
    %130 = arith.mulf %120, %101 : vector<1x64xf32>
    %131 = arith.mulf %113, %122 : vector<1x64xf32>
    %132 = arith.addf %130, %131 : vector<1x64xf32>
    %133 = math.tanh %132 : vector<1x64xf32>
    %134 = arith.mulf %129, %133 : vector<1x64xf32>
    %c0_90 = arith.constant 0 : index
    %c0_91 = arith.constant 0 : index
    %135 = vector.load %arg10[%c0_90, %c0_91] : memref<1280x70xf32, #tpu.memory_space<vmem>>, vector<64x70xf32>
    %cst_92 = arith.constant dense<0.000000e+00> : vector<1x70xf32>
    %136 = tpu.matmul %134, %135, %cst_92 {dimension_numbers = #tpu.dot_dimension_numbers<[1], [0], [0], [1], [0, 0, 1, 1], [], []>} : vector<1x64xf32>, vector<64x70xf32>, vector<1x70xf32> -> vector<1x70xf32>
    %137 = arith.addf %102, %136 : vector<1x70xf32>
    %138 = vector.extract_strided_slice %99 {offsets = [1, 0], sizes = [1, 256], strides = [1, 1]} : vector<20x256xf32> to vector<1x256xf32>
    %c0_93 = arith.constant 0 : index
    %c0_94 = arith.constant 0 : index
    %139 = vector.load %arg8[%c0_93, %c0_94] : memref<64x256xf32, #tpu.memory_space<vmem>>, vector<64x256xf32>
    %cst_95 = arith.constant dense<0.000000e+00> : vector<1x256xf32>
    %140 = tpu.matmul %134, %139, %cst_95 {dimension_numbers = #tpu.dot_dimension_numbers<[1], [0], [0], [1], [0, 0, 1, 1], [], []>} : vector<1x64xf32>, vector<64x256xf32>, vector<1x256xf32> -> vector<1x256xf32>
    %141 = arith.addf %138, %140 : vector<1x256xf32>
    %142 = vector.extract_strided_slice %141 {offsets = [0, 0], sizes = [1, 64], strides = [1, 1]} : vector<1x256xf32> to vector<1x64xf32>
    %cst_96 = arith.constant 0.000000e+00 : f32
    %143 = vector.broadcast %cst_96 : f32 to vector<1x64xf32>
    %144 = arith.subf %143, %142 : vector<1x64xf32>
    %145 = math.exp %144 : vector<1x64xf32>
    %cst_97 = arith.constant 1.000000e+00 : f32
    %146 = vector.broadcast %cst_97 : f32 to vector<1x64xf32>
    %147 = arith.addf %146, %145 : vector<1x64xf32>
    %148 = tpu.reciprocal %147 {approx = true} : vector<1x64xf32> -> vector<1x64xf32>
    %149 = vector.extract_strided_slice %141 {offsets = [0, 64], sizes = [1, 64], strides = [1, 1]} : vector<1x256xf32> to vector<1x64xf32>
    %cst_98 = arith.constant 0.000000e+00 : f32
    %150 = vector.broadcast %cst_98 : f32 to vector<1x64xf32>
    %151 = arith.subf %150, %149 : vector<1x64xf32>
    %152 = math.exp %151 : vector<1x64xf32>
    %cst_99 = arith.constant 1.000000e+00 : f32
    %153 = vector.broadcast %cst_99 : f32 to vector<1x64xf32>
    %154 = arith.addf %153, %152 : vector<1x64xf32>
    %155 = tpu.reciprocal %154 {approx = true} : vector<1x64xf32> -> vector<1x64xf32>
    %156 = vector.extract_strided_slice %141 {offsets = [0, 128], sizes = [1, 64], strides = [1, 1]} : vector<1x256xf32> to vector<1x64xf32>
    %157 = math.tanh %156 : vector<1x64xf32>
    %158 = vector.extract_strided_slice %141 {offsets = [0, 192], sizes = [1, 64], strides = [1, 1]} : vector<1x256xf32> to vector<1x64xf32>
    %cst_100 = arith.constant 0.000000e+00 : f32
    %159 = vector.broadcast %cst_100 : f32 to vector<1x64xf32>
    %160 = arith.subf %159, %158 : vector<1x64xf32>
    %161 = math.exp %160 : vector<1x64xf32>
    %cst_101 = arith.constant 1.000000e+00 : f32
    %162 = vector.broadcast %cst_101 : f32 to vector<1x64xf32>
    %163 = arith.addf %162, %161 : vector<1x64xf32>
    %164 = tpu.reciprocal %163 {approx = true} : vector<1x64xf32> -> vector<1x64xf32>
    %165 = arith.mulf %155, %132 : vector<1x64xf32>
    %166 = arith.mulf %148, %157 : vector<1x64xf32>
    %167 = arith.addf %165, %166 : vector<1x64xf32>
    %168 = math.tanh %167 : vector<1x64xf32>
    %169 = arith.mulf %164, %168 : vector<1x64xf32>
    %c64 = arith.constant 64 : index
    %c0_102 = arith.constant 0 : index
    %170 = vector.load %arg10[%c64, %c0_102] : memref<1280x70xf32, #tpu.memory_space<vmem>>, vector<64x70xf32>
    %cst_103 = arith.constant dense<0.000000e+00> : vector<1x70xf32>
    %171 = tpu.matmul %169, %170, %cst_103 {dimension_numbers = #tpu.dot_dimension_numbers<[1], [0], [0], [1], [0, 0, 1, 1], [], []>} : vector<1x64xf32>, vector<64x70xf32>, vector<1x70xf32> -> vector<1x70xf32>
    %172 = arith.addf %137, %171 : vector<1x70xf32>
    %173 = vector.extract_strided_slice %99 {offsets = [2, 0], sizes = [1, 256], strides = [1, 1]} : vector<20x256xf32> to vector<1x256xf32>
    %c0_104 = arith.constant 0 : index
    %c0_105 = arith.constant 0 : index
    %174 = vector.load %arg8[%c0_104, %c0_105] : memref<64x256xf32, #tpu.memory_space<vmem>>, vector<64x256xf32>
    %cst_106 = arith.constant dense<0.000000e+00> : vector<1x256xf32>
    %175 = tpu.matmul %169, %174, %cst_106 {dimension_numbers = #tpu.dot_dimension_numbers<[1], [0], [0], [1], [0, 0, 1, 1], [], []>} : vector<1x64xf32>, vector<64x256xf32>, vector<1x256xf32> -> vector<1x256xf32>
    %176 = arith.addf %173, %175 : vector<1x256xf32>
    %177 = vector.extract_strided_slice %176 {offsets = [0, 0], sizes = [1, 64], strides = [1, 1]} : vector<1x256xf32> to vector<1x64xf32>
    %cst_107 = arith.constant 0.000000e+00 : f32
    %178 = vector.broadcast %cst_107 : f32 to vector<1x64xf32>
    %179 = arith.subf %178, %177 : vector<1x64xf32>
    %180 = math.exp %179 : vector<1x64xf32>
    %cst_108 = arith.constant 1.000000e+00 : f32
    %181 = vector.broadcast %cst_108 : f32 to vector<1x64xf32>
    %182 = arith.addf %181, %180 : vector<1x64xf32>
    %183 = tpu.reciprocal %182 {approx = true} : vector<1x64xf32> -> vector<1x64xf32>
    %184 = vector.extract_strided_slice %176 {offsets = [0, 64], sizes = [1, 64], strides = [1, 1]} : vector<1x256xf32> to vector<1x64xf32>
    %cst_109 = arith.constant 0.000000e+00 : f32
    %185 = vector.broadcast %cst_109 : f32 to vector<1x64xf32>
    %186 = arith.subf %185, %184 : vector<1x64xf32>
    %187 = math.exp %186 : vector<1x64xf32>
    %cst_110 = arith.constant 1.000000e+00 : f32
    %188 = vector.broadcast %cst_110 : f32 to vector<1x64xf32>
    %189 = arith.addf %188, %187 : vector<1x64xf32>
    %190 = tpu.reciprocal %189 {approx = true} : vector<1x64xf32> -> vector<1x64xf32>
    %191 = vector.extract_strided_slice %176 {offsets = [0, 128], sizes = [1, 64], strides = [1, 1]} : vector<1x256xf32> to vector<1x64xf32>
    %192 = math.tanh %191 : vector<1x64xf32>
    %193 = vector.extract_strided_slice %176 {offsets = [0, 192], sizes = [1, 64], strides = [1, 1]} : vector<1x256xf32> to vector<1x64xf32>
    %cst_111 = arith.constant 0.000000e+00 : f32
    %194 = vector.broadcast %cst_111 : f32 to vector<1x64xf32>
    %195 = arith.subf %194, %193 : vector<1x64xf32>
    %196 = math.exp %195 : vector<1x64xf32>
    %cst_112 = arith.constant 1.000000e+00 : f32
    %197 = vector.broadcast %cst_112 : f32 to vector<1x64xf32>
    %198 = arith.addf %197, %196 : vector<1x64xf32>
    %199 = tpu.reciprocal %198 {approx = true} : vector<1x64xf32> -> vector<1x64xf32>
    %200 = arith.mulf %190, %167 : vector<1x64xf32>
    %201 = arith.mulf %183, %192 : vector<1x64xf32>
    %202 = arith.addf %200, %201 : vector<1x64xf32>
    %203 = math.tanh %202 : vector<1x64xf32>
    %204 = arith.mulf %199, %203 : vector<1x64xf32>
    %c128 = arith.constant 128 : index
    %c0_113 = arith.constant 0 : index
    %205 = vector.load %arg10[%c128, %c0_113] : memref<1280x70xf32, #tpu.memory_space<vmem>>, vector<64x70xf32>
    %cst_114 = arith.constant dense<0.000000e+00> : vector<1x70xf32>
    %206 = tpu.matmul %204, %205, %cst_114 {dimension_numbers = #tpu.dot_dimension_numbers<[1], [0], [0], [1], [0, 0, 1, 1], [], []>} : vector<1x64xf32>, vector<64x70xf32>, vector<1x70xf32> -> vector<1x70xf32>
    %207 = arith.addf %172, %206 : vector<1x70xf32>
    %208 = vector.extract_strided_slice %99 {offsets = [3, 0], sizes = [1, 256], strides = [1, 1]} : vector<20x256xf32> to vector<1x256xf32>
    %c0_115 = arith.constant 0 : index
    %c0_116 = arith.constant 0 : index
    %209 = vector.load %arg8[%c0_115, %c0_116] : memref<64x256xf32, #tpu.memory_space<vmem>>, vector<64x256xf32>
    %cst_117 = arith.constant dense<0.000000e+00> : vector<1x256xf32>
    %210 = tpu.matmul %204, %209, %cst_117 {dimension_numbers = #tpu.dot_dimension_numbers<[1], [0], [0], [1], [0, 0, 1, 1], [], []>} : vector<1x64xf32>, vector<64x256xf32>, vector<1x256xf32> -> vector<1x256xf32>
    %211 = arith.addf %208, %210 : vector<1x256xf32>
    %212 = vector.extract_strided_slice %211 {offsets = [0, 0], sizes = [1, 64], strides = [1, 1]} : vector<1x256xf32> to vector<1x64xf32>
    %cst_118 = arith.constant 0.000000e+00 : f32
    %213 = vector.broadcast %cst_118 : f32 to vector<1x64xf32>
    %214 = arith.subf %213, %212 : vector<1x64xf32>
    %215 = math.exp %214 : vector<1x64xf32>
    %cst_119 = arith.constant 1.000000e+00 : f32
    %216 = vector.broadcast %cst_119 : f32 to vector<1x64xf32>
    %217 = arith.addf %216, %215 : vector<1x64xf32>
    %218 = tpu.reciprocal %217 {approx = true} : vector<1x64xf32> -> vector<1x64xf32>
    %219 = vector.extract_strided_slice %211 {offsets = [0, 64], sizes = [1, 64], strides = [1, 1]} : vector<1x256xf32> to vector<1x64xf32>
    %cst_120 = arith.constant 0.000000e+00 : f32
    %220 = vector.broadcast %cst_120 : f32 to vector<1x64xf32>
    %221 = arith.subf %220, %219 : vector<1x64xf32>
    %222 = math.exp %221 : vector<1x64xf32>
    %cst_121 = arith.constant 1.000000e+00 : f32
    %223 = vector.broadcast %cst_121 : f32 to vector<1x64xf32>
    %224 = arith.addf %223, %222 : vector<1x64xf32>
    %225 = tpu.reciprocal %224 {approx = true} : vector<1x64xf32> -> vector<1x64xf32>
    %226 = vector.extract_strided_slice %211 {offsets = [0, 128], sizes = [1, 64], strides = [1, 1]} : vector<1x256xf32> to vector<1x64xf32>
    %227 = math.tanh %226 : vector<1x64xf32>
    %228 = vector.extract_strided_slice %211 {offsets = [0, 192], sizes = [1, 64], strides = [1, 1]} : vector<1x256xf32> to vector<1x64xf32>
    %cst_122 = arith.constant 0.000000e+00 : f32
    %229 = vector.broadcast %cst_122 : f32 to vector<1x64xf32>
    %230 = arith.subf %229, %228 : vector<1x64xf32>
    %231 = math.exp %230 : vector<1x64xf32>
    %cst_123 = arith.constant 1.000000e+00 : f32
    %232 = vector.broadcast %cst_123 : f32 to vector<1x64xf32>
    %233 = arith.addf %232, %231 : vector<1x64xf32>
    %234 = tpu.reciprocal %233 {approx = true} : vector<1x64xf32> -> vector<1x64xf32>
    %235 = arith.mulf %225, %202 : vector<1x64xf32>
    %236 = arith.mulf %218, %227 : vector<1x64xf32>
    %237 = arith.addf %235, %236 : vector<1x64xf32>
    %238 = math.tanh %237 : vector<1x64xf32>
    %239 = arith.mulf %234, %238 : vector<1x64xf32>
    %c192 = arith.constant 192 : index
    %c0_124 = arith.constant 0 : index
    %240 = vector.load %arg10[%c192, %c0_124] : memref<1280x70xf32, #tpu.memory_space<vmem>>, vector<64x70xf32>
    %cst_125 = arith.constant dense<0.000000e+00> : vector<1x70xf32>
    %241 = tpu.matmul %239, %240, %cst_125 {dimension_numbers = #tpu.dot_dimension_numbers<[1], [0], [0], [1], [0, 0, 1, 1], [], []>} : vector<1x64xf32>, vector<64x70xf32>, vector<1x70xf32> -> vector<1x70xf32>
    %242 = arith.addf %207, %241 : vector<1x70xf32>
    %243 = vector.extract_strided_slice %99 {offsets = [4, 0], sizes = [1, 256], strides = [1, 1]} : vector<20x256xf32> to vector<1x256xf32>
    %c0_126 = arith.constant 0 : index
    %c0_127 = arith.constant 0 : index
    %244 = vector.load %arg8[%c0_126, %c0_127] : memref<64x256xf32, #tpu.memory_space<vmem>>, vector<64x256xf32>
    %cst_128 = arith.constant dense<0.000000e+00> : vector<1x256xf32>
    %245 = tpu.matmul %239, %244, %cst_128 {dimension_numbers = #tpu.dot_dimension_numbers<[1], [0], [0], [1], [0, 0, 1, 1], [], []>} : vector<1x64xf32>, vector<64x256xf32>, vector<1x256xf32> -> vector<1x256xf32>
    %246 = arith.addf %243, %245 : vector<1x256xf32>
    %247 = vector.extract_strided_slice %246 {offsets = [0, 0], sizes = [1, 64], strides = [1, 1]} : vector<1x256xf32> to vector<1x64xf32>
    %cst_129 = arith.constant 0.000000e+00 : f32
    %248 = vector.broadcast %cst_129 : f32 to vector<1x64xf32>
    %249 = arith.subf %248, %247 : vector<1x64xf32>
    %250 = math.exp %249 : vector<1x64xf32>
    %cst_130 = arith.constant 1.000000e+00 : f32
    %251 = vector.broadcast %cst_130 : f32 to vector<1x64xf32>
    %252 = arith.addf %251, %250 : vector<1x64xf32>
    %253 = tpu.reciprocal %252 {approx = true} : vector<1x64xf32> -> vector<1x64xf32>
    %254 = vector.extract_strided_slice %246 {offsets = [0, 64], sizes = [1, 64], strides = [1, 1]} : vector<1x256xf32> to vector<1x64xf32>
    %cst_131 = arith.constant 0.000000e+00 : f32
    %255 = vector.broadcast %cst_131 : f32 to vector<1x64xf32>
    %256 = arith.subf %255, %254 : vector<1x64xf32>
    %257 = math.exp %256 : vector<1x64xf32>
    %cst_132 = arith.constant 1.000000e+00 : f32
    %258 = vector.broadcast %cst_132 : f32 to vector<1x64xf32>
    %259 = arith.addf %258, %257 : vector<1x64xf32>
    %260 = tpu.reciprocal %259 {approx = true} : vector<1x64xf32> -> vector<1x64xf32>
    %261 = vector.extract_strided_slice %246 {offsets = [0, 128], sizes = [1, 64], strides = [1, 1]} : vector<1x256xf32> to vector<1x64xf32>
    %262 = math.tanh %261 : vector<1x64xf32>
    %263 = vector.extract_strided_slice %246 {offsets = [0, 192], sizes = [1, 64], strides = [1, 1]} : vector<1x256xf32> to vector<1x64xf32>
    %cst_133 = arith.constant 0.000000e+00 : f32
    %264 = vector.broadcast %cst_133 : f32 to vector<1x64xf32>
    %265 = arith.subf %264, %263 : vector<1x64xf32>
    %266 = math.exp %265 : vector<1x64xf32>
    %cst_134 = arith.constant 1.000000e+00 : f32
    %267 = vector.broadcast %cst_134 : f32 to vector<1x64xf32>
    %268 = arith.addf %267, %266 : vector<1x64xf32>
    %269 = tpu.reciprocal %268 {approx = true} : vector<1x64xf32> -> vector<1x64xf32>
    %270 = arith.mulf %260, %237 : vector<1x64xf32>
    %271 = arith.mulf %253, %262 : vector<1x64xf32>
    %272 = arith.addf %270, %271 : vector<1x64xf32>
    %273 = math.tanh %272 : vector<1x64xf32>
    %274 = arith.mulf %269, %273 : vector<1x64xf32>
    %c256 = arith.constant 256 : index
    %c0_135 = arith.constant 0 : index
    %275 = vector.load %arg10[%c256, %c0_135] : memref<1280x70xf32, #tpu.memory_space<vmem>>, vector<64x70xf32>
    %cst_136 = arith.constant dense<0.000000e+00> : vector<1x70xf32>
    %276 = tpu.matmul %274, %275, %cst_136 {dimension_numbers = #tpu.dot_dimension_numbers<[1], [0], [0], [1], [0, 0, 1, 1], [], []>} : vector<1x64xf32>, vector<64x70xf32>, vector<1x70xf32> -> vector<1x70xf32>
    %277 = arith.addf %242, %276 : vector<1x70xf32>
    %278 = vector.extract_strided_slice %99 {offsets = [5, 0], sizes = [1, 256], strides = [1, 1]} : vector<20x256xf32> to vector<1x256xf32>
    %c0_137 = arith.constant 0 : index
    %c0_138 = arith.constant 0 : index
    %279 = vector.load %arg8[%c0_137, %c0_138] : memref<64x256xf32, #tpu.memory_space<vmem>>, vector<64x256xf32>
    %cst_139 = arith.constant dense<0.000000e+00> : vector<1x256xf32>
    %280 = tpu.matmul %274, %279, %cst_139 {dimension_numbers = #tpu.dot_dimension_numbers<[1], [0], [0], [1], [0, 0, 1, 1], [], []>} : vector<1x64xf32>, vector<64x256xf32>, vector<1x256xf32> -> vector<1x256xf32>
    %281 = arith.addf %278, %280 : vector<1x256xf32>
    %282 = vector.extract_strided_slice %281 {offsets = [0, 0], sizes = [1, 64], strides = [1, 1]} : vector<1x256xf32> to vector<1x64xf32>
    %cst_140 = arith.constant 0.000000e+00 : f32
    %283 = vector.broadcast %cst_140 : f32 to vector<1x64xf32>
    %284 = arith.subf %283, %282 : vector<1x64xf32>
    %285 = math.exp %284 : vector<1x64xf32>
    %cst_141 = arith.constant 1.000000e+00 : f32
    %286 = vector.broadcast %cst_141 : f32 to vector<1x64xf32>
    %287 = arith.addf %286, %285 : vector<1x64xf32>
    %288 = tpu.reciprocal %287 {approx = true} : vector<1x64xf32> -> vector<1x64xf32>
    %289 = vector.extract_strided_slice %281 {offsets = [0, 64], sizes = [1, 64], strides = [1, 1]} : vector<1x256xf32> to vector<1x64xf32>
    %cst_142 = arith.constant 0.000000e+00 : f32
    %290 = vector.broadcast %cst_142 : f32 to vector<1x64xf32>
    %291 = arith.subf %290, %289 : vector<1x64xf32>
    %292 = math.exp %291 : vector<1x64xf32>
    %cst_143 = arith.constant 1.000000e+00 : f32
    %293 = vector.broadcast %cst_143 : f32 to vector<1x64xf32>
    %294 = arith.addf %293, %292 : vector<1x64xf32>
    %295 = tpu.reciprocal %294 {approx = true} : vector<1x64xf32> -> vector<1x64xf32>
    %296 = vector.extract_strided_slice %281 {offsets = [0, 128], sizes = [1, 64], strides = [1, 1]} : vector<1x256xf32> to vector<1x64xf32>
    %297 = math.tanh %296 : vector<1x64xf32>
    %298 = vector.extract_strided_slice %281 {offsets = [0, 192], sizes = [1, 64], strides = [1, 1]} : vector<1x256xf32> to vector<1x64xf32>
    %cst_144 = arith.constant 0.000000e+00 : f32
    %299 = vector.broadcast %cst_144 : f32 to vector<1x64xf32>
    %300 = arith.subf %299, %298 : vector<1x64xf32>
    %301 = math.exp %300 : vector<1x64xf32>
    %cst_145 = arith.constant 1.000000e+00 : f32
    %302 = vector.broadcast %cst_145 : f32 to vector<1x64xf32>
    %303 = arith.addf %302, %301 : vector<1x64xf32>
    %304 = tpu.reciprocal %303 {approx = true} : vector<1x64xf32> -> vector<1x64xf32>
    %305 = arith.mulf %295, %272 : vector<1x64xf32>
    %306 = arith.mulf %288, %297 : vector<1x64xf32>
    %307 = arith.addf %305, %306 : vector<1x64xf32>
    %308 = math.tanh %307 : vector<1x64xf32>
    %309 = arith.mulf %304, %308 : vector<1x64xf32>
    %c320 = arith.constant 320 : index
    %c0_146 = arith.constant 0 : index
    %310 = vector.load %arg10[%c320, %c0_146] : memref<1280x70xf32, #tpu.memory_space<vmem>>, vector<64x70xf32>
    %cst_147 = arith.constant dense<0.000000e+00> : vector<1x70xf32>
    %311 = tpu.matmul %309, %310, %cst_147 {dimension_numbers = #tpu.dot_dimension_numbers<[1], [0], [0], [1], [0, 0, 1, 1], [], []>} : vector<1x64xf32>, vector<64x70xf32>, vector<1x70xf32> -> vector<1x70xf32>
    %312 = arith.addf %277, %311 : vector<1x70xf32>
    %313 = vector.extract_strided_slice %99 {offsets = [6, 0], sizes = [1, 256], strides = [1, 1]} : vector<20x256xf32> to vector<1x256xf32>
    %c0_148 = arith.constant 0 : index
    %c0_149 = arith.constant 0 : index
    %314 = vector.load %arg8[%c0_148, %c0_149] : memref<64x256xf32, #tpu.memory_space<vmem>>, vector<64x256xf32>
    %cst_150 = arith.constant dense<0.000000e+00> : vector<1x256xf32>
    %315 = tpu.matmul %309, %314, %cst_150 {dimension_numbers = #tpu.dot_dimension_numbers<[1], [0], [0], [1], [0, 0, 1, 1], [], []>} : vector<1x64xf32>, vector<64x256xf32>, vector<1x256xf32> -> vector<1x256xf32>
    %316 = arith.addf %313, %315 : vector<1x256xf32>
    %317 = vector.extract_strided_slice %316 {offsets = [0, 0], sizes = [1, 64], strides = [1, 1]} : vector<1x256xf32> to vector<1x64xf32>
    %cst_151 = arith.constant 0.000000e+00 : f32
    %318 = vector.broadcast %cst_151 : f32 to vector<1x64xf32>
    %319 = arith.subf %318, %317 : vector<1x64xf32>
    %320 = math.exp %319 : vector<1x64xf32>
    %cst_152 = arith.constant 1.000000e+00 : f32
    %321 = vector.broadcast %cst_152 : f32 to vector<1x64xf32>
    %322 = arith.addf %321, %320 : vector<1x64xf32>
    %323 = tpu.reciprocal %322 {approx = true} : vector<1x64xf32> -> vector<1x64xf32>
    %324 = vector.extract_strided_slice %316 {offsets = [0, 64], sizes = [1, 64], strides = [1, 1]} : vector<1x256xf32> to vector<1x64xf32>
    %cst_153 = arith.constant 0.000000e+00 : f32
    %325 = vector.broadcast %cst_153 : f32 to vector<1x64xf32>
    %326 = arith.subf %325, %324 : vector<1x64xf32>
    %327 = math.exp %326 : vector<1x64xf32>
    %cst_154 = arith.constant 1.000000e+00 : f32
    %328 = vector.broadcast %cst_154 : f32 to vector<1x64xf32>
    %329 = arith.addf %328, %327 : vector<1x64xf32>
    %330 = tpu.reciprocal %329 {approx = true} : vector<1x64xf32> -> vector<1x64xf32>
    %331 = vector.extract_strided_slice %316 {offsets = [0, 128], sizes = [1, 64], strides = [1, 1]} : vector<1x256xf32> to vector<1x64xf32>
    %332 = math.tanh %331 : vector<1x64xf32>
    %333 = vector.extract_strided_slice %316 {offsets = [0, 192], sizes = [1, 64], strides = [1, 1]} : vector<1x256xf32> to vector<1x64xf32>
    %cst_155 = arith.constant 0.000000e+00 : f32
    %334 = vector.broadcast %cst_155 : f32 to vector<1x64xf32>
    %335 = arith.subf %334, %333 : vector<1x64xf32>
    %336 = math.exp %335 : vector<1x64xf32>
    %cst_156 = arith.constant 1.000000e+00 : f32
    %337 = vector.broadcast %cst_156 : f32 to vector<1x64xf32>
    %338 = arith.addf %337, %336 : vector<1x64xf32>
    %339 = tpu.reciprocal %338 {approx = true} : vector<1x64xf32> -> vector<1x64xf32>
    %340 = arith.mulf %330, %307 : vector<1x64xf32>
    %341 = arith.mulf %323, %332 : vector<1x64xf32>
    %342 = arith.addf %340, %341 : vector<1x64xf32>
    %343 = math.tanh %342 : vector<1x64xf32>
    %344 = arith.mulf %339, %343 : vector<1x64xf32>
    %c384 = arith.constant 384 : index
    %c0_157 = arith.constant 0 : index
    %345 = vector.load %arg10[%c384, %c0_157] : memref<1280x70xf32, #tpu.memory_space<vmem>>, vector<64x70xf32>
    %cst_158 = arith.constant dense<0.000000e+00> : vector<1x70xf32>
    %346 = tpu.matmul %344, %345, %cst_158 {dimension_numbers = #tpu.dot_dimension_numbers<[1], [0], [0], [1], [0, 0, 1, 1], [], []>} : vector<1x64xf32>, vector<64x70xf32>, vector<1x70xf32> -> vector<1x70xf32>
    %347 = arith.addf %312, %346 : vector<1x70xf32>
    %348 = vector.extract_strided_slice %99 {offsets = [7, 0], sizes = [1, 256], strides = [1, 1]} : vector<20x256xf32> to vector<1x256xf32>
    %c0_159 = arith.constant 0 : index
    %c0_160 = arith.constant 0 : index
    %349 = vector.load %arg8[%c0_159, %c0_160] : memref<64x256xf32, #tpu.memory_space<vmem>>, vector<64x256xf32>
    %cst_161 = arith.constant dense<0.000000e+00> : vector<1x256xf32>
    %350 = tpu.matmul %344, %349, %cst_161 {dimension_numbers = #tpu.dot_dimension_numbers<[1], [0], [0], [1], [0, 0, 1, 1], [], []>} : vector<1x64xf32>, vector<64x256xf32>, vector<1x256xf32> -> vector<1x256xf32>
    %351 = arith.addf %348, %350 : vector<1x256xf32>
    %352 = vector.extract_strided_slice %351 {offsets = [0, 0], sizes = [1, 64], strides = [1, 1]} : vector<1x256xf32> to vector<1x64xf32>
    %cst_162 = arith.constant 0.000000e+00 : f32
    %353 = vector.broadcast %cst_162 : f32 to vector<1x64xf32>
    %354 = arith.subf %353, %352 : vector<1x64xf32>
    %355 = math.exp %354 : vector<1x64xf32>
    %cst_163 = arith.constant 1.000000e+00 : f32
    %356 = vector.broadcast %cst_163 : f32 to vector<1x64xf32>
    %357 = arith.addf %356, %355 : vector<1x64xf32>
    %358 = tpu.reciprocal %357 {approx = true} : vector<1x64xf32> -> vector<1x64xf32>
    %359 = vector.extract_strided_slice %351 {offsets = [0, 64], sizes = [1, 64], strides = [1, 1]} : vector<1x256xf32> to vector<1x64xf32>
    %cst_164 = arith.constant 0.000000e+00 : f32
    %360 = vector.broadcast %cst_164 : f32 to vector<1x64xf32>
    %361 = arith.subf %360, %359 : vector<1x64xf32>
    %362 = math.exp %361 : vector<1x64xf32>
    %cst_165 = arith.constant 1.000000e+00 : f32
    %363 = vector.broadcast %cst_165 : f32 to vector<1x64xf32>
    %364 = arith.addf %363, %362 : vector<1x64xf32>
    %365 = tpu.reciprocal %364 {approx = true} : vector<1x64xf32> -> vector<1x64xf32>
    %366 = vector.extract_strided_slice %351 {offsets = [0, 128], sizes = [1, 64], strides = [1, 1]} : vector<1x256xf32> to vector<1x64xf32>
    %367 = math.tanh %366 : vector<1x64xf32>
    %368 = vector.extract_strided_slice %351 {offsets = [0, 192], sizes = [1, 64], strides = [1, 1]} : vector<1x256xf32> to vector<1x64xf32>
    %cst_166 = arith.constant 0.000000e+00 : f32
    %369 = vector.broadcast %cst_166 : f32 to vector<1x64xf32>
    %370 = arith.subf %369, %368 : vector<1x64xf32>
    %371 = math.exp %370 : vector<1x64xf32>
    %cst_167 = arith.constant 1.000000e+00 : f32
    %372 = vector.broadcast %cst_167 : f32 to vector<1x64xf32>
    %373 = arith.addf %372, %371 : vector<1x64xf32>
    %374 = tpu.reciprocal %373 {approx = true} : vector<1x64xf32> -> vector<1x64xf32>
    %375 = arith.mulf %365, %342 : vector<1x64xf32>
    %376 = arith.mulf %358, %367 : vector<1x64xf32>
    %377 = arith.addf %375, %376 : vector<1x64xf32>
    %378 = math.tanh %377 : vector<1x64xf32>
    %379 = arith.mulf %374, %378 : vector<1x64xf32>
    %c448 = arith.constant 448 : index
    %c0_168 = arith.constant 0 : index
    %380 = vector.load %arg10[%c448, %c0_168] : memref<1280x70xf32, #tpu.memory_space<vmem>>, vector<64x70xf32>
    %cst_169 = arith.constant dense<0.000000e+00> : vector<1x70xf32>
    %381 = tpu.matmul %379, %380, %cst_169 {dimension_numbers = #tpu.dot_dimension_numbers<[1], [0], [0], [1], [0, 0, 1, 1], [], []>} : vector<1x64xf32>, vector<64x70xf32>, vector<1x70xf32> -> vector<1x70xf32>
    %382 = arith.addf %347, %381 : vector<1x70xf32>
    %383 = vector.extract_strided_slice %99 {offsets = [8, 0], sizes = [1, 256], strides = [1, 1]} : vector<20x256xf32> to vector<1x256xf32>
    %c0_170 = arith.constant 0 : index
    %c0_171 = arith.constant 0 : index
    %384 = vector.load %arg8[%c0_170, %c0_171] : memref<64x256xf32, #tpu.memory_space<vmem>>, vector<64x256xf32>
    %cst_172 = arith.constant dense<0.000000e+00> : vector<1x256xf32>
    %385 = tpu.matmul %379, %384, %cst_172 {dimension_numbers = #tpu.dot_dimension_numbers<[1], [0], [0], [1], [0, 0, 1, 1], [], []>} : vector<1x64xf32>, vector<64x256xf32>, vector<1x256xf32> -> vector<1x256xf32>
    %386 = arith.addf %383, %385 : vector<1x256xf32>
    %387 = vector.extract_strided_slice %386 {offsets = [0, 0], sizes = [1, 64], strides = [1, 1]} : vector<1x256xf32> to vector<1x64xf32>
    %cst_173 = arith.constant 0.000000e+00 : f32
    %388 = vector.broadcast %cst_173 : f32 to vector<1x64xf32>
    %389 = arith.subf %388, %387 : vector<1x64xf32>
    %390 = math.exp %389 : vector<1x64xf32>
    %cst_174 = arith.constant 1.000000e+00 : f32
    %391 = vector.broadcast %cst_174 : f32 to vector<1x64xf32>
    %392 = arith.addf %391, %390 : vector<1x64xf32>
    %393 = tpu.reciprocal %392 {approx = true} : vector<1x64xf32> -> vector<1x64xf32>
    %394 = vector.extract_strided_slice %386 {offsets = [0, 64], sizes = [1, 64], strides = [1, 1]} : vector<1x256xf32> to vector<1x64xf32>
    %cst_175 = arith.constant 0.000000e+00 : f32
    %395 = vector.broadcast %cst_175 : f32 to vector<1x64xf32>
    %396 = arith.subf %395, %394 : vector<1x64xf32>
    %397 = math.exp %396 : vector<1x64xf32>
    %cst_176 = arith.constant 1.000000e+00 : f32
    %398 = vector.broadcast %cst_176 : f32 to vector<1x64xf32>
    %399 = arith.addf %398, %397 : vector<1x64xf32>
    %400 = tpu.reciprocal %399 {approx = true} : vector<1x64xf32> -> vector<1x64xf32>
    %401 = vector.extract_strided_slice %386 {offsets = [0, 128], sizes = [1, 64], strides = [1, 1]} : vector<1x256xf32> to vector<1x64xf32>
    %402 = math.tanh %401 : vector<1x64xf32>
    %403 = vector.extract_strided_slice %386 {offsets = [0, 192], sizes = [1, 64], strides = [1, 1]} : vector<1x256xf32> to vector<1x64xf32>
    %cst_177 = arith.constant 0.000000e+00 : f32
    %404 = vector.broadcast %cst_177 : f32 to vector<1x64xf32>
    %405 = arith.subf %404, %403 : vector<1x64xf32>
    %406 = math.exp %405 : vector<1x64xf32>
    %cst_178 = arith.constant 1.000000e+00 : f32
    %407 = vector.broadcast %cst_178 : f32 to vector<1x64xf32>
    %408 = arith.addf %407, %406 : vector<1x64xf32>
    %409 = tpu.reciprocal %408 {approx = true} : vector<1x64xf32> -> vector<1x64xf32>
    %410 = arith.mulf %400, %377 : vector<1x64xf32>
    %411 = arith.mulf %393, %402 : vector<1x64xf32>
    %412 = arith.addf %410, %411 : vector<1x64xf32>
    %413 = math.tanh %412 : vector<1x64xf32>
    %414 = arith.mulf %409, %413 : vector<1x64xf32>
    %c512 = arith.constant 512 : index
    %c0_179 = arith.constant 0 : index
    %415 = vector.load %arg10[%c512, %c0_179] : memref<1280x70xf32, #tpu.memory_space<vmem>>, vector<64x70xf32>
    %cst_180 = arith.constant dense<0.000000e+00> : vector<1x70xf32>
    %416 = tpu.matmul %414, %415, %cst_180 {dimension_numbers = #tpu.dot_dimension_numbers<[1], [0], [0], [1], [0, 0, 1, 1], [], []>} : vector<1x64xf32>, vector<64x70xf32>, vector<1x70xf32> -> vector<1x70xf32>
    %417 = arith.addf %382, %416 : vector<1x70xf32>
    %418 = vector.extract_strided_slice %99 {offsets = [9, 0], sizes = [1, 256], strides = [1, 1]} : vector<20x256xf32> to vector<1x256xf32>
    %c0_181 = arith.constant 0 : index
    %c0_182 = arith.constant 0 : index
    %419 = vector.load %arg8[%c0_181, %c0_182] : memref<64x256xf32, #tpu.memory_space<vmem>>, vector<64x256xf32>
    %cst_183 = arith.constant dense<0.000000e+00> : vector<1x256xf32>
    %420 = tpu.matmul %414, %419, %cst_183 {dimension_numbers = #tpu.dot_dimension_numbers<[1], [0], [0], [1], [0, 0, 1, 1], [], []>} : vector<1x64xf32>, vector<64x256xf32>, vector<1x256xf32> -> vector<1x256xf32>
    %421 = arith.addf %418, %420 : vector<1x256xf32>
    %422 = vector.extract_strided_slice %421 {offsets = [0, 0], sizes = [1, 64], strides = [1, 1]} : vector<1x256xf32> to vector<1x64xf32>
    %cst_184 = arith.constant 0.000000e+00 : f32
    %423 = vector.broadcast %cst_184 : f32 to vector<1x64xf32>
    %424 = arith.subf %423, %422 : vector<1x64xf32>
    %425 = math.exp %424 : vector<1x64xf32>
    %cst_185 = arith.constant 1.000000e+00 : f32
    %426 = vector.broadcast %cst_185 : f32 to vector<1x64xf32>
    %427 = arith.addf %426, %425 : vector<1x64xf32>
    %428 = tpu.reciprocal %427 {approx = true} : vector<1x64xf32> -> vector<1x64xf32>
    %429 = vector.extract_strided_slice %421 {offsets = [0, 64], sizes = [1, 64], strides = [1, 1]} : vector<1x256xf32> to vector<1x64xf32>
    %cst_186 = arith.constant 0.000000e+00 : f32
    %430 = vector.broadcast %cst_186 : f32 to vector<1x64xf32>
    %431 = arith.subf %430, %429 : vector<1x64xf32>
    %432 = math.exp %431 : vector<1x64xf32>
    %cst_187 = arith.constant 1.000000e+00 : f32
    %433 = vector.broadcast %cst_187 : f32 to vector<1x64xf32>
    %434 = arith.addf %433, %432 : vector<1x64xf32>
    %435 = tpu.reciprocal %434 {approx = true} : vector<1x64xf32> -> vector<1x64xf32>
    %436 = vector.extract_strided_slice %421 {offsets = [0, 128], sizes = [1, 64], strides = [1, 1]} : vector<1x256xf32> to vector<1x64xf32>
    %437 = math.tanh %436 : vector<1x64xf32>
    %438 = vector.extract_strided_slice %421 {offsets = [0, 192], sizes = [1, 64], strides = [1, 1]} : vector<1x256xf32> to vector<1x64xf32>
    %cst_188 = arith.constant 0.000000e+00 : f32
    %439 = vector.broadcast %cst_188 : f32 to vector<1x64xf32>
    %440 = arith.subf %439, %438 : vector<1x64xf32>
    %441 = math.exp %440 : vector<1x64xf32>
    %cst_189 = arith.constant 1.000000e+00 : f32
    %442 = vector.broadcast %cst_189 : f32 to vector<1x64xf32>
    %443 = arith.addf %442, %441 : vector<1x64xf32>
    %444 = tpu.reciprocal %443 {approx = true} : vector<1x64xf32> -> vector<1x64xf32>
    %445 = arith.mulf %435, %412 : vector<1x64xf32>
    %446 = arith.mulf %428, %437 : vector<1x64xf32>
    %447 = arith.addf %445, %446 : vector<1x64xf32>
    %448 = math.tanh %447 : vector<1x64xf32>
    %449 = arith.mulf %444, %448 : vector<1x64xf32>
    %c576 = arith.constant 576 : index
    %c0_190 = arith.constant 0 : index
    %450 = vector.load %arg10[%c576, %c0_190] : memref<1280x70xf32, #tpu.memory_space<vmem>>, vector<64x70xf32>
    %cst_191 = arith.constant dense<0.000000e+00> : vector<1x70xf32>
    %451 = tpu.matmul %449, %450, %cst_191 {dimension_numbers = #tpu.dot_dimension_numbers<[1], [0], [0], [1], [0, 0, 1, 1], [], []>} : vector<1x64xf32>, vector<64x70xf32>, vector<1x70xf32> -> vector<1x70xf32>
    %452 = arith.addf %417, %451 : vector<1x70xf32>
    %453 = vector.extract_strided_slice %99 {offsets = [10, 0], sizes = [1, 256], strides = [1, 1]} : vector<20x256xf32> to vector<1x256xf32>
    %c0_192 = arith.constant 0 : index
    %c0_193 = arith.constant 0 : index
    %454 = vector.load %arg8[%c0_192, %c0_193] : memref<64x256xf32, #tpu.memory_space<vmem>>, vector<64x256xf32>
    %cst_194 = arith.constant dense<0.000000e+00> : vector<1x256xf32>
    %455 = tpu.matmul %449, %454, %cst_194 {dimension_numbers = #tpu.dot_dimension_numbers<[1], [0], [0], [1], [0, 0, 1, 1], [], []>} : vector<1x64xf32>, vector<64x256xf32>, vector<1x256xf32> -> vector<1x256xf32>
    %456 = arith.addf %453, %455 : vector<1x256xf32>
    %457 = vector.extract_strided_slice %456 {offsets = [0, 0], sizes = [1, 64], strides = [1, 1]} : vector<1x256xf32> to vector<1x64xf32>
    %cst_195 = arith.constant 0.000000e+00 : f32
    %458 = vector.broadcast %cst_195 : f32 to vector<1x64xf32>
    %459 = arith.subf %458, %457 : vector<1x64xf32>
    %460 = math.exp %459 : vector<1x64xf32>
    %cst_196 = arith.constant 1.000000e+00 : f32
    %461 = vector.broadcast %cst_196 : f32 to vector<1x64xf32>
    %462 = arith.addf %461, %460 : vector<1x64xf32>
    %463 = tpu.reciprocal %462 {approx = true} : vector<1x64xf32> -> vector<1x64xf32>
    %464 = vector.extract_strided_slice %456 {offsets = [0, 64], sizes = [1, 64], strides = [1, 1]} : vector<1x256xf32> to vector<1x64xf32>
    %cst_197 = arith.constant 0.000000e+00 : f32
    %465 = vector.broadcast %cst_197 : f32 to vector<1x64xf32>
    %466 = arith.subf %465, %464 : vector<1x64xf32>
    %467 = math.exp %466 : vector<1x64xf32>
    %cst_198 = arith.constant 1.000000e+00 : f32
    %468 = vector.broadcast %cst_198 : f32 to vector<1x64xf32>
    %469 = arith.addf %468, %467 : vector<1x64xf32>
    %470 = tpu.reciprocal %469 {approx = true} : vector<1x64xf32> -> vector<1x64xf32>
    %471 = vector.extract_strided_slice %456 {offsets = [0, 128], sizes = [1, 64], strides = [1, 1]} : vector<1x256xf32> to vector<1x64xf32>
    %472 = math.tanh %471 : vector<1x64xf32>
    %473 = vector.extract_strided_slice %456 {offsets = [0, 192], sizes = [1, 64], strides = [1, 1]} : vector<1x256xf32> to vector<1x64xf32>
    %cst_199 = arith.constant 0.000000e+00 : f32
    %474 = vector.broadcast %cst_199 : f32 to vector<1x64xf32>
    %475 = arith.subf %474, %473 : vector<1x64xf32>
    %476 = math.exp %475 : vector<1x64xf32>
    %cst_200 = arith.constant 1.000000e+00 : f32
    %477 = vector.broadcast %cst_200 : f32 to vector<1x64xf32>
    %478 = arith.addf %477, %476 : vector<1x64xf32>
    %479 = tpu.reciprocal %478 {approx = true} : vector<1x64xf32> -> vector<1x64xf32>
    %480 = arith.mulf %470, %447 : vector<1x64xf32>
    %481 = arith.mulf %463, %472 : vector<1x64xf32>
    %482 = arith.addf %480, %481 : vector<1x64xf32>
    %483 = math.tanh %482 : vector<1x64xf32>
    %484 = arith.mulf %479, %483 : vector<1x64xf32>
    %c640 = arith.constant 640 : index
    %c0_201 = arith.constant 0 : index
    %485 = vector.load %arg10[%c640, %c0_201] : memref<1280x70xf32, #tpu.memory_space<vmem>>, vector<64x70xf32>
    %cst_202 = arith.constant dense<0.000000e+00> : vector<1x70xf32>
    %486 = tpu.matmul %484, %485, %cst_202 {dimension_numbers = #tpu.dot_dimension_numbers<[1], [0], [0], [1], [0, 0, 1, 1], [], []>} : vector<1x64xf32>, vector<64x70xf32>, vector<1x70xf32> -> vector<1x70xf32>
    %487 = arith.addf %452, %486 : vector<1x70xf32>
    %488 = vector.extract_strided_slice %99 {offsets = [11, 0], sizes = [1, 256], strides = [1, 1]} : vector<20x256xf32> to vector<1x256xf32>
    %c0_203 = arith.constant 0 : index
    %c0_204 = arith.constant 0 : index
    %489 = vector.load %arg8[%c0_203, %c0_204] : memref<64x256xf32, #tpu.memory_space<vmem>>, vector<64x256xf32>
    %cst_205 = arith.constant dense<0.000000e+00> : vector<1x256xf32>
    %490 = tpu.matmul %484, %489, %cst_205 {dimension_numbers = #tpu.dot_dimension_numbers<[1], [0], [0], [1], [0, 0, 1, 1], [], []>} : vector<1x64xf32>, vector<64x256xf32>, vector<1x256xf32> -> vector<1x256xf32>
    %491 = arith.addf %488, %490 : vector<1x256xf32>
    %492 = vector.extract_strided_slice %491 {offsets = [0, 0], sizes = [1, 64], strides = [1, 1]} : vector<1x256xf32> to vector<1x64xf32>
    %cst_206 = arith.constant 0.000000e+00 : f32
    %493 = vector.broadcast %cst_206 : f32 to vector<1x64xf32>
    %494 = arith.subf %493, %492 : vector<1x64xf32>
    %495 = math.exp %494 : vector<1x64xf32>
    %cst_207 = arith.constant 1.000000e+00 : f32
    %496 = vector.broadcast %cst_207 : f32 to vector<1x64xf32>
    %497 = arith.addf %496, %495 : vector<1x64xf32>
    %498 = tpu.reciprocal %497 {approx = true} : vector<1x64xf32> -> vector<1x64xf32>
    %499 = vector.extract_strided_slice %491 {offsets = [0, 64], sizes = [1, 64], strides = [1, 1]} : vector<1x256xf32> to vector<1x64xf32>
    %cst_208 = arith.constant 0.000000e+00 : f32
    %500 = vector.broadcast %cst_208 : f32 to vector<1x64xf32>
    %501 = arith.subf %500, %499 : vector<1x64xf32>
    %502 = math.exp %501 : vector<1x64xf32>
    %cst_209 = arith.constant 1.000000e+00 : f32
    %503 = vector.broadcast %cst_209 : f32 to vector<1x64xf32>
    %504 = arith.addf %503, %502 : vector<1x64xf32>
    %505 = tpu.reciprocal %504 {approx = true} : vector<1x64xf32> -> vector<1x64xf32>
    %506 = vector.extract_strided_slice %491 {offsets = [0, 128], sizes = [1, 64], strides = [1, 1]} : vector<1x256xf32> to vector<1x64xf32>
    %507 = math.tanh %506 : vector<1x64xf32>
    %508 = vector.extract_strided_slice %491 {offsets = [0, 192], sizes = [1, 64], strides = [1, 1]} : vector<1x256xf32> to vector<1x64xf32>
    %cst_210 = arith.constant 0.000000e+00 : f32
    %509 = vector.broadcast %cst_210 : f32 to vector<1x64xf32>
    %510 = arith.subf %509, %508 : vector<1x64xf32>
    %511 = math.exp %510 : vector<1x64xf32>
    %cst_211 = arith.constant 1.000000e+00 : f32
    %512 = vector.broadcast %cst_211 : f32 to vector<1x64xf32>
    %513 = arith.addf %512, %511 : vector<1x64xf32>
    %514 = tpu.reciprocal %513 {approx = true} : vector<1x64xf32> -> vector<1x64xf32>
    %515 = arith.mulf %505, %482 : vector<1x64xf32>
    %516 = arith.mulf %498, %507 : vector<1x64xf32>
    %517 = arith.addf %515, %516 : vector<1x64xf32>
    %518 = math.tanh %517 : vector<1x64xf32>
    %519 = arith.mulf %514, %518 : vector<1x64xf32>
    %c704 = arith.constant 704 : index
    %c0_212 = arith.constant 0 : index
    %520 = vector.load %arg10[%c704, %c0_212] : memref<1280x70xf32, #tpu.memory_space<vmem>>, vector<64x70xf32>
    %cst_213 = arith.constant dense<0.000000e+00> : vector<1x70xf32>
    %521 = tpu.matmul %519, %520, %cst_213 {dimension_numbers = #tpu.dot_dimension_numbers<[1], [0], [0], [1], [0, 0, 1, 1], [], []>} : vector<1x64xf32>, vector<64x70xf32>, vector<1x70xf32> -> vector<1x70xf32>
    %522 = arith.addf %487, %521 : vector<1x70xf32>
    %523 = vector.extract_strided_slice %99 {offsets = [12, 0], sizes = [1, 256], strides = [1, 1]} : vector<20x256xf32> to vector<1x256xf32>
    %c0_214 = arith.constant 0 : index
    %c0_215 = arith.constant 0 : index
    %524 = vector.load %arg8[%c0_214, %c0_215] : memref<64x256xf32, #tpu.memory_space<vmem>>, vector<64x256xf32>
    %cst_216 = arith.constant dense<0.000000e+00> : vector<1x256xf32>
    %525 = tpu.matmul %519, %524, %cst_216 {dimension_numbers = #tpu.dot_dimension_numbers<[1], [0], [0], [1], [0, 0, 1, 1], [], []>} : vector<1x64xf32>, vector<64x256xf32>, vector<1x256xf32> -> vector<1x256xf32>
    %526 = arith.addf %523, %525 : vector<1x256xf32>
    %527 = vector.extract_strided_slice %526 {offsets = [0, 0], sizes = [1, 64], strides = [1, 1]} : vector<1x256xf32> to vector<1x64xf32>
    %cst_217 = arith.constant 0.000000e+00 : f32
    %528 = vector.broadcast %cst_217 : f32 to vector<1x64xf32>
    %529 = arith.subf %528, %527 : vector<1x64xf32>
    %530 = math.exp %529 : vector<1x64xf32>
    %cst_218 = arith.constant 1.000000e+00 : f32
    %531 = vector.broadcast %cst_218 : f32 to vector<1x64xf32>
    %532 = arith.addf %531, %530 : vector<1x64xf32>
    %533 = tpu.reciprocal %532 {approx = true} : vector<1x64xf32> -> vector<1x64xf32>
    %534 = vector.extract_strided_slice %526 {offsets = [0, 64], sizes = [1, 64], strides = [1, 1]} : vector<1x256xf32> to vector<1x64xf32>
    %cst_219 = arith.constant 0.000000e+00 : f32
    %535 = vector.broadcast %cst_219 : f32 to vector<1x64xf32>
    %536 = arith.subf %535, %534 : vector<1x64xf32>
    %537 = math.exp %536 : vector<1x64xf32>
    %cst_220 = arith.constant 1.000000e+00 : f32
    %538 = vector.broadcast %cst_220 : f32 to vector<1x64xf32>
    %539 = arith.addf %538, %537 : vector<1x64xf32>
    %540 = tpu.reciprocal %539 {approx = true} : vector<1x64xf32> -> vector<1x64xf32>
    %541 = vector.extract_strided_slice %526 {offsets = [0, 128], sizes = [1, 64], strides = [1, 1]} : vector<1x256xf32> to vector<1x64xf32>
    %542 = math.tanh %541 : vector<1x64xf32>
    %543 = vector.extract_strided_slice %526 {offsets = [0, 192], sizes = [1, 64], strides = [1, 1]} : vector<1x256xf32> to vector<1x64xf32>
    %cst_221 = arith.constant 0.000000e+00 : f32
    %544 = vector.broadcast %cst_221 : f32 to vector<1x64xf32>
    %545 = arith.subf %544, %543 : vector<1x64xf32>
    %546 = math.exp %545 : vector<1x64xf32>
    %cst_222 = arith.constant 1.000000e+00 : f32
    %547 = vector.broadcast %cst_222 : f32 to vector<1x64xf32>
    %548 = arith.addf %547, %546 : vector<1x64xf32>
    %549 = tpu.reciprocal %548 {approx = true} : vector<1x64xf32> -> vector<1x64xf32>
    %550 = arith.mulf %540, %517 : vector<1x64xf32>
    %551 = arith.mulf %533, %542 : vector<1x64xf32>
    %552 = arith.addf %550, %551 : vector<1x64xf32>
    %553 = math.tanh %552 : vector<1x64xf32>
    %554 = arith.mulf %549, %553 : vector<1x64xf32>
    %c768 = arith.constant 768 : index
    %c0_223 = arith.constant 0 : index
    %555 = vector.load %arg10[%c768, %c0_223] : memref<1280x70xf32, #tpu.memory_space<vmem>>, vector<64x70xf32>
    %cst_224 = arith.constant dense<0.000000e+00> : vector<1x70xf32>
    %556 = tpu.matmul %554, %555, %cst_224 {dimension_numbers = #tpu.dot_dimension_numbers<[1], [0], [0], [1], [0, 0, 1, 1], [], []>} : vector<1x64xf32>, vector<64x70xf32>, vector<1x70xf32> -> vector<1x70xf32>
    %557 = arith.addf %522, %556 : vector<1x70xf32>
    %558 = vector.extract_strided_slice %99 {offsets = [13, 0], sizes = [1, 256], strides = [1, 1]} : vector<20x256xf32> to vector<1x256xf32>
    %c0_225 = arith.constant 0 : index
    %c0_226 = arith.constant 0 : index
    %559 = vector.load %arg8[%c0_225, %c0_226] : memref<64x256xf32, #tpu.memory_space<vmem>>, vector<64x256xf32>
    %cst_227 = arith.constant dense<0.000000e+00> : vector<1x256xf32>
    %560 = tpu.matmul %554, %559, %cst_227 {dimension_numbers = #tpu.dot_dimension_numbers<[1], [0], [0], [1], [0, 0, 1, 1], [], []>} : vector<1x64xf32>, vector<64x256xf32>, vector<1x256xf32> -> vector<1x256xf32>
    %561 = arith.addf %558, %560 : vector<1x256xf32>
    %562 = vector.extract_strided_slice %561 {offsets = [0, 0], sizes = [1, 64], strides = [1, 1]} : vector<1x256xf32> to vector<1x64xf32>
    %cst_228 = arith.constant 0.000000e+00 : f32
    %563 = vector.broadcast %cst_228 : f32 to vector<1x64xf32>
    %564 = arith.subf %563, %562 : vector<1x64xf32>
    %565 = math.exp %564 : vector<1x64xf32>
    %cst_229 = arith.constant 1.000000e+00 : f32
    %566 = vector.broadcast %cst_229 : f32 to vector<1x64xf32>
    %567 = arith.addf %566, %565 : vector<1x64xf32>
    %568 = tpu.reciprocal %567 {approx = true} : vector<1x64xf32> -> vector<1x64xf32>
    %569 = vector.extract_strided_slice %561 {offsets = [0, 64], sizes = [1, 64], strides = [1, 1]} : vector<1x256xf32> to vector<1x64xf32>
    %cst_230 = arith.constant 0.000000e+00 : f32
    %570 = vector.broadcast %cst_230 : f32 to vector<1x64xf32>
    %571 = arith.subf %570, %569 : vector<1x64xf32>
    %572 = math.exp %571 : vector<1x64xf32>
    %cst_231 = arith.constant 1.000000e+00 : f32
    %573 = vector.broadcast %cst_231 : f32 to vector<1x64xf32>
    %574 = arith.addf %573, %572 : vector<1x64xf32>
    %575 = tpu.reciprocal %574 {approx = true} : vector<1x64xf32> -> vector<1x64xf32>
    %576 = vector.extract_strided_slice %561 {offsets = [0, 128], sizes = [1, 64], strides = [1, 1]} : vector<1x256xf32> to vector<1x64xf32>
    %577 = math.tanh %576 : vector<1x64xf32>
    %578 = vector.extract_strided_slice %561 {offsets = [0, 192], sizes = [1, 64], strides = [1, 1]} : vector<1x256xf32> to vector<1x64xf32>
    %cst_232 = arith.constant 0.000000e+00 : f32
    %579 = vector.broadcast %cst_232 : f32 to vector<1x64xf32>
    %580 = arith.subf %579, %578 : vector<1x64xf32>
    %581 = math.exp %580 : vector<1x64xf32>
    %cst_233 = arith.constant 1.000000e+00 : f32
    %582 = vector.broadcast %cst_233 : f32 to vector<1x64xf32>
    %583 = arith.addf %582, %581 : vector<1x64xf32>
    %584 = tpu.reciprocal %583 {approx = true} : vector<1x64xf32> -> vector<1x64xf32>
    %585 = arith.mulf %575, %552 : vector<1x64xf32>
    %586 = arith.mulf %568, %577 : vector<1x64xf32>
    %587 = arith.addf %585, %586 : vector<1x64xf32>
    %588 = math.tanh %587 : vector<1x64xf32>
    %589 = arith.mulf %584, %588 : vector<1x64xf32>
    %c832 = arith.constant 832 : index
    %c0_234 = arith.constant 0 : index
    %590 = vector.load %arg10[%c832, %c0_234] : memref<1280x70xf32, #tpu.memory_space<vmem>>, vector<64x70xf32>
    %cst_235 = arith.constant dense<0.000000e+00> : vector<1x70xf32>
    %591 = tpu.matmul %589, %590, %cst_235 {dimension_numbers = #tpu.dot_dimension_numbers<[1], [0], [0], [1], [0, 0, 1, 1], [], []>} : vector<1x64xf32>, vector<64x70xf32>, vector<1x70xf32> -> vector<1x70xf32>
    %592 = arith.addf %557, %591 : vector<1x70xf32>
    %593 = vector.extract_strided_slice %99 {offsets = [14, 0], sizes = [1, 256], strides = [1, 1]} : vector<20x256xf32> to vector<1x256xf32>
    %c0_236 = arith.constant 0 : index
    %c0_237 = arith.constant 0 : index
    %594 = vector.load %arg8[%c0_236, %c0_237] : memref<64x256xf32, #tpu.memory_space<vmem>>, vector<64x256xf32>
    %cst_238 = arith.constant dense<0.000000e+00> : vector<1x256xf32>
    %595 = tpu.matmul %589, %594, %cst_238 {dimension_numbers = #tpu.dot_dimension_numbers<[1], [0], [0], [1], [0, 0, 1, 1], [], []>} : vector<1x64xf32>, vector<64x256xf32>, vector<1x256xf32> -> vector<1x256xf32>
    %596 = arith.addf %593, %595 : vector<1x256xf32>
    %597 = vector.extract_strided_slice %596 {offsets = [0, 0], sizes = [1, 64], strides = [1, 1]} : vector<1x256xf32> to vector<1x64xf32>
    %cst_239 = arith.constant 0.000000e+00 : f32
    %598 = vector.broadcast %cst_239 : f32 to vector<1x64xf32>
    %599 = arith.subf %598, %597 : vector<1x64xf32>
    %600 = math.exp %599 : vector<1x64xf32>
    %cst_240 = arith.constant 1.000000e+00 : f32
    %601 = vector.broadcast %cst_240 : f32 to vector<1x64xf32>
    %602 = arith.addf %601, %600 : vector<1x64xf32>
    %603 = tpu.reciprocal %602 {approx = true} : vector<1x64xf32> -> vector<1x64xf32>
    %604 = vector.extract_strided_slice %596 {offsets = [0, 64], sizes = [1, 64], strides = [1, 1]} : vector<1x256xf32> to vector<1x64xf32>
    %cst_241 = arith.constant 0.000000e+00 : f32
    %605 = vector.broadcast %cst_241 : f32 to vector<1x64xf32>
    %606 = arith.subf %605, %604 : vector<1x64xf32>
    %607 = math.exp %606 : vector<1x64xf32>
    %cst_242 = arith.constant 1.000000e+00 : f32
    %608 = vector.broadcast %cst_242 : f32 to vector<1x64xf32>
    %609 = arith.addf %608, %607 : vector<1x64xf32>
    %610 = tpu.reciprocal %609 {approx = true} : vector<1x64xf32> -> vector<1x64xf32>
    %611 = vector.extract_strided_slice %596 {offsets = [0, 128], sizes = [1, 64], strides = [1, 1]} : vector<1x256xf32> to vector<1x64xf32>
    %612 = math.tanh %611 : vector<1x64xf32>
    %613 = vector.extract_strided_slice %596 {offsets = [0, 192], sizes = [1, 64], strides = [1, 1]} : vector<1x256xf32> to vector<1x64xf32>
    %cst_243 = arith.constant 0.000000e+00 : f32
    %614 = vector.broadcast %cst_243 : f32 to vector<1x64xf32>
    %615 = arith.subf %614, %613 : vector<1x64xf32>
    %616 = math.exp %615 : vector<1x64xf32>
    %cst_244 = arith.constant 1.000000e+00 : f32
    %617 = vector.broadcast %cst_244 : f32 to vector<1x64xf32>
    %618 = arith.addf %617, %616 : vector<1x64xf32>
    %619 = tpu.reciprocal %618 {approx = true} : vector<1x64xf32> -> vector<1x64xf32>
    %620 = arith.mulf %610, %587 : vector<1x64xf32>
    %621 = arith.mulf %603, %612 : vector<1x64xf32>
    %622 = arith.addf %620, %621 : vector<1x64xf32>
    %623 = math.tanh %622 : vector<1x64xf32>
    %624 = arith.mulf %619, %623 : vector<1x64xf32>
    %c896 = arith.constant 896 : index
    %c0_245 = arith.constant 0 : index
    %625 = vector.load %arg10[%c896, %c0_245] : memref<1280x70xf32, #tpu.memory_space<vmem>>, vector<64x70xf32>
    %cst_246 = arith.constant dense<0.000000e+00> : vector<1x70xf32>
    %626 = tpu.matmul %624, %625, %cst_246 {dimension_numbers = #tpu.dot_dimension_numbers<[1], [0], [0], [1], [0, 0, 1, 1], [], []>} : vector<1x64xf32>, vector<64x70xf32>, vector<1x70xf32> -> vector<1x70xf32>
    %627 = arith.addf %592, %626 : vector<1x70xf32>
    %628 = vector.extract_strided_slice %99 {offsets = [15, 0], sizes = [1, 256], strides = [1, 1]} : vector<20x256xf32> to vector<1x256xf32>
    %c0_247 = arith.constant 0 : index
    %c0_248 = arith.constant 0 : index
    %629 = vector.load %arg8[%c0_247, %c0_248] : memref<64x256xf32, #tpu.memory_space<vmem>>, vector<64x256xf32>
    %cst_249 = arith.constant dense<0.000000e+00> : vector<1x256xf32>
    %630 = tpu.matmul %624, %629, %cst_249 {dimension_numbers = #tpu.dot_dimension_numbers<[1], [0], [0], [1], [0, 0, 1, 1], [], []>} : vector<1x64xf32>, vector<64x256xf32>, vector<1x256xf32> -> vector<1x256xf32>
    %631 = arith.addf %628, %630 : vector<1x256xf32>
    %632 = vector.extract_strided_slice %631 {offsets = [0, 0], sizes = [1, 64], strides = [1, 1]} : vector<1x256xf32> to vector<1x64xf32>
    %cst_250 = arith.constant 0.000000e+00 : f32
    %633 = vector.broadcast %cst_250 : f32 to vector<1x64xf32>
    %634 = arith.subf %633, %632 : vector<1x64xf32>
    %635 = math.exp %634 : vector<1x64xf32>
    %cst_251 = arith.constant 1.000000e+00 : f32
    %636 = vector.broadcast %cst_251 : f32 to vector<1x64xf32>
    %637 = arith.addf %636, %635 : vector<1x64xf32>
    %638 = tpu.reciprocal %637 {approx = true} : vector<1x64xf32> -> vector<1x64xf32>
    %639 = vector.extract_strided_slice %631 {offsets = [0, 64], sizes = [1, 64], strides = [1, 1]} : vector<1x256xf32> to vector<1x64xf32>
    %cst_252 = arith.constant 0.000000e+00 : f32
    %640 = vector.broadcast %cst_252 : f32 to vector<1x64xf32>
    %641 = arith.subf %640, %639 : vector<1x64xf32>
    %642 = math.exp %641 : vector<1x64xf32>
    %cst_253 = arith.constant 1.000000e+00 : f32
    %643 = vector.broadcast %cst_253 : f32 to vector<1x64xf32>
    %644 = arith.addf %643, %642 : vector<1x64xf32>
    %645 = tpu.reciprocal %644 {approx = true} : vector<1x64xf32> -> vector<1x64xf32>
    %646 = vector.extract_strided_slice %631 {offsets = [0, 128], sizes = [1, 64], strides = [1, 1]} : vector<1x256xf32> to vector<1x64xf32>
    %647 = math.tanh %646 : vector<1x64xf32>
    %648 = vector.extract_strided_slice %631 {offsets = [0, 192], sizes = [1, 64], strides = [1, 1]} : vector<1x256xf32> to vector<1x64xf32>
    %cst_254 = arith.constant 0.000000e+00 : f32
    %649 = vector.broadcast %cst_254 : f32 to vector<1x64xf32>
    %650 = arith.subf %649, %648 : vector<1x64xf32>
    %651 = math.exp %650 : vector<1x64xf32>
    %cst_255 = arith.constant 1.000000e+00 : f32
    %652 = vector.broadcast %cst_255 : f32 to vector<1x64xf32>
    %653 = arith.addf %652, %651 : vector<1x64xf32>
    %654 = tpu.reciprocal %653 {approx = true} : vector<1x64xf32> -> vector<1x64xf32>
    %655 = arith.mulf %645, %622 : vector<1x64xf32>
    %656 = arith.mulf %638, %647 : vector<1x64xf32>
    %657 = arith.addf %655, %656 : vector<1x64xf32>
    %658 = math.tanh %657 : vector<1x64xf32>
    %659 = arith.mulf %654, %658 : vector<1x64xf32>
    %c960 = arith.constant 960 : index
    %c0_256 = arith.constant 0 : index
    %660 = vector.load %arg10[%c960, %c0_256] : memref<1280x70xf32, #tpu.memory_space<vmem>>, vector<64x70xf32>
    %cst_257 = arith.constant dense<0.000000e+00> : vector<1x70xf32>
    %661 = tpu.matmul %659, %660, %cst_257 {dimension_numbers = #tpu.dot_dimension_numbers<[1], [0], [0], [1], [0, 0, 1, 1], [], []>} : vector<1x64xf32>, vector<64x70xf32>, vector<1x70xf32> -> vector<1x70xf32>
    %662 = arith.addf %627, %661 : vector<1x70xf32>
    %663 = vector.extract_strided_slice %99 {offsets = [16, 0], sizes = [1, 256], strides = [1, 1]} : vector<20x256xf32> to vector<1x256xf32>
    %c0_258 = arith.constant 0 : index
    %c0_259 = arith.constant 0 : index
    %664 = vector.load %arg8[%c0_258, %c0_259] : memref<64x256xf32, #tpu.memory_space<vmem>>, vector<64x256xf32>
    %cst_260 = arith.constant dense<0.000000e+00> : vector<1x256xf32>
    %665 = tpu.matmul %659, %664, %cst_260 {dimension_numbers = #tpu.dot_dimension_numbers<[1], [0], [0], [1], [0, 0, 1, 1], [], []>} : vector<1x64xf32>, vector<64x256xf32>, vector<1x256xf32> -> vector<1x256xf32>
    %666 = arith.addf %663, %665 : vector<1x256xf32>
    %667 = vector.extract_strided_slice %666 {offsets = [0, 0], sizes = [1, 64], strides = [1, 1]} : vector<1x256xf32> to vector<1x64xf32>
    %cst_261 = arith.constant 0.000000e+00 : f32
    %668 = vector.broadcast %cst_261 : f32 to vector<1x64xf32>
    %669 = arith.subf %668, %667 : vector<1x64xf32>
    %670 = math.exp %669 : vector<1x64xf32>
    %cst_262 = arith.constant 1.000000e+00 : f32
    %671 = vector.broadcast %cst_262 : f32 to vector<1x64xf32>
    %672 = arith.addf %671, %670 : vector<1x64xf32>
    %673 = tpu.reciprocal %672 {approx = true} : vector<1x64xf32> -> vector<1x64xf32>
    %674 = vector.extract_strided_slice %666 {offsets = [0, 64], sizes = [1, 64], strides = [1, 1]} : vector<1x256xf32> to vector<1x64xf32>
    %cst_263 = arith.constant 0.000000e+00 : f32
    %675 = vector.broadcast %cst_263 : f32 to vector<1x64xf32>
    %676 = arith.subf %675, %674 : vector<1x64xf32>
    %677 = math.exp %676 : vector<1x64xf32>
    %cst_264 = arith.constant 1.000000e+00 : f32
    %678 = vector.broadcast %cst_264 : f32 to vector<1x64xf32>
    %679 = arith.addf %678, %677 : vector<1x64xf32>
    %680 = tpu.reciprocal %679 {approx = true} : vector<1x64xf32> -> vector<1x64xf32>
    %681 = vector.extract_strided_slice %666 {offsets = [0, 128], sizes = [1, 64], strides = [1, 1]} : vector<1x256xf32> to vector<1x64xf32>
    %682 = math.tanh %681 : vector<1x64xf32>
    %683 = vector.extract_strided_slice %666 {offsets = [0, 192], sizes = [1, 64], strides = [1, 1]} : vector<1x256xf32> to vector<1x64xf32>
    %cst_265 = arith.constant 0.000000e+00 : f32
    %684 = vector.broadcast %cst_265 : f32 to vector<1x64xf32>
    %685 = arith.subf %684, %683 : vector<1x64xf32>
    %686 = math.exp %685 : vector<1x64xf32>
    %cst_266 = arith.constant 1.000000e+00 : f32
    %687 = vector.broadcast %cst_266 : f32 to vector<1x64xf32>
    %688 = arith.addf %687, %686 : vector<1x64xf32>
    %689 = tpu.reciprocal %688 {approx = true} : vector<1x64xf32> -> vector<1x64xf32>
    %690 = arith.mulf %680, %657 : vector<1x64xf32>
    %691 = arith.mulf %673, %682 : vector<1x64xf32>
    %692 = arith.addf %690, %691 : vector<1x64xf32>
    %693 = math.tanh %692 : vector<1x64xf32>
    %694 = arith.mulf %689, %693 : vector<1x64xf32>
    %c1024 = arith.constant 1024 : index
    %c0_267 = arith.constant 0 : index
    %695 = vector.load %arg10[%c1024, %c0_267] : memref<1280x70xf32, #tpu.memory_space<vmem>>, vector<64x70xf32>
    %cst_268 = arith.constant dense<0.000000e+00> : vector<1x70xf32>
    %696 = tpu.matmul %694, %695, %cst_268 {dimension_numbers = #tpu.dot_dimension_numbers<[1], [0], [0], [1], [0, 0, 1, 1], [], []>} : vector<1x64xf32>, vector<64x70xf32>, vector<1x70xf32> -> vector<1x70xf32>
    %697 = arith.addf %662, %696 : vector<1x70xf32>
    %698 = vector.extract_strided_slice %99 {offsets = [17, 0], sizes = [1, 256], strides = [1, 1]} : vector<20x256xf32> to vector<1x256xf32>
    %c0_269 = arith.constant 0 : index
    %c0_270 = arith.constant 0 : index
    %699 = vector.load %arg8[%c0_269, %c0_270] : memref<64x256xf32, #tpu.memory_space<vmem>>, vector<64x256xf32>
    %cst_271 = arith.constant dense<0.000000e+00> : vector<1x256xf32>
    %700 = tpu.matmul %694, %699, %cst_271 {dimension_numbers = #tpu.dot_dimension_numbers<[1], [0], [0], [1], [0, 0, 1, 1], [], []>} : vector<1x64xf32>, vector<64x256xf32>, vector<1x256xf32> -> vector<1x256xf32>
    %701 = arith.addf %698, %700 : vector<1x256xf32>
    %702 = vector.extract_strided_slice %701 {offsets = [0, 0], sizes = [1, 64], strides = [1, 1]} : vector<1x256xf32> to vector<1x64xf32>
    %cst_272 = arith.constant 0.000000e+00 : f32
    %703 = vector.broadcast %cst_272 : f32 to vector<1x64xf32>
    %704 = arith.subf %703, %702 : vector<1x64xf32>
    %705 = math.exp %704 : vector<1x64xf32>
    %cst_273 = arith.constant 1.000000e+00 : f32
    %706 = vector.broadcast %cst_273 : f32 to vector<1x64xf32>
    %707 = arith.addf %706, %705 : vector<1x64xf32>
    %708 = tpu.reciprocal %707 {approx = true} : vector<1x64xf32> -> vector<1x64xf32>
    %709 = vector.extract_strided_slice %701 {offsets = [0, 64], sizes = [1, 64], strides = [1, 1]} : vector<1x256xf32> to vector<1x64xf32>
    %cst_274 = arith.constant 0.000000e+00 : f32
    %710 = vector.broadcast %cst_274 : f32 to vector<1x64xf32>
    %711 = arith.subf %710, %709 : vector<1x64xf32>
    %712 = math.exp %711 : vector<1x64xf32>
    %cst_275 = arith.constant 1.000000e+00 : f32
    %713 = vector.broadcast %cst_275 : f32 to vector<1x64xf32>
    %714 = arith.addf %713, %712 : vector<1x64xf32>
    %715 = tpu.reciprocal %714 {approx = true} : vector<1x64xf32> -> vector<1x64xf32>
    %716 = vector.extract_strided_slice %701 {offsets = [0, 128], sizes = [1, 64], strides = [1, 1]} : vector<1x256xf32> to vector<1x64xf32>
    %717 = math.tanh %716 : vector<1x64xf32>
    %718 = vector.extract_strided_slice %701 {offsets = [0, 192], sizes = [1, 64], strides = [1, 1]} : vector<1x256xf32> to vector<1x64xf32>
    %cst_276 = arith.constant 0.000000e+00 : f32
    %719 = vector.broadcast %cst_276 : f32 to vector<1x64xf32>
    %720 = arith.subf %719, %718 : vector<1x64xf32>
    %721 = math.exp %720 : vector<1x64xf32>
    %cst_277 = arith.constant 1.000000e+00 : f32
    %722 = vector.broadcast %cst_277 : f32 to vector<1x64xf32>
    %723 = arith.addf %722, %721 : vector<1x64xf32>
    %724 = tpu.reciprocal %723 {approx = true} : vector<1x64xf32> -> vector<1x64xf32>
    %725 = arith.mulf %715, %692 : vector<1x64xf32>
    %726 = arith.mulf %708, %717 : vector<1x64xf32>
    %727 = arith.addf %725, %726 : vector<1x64xf32>
    %728 = math.tanh %727 : vector<1x64xf32>
    %729 = arith.mulf %724, %728 : vector<1x64xf32>
    %c1088 = arith.constant 1088 : index
    %c0_278 = arith.constant 0 : index
    %730 = vector.load %arg10[%c1088, %c0_278] : memref<1280x70xf32, #tpu.memory_space<vmem>>, vector<64x70xf32>
    %cst_279 = arith.constant dense<0.000000e+00> : vector<1x70xf32>
    %731 = tpu.matmul %729, %730, %cst_279 {dimension_numbers = #tpu.dot_dimension_numbers<[1], [0], [0], [1], [0, 0, 1, 1], [], []>} : vector<1x64xf32>, vector<64x70xf32>, vector<1x70xf32> -> vector<1x70xf32>
    %732 = arith.addf %697, %731 : vector<1x70xf32>
    %733 = vector.extract_strided_slice %99 {offsets = [18, 0], sizes = [1, 256], strides = [1, 1]} : vector<20x256xf32> to vector<1x256xf32>
    %c0_280 = arith.constant 0 : index
    %c0_281 = arith.constant 0 : index
    %734 = vector.load %arg8[%c0_280, %c0_281] : memref<64x256xf32, #tpu.memory_space<vmem>>, vector<64x256xf32>
    %cst_282 = arith.constant dense<0.000000e+00> : vector<1x256xf32>
    %735 = tpu.matmul %729, %734, %cst_282 {dimension_numbers = #tpu.dot_dimension_numbers<[1], [0], [0], [1], [0, 0, 1, 1], [], []>} : vector<1x64xf32>, vector<64x256xf32>, vector<1x256xf32> -> vector<1x256xf32>
    %736 = arith.addf %733, %735 : vector<1x256xf32>
    %737 = vector.extract_strided_slice %736 {offsets = [0, 0], sizes = [1, 64], strides = [1, 1]} : vector<1x256xf32> to vector<1x64xf32>
    %cst_283 = arith.constant 0.000000e+00 : f32
    %738 = vector.broadcast %cst_283 : f32 to vector<1x64xf32>
    %739 = arith.subf %738, %737 : vector<1x64xf32>
    %740 = math.exp %739 : vector<1x64xf32>
    %cst_284 = arith.constant 1.000000e+00 : f32
    %741 = vector.broadcast %cst_284 : f32 to vector<1x64xf32>
    %742 = arith.addf %741, %740 : vector<1x64xf32>
    %743 = tpu.reciprocal %742 {approx = true} : vector<1x64xf32> -> vector<1x64xf32>
    %744 = vector.extract_strided_slice %736 {offsets = [0, 64], sizes = [1, 64], strides = [1, 1]} : vector<1x256xf32> to vector<1x64xf32>
    %cst_285 = arith.constant 0.000000e+00 : f32
    %745 = vector.broadcast %cst_285 : f32 to vector<1x64xf32>
    %746 = arith.subf %745, %744 : vector<1x64xf32>
    %747 = math.exp %746 : vector<1x64xf32>
    %cst_286 = arith.constant 1.000000e+00 : f32
    %748 = vector.broadcast %cst_286 : f32 to vector<1x64xf32>
    %749 = arith.addf %748, %747 : vector<1x64xf32>
    %750 = tpu.reciprocal %749 {approx = true} : vector<1x64xf32> -> vector<1x64xf32>
    %751 = vector.extract_strided_slice %736 {offsets = [0, 128], sizes = [1, 64], strides = [1, 1]} : vector<1x256xf32> to vector<1x64xf32>
    %752 = math.tanh %751 : vector<1x64xf32>
    %753 = vector.extract_strided_slice %736 {offsets = [0, 192], sizes = [1, 64], strides = [1, 1]} : vector<1x256xf32> to vector<1x64xf32>
    %cst_287 = arith.constant 0.000000e+00 : f32
    %754 = vector.broadcast %cst_287 : f32 to vector<1x64xf32>
    %755 = arith.subf %754, %753 : vector<1x64xf32>
    %756 = math.exp %755 : vector<1x64xf32>
    %cst_288 = arith.constant 1.000000e+00 : f32
    %757 = vector.broadcast %cst_288 : f32 to vector<1x64xf32>
    %758 = arith.addf %757, %756 : vector<1x64xf32>
    %759 = tpu.reciprocal %758 {approx = true} : vector<1x64xf32> -> vector<1x64xf32>
    %760 = arith.mulf %750, %727 : vector<1x64xf32>
    %761 = arith.mulf %743, %752 : vector<1x64xf32>
    %762 = arith.addf %760, %761 : vector<1x64xf32>
    %763 = math.tanh %762 : vector<1x64xf32>
    %764 = arith.mulf %759, %763 : vector<1x64xf32>
    %c1152 = arith.constant 1152 : index
    %c0_289 = arith.constant 0 : index
    %765 = vector.load %arg10[%c1152, %c0_289] : memref<1280x70xf32, #tpu.memory_space<vmem>>, vector<64x70xf32>
    %cst_290 = arith.constant dense<0.000000e+00> : vector<1x70xf32>
    %766 = tpu.matmul %764, %765, %cst_290 {dimension_numbers = #tpu.dot_dimension_numbers<[1], [0], [0], [1], [0, 0, 1, 1], [], []>} : vector<1x64xf32>, vector<64x70xf32>, vector<1x70xf32> -> vector<1x70xf32>
    %767 = arith.addf %732, %766 : vector<1x70xf32>
    %768 = vector.extract_strided_slice %99 {offsets = [19, 0], sizes = [1, 256], strides = [1, 1]} : vector<20x256xf32> to vector<1x256xf32>
    %c0_291 = arith.constant 0 : index
    %c0_292 = arith.constant 0 : index
    %769 = vector.load %arg8[%c0_291, %c0_292] : memref<64x256xf32, #tpu.memory_space<vmem>>, vector<64x256xf32>
    %cst_293 = arith.constant dense<0.000000e+00> : vector<1x256xf32>
    %770 = tpu.matmul %764, %769, %cst_293 {dimension_numbers = #tpu.dot_dimension_numbers<[1], [0], [0], [1], [0, 0, 1, 1], [], []>} : vector<1x64xf32>, vector<64x256xf32>, vector<1x256xf32> -> vector<1x256xf32>
    %771 = arith.addf %768, %770 : vector<1x256xf32>
    %772 = vector.extract_strided_slice %771 {offsets = [0, 0], sizes = [1, 64], strides = [1, 1]} : vector<1x256xf32> to vector<1x64xf32>
    %cst_294 = arith.constant 0.000000e+00 : f32
    %773 = vector.broadcast %cst_294 : f32 to vector<1x64xf32>
    %774 = arith.subf %773, %772 : vector<1x64xf32>
    %775 = math.exp %774 : vector<1x64xf32>
    %cst_295 = arith.constant 1.000000e+00 : f32
    %776 = vector.broadcast %cst_295 : f32 to vector<1x64xf32>
    %777 = arith.addf %776, %775 : vector<1x64xf32>
    %778 = tpu.reciprocal %777 {approx = true} : vector<1x64xf32> -> vector<1x64xf32>
    %779 = vector.extract_strided_slice %771 {offsets = [0, 64], sizes = [1, 64], strides = [1, 1]} : vector<1x256xf32> to vector<1x64xf32>
    %cst_296 = arith.constant 0.000000e+00 : f32
    %780 = vector.broadcast %cst_296 : f32 to vector<1x64xf32>
    %781 = arith.subf %780, %779 : vector<1x64xf32>
    %782 = math.exp %781 : vector<1x64xf32>
    %cst_297 = arith.constant 1.000000e+00 : f32
    %783 = vector.broadcast %cst_297 : f32 to vector<1x64xf32>
    %784 = arith.addf %783, %782 : vector<1x64xf32>
    %785 = tpu.reciprocal %784 {approx = true} : vector<1x64xf32> -> vector<1x64xf32>
    %786 = vector.extract_strided_slice %771 {offsets = [0, 128], sizes = [1, 64], strides = [1, 1]} : vector<1x256xf32> to vector<1x64xf32>
    %787 = math.tanh %786 : vector<1x64xf32>
    %788 = vector.extract_strided_slice %771 {offsets = [0, 192], sizes = [1, 64], strides = [1, 1]} : vector<1x256xf32> to vector<1x64xf32>
    %cst_298 = arith.constant 0.000000e+00 : f32
    %789 = vector.broadcast %cst_298 : f32 to vector<1x64xf32>
    %790 = arith.subf %789, %788 : vector<1x64xf32>
    %791 = math.exp %790 : vector<1x64xf32>
    %cst_299 = arith.constant 1.000000e+00 : f32
    %792 = vector.broadcast %cst_299 : f32 to vector<1x64xf32>
    %793 = arith.addf %792, %791 : vector<1x64xf32>
    %794 = tpu.reciprocal %793 {approx = true} : vector<1x64xf32> -> vector<1x64xf32>
    %795 = arith.mulf %785, %762 : vector<1x64xf32>
    %796 = arith.mulf %778, %787 : vector<1x64xf32>
    %797 = arith.addf %795, %796 : vector<1x64xf32>
    %798 = math.tanh %797 : vector<1x64xf32>
    %799 = arith.mulf %794, %798 : vector<1x64xf32>
    %c1216 = arith.constant 1216 : index
    %c0_300 = arith.constant 0 : index
    %800 = vector.load %arg10[%c1216, %c0_300] : memref<1280x70xf32, #tpu.memory_space<vmem>>, vector<64x70xf32>
    %cst_301 = arith.constant dense<0.000000e+00> : vector<1x70xf32>
    %801 = tpu.matmul %799, %800, %cst_301 {dimension_numbers = #tpu.dot_dimension_numbers<[1], [0], [0], [1], [0, 0, 1, 1], [], []>} : vector<1x64xf32>, vector<64x70xf32>, vector<1x70xf32> -> vector<1x70xf32>
    %802 = arith.addf %767, %801 : vector<1x70xf32>
    %c0_302 = arith.constant 0 : index
    %c0_303 = arith.constant 0 : index
    %803 = vector.load %arg11[%c0_302, %c0_303] : memref<1x70xf32, #tpu.memory_space<vmem>>, vector<1x70xf32>
    %804 = arith.addf %802, %803 : vector<1x70xf32>
    %cst_304 = arith.constant 0.000000e+00 : f32
    %805 = vector.broadcast %cst_304 : f32 to vector<1x70xf32>
    %806 = arith.maximumf %804, %805 : vector<1x70xf32>
    %c0_305 = arith.constant 0 : index
    %c0_306 = arith.constant 0 : index
    %807 = vector.load %arg12[%c0_305, %c0_306] : memref<70x1xf32, #tpu.memory_space<vmem>>, vector<70x1xf32>
    %cst_307 = arith.constant dense<0.000000e+00> : vector<1x1xf32>
    %808 = tpu.matmul %806, %807, %cst_307 {dimension_numbers = #tpu.dot_dimension_numbers<[1], [0], [0], [1], [0, 0, 1, 1], [], []>} : vector<1x70xf32>, vector<70x1xf32>, vector<1x1xf32> -> vector<1x1xf32>
    %c0_308 = arith.constant 0 : index
    %c0_309 = arith.constant 0 : index
    %809 = vector.load %arg13[%c0_308, %c0_309] : memref<1x1xf32, #tpu.memory_space<vmem>>, vector<1x1xf32>
    %810 = arith.addf %808, %809 : vector<1x1xf32>
    %c0_310 = arith.constant 0 : index
    %c0_311 = arith.constant 0 : index
    %c0_312 = arith.constant 0 : index
    %811 = vector.load %arg14[%c0_310, %c0_311, %c0_312] : memref<1x1x1xf32, #tpu.memory_space<vmem>>, vector<1x1x1xf32>
    %812 = vector.shape_cast %811 : vector<1x1x1xf32> to vector<1x1xf32>
    %813 = vector.shape_cast %810 : vector<1x1xf32> to vector<1x1x1xf32>
    tpu.vector_store %arg14[%c0_310, %c0_311, %c0_312], %813 {strides = array<i32>} : memref<1x1x1xf32, #tpu.memory_space<vmem>>, vector<1x1x1xf32>,
    return
  }
  func.func @transform_0(%arg0: i32) -> (i32, i32, i32) {
    %c0_i32 = arith.constant 0 : i32
    %c0_i32_0 = arith.constant 0 : i32
    %c0_i32_1 = arith.constant 0 : i32
    return %arg0, %c0_i32, %c0_i32_0 : i32, i32, i32
  }
  func.func @transform_1(%arg0: i32) -> (i32, i32) {
    %c0_i32 = arith.constant 0 : i32
    %c0_i32_0 = arith.constant 0 : i32
    %c0_i32_1 = arith.constant 0 : i32
    return %c0_i32, %c0_i32_0 : i32, i32
  }
  func.func @transform_2(%arg0: i32) -> (i32, i32, i32) {
    %c0_i32 = arith.constant 0 : i32
    %c0_i32_0 = arith.constant 0 : i32
    %c0_i32_1 = arith.constant 0 : i32
    %c0_i32_2 = arith.constant 0 : i32
    return %c0_i32, %c0_i32_0, %c0_i32_1 : i32, i32, i32
  }
  func.func @transform_3(%arg0: i32) -> (i32, i32) {
    %c0_i32 = arith.constant 0 : i32
    %c0_i32_0 = arith.constant 0 : i32
    %c0_i32_1 = arith.constant 0 : i32
    return %c0_i32, %c0_i32_0 : i32, i32
  }
  func.func @transform_4(%arg0: i32) -> (i32, i32, i32) {
    %c0_i32 = arith.constant 0 : i32
    %c0_i32_0 = arith.constant 0 : i32
    %c0_i32_1 = arith.constant 0 : i32
    %c0_i32_2 = arith.constant 0 : i32
    return %c0_i32, %c0_i32_0, %c0_i32_1 : i32, i32, i32
  }
  func.func @transform_5(%arg0: i32) -> (i32, i32) {
    %c0_i32 = arith.constant 0 : i32
    %c0_i32_0 = arith.constant 0 : i32
    %c0_i32_1 = arith.constant 0 : i32
    return %c0_i32, %c0_i32_0 : i32, i32
  }
  func.func @transform_6(%arg0: i32) -> (i32, i32) {
    %c0_i32 = arith.constant 0 : i32
    %c0_i32_0 = arith.constant 0 : i32
    %c0_i32_1 = arith.constant 0 : i32
    return %c0_i32, %c0_i32_0 : i32, i32
  }
  func.func @transform_7(%arg0: i32) -> (i32, i32) {
    %c0_i32 = arith.constant 0 : i32
    %c0_i32_0 = arith.constant 0 : i32
    %c0_i32_1 = arith.constant 0 : i32
    return %c0_i32, %c0_i32_0 : i32, i32
  }
  func.func @transform_8(%arg0: i32) -> (i32, i32) {
    %c0_i32 = arith.constant 0 : i32
    %c0_i32_0 = arith.constant 0 : i32
    %c0_i32_1 = arith.constant 0 : i32
    return %c0_i32, %c0_i32_0 : i32, i32
  }
  func.func @transform_9(%arg0: i32) -> (i32, i32) {
    %c0_i32 = arith.constant 0 : i32
    %c0_i32_0 = arith.constant 0 : i32
    %c0_i32_1 = arith.constant 0 : i32
    return %c0_i32, %c0_i32_0 : i32, i32
  }
  func.func @transform_10(%arg0: i32) -> (i32, i32) {
    %c0_i32 = arith.constant 0 : i32
    %c0_i32_0 = arith.constant 0 : i32
    %c0_i32_1 = arith.constant 0 : i32
    return %c0_i32, %c0_i32_0 : i32, i32
  }
  func.func @transform_11(%arg0: i32) -> (i32, i32) {
    %c0_i32 = arith.constant 0 : i32
    %c0_i32_0 = arith.constant 0 : i32
    %c0_i32_1 = arith.constant 0 : i32
    return %c0_i32, %c0_i32_0 : i32, i32
  }
  func.func @transform_12(%arg0: i32) -> (i32, i32) {
    %c0_i32 = arith.constant 0 : i32
    %c0_i32_0 = arith.constant 0 : i32
    %c0_i32_1 = arith.constant 0 : i32
    return %c0_i32, %c0_i32_0 : i32, i32
  }
  func.func @transform_13(%arg0: i32) -> (i32, i32, i32) {
    %c0_i32 = arith.constant 0 : i32
    %c0_i32_0 = arith.constant 0 : i32
    %c0_i32_1 = arith.constant 0 : i32
    return %arg0, %c0_i32, %c0_i32_0 : i32, i32, i32
  }
}

</mosaic_0001>

<llo_original>
// kernel: convlstm_forward.1
$region0: #{convlstm_forward.1}
  #allocation0 [shape = 'u32[]', space=smem, size = 0x4, offset = 0x4, fixed_abs, tag = 'smem constant byte address 0x4 - core index']
  #allocation1 [shape = 'u32[144,128]{1,0:T(1,128)}', space=vmem, size = 0x12000, scoped, tag = 'internal scratch']
  #allocation2 [shape = 'f32[520,24]{1,0:T(8,128)}', space=vmem, size = 0x41000, scoped, tag = 'scratch operand']
  #allocation3 [shape = 'f32[100,30]{1,0:T(8,128)}', space=vmem, size = 0xd000, scoped, tag = 'scratch operand']
  #allocation4 [shape = 'f32[1,1]{1,0:T(1,128)S(1)}', space=vmem, size = 0x200, scoped, tag = 'scoped memory for convlstm_forward.1']
  %s0 = inlined_call_operand.vmem [shape: f32[2,524,7], index: 0, kind: input, shape index: {}]
  %s1 = inlined_call_operand.vmem [shape: f32[1,2], index: 1, kind: input, shape index: {}]
  %s2 = inlined_call_operand.vmem [shape: f32[5,7,24], index: 2, kind: input, shape index: {}]
  %s3 = inlined_call_operand.vmem [shape: f32[1,24], index: 3, kind: input, shape index: {}]
  %s4 = inlined_call_operand.vmem [shape: f32[5,24,30], index: 4, kind: input, shape index: {}]
  %s5 = inlined_call_operand.vmem [shape: f32[1,30], index: 5, kind: input, shape index: {}]
  %s6 = inlined_call_operand.vmem [shape: f32[10,256], index: 6, kind: input, shape index: {}]
  %s7 = inlined_call_operand.vmem [shape: f32[64,256], index: 7, kind: input, shape index: {}]
  %s8 = inlined_call_operand.vmem [shape: f32[1,256], index: 8, kind: input, shape index: {}]
  %s9 = inlined_call_operand.vmem [shape: f32[1280,70], index: 9, kind: input, shape index: {}]
  %s10 = inlined_call_operand.vmem [shape: f32[1,70], index: 10, kind: input, shape index: {}]
  %s11 = inlined_call_operand.vmem [shape: f32[70,1], index: 11, kind: input, shape index: {}]
  %s12 = inlined_call_operand.<no memory space> [shape: f32[1,1], index: 12, kind: input, shape index: {}]
  %s13 = inlined_call_operand.vmem [shape: f32[2,1,1], index: 13, kind: output, shape index: {}]
  %s14 = sld [smem:[#allocation0]]
  $region85: #{convlstm_forward.1} parent=0
    _
  %s16 = ssub.s32 1, %s14
  %s17 = scalar_select 0, %s16, %s14
  %v18 = vstv %s12
  %19 = vst [vmem:[#allocation4] sm:$0x1] %v18
  loop: start=0, step=1, limit=4
  $region2: #{convlstm_forward.1} parent=0 // loop_pre_header
    _
  $region3: #{convlstm_forward.1} parent=0 // loop_header
    %s21 = sphi 0, %s25
    %p22 = scmp.ge.s32.totalorder %s21, 4
    %s31 = sphi 0, %s33
    %s34 = sphi 0, %s31
    %s35 = sphi 0, %s34
    %s51 = sphi 0, %s35
    %s55 = sphi 0, %s55
    %s57 = sphi 0, %s55
    %s58 = sphi 0, %s57
    %s72 = sphi 0, %s58
    %s76 = sphi 0, %s76
    %s78 = sphi 0, %s76
    %s79 = sphi 0, %s78
    %s93 = sphi 0, %s79
    %s97 = sphi 0, %s97
    %s99 = sphi 0, %s97
    %s100 = sphi 0, %s99
    %s114 = sphi 0, %s100
    %s118 = sphi 0, %s118
    %s120 = sphi 0, %s118
    %s121 = sphi 0, %s120
    %s135 = sphi 0, %s121
    %s139 = sphi 0, %s139
    %s141 = sphi 0, %s139
    %s142 = sphi 0, %s141
    %s156 = sphi 0, %s142
    %s160 = sphi 0, %s160
    %s162 = sphi 0, %s160
    %s163 = sphi 0, %s162
    %s177 = sphi 0, %s163
    %s181 = sphi 0, %s181
    %s183 = sphi 0, %s181
    %s184 = sphi 0, %s183
    %s198 = sphi 0, %s184
    %s202 = sphi 0, %s202
    %s204 = sphi 0, %s202
    %s205 = sphi 0, %s204
    %s219 = sphi 0, %s205
    %s223 = sphi 0, %s223
    %s225 = sphi 0, %s223
    %s226 = sphi 0, %s225
    %s240 = sphi 0, %s226
    %s244 = sphi 0, %s244
    %s246 = sphi 0, %s244
    %s247 = sphi 0, %s246
    %s261 = sphi 0, %s247
    %s265 = sphi 0, %s265
    %s267 = sphi 0, %s265
    %s268 = sphi 0, %s267
    %s282 = sphi 0, %s268
    %s286 = sphi 0, %s286
    %s288 = sphi 0, %s286
    %s289 = sphi 0, %s288
    %s303 = sphi 0, %s289
    %s309 = sphi 0, %s311
    %s312 = sphi 0, %s309
    %s313 = sphi 0, %s312
    %s329 = sphi 0, %s313
  $region4: #{convlstm_forward.1} parent=0 // loop_header_branch
    %24 = sbr.rel (%p22) target = $region8
  $region5: #{convlstm_forward.1} parent=0 // loop_body
    %s26 = ssub.s32 %s21, 1
    %s27 = ssub.s32 %s21, 2
    %s28 = sadd.s32 %s21, 1
    %s29 = ssub.s32 %s21, %s28
    %p30 = scmp.eq.s32.totalorder %s29, 0
    %s32 = sadd.s32 %s31, 1
    %s33 = scalar_select %p30, %s31, %s32
    %p36 = pneg %p30
    %p37 = scmp.eq.s32.totalorder %s21, 1
    %p38 = por %p36, %p37
    %p39 = scmp.ne.s32.totalorder %s31, %s34
    %p40 = scmp.eq.s32.totalorder %s21, 0
    %p41 = por %p39, %p40
    %p42 = scmp.ne.s32.totalorder %s31, %s34
    %p43 = scmp.eq.s32.totalorder %s26, 1
    %p44 = por %p42, %p43
    %p45 = scmp.ne.s32.totalorder %s34, %s35
    %p46 = scmp.eq.s32.totalorder %s26, 0
    %p47 = por %p45, %p46
    %p48 = scmp.ne.s32.totalorder %s34, %s35
    %p49 = scmp.eq.s32.totalorder %s27, 1
    %p50 = por %p48, %p49
    %p52 = scmp.ne.s32.totalorder %s35, %s51
    %p53 = scmp.eq.s32.totalorder %s27, 0
    %p54 = por %p52, %p53
    %s56 = sadd.s32 %s55, 1
    %p59 = scmp.eq.s32.totalorder %s21, 1
    %p60 = scmp.ne.s32.totalorder %s55, %s57
    %p61 = scmp.eq.s32.totalorder %s21, 0
    %p62 = por %p60, %p61
    %p63 = scmp.ne.s32.totalorder %s55, %s57
    %p64 = scmp.eq.s32.totalorder %s26, 1
    %p65 = por %p63, %p64
    %p66 = scmp.ne.s32.totalorder %s57, %s58
    %p67 = scmp.eq.s32.totalorder %s26, 0
    %p68 = por %p66, %p67
    %p69 = scmp.ne.s32.totalorder %s57, %s58
    %p70 = scmp.eq.s32.totalorder %s27, 1
    %p71 = por %p69, %p70
    %p73 = scmp.ne.s32.totalorder %s58, %s72
    %p74 = scmp.eq.s32.totalorder %s27, 0
    %p75 = por %p73, %p74
    %s77 = sadd.s32 %s76, 1
    %p80 = scmp.eq.s32.totalorder %s21, 1
    %p81 = scmp.ne.s32.totalorder %s76, %s78
    %p82 = scmp.eq.s32.totalorder %s21, 0
    %p83 = por %p81, %p82
    %p84 = scmp.ne.s32.totalorder %s76, %s78
    %p85 = scmp.eq.s32.totalorder %s26, 1
    %p86 = por %p84, %p85
    %p87 = scmp.ne.s32.totalorder %s78, %s79
    %p88 = scmp.eq.s32.totalorder %s26, 0
    %p89 = por %p87, %p88
    %p90 = scmp.ne.s32.totalorder %s78, %s79
    %p91 = scmp.eq.s32.totalorder %s27, 1
    %p92 = por %p90, %p91
    %p94 = scmp.ne.s32.totalorder %s79, %s93
    %p95 = scmp.eq.s32.totalorder %s27, 0
    %p96 = por %p94, %p95
    %s98 = sadd.s32 %s97, 1
    %p101 = scmp.eq.s32.totalorder %s21, 1
    %p102 = scmp.ne.s32.totalorder %s97, %s99
    %p103 = scmp.eq.s32.totalorder %s21, 0
    %p104 = por %p102, %p103
    %p105 = scmp.ne.s32.totalorder %s97, %s99
    %p106 = scmp.eq.s32.totalorder %s26, 1
    %p107 = por %p105, %p106
    %p108 = scmp.ne.s32.totalorder %s99, %s100
    %p109 = scmp.eq.s32.totalorder %s26, 0
    %p110 = por %p108, %p109
    %p111 = scmp.ne.s32.totalorder %s99, %s100
    %p112 = scmp.eq.s32.totalorder %s27, 1
    %p113 = por %p111, %p112
    %p115 = scmp.ne.s32.totalorder %s100, %s114
    %p116 = scmp.eq.s32.totalorder %s27, 0
    %p117 = por %p115, %p116
    %s119 = sadd.s32 %s118, 1
    %p122 = scmp.eq.s32.totalorder %s21, 1
    %p123 = scmp.ne.s32.totalorder %s118, %s120
    %p124 = scmp.eq.s32.totalorder %s21, 0
    %p125 = por %p123, %p124
    %p126 = scmp.ne.s32.totalorder %s118, %s120
    %p127 = scmp.eq.s32.totalorder %s26, 1
    %p128 = por %p126, %p127
    %p129 = scmp.ne.s32.totalorder %s120, %s121
    %p130 = scmp.eq.s32.totalorder %s26, 0
    %p131 = por %p129, %p130
    %p132 = scmp.ne.s32.totalorder %s120, %s121
    %p133 = scmp.eq.s32.totalorder %s27, 1
    %p134 = por %p132, %p133
    %p136 = scmp.ne.s32.totalorder %s121, %s135
    %p137 = scmp.eq.s32.totalorder %s27, 0
    %p138 = por %p136, %p137
    %s140 = sadd.s32 %s139, 1
    %p143 = scmp.eq.s32.totalorder %s21, 1
    %p144 = scmp.ne.s32.totalorder %s139, %s141
    %p145 = scmp.eq.s32.totalorder %s21, 0
    %p146 = por %p144, %p145
    %p147 = scmp.ne.s32.totalorder %s139, %s141
    %p148 = scmp.eq.s32.totalorder %s26, 1
    %p149 = por %p147, %p148
    %p150 = scmp.ne.s32.totalorder %s141, %s142
    %p151 = scmp.eq.s32.totalorder %s26, 0
    %p152 = por %p150, %p151
    %p153 = scmp.ne.s32.totalorder %s141, %s142
    %p154 = scmp.eq.s32.totalorder %s27, 1
    %p155 = por %p153, %p154
    %p157 = scmp.ne.s32.totalorder %s142, %s156
    %p158 = scmp.eq.s32.totalorder %s27, 0
    %p159 = por %p157, %p158
    %s161 = sadd.s32 %s160, 1
    %p164 = scmp.eq.s32.totalorder %s21, 1
    %p165 = scmp.ne.s32.totalorder %s160, %s162
    %p166 = scmp.eq.s32.totalorder %s21, 0
    %p167 = por %p165, %p166
    %p168 = scmp.ne.s32.totalorder %s160, %s162
    %p169 = scmp.eq.s32.totalorder %s26, 1
    %p170 = por %p168, %p169
    %p171 = scmp.ne.s32.totalorder %s162, %s163
    %p172 = scmp.eq.s32.totalorder %s26, 0
    %p173 = por %p171, %p172
    %p174 = scmp.ne.s32.totalorder %s162, %s163
    %p175 = scmp.eq.s32.totalorder %s27, 1
    %p176 = por %p174, %p175
    %p178 = scmp.ne.s32.totalorder %s163, %s177
    %p179 = scmp.eq.s32.totalorder %s27, 0
    %p180 = por %p178, %p179
    %s182 = sadd.s32 %s181, 1
    %p185 = scmp.eq.s32.totalorder %s21, 1
    %p186 = scmp.ne.s32.totalorder %s181, %s183
    %p187 = scmp.eq.s32.totalorder %s21, 0
    %p188 = por %p186, %p187
    %p189 = scmp.ne.s32.totalorder %s181, %s183
    %p190 = scmp.eq.s32.totalorder %s26, 1
    %p191 = por %p189, %p190
    %p192 = scmp.ne.s32.totalorder %s183, %s184
    %p193 = scmp.eq.s32.totalorder %s26, 0
    %p194 = por %p192, %p193
    %p195 = scmp.ne.s32.totalorder %s183, %s184
    %p196 = scmp.eq.s32.totalorder %s27, 1
    %p197 = por %p195, %p196
    %p199 = scmp.ne.s32.totalorder %s184, %s198
    %p200 = scmp.eq.s32.totalorder %s27, 0
    %p201 = por %p199, %p200
    %s203 = sadd.s32 %s202, 1
    %p206 = scmp.eq.s32.totalorder %s21, 1
    %p207 = scmp.ne.s32.totalorder %s202, %s204
    %p208 = scmp.eq.s32.totalorder %s21, 0
    %p209 = por %p207, %p208
    %p210 = scmp.ne.s32.totalorder %s202, %s204
    %p211 = scmp.eq.s32.totalorder %s26, 1
    %p212 = por %p210, %p211
    %p213 = scmp.ne.s32.totalorder %s204, %s205
    %p214 = scmp.eq.s32.totalorder %s26, 0
    %p215 = por %p213, %p214
    %p216 = scmp.ne.s32.totalorder %s204, %s205
    %p217 = scmp.eq.s32.totalorder %s27, 1
    %p218 = por %p216, %p217
    %p220 = scmp.ne.s32.totalorder %s205, %s219
    %p221 = scmp.eq.s32.totalorder %s27, 0
    %p222 = por %p220, %p221
    %s224 = sadd.s32 %s223, 1
    %p227 = scmp.eq.s32.totalorder %s21, 1
    %p228 = scmp.ne.s32.totalorder %s223, %s225
    %p229 = scmp.eq.s32.totalorder %s21, 0
    %p230 = por %p228, %p229
    %p231 = scmp.ne.s32.totalorder %s223, %s225
    %p232 = scmp.eq.s32.totalorder %s26, 1
    %p233 = por %p231, %p232
    %p234 = scmp.ne.s32.totalorder %s225, %s226
    %p235 = scmp.eq.s32.totalorder %s26, 0
    %p236 = por %p234, %p235
    %p237 = scmp.ne.s32.totalorder %s225, %s226
    %p238 = scmp.eq.s32.totalorder %s27, 1
    %p239 = por %p237, %p238
    %p241 = scmp.ne.s32.totalorder %s226, %s240
    %p242 = scmp.eq.s32.totalorder %s27, 0
    %p243 = por %p241, %p242
    %s245 = sadd.s32 %s244, 1
    %p248 = scmp.eq.s32.totalorder %s21, 1
    %p249 = scmp.ne.s32.totalorder %s244, %s246
    %p250 = scmp.eq.s32.totalorder %s21, 0
    %p251 = por %p249, %p250
    %p252 = scmp.ne.s32.totalorder %s244, %s246
    %p253 = scmp.eq.s32.totalorder %s26, 1
    %p254 = por %p252, %p253
    %p255 = scmp.ne.s32.totalorder %s246, %s247
    %p256 = scmp.eq.s32.totalorder %s26, 0
    %p257 = por %p255, %p256
    %p258 = scmp.ne.s32.totalorder %s246, %s247
    %p259 = scmp.eq.s32.totalorder %s27, 1
    %p260 = por %p258, %p259
    %p262 = scmp.ne.s32.totalorder %s247, %s261
    %p263 = scmp.eq.s32.totalorder %s27, 0
    %p264 = por %p262, %p263
    %s266 = sadd.s32 %s265, 1
    %p269 = scmp.eq.s32.totalorder %s21, 1
    %p270 = scmp.ne.s32.totalorder %s265, %s267
    %p271 = scmp.eq.s32.totalorder %s21, 0
    %p272 = por %p270, %p271
    %p273 = scmp.ne.s32.totalorder %s265, %s267
    %p274 = scmp.eq.s32.totalorder %s26, 1
    %p275 = por %p273, %p274
    %p276 = scmp.ne.s32.totalorder %s267, %s268
    %p277 = scmp.eq.s32.totalorder %s26, 0
    %p278 = por %p276, %p277
    %p279 = scmp.ne.s32.totalorder %s267, %s268
    %p280 = scmp.eq.s32.totalorder %s27, 1
    %p281 = por %p279, %p280
    %p283 = scmp.ne.s32.totalorder %s268, %s282
    %p284 = scmp.eq.s32.totalorder %s27, 0
    %p285 = por %p283, %p284
    %s287 = sadd.s32 %s286, 1
    %p290 = scmp.eq.s32.totalorder %s21, 1
    %p291 = scmp.ne.s32.totalorder %s286, %s288
    %p292 = scmp.eq.s32.totalorder %s21, 0
    %p293 = por %p291, %p292
    %p294 = scmp.ne.s32.totalorder %s286, %s288
    %p295 = scmp.eq.s32.totalorder %s26, 1
    %p296 = por %p294, %p295
    %p297 = scmp.ne.s32.totalorder %s288, %s289
    %p298 = scmp.eq.s32.totalorder %s26, 0
    %p299 = por %p297, %p298
    %p300 = scmp.ne.s32.totalorder %s288, %s289
    %p301 = scmp.eq.s32.totalorder %s27, 1
    %p302 = por %p300, %p301
    %p304 = scmp.ne.s32.totalorder %s289, %s303
    %p305 = scmp.eq.s32.totalorder %s27, 0
    %p306 = por %p304, %p305
    %s307 = ssub.s32 %s21, %s28
    %p308 = scmp.eq.s32.totalorder %s307, 0
    %s310 = sadd.s32 %s309, 1
    %s311 = scalar_select %p308, %s309, %s310
    %p314 = pneg %p308
    %p315 = scmp.eq.s32.totalorder %s21, 1
    %p316 = por %p314, %p315
    %p317 = scmp.ne.s32.totalorder %s309, %s312
    %p318 = scmp.eq.s32.totalorder %s21, 0
    %p319 = por %p317, %p318
    %p320 = scmp.ne.s32.totalorder %s309, %s312
    %p321 = scmp.eq.s32.totalorder %s26, 1
    %p322 = por %p320, %p321
    %p323 = scmp.ne.s32.totalorder %s312, %s313
    %p324 = scmp.eq.s32.totalorder %s26, 0
    %p325 = por %p323, %p324
    %p326 = scmp.ne.s32.totalorder %s312, %s313
    %p327 = scmp.eq.s32.totalorder %s27, 1
    %p328 = por %p326, %p327
    %p330 = scmp.ne.s32.totalorder %s313, %s329
    %p331 = scmp.eq.s32.totalorder %s27, 0
    %p332 = por %p330, %p331
    %p333 = scmp.le.s32.totalorder 1, %s21
    %p334 = scmp.lt.s32.totalorder %s21, 3
    %p335 = pnand %p333, %p334
    %p336 = pneg %p335
    // Predicated region
    $region9: #{convlstm_forward.1} parent=5 // pred_check
      _
    $region10: #{convlstm_forward.1} parent=5 // pred_check_branch
      %338 = sbr.rel (%p335) target = $region12
    $region11: #{convlstm_forward.1} parent=5 // pred_region
      %s339 = ssub.s32 %s21, 1
      // Predicated region
      $region13: #{convlstm_forward.1} parent=11 // pred_check
        %p340 = pneg %p68
      $region14: #{convlstm_forward.1} parent=11 // pred_check_branch
        %342 = sbr.rel (%p340) target = $region16
      $region15: #{convlstm_forward.1} parent=11 // pred_region
        _
      $region16: #{convlstm_forward.1} parent=11 // pred_fallthru
        _
      // Predicated region
      $region17: #{convlstm_forward.1} parent=11 // pred_check
        %p343 = pneg %p89
      $region18: #{convlstm_forward.1} parent=11 // pred_check_branch
        %345 = sbr.rel (%p343) target = $region20
      $region19: #{convlstm_forward.1} parent=11 // pred_region
        _
      $region20: #{convlstm_forward.1} parent=11 // pred_fallthru
        _
      // Predicated region
      $region21: #{convlstm_forward.1} parent=11 // pred_check
        %p346 = pneg %p110
      $region22: #{convlstm_forward.1} parent=11 // pred_check_branch
        %348 = sbr.rel (%p346) target = $region24
      $region23: #{convlstm_forward.1} parent=11 // pred_region
        _
      $region24: #{convlstm_forward.1} parent=11 // pred_fallthru
        _
      // Predicated region
      $region25: #{convlstm_forward.1} parent=11 // pred_check
        %p349 = pneg %p131
      $region26: #{convlstm_forward.1} parent=11 // pred_check_branch
        %351 = sbr.rel (%p349) target = $region28
      $region27: #{convlstm_forward.1} parent=11 // pred_region
        _
      $region28: #{convlstm_forward.1} parent=11 // pred_fallthru
        _
      // Predicated region
      $region29: #{convlstm_forward.1} parent=11 // pred_check
        %p352 = pneg %p152
      $region30: #{convlstm_forward.1} parent=11 // pred_check_branch
        %354 = sbr.rel (%p352) target = $region32
      $region31: #{convlstm_forward.1} parent=11 // pred_region
        _
      $region32: #{convlstm_forward.1} parent=11 // pred_fallthru
        _
      // Predicated region
      $region33: #{convlstm_forward.1} parent=11 // pred_check
        %p355 = pneg %p173
      $region34: #{convlstm_forward.1} parent=11 // pred_check_branch
        %357 = sbr.rel (%p355) target = $region36
      $region35: #{convlstm_forward.1} parent=11 // pred_region
        _
      $region36: #{convlstm_forward.1} parent=11 // pred_fallthru
        _
      // Predicated region
      $region37: #{convlstm_forward.1} parent=11 // pred_check
        %p358 = pneg %p194
      $region38: #{convlstm_forward.1} parent=11 // pred_check_branch
        %360 = sbr.rel (%p358) target = $region40
      $region39: #{convlstm_forward.1} parent=11 // pred_region
        _
      $region40: #{convlstm_forward.1} parent=11 // pred_fallthru
        _
      // Predicated region
      $region41: #{convlstm_forward.1} parent=11 // pred_check
        %p361 = pneg %p215
      $region42: #{convlstm_forward.1} parent=11 // pred_check_branch
        %363 = sbr.rel (%p361) target = $region44
      $region43: #{convlstm_forward.1} parent=11 // pred_region
        _
      $region44: #{convlstm_forward.1} parent=11 // pred_fallthru
        _
      // Predicated region
      $region45: #{convlstm_forward.1} parent=11 // pred_check
        %p364 = pneg %p236
      $region46: #{convlstm_forward.1} parent=11 // pred_check_branch
        %366 = sbr.rel (%p364) target = $region48
      $region47: #{convlstm_forward.1} parent=11 // pred_region
        _
      $region48: #{convlstm_forward.1} parent=11 // pred_fallthru
        _
      // Predicated region
      $region49: #{convlstm_forward.1} parent=11 // pred_check
        %p367 = pneg %p257
      $region50: #{convlstm_forward.1} parent=11 // pred_check_branch
        %369 = sbr.rel (%p367) target = $region52
      $region51: #{convlstm_forward.1} parent=11 // pred_region
        _
      $region52: #{convlstm_forward.1} parent=11 // pred_fallthru
        _
      // Predicated region
      $region53: #{convlstm_forward.1} parent=11 // pred_check
        %p370 = pneg %p278
      $region54: #{convlstm_forward.1} parent=11 // pred_check_branch
        %372 = sbr.rel (%p370) target = $region56
      $region55: #{convlstm_forward.1} parent=11 // pred_region
        _
      $region56: #{convlstm_forward.1} parent=11 // pred_fallthru
        _
      // Predicated region
      $region57: #{convlstm_forward.1} parent=11 // pred_check
        %p373 = pneg %p299
      $region58: #{convlstm_forward.1} parent=11 // pred_check_branch
        %375 = sbr.rel (%p373) target = $region60
      $region59: #{convlstm_forward.1} parent=11 // pred_region
        _
      $region60: #{convlstm_forward.1} parent=11 // pred_fallthru
        _
    $region12: #{convlstm_forward.1} parent=5 // pred_fallthru
      _
    %p376 = scmp.lt.s32.totalorder %s21, 2
    // Predicated region
    $region61: #{convlstm_forward.1} parent=5 // pred_check
      %p377 = pneg %p376
    $region62: #{convlstm_forward.1} parent=5 // pred_check_branch
      %379 = sbr.rel (%p377) target = $region64
    $region63: #{convlstm_forward.1} parent=5 // pred_region
      // Predicated region
      $region65: #{convlstm_forward.1} parent=63 // pred_check
        %p380 = pneg %p41
      $region66: #{convlstm_forward.1} parent=63 // pred_check_branch
        %382 = sbr.rel (%p380) target = $region68
      $region67: #{convlstm_forward.1} parent=63 // pred_region
        %p383 = scmp.lt.s32.totalorder %s21, 1
        %s384 = scalar_select %p383, %s21, 1
        %s385 = smul.addr %s384, 66
        %s386 = smul.addr %s385, 8
        %s387 = scalar_lea.vmem %s0, %s386
      $region68: #{convlstm_forward.1} parent=63 // pred_fallthru
        _
    $region64: #{convlstm_forward.1} parent=5 // pred_fallthru
      _
    %p388 = scmp.le.s32.totalorder 1, %s21
    %p389 = scmp.lt.s32.totalorder %s21, 3
    %p390 = pnand %p388, %p389
    %p391 = pneg %p390
    // Predicated region
    $region69: #{convlstm_forward.1} parent=5 // pred_check
      _
    $region70: #{convlstm_forward.1} parent=5 // pred_check_branch
      %393 = sbr.rel (%p390) target = $region72
    $region71: #{convlstm_forward.1} parent=5 // pred_region
      %s394 = ssub.s32 %s21, 1
      %p395 = scmp.lt.s32.totalorder %s26, 1
      %s396 = scalar_select %p395, %s26, 1
      %s397 = smul.addr %s396, 66
      %s398 = smul.addr %s397, 8
      %s399 = scalar_lea.vmem %s0, %s398
      %p400 = pneg %p47
      %p401 = pneg %p44
      %p402 = pneg %p68
      %p403 = pneg %p65
      %p404 = pneg %p89
      %p405 = pneg %p86
      %p406 = pneg %p110
      %p407 = pneg %p107
      %p408 = pneg %p131
      %p409 = pneg %p128
      %p410 = pneg %p152
      %p411 = pneg %p149
      %p412 = pneg %p173
      %p413 = pneg %p170
      %p414 = pneg %p194
      %p415 = pneg %p191
      %p416 = pneg %p215
      %p417 = pneg %p212
      %p418 = pneg %p236
      %p419 = pneg %p233
      %p420 = pneg %p257
      %p421 = pneg %p254
      %p422 = pneg %p278
      %p423 = pneg %p275
      %p424 = pneg %p299
      %p425 = pneg %p296
      %p426 = pneg %p325
      %p427 = pneg %p322
      %p428 = scmp.lt.s32.totalorder %s26, 1
      %s429 = scalar_select %p428, %s26, 1
      %s430 = scalar_lea.vmem %s13, %s429
      %p431 = scmp.lt.s32.totalorder %s26, 1
      %s432 = scalar_select %p431, %s26, 1
      %s433 = smul.addr %s432, 66
      %s434 = smul.addr %s433, 8
      %s435 = scalar_lea.vmem %s0, %s434
      %p436 = scmp.lt.s32.totalorder %s26, 1
      %s437 = scalar_select %p436, %s26, 1
      %s438 = scalar_lea.vmem %s13, %s437
      %v439 = vld [vmem:[%s435] sm:$0xff]
      %v440 = vld [vmem:[%s435 + $0x8] sm:$0xff]
      %v441 = vld [vmem:[%s435 + $0x10] sm:$0xff]
      %v442 = vld [vmem:[%s435 + $0x18] sm:$0xff]
      %v443 = vld [vmem:[%s435 + $0x20] sm:$0xff]
      %v444 = vld [vmem:[%s435 + $0x28] sm:$0xff]
      %v445 = vld [vmem:[%s435 + $0x30] sm:$0xff]
      %v446 = vld [vmem:[%s435 + $0x38] sm:$0xff]
      %v447 = vld [vmem:[%s435 + $0x40] sm:$0xff]
      %v448 = vld [vmem:[%s435 + $0x48] sm:$0xff]
      %v449 = vld [vmem:[%s435 + $0x50] sm:$0xff]
      %v450 = vld [vmem:[%s435 + $0x58] sm:$0xff]
      %v451 = vld [vmem:[%s435 + $0x60] sm:$0xff]
      %v452 = vld [vmem:[%s435 + $0x68] sm:$0xff]
      %v453 = vld [vmem:[%s435 + $0x70] sm:$0xff]
      %v454 = vld [vmem:[%s435 + $0x78] sm:$0xff]
      %v455 = vld [vmem:[%s435 + $0x80] sm:$0xff]
      %v456 = vld [vmem:[%s435 + $0x88] sm:$0xff]
      %v457 = vld [vmem:[%s435 + $0x90] sm:$0xff]
      %v458 = vld [vmem:[%s435 + $0x98] sm:$0xff]
      %v459 = vld [vmem:[%s435 + $0xa0] sm:$0xff]
      %v460 = vld [vmem:[%s435 + $0xa8] sm:$0xff]
      %v461 = vld [vmem:[%s435 + $0xb0] sm:$0xff]
      %v462 = vld [vmem:[%s435 + $0xb8] sm:$0xff]
      %v463 = vld [vmem:[%s435 + $0xc0] sm:$0xff]
      %v464 = vld [vmem:[%s435 + $0xc8] sm:$0xff]
      %v465 = vld [vmem:[%s435 + $0xd0] sm:$0xff]
      %v466 = vld [vmem:[%s435 + $0xd8] sm:$0xff]
      %v467 = vld [vmem:[%s435 + $0xe0] sm:$0xff]
      %v468 = vld [vmem:[%s435 + $0xe8] sm:$0xff]
      %v469 = vld [vmem:[%s435 + $0xf0] sm:$0xff]
      %v470 = vld [vmem:[%s435 + $0xf8] sm:$0xff]
      %v471 = vld [vmem:[%s435 + $0x100] sm:$0xff]
      %v472 = vld [vmem:[%s435 + $0x108] sm:$0xff]
      %v473 = vld [vmem:[%s435 + $0x110] sm:$0xff]
      %v474 = vld [vmem:[%s435 + $0x118] sm:$0xff]
      %v475 = vld [vmem:[%s435 + $0x120] sm:$0xff]
      %v476 = vld [vmem:[%s435 + $0x128] sm:$0xff]
      %v477 = vld [vmem:[%s435 + $0x130] sm:$0xff]
      %v478 = vld [vmem:[%s435 + $0x138] sm:$0xff]
      %v479 = vld [vmem:[%s435 + $0x140] sm:$0xff]
      %v480 = vld [vmem:[%s435 + $0x148] sm:$0xff]
      %v481 = vld [vmem:[%s435 + $0x150] sm:$0xff]
      %v482 = vld [vmem:[%s435 + $0x158] sm:$0xff]
      %v483 = vld [vmem:[%s435 + $0x160] sm:$0xff]
      %v484 = vld [vmem:[%s435 + $0x168] sm:$0xff]
      %v485 = vld [vmem:[%s435 + $0x170] sm:$0xff]
      %v486 = vld [vmem:[%s435 + $0x178] sm:$0xff]
      %v487 = vld [vmem:[%s435 + $0x180] sm:$0xff]
      %v488 = vld [vmem:[%s435 + $0x188] sm:$0xff]
      %v489 = vld [vmem:[%s435 + $0x190] sm:$0xff]
      %v490 = vld [vmem:[%s435 + $0x198] sm:$0xff]
      %v491 = vld [vmem:[%s435 + $0x1a0] sm:$0xff]
      %v492 = vld [vmem:[%s435 + $0x1a8] sm:$0xff]
      %v493 = vld [vmem:[%s435 + $0x1b0] sm:$0xff]
      %v494 = vld [vmem:[%s435 + $0x1b8] sm:$0xff]
      %v495 = vld [vmem:[%s435 + $0x1c0] sm:$0xff]
      %v496 = vld [vmem:[%s435 + $0x1c8] sm:$0xff]
      %v497 = vld [vmem:[%s435 + $0x1d0] sm:$0xff]
      %v498 = vld [vmem:[%s435 + $0x1d8] sm:$0xff]
      %v499 = vld [vmem:[%s435 + $0x1e0] sm:$0xff]
      %v500 = vld [vmem:[%s435 + $0x1e8] sm:$0xff]
      %v501 = vld [vmem:[%s435 + $0x1f0] sm:$0xff]
      %v502 = vld [vmem:[%s435 + $0x1f8] sm:$0xff]
      %v503 = vld [vmem:[%s435 + $0x200] sm:$0xff]
      %v504 = vld [vmem:[%s435 + $0x208] sm:$0xf]
      %v505 = vld [vmem:[%s1] sm:$0x1]
      %v507 = vlaneseq
      %v508 = vshrl.u32 %v507, 7
      %v509 = vsub.s32 0, %v508
      %v510 = vrot.slane %v505, %v509
      %511 = vset.pattern.permute.xlu0 0
      %512 = vperm.xlu0 %511, %v510
      %v513 = vpop.permute.xlu0 %512
      %v515 = vmul.f32 %v439, %v513
      %v516 = vmul.f32 %v440, %v513
      %v517 = vmul.f32 %v441, %v513
      %v518 = vmul.f32 %v442, %v513
      %v519 = vmul.f32 %v443, %v513
      %v520 = vmul.f32 %v444, %v513
      %v521 = vmul.f32 %v445, %v513
      %v522 = vmul.f32 %v446, %v513
      %v523 = vmul.f32 %v447, %v513
      %v524 = vmul.f32 %v448, %v513
      %v525 = vmul.f32 %v449, %v513
      %v526 = vmul.f32 %v450, %v513
      %v527 = vmul.f32 %v451, %v513
      %v528 = vmul.f32 %v452, %v513
      %v529 = vmul.f32 %v453, %v513
      %v530 = vmul.f32 %v454, %v513
      %v531 = vmul.f32 %v455, %v513
      %v532 = vmul.f32 %v456, %v513
      %v533 = vmul.f32 %v457, %v513
      %v534 = vmul.f32 %v458, %v513
      %v535 = vmul.f32 %v459, %v513
      %v536 = vmul.f32 %v460, %v513
      %v537 = vmul.f32 %v461, %v513
      %v538 = vmul.f32 %v462, %v513
      %v539 = vmul.f32 %v463, %v513
      %v540 = vmul.f32 %v464, %v513
      %v541 = vmul.f32 %v465, %v513
      %v542 = vmul.f32 %v466, %v513
      %v543 = vmul.f32 %v467, %v513
      %v544 = vmul.f32 %v468, %v513
      %v545 = vmul.f32 %v469, %v513
      %v546 = vmul.f32 %v470, %v513
      %v547 = vmul.f32 %v471, %v513
      %v548 = vmul.f32 %v472, %v513
      %v549 = vmul.f32 %v473, %v513
      %v550 = vmul.f32 %v474, %v513
      %v551 = vmul.f32 %v475, %v513
      %v552 = vmul.f32 %v476, %v513
      %v553 = vmul.f32 %v477, %v513
      %v554 = vmul.f32 %v478, %v513
      %v555 = vmul.f32 %v479, %v513
      %v556 = vmul.f32 %v480, %v513
      %v557 = vmul.f32 %v481, %v513
      %v558 = vmul.f32 %v482, %v513
      %v559 = vmul.f32 %v483, %v513
      %v560 = vmul.f32 %v484, %v513
      %v561 = vmul.f32 %v485, %v513
      %v562 = vmul.f32 %v486, %v513
      %v563 = vmul.f32 %v487, %v513
      %v564 = vmul.f32 %v488, %v513
      %v565 = vmul.f32 %v489, %v513
      %v566 = vmul.f32 %v490, %v513
      %v567 = vmul.f32 %v491, %v513
      %v568 = vmul.f32 %v492, %v513
      %v569 = vmul.f32 %v493, %v513
      %v570 = vmul.f32 %v494, %v513
      %v571 = vmul.f32 %v495, %v513
      %v572 = vmul.f32 %v496, %v513
      %v573 = vmul.f32 %v497, %v513
      %v574 = vmul.f32 %v498, %v513
      %v575 = vmul.f32 %v499, %v513
      %v576 = vmul.f32 %v500, %v513
      %v577 = vmul.f32 %v501, %v513
      %v578 = vmul.f32 %v502, %v513
      %v579 = vmul.f32 %v503, %v513
      %v580 = vmul.f32 %v504, %v513
      %581 = vset.pattern.permute.xlu0 1
      %582 = vperm.xlu0 %581, %v510
      %v583 = vpop.permute.xlu0 %582
      %v585 = vadd.f32 %v515, %v583
      %v586 = vadd.f32 %v516, %v583
      %v587 = vadd.f32 %v517, %v583
      %v588 = vadd.f32 %v518, %v583
      %v589 = vadd.f32 %v519, %v583
      %v590 = vadd.f32 %v520, %v583
      %v591 = vadd.f32 %v521, %v583
      %v592 = vadd.f32 %v522, %v583
      %v593 = vadd.f32 %v523, %v583
      %v594 = vadd.f32 %v524, %v583
      %v595 = vadd.f32 %v525, %v583
      %v596 = vadd.f32 %v526, %v583
      %v597 = vadd.f32 %v527, %v583
      %v598 = vadd.f32 %v528, %v583
      %v599 = vadd.f32 %v529, %v583
      %v600 = vadd.f32 %v530, %v583
      %v601 = vadd.f32 %v531, %v583
      %v602 = vadd.f32 %v532, %v583
      %v603 = vadd.f32 %v533, %v583
      %v604 = vadd.f32 %v534, %v583
      %v605 = vadd.f32 %v535, %v583
      %v606 = vadd.f32 %v536, %v583
      %v607 = vadd.f32 %v537, %v583
      %v608 = vadd.f32 %v538, %v583
      %v609 = vadd.f32 %v539, %v583
      %v610 = vadd.f32 %v540, %v583
      %v611 = vadd.f32 %v541, %v583
      %v612 = vadd.f32 %v542, %v583
      %v613 = vadd.f32 %v543, %v583
      %v614 = vadd.f32 %v544, %v583
      %v615 = vadd.f32 %v545, %v583
      %v616 = vadd.f32 %v546, %v583
      %v617 = vadd.f32 %v547, %v583
      %v618 = vadd.f32 %v548, %v583
      %v619 = vadd.f32 %v549, %v583
      %v620 = vadd.f32 %v550, %v583
      %v621 = vadd.f32 %v551, %v583
      %v622 = vadd.f32 %v552, %v583
      %v623 = vadd.f32 %v553, %v583
      %v624 = vadd.f32 %v554, %v583
      %v625 = vadd.f32 %v555, %v583
      %v626 = vadd.f32 %v556, %v583
      %v627 = vadd.f32 %v557, %v583
      %v628 = vadd.f32 %v558, %v583
      %v629 = vadd.f32 %v559, %v583
      %v630 = vadd.f32 %v560, %v583
      %v631 = vadd.f32 %v561, %v583
      %v632 = vadd.f32 %v562, %v583
      %v633 = vadd.f32 %v563, %v583
      %v634 = vadd.f32 %v564, %v583
      %v635 = vadd.f32 %v565, %v583
      %v636 = vadd.f32 %v566, %v583
      %v637 = vadd.f32 %v567, %v583
      %v638 = vadd.f32 %v568, %v583
      %v639 = vadd.f32 %v569, %v583
      %v640 = vadd.f32 %v570, %v583
      %v641 = vadd.f32 %v571, %v583
      %v642 = vadd.f32 %v572, %v583
      %v643 = vadd.f32 %v573, %v583
      %v644 = vadd.f32 %v574, %v583
      %v645 = vadd.f32 %v575, %v583
      %v646 = vadd.f32 %v576, %v583
      %v647 = vadd.f32 %v577, %v583
      %v648 = vadd.f32 %v578, %v583
      %v649 = vadd.f32 %v579, %v583
      %v650 = vadd.f32 %v580, %v583
      %v651 = vld [vmem:[%s3] sm:$0x1]
      %v653 = vlaneseq
      %v654 = vshrl.u32 %v653, 7
      %v655 = vsub.s32 0, %v654
      %v656 = vrot.slane %v651, %v655
      %v658 = vadd.f32 %v656, 0.0
      %v659 = vld [vmem:[%s2] sm:$0x7f]
      %vm660 = vcmask 56320
      %v662 = vsel %vm660, %v585, 0
      %v665 = vsel %vm660, %v586, 0
      %v668 = vsel %vm660, %v587, 0
      %v671 = vsel %vm660, %v588, 0
      %v674 = vsel %vm660, %v589, 0
      %v677 = vsel %vm660, %v590, 0
      %v680 = vsel %vm660, %v591, 0
      %v683 = vsel %vm660, %v592, 0
      %v686 = vsel %vm660, %v593, 0
      %v689 = vsel %vm660, %v594, 0
      %v692 = vsel %vm660, %v595, 0
      %v695 = vsel %vm660, %v596, 0
      %v698 = vsel %vm660, %v597, 0
      %v701 = vsel %vm660, %v598, 0
      %v704 = vsel %vm660, %v599, 0
      %v707 = vsel %vm660, %v600, 0
      %v710 = vsel %vm660, %v601, 0
      %v713 = vsel %vm660, %v602, 0
      %v716 = vsel %vm660, %v603, 0
      %v719 = vsel %vm660, %v604, 0
      %v722 = vsel %vm660, %v605, 0
      %v725 = vsel %vm660, %v606, 0
      %v728 = vsel %vm660, %v607, 0
      %v731 = vsel %vm660, %v608, 0
      %v734 = vsel %vm660, %v609, 0
      %v737 = vsel %vm660, %v610, 0
      %v740 = vsel %vm660, %v611, 0
      %v743 = vsel %vm660, %v612, 0
      %v746 = vsel %vm660, %v613, 0
      %v749 = vsel %vm660, %v614, 0
      %v752 = vsel %vm660, %v615, 0
      %v755 = vsel %vm660, %v616, 0
      %v758 = vsel %vm660, %v617, 0
      %v761 = vsel %vm660, %v618, 0
      %v764 = vsel %vm660, %v619, 0
      %v767 = vsel %vm660, %v620, 0
      %v770 = vsel %vm660, %v621, 0
      %v773 = vsel %vm660, %v622, 0
      %v776 = vsel %vm660, %v623, 0
      %v779 = vsel %vm660, %v624, 0
      %v782 = vsel %vm660, %v625, 0
      %v785 = vsel %vm660, %v626, 0
      %v788 = vsel %vm660, %v627, 0
      %v791 = vsel %vm660, %v628, 0
      %v794 = vsel %vm660, %v629, 0
      %v797 = vsel %vm660, %v630, 0
      %v800 = vsel %vm660, %v631, 0
      %v803 = vsel %vm660, %v632, 0
      %v806 = vsel %vm660, %v633, 0
      %v809 = vsel %vm660, %v634, 0
      %v812 = vsel %vm660, %v635, 0
      %v815 = vsel %vm660, %v636, 0
      %v818 = vsel %vm660, %v637, 0
      %v821 = vsel %vm660, %v638, 0
      %v824 = vsel %vm660, %v639, 0
      %v827 = vsel %vm660, %v640, 0
      %v830 = vsel %vm660, %v641, 0
      %v833 = vsel %vm660, %v642, 0
      %v836 = vsel %vm660, %v643, 0
      %v839 = vsel %vm660, %v644, 0
      %v842 = vsel %vm660, %v645, 0
      %v845 = vsel %vm660, %v646, 0
      %v848 = vsel %vm660, %v647, 0
      %v851 = vsel %vm660, %v648, 0
      %v854 = vsel %vm660, %v649, 0
      %vm856 = vcmask 1046528
      %v858 = vsel %vm856, %v659, 0
      %860 = vmatprep.subr.mxu0 0.0
      %861 = vmatpush1.msra.mxu0 %v858
      %862 = vmatprep.subr.mxu0 0.0
      %863 = vmatpush1.msra.mxu0 0.0
      %864 = vmatprep.subr.mxu0 0.0
      %865 = vmatpush1.msra.mxu0 0.0
      %866 = vmatprep.subr.mxu0 0.0
      %867 = vmatpush1.msra.mxu0 0.0
      %868 = vmatprep.subr.mxu0 0.0
      %869 = vmatpush1.msra.mxu0 0.0
      %870 = vmatprep.subr.mxu0 0.0
      %871 = vmatpush1.msra.mxu0 0.0
      %872 = vmatprep.subr.mxu0 0.0
      %873 = vmatpush1.msra.mxu0 0.0
      %874 = vmatprep.subr.mxu0 0.0
      %875 = vmatpush1.msra.mxu0 0.0
      %876 = vmatprep.subr.mxu0 0.0
      %877 = vmatpush1.msra.mxu0 0.0
      %878 = vmatprep.subr.mxu0 0.0
      %879 = vmatpush1.msra.mxu0 0.0
      %880 = vmatprep.subr.mxu0 0.0
      %881 = vmatpush1.msra.mxu0 0.0
      %882 = vmatprep.subr.mxu0 0.0
      %883 = vmatpush1.msra.mxu0 0.0
      %884 = vmatprep.subr.mxu0 0.0
      %885 = vmatpush1.msra.mxu0 0.0
      %886 = vmatprep.subr.mxu0 0.0
      %887 = vmatpush1.msra.mxu0 0.0
      %888 = vmatprep.subr.mxu0 0.0
      %889 = vmatpush1.msra.mxu0 0.0
      %890 = vmatprep.subr.mxu0 0.0
      %891 = vmatpush1.msra.mxu0 0.0
      %892 = vmatprep.subr.mxu0 0.0
      %893 = vmatpush1.msra.mxu0 0.0
      %894 = vmatprep.subr.mxu0 0.0
      %895 = vmatpush1.msra.mxu0 0.0
      %896 = vmatprep.subr.mxu0 0.0
      %897 = vmatpush1.msra.mxu0 0.0
      %898 = vmatprep.subr.mxu0 0.0
      %899 = vmatpush1.msra.mxu0 0.0
      %900 = vmatprep.subr.mxu0 0.0
      %901 = vmatpush1.msra.mxu0 0.0
      %902 = vmatprep.subr.mxu0 0.0
      %903 = vmatpush1.msra.mxu0 0.0
      %904 = vmatprep.subr.mxu0 0.0
      %905 = vmatpush1.msra.mxu0 0.0
      %906 = vmatprep.subr.mxu0 0.0
      %907 = vmatpush1.msra.mxu0 0.0
      %908 = vmatprep.subr.mxu0 0.0
      %909 = vmatpush1.msra.mxu0 0.0
      %910 = vmatprep.subr.mxu0 0.0
      %911 = vmatpush1.msra.mxu0 0.0
      %912 = vmatprep.subr.mxu0 0.0
      %913 = vmatpush1.msra.mxu0 0.0
      %914 = vmatprep.subr.mxu0 0.0
      %915 = vmatpush1.msra.mxu0 0.0
      %916 = vmatprep.subr.mxu0 0.0
      %917 = vmatpush1.msra.mxu0 0.0
      %918 = vmatprep.subr.mxu0 0.0
      %919 = vmatpush1.msra.mxu0 0.0
      %920 = vmatprep.subr.mxu0 0.0
      %921 = vmatpush1.msra.mxu0 0.0
      %922 = vmatprep.subr.mxu0 0.0
      %923 = vmatpush1.msra.mxu0 0.0
      %924 = vmatprep.mubr.f32.mxu0 0.0
      %925 = vmatmul.mubr.f32.gmra.mrb[0].mxu0 %v662
      %v926 = vpop.f32.mrb[0].mxu0
      %v927 = vadd.f32 0.0, %v926
      %v928 = vpop.f32.mrb[0].mxu0
      %929 = vmatprep.mubr.f32.mxu0 0.0
      %930 = vmatmul.mubr.f32.gmra.mrb[0].mxu0 %v665
      %v931 = vpop.f32.mrb[0].mxu0
      %v932 = vadd.f32 0.0, %v931
      %v933 = vpop.f32.mrb[0].mxu0
      %934 = vmatprep.mubr.f32.mxu0 0.0
      %935 = vmatmul.mubr.f32.gmra.mrb[0].mxu0 %v668
      %v936 = vpop.f32.mrb[0].mxu0
      %v937 = vadd.f32 0.0, %v936
      %v938 = vpop.f32.mrb[0].mxu0
      %939 = vmatprep.mubr.f32.mxu0 0.0
      %940 = vmatmul.mubr.f32.gmra.mrb[0].mxu0 %v671
      %v941 = vpop.f32.mrb[0].mxu0
      %v942 = vadd.f32 0.0, %v941
      %v943 = vpop.f32.mrb[0].mxu0
      %944 = vmatprep.mubr.f32.mxu0 0.0
      %945 = vmatmul.mubr.f32.gmra.mrb[0].mxu0 %v674
      %v946 = vpop.f32.mrb[0].mxu0
      %v947 = vadd.f32 0.0, %v946
      %v948 = vpop.f32.mrb[0].mxu0
      %949 = vmatprep.mubr.f32.mxu0 0.0
      %950 = vmatmul.mubr.f32.gmra.mrb[0].mxu0 %v677
      %v951 = vpop.f32.mrb[0].mxu0
      %v952 = vadd.f32 0.0, %v951
      %v953 = vpop.f32.mrb[0].mxu0
      %954 = vmatprep.mubr.f32.mxu0 0.0
      %955 = vmatmul.mubr.f32.gmra.mrb[0].mxu0 %v680
      %v956 = vpop.f32.mrb[0].mxu0
      %v957 = vadd.f32 0.0, %v956
      %v958 = vpop.f32.mrb[0].mxu0
      %959 = vmatprep.mubr.f32.mxu0 0.0
      %960 = vmatmul.mubr.f32.gmra.mrb[0].mxu0 %v683
      %v961 = vpop.f32.mrb[0].mxu0
      %v962 = vadd.f32 0.0, %v961
      %v963 = vpop.f32.mrb[0].mxu0
      %964 = vmatprep.mubr.f32.mxu0 0.0
      %965 = vmatmul.mubr.f32.gmra.mrb[0].mxu0 %v686
      %v966 = vpop.f32.mrb[0].mxu0
      %v967 = vadd.f32 0.0, %v966
      %v968 = vpop.f32.mrb[0].mxu0
      %969 = vmatprep.mubr.f32.mxu0 0.0
      %970 = vmatmul.mubr.f32.gmra.mrb[0].mxu0 %v689
      %v971 = vpop.f32.mrb[0].mxu0
      %v972 = vadd.f32 0.0, %v971
      %v973 = vpop.f32.mrb[0].mxu0
      %974 = vmatprep.mubr.f32.mxu0 0.0
      %975 = vmatmul.mubr.f32.gmra.mrb[0].mxu0 %v692
      %v976 = vpop.f32.mrb[0].mxu0
      %v977 = vadd.f32 0.0, %v976
      %v978 = vpop.f32.mrb[0].mxu0
      %979 = vmatprep.mubr.f32.mxu0 0.0
      %980 = vmatmul.mubr.f32.gmra.mrb[0].mxu0 %v695
      %v981 = vpop.f32.mrb[0].mxu0
      %v982 = vadd.f32 0.0, %v981
      %v983 = vpop.f32.mrb[0].mxu0
      %984 = vmatprep.mubr.f32.mxu0 0.0
      %985 = vmatmul.mubr.f32.gmra.mrb[0].mxu0 %v698
      %v986 = vpop.f32.mrb[0].mxu0
      %v987 = vadd.f32 0.0, %v986
      %v988 = vpop.f32.mrb[0].mxu0
      %989 = vmatprep.mubr.f32.mxu0 0.0
      %990 = vmatmul.mubr.f32.gmra.mrb[0].mxu0 %v701
      %v991 = vpop.f32.mrb[0].mxu0
      %v992 = vadd.f32 0.0, %v991
      %v993 = vpop.f32.mrb[0].mxu0
      %994 = vmatprep.mubr.f32.mxu0 0.0
      %995 = vmatmul.mubr.f32.gmra.mrb[0].mxu0 %v704
      %v996 = vpop.f32.mrb[0].mxu0
      %v997 = vadd.f32 0.0, %v996
      %v998 = vpop.f32.mrb[0].mxu0
      %999 = vmatprep.mubr.f32.mxu0 0.0
      %1000 = vmatmul.mubr.f32.gmra.mrb[0].mxu0 %v707
      %v1001 = vpop.f32.mrb[0].mxu0
      %v1002 = vadd.f32 0.0, %v1001
      %v1003 = vpop.f32.mrb[0].mxu0
      %1004 = vmatprep.mubr.f32.mxu0 0.0
      %1005 = vmatmul.mubr.f32.gmra.mrb[0].mxu0 %v710
      %v1006 = vpop.f32.mrb[0].mxu0
      %v1007 = vadd.f32 0.0, %v1006
      %v1008 = vpop.f32.mrb[0].mxu0
      %1009 = vmatprep.mubr.f32.mxu0 0.0
      %1010 = vmatmul.mubr.f32.gmra.mrb[0].mxu0 %v713
      %v1011 = vpop.f32.mrb[0].mxu0
      %v1012 = vadd.f32 0.0, %v1011
      %v1013 = vpop.f32.mrb[0].mxu0
      %1014 = vmatprep.mubr.f32.mxu0 0.0
      %1015 = vmatmul.mubr.f32.gmra.mrb[0].mxu0 %v716
      %v1016 = vpop.f32.mrb[0].mxu0
      %v1017 = vadd.f32 0.0, %v1016
      %v1018 = vpop.f32.mrb[0].mxu0
      %1019 = vmatprep.mubr.f32.mxu0 0.0
      %1020 = vmatmul.mubr.f32.gmra.mrb[0].mxu0 %v719
      %v1021 = vpop.f32.mrb[0].mxu0
      %v1022 = vadd.f32 0.0, %v1021
      %v1023 = vpop.f32.mrb[0].mxu0
      %1024 = vmatprep.mubr.f32.mxu0 0.0
      %1025 = vmatmul.mubr.f32.gmra.mrb[0].mxu0 %v722
      %v1026 = vpop.f32.mrb[0].mxu0
      %v1027 = vadd.f32 0.0, %v1026
      %v1028 = vpop.f32.mrb[0].mxu0
      %1029 = vmatprep.mubr.f32.mxu0 0.0
      %1030 = vmatmul.mubr.f32.gmra.mrb[0].mxu0 %v725
      %v1031 = vpop.f32.mrb[0].mxu0
      %v1032 = vadd.f32 0.0, %v1031
      %v1033 = vpop.f32.mrb[0].mxu0
      %1034 = vmatprep.mubr.f32.mxu0 0.0
      %1035 = vmatmul.mubr.f32.gmra.mrb[0].mxu0 %v728
      %v1036 = vpop.f32.mrb[0].mxu0
      %v1037 = vadd.f32 0.0, %v1036
      %v1038 = vpop.f32.mrb[0].mxu0
      %1039 = vmatprep.mubr.f32.mxu0 0.0
      %1040 = vmatmul.mubr.f32.gmra.mrb[0].mxu0 %v731
      %v1041 = vpop.f32.mrb[0].mxu0
      %v1042 = vadd.f32 0.0, %v1041
      %v1043 = vpop.f32.mrb[0].mxu0
      %1044 = vmatprep.mubr.f32.mxu0 0.0
      %1045 = vmatmul.mubr.f32.gmra.mrb[0].mxu0 %v734
      %v1046 = vpop.f32.mrb[0].mxu0
      %v1047 = vadd.f32 0.0, %v1046
      %v1048 = vpop.f32.mrb[0].mxu0
      %1049 = vmatprep.mubr.f32.mxu0 0.0
      %1050 = vmatmul.mubr.f32.gmra.mrb[0].mxu0 %v737
      %v1051 = vpop.f32.mrb[0].mxu0
      %v1052 = vadd.f32 0.0, %v1051
      %v1053 = vpop.f32.mrb[0].mxu0
      %1054 = vmatprep.mubr.f32.mxu0 0.0
      %1055 = vmatmul.mubr.f32.gmra.mrb[0].mxu0 %v740
      %v1056 = vpop.f32.mrb[0].mxu0
      %v1057 = vadd.f32 0.0, %v1056
      %v1058 = vpop.f32.mrb[0].mxu0
      %1059 = vmatprep.mubr.f32.mxu0 0.0
      %1060 = vmatmul.mubr.f32.gmra.mrb[0].mxu0 %v743
      %v1061 = vpop.f32.mrb[0].mxu0
      %v1062 = vadd.f32 0.0, %v1061
      %v1063 = vpop.f32.mrb[0].mxu0
      %1064 = vmatprep.mubr.f32.mxu0 0.0
      %1065 = vmatmul.mubr.f32.gmra.mrb[0].mxu0 %v746
      %v1066 = vpop.f32.mrb[0].mxu0
      %v1067 = vadd.f32 0.0, %v1066
      %v1068 = vpop.f32.mrb[0].mxu0
      %1069 = vmatprep.mubr.f32.mxu0 0.0
      %1070 = vmatmul.mubr.f32.gmra.mrb[0].mxu0 %v749
      %v1071 = vpop.f32.mrb[0].mxu0
      %v1072 = vadd.f32 0.0, %v1071
      %v1073 = vpop.f32.mrb[0].mxu0
      %1074 = vmatprep.mubr.f32.mxu0 0.0
      %1075 = vmatmul.mubr.f32.gmra.mrb[0].mxu0 %v752
      %v1076 = vpop.f32.mrb[0].mxu0
      %v1077 = vadd.f32 0.0, %v1076
      %v1078 = vpop.f32.mrb[0].mxu0
      %1079 = vmatprep.mubr.f32.mxu0 0.0
      %1080 = vmatmul.mubr.f32.gmra.mrb[0].mxu0 %v755
      %v1081 = vpop.f32.mrb[0].mxu0
      %v1082 = vadd.f32 0.0, %v1081
      %v1083 = vpop.f32.mrb[0].mxu0
      %1084 = vmatprep.mubr.f32.mxu0 0.0
      %1085 = vmatmul.mubr.f32.gmra.mrb[0].mxu0 %v758
      %v1086 = vpop.f32.mrb[0].mxu0
      %v1087 = vadd.f32 0.0, %v1086
      %v1088 = vpop.f32.mrb[0].mxu0
      %1089 = vmatprep.mubr.f32.mxu0 0.0
      %1090 = vmatmul.mubr.f32.gmra.mrb[0].mxu0 %v761
      %v1091 = vpop.f32.mrb[0].mxu0
      %v1092 = vadd.f32 0.0, %v1091
      %v1093 = vpop.f32.mrb[0].mxu0
      %1094 = vmatprep.mubr.f32.mxu0 0.0
      %1095 = vmatmul.mubr.f32.gmra.mrb[0].mxu0 %v764
      %v1096 = vpop.f32.mrb[0].mxu0
      %v1097 = vadd.f32 0.0, %v1096
      %v1098 = vpop.f32.mrb[0].mxu0
      %1099 = vmatprep.mubr.f32.mxu0 0.0
      %1100 = vmatmul.mubr.f32.gmra.mrb[0].mxu0 %v767
      %v1101 = vpop.f32.mrb[0].mxu0
      %v1102 = vadd.f32 0.0, %v1101
      %v1103 = vpop.f32.mrb[0].mxu0
      %1104 = vmatprep.mubr.f32.mxu0 0.0
      %1105 = vmatmul.mubr.f32.gmra.mrb[0].mxu0 %v770
      %v1106 = vpop.f32.mrb[0].mxu0
      %v1107 = vadd.f32 0.0, %v1106
      %v1108 = vpop.f32.mrb[0].mxu0
      %1109 = vmatprep.mubr.f32.mxu0 0.0
      %1110 = vmatmul.mubr.f32.gmra.mrb[0].mxu0 %v773
      %v1111 = vpop.f32.mrb[0].mxu0
      %v1112 = vadd.f32 0.0, %v1111
      %v1113 = vpop.f32.mrb[0].mxu0
      %1114 = vmatprep.mubr.f32.mxu0 0.0
      %1115 = vmatmul.mubr.f32.gmra.mrb[0].mxu0 %v776
      %v1116 = vpop.f32.mrb[0].mxu0
      %v1117 = vadd.f32 0.0, %v1116
      %v1118 = vpop.f32.mrb[0].mxu0
      %1119 = vmatprep.mubr.f32.mxu0 0.0
      %1120 = vmatmul.mubr.f32.gmra.mrb[0].mxu0 %v779
      %v1121 = vpop.f32.mrb[0].mxu0
      %v1122 = vadd.f32 0.0, %v1121
      %v1123 = vpop.f32.mrb[0].mxu0
      %1124 = vmatprep.mubr.f32.mxu0 0.0
      %1125 = vmatmul.mubr.f32.gmra.mrb[0].mxu0 %v782
      %v1126 = vpop.f32.mrb[0].mxu0
      %v1127 = vadd.f32 0.0, %v1126
      %v1128 = vpop.f32.mrb[0].mxu0
      %1129 = vmatprep.mubr.f32.mxu0 0.0
      %1130 = vmatmul.mubr.f32.gmra.mrb[0].mxu0 %v785
      %v1131 = vpop.f32.mrb[0].mxu0
      %v1132 = vadd.f32 0.0, %v1131
      %v1133 = vpop.f32.mrb[0].mxu0
      %1134 = vmatprep.mubr.f32.mxu0 0.0
      %1135 = vmatmul.mubr.f32.gmra.mrb[0].mxu0 %v788
      %v1136 = vpop.f32.mrb[0].mxu0
      %v1137 = vadd.f32 0.0, %v1136
      %v1138 = vpop.f32.mrb[0].mxu0
      %1139 = vmatprep.mubr.f32.mxu0 0.0
      %1140 = vmatmul.mubr.f32.gmra.mrb[0].mxu0 %v791
      %v1141 = vpop.f32.mrb[0].mxu0
      %v1142 = vadd.f32 0.0, %v1141
      %v1143 = vpop.f32.mrb[0].mxu0
      %1144 = vmatprep.mubr.f32.mxu0 0.0
      %1145 = vmatmul.mubr.f32.gmra.mrb[0].mxu0 %v794
      %v1146 = vpop.f32.mrb[0].mxu0
      %v1147 = vadd.f32 0.0, %v1146
      %v1148 = vpop.f32.mrb[0].mxu0
      %1149 = vmatprep.mubr.f32.mxu0 0.0
      %1150 = vmatmul.mubr.f32.gmra.mrb[0].mxu0 %v797
      %v1151 = vpop.f32.mrb[0].mxu0
      %v1152 = vadd.f32 0.0, %v1151
      %v1153 = vpop.f32.mrb[0].mxu0
      %1154 = vmatprep.mubr.f32.mxu0 0.0
      %1155 = vmatmul.mubr.f32.gmra.mrb[0].mxu0 %v800
      %v1156 = vpop.f32.mrb[0].mxu0
      %v1157 = vadd.f32 0.0, %v1156
      %v1158 = vpop.f32.mrb[0].mxu0
      %1159 = vmatprep.mubr.f32.mxu0 0.0
      %1160 = vmatmul.mubr.f32.gmra.mrb[0].mxu0 %v803
      %v1161 = vpop.f32.mrb[0].mxu0
      %v1162 = vadd.f32 0.0, %v1161
      %v1163 = vpop.f32.mrb[0].mxu0
      %1164 = vmatprep.mubr.f32.mxu0 0.0
      %1165 = vmatmul.mubr.f32.gmra.mrb[0].mxu0 %v806
      %v1166 = vpop.f32.mrb[0].mxu0
      %v1167 = vadd.f32 0.0, %v1166
      %v1168 = vpop.f32.mrb[0].mxu0
      %1169 = vmatprep.mubr.f32.mxu0 0.0
      %1170 = vmatmul.mubr.f32.gmra.mrb[0].mxu0 %v809
      %v1171 = vpop.f32.mrb[0].mxu0
      %v1172 = vadd.f32 0.0, %v1171
      %v1173 = vpop.f32.mrb[0].mxu0
      %1174 = vmatprep.mubr.f32.mxu0 0.0
      %1175 = vmatmul.mubr.f32.gmra.mrb[0].mxu0 %v812
      %v1176 = vpop.f32.mrb[0].mxu0
      %v1177 = vadd.f32 0.0, %v1176
      %v1178 = vpop.f32.mrb[0].mxu0
      %1179 = vmatprep.mubr.f32.mxu0 0.0
      %1180 = vmatmul.mubr.f32.gmra.mrb[0].mxu0 %v815
      %v1181 = vpop.f32.mrb[0].mxu0
      %v1182 = vadd.f32 0.0, %v1181
      %v1183 = vpop.f32.mrb[0].mxu0
      %1184 = vmatprep.mubr.f32.mxu0 0.0
      %1185 = vmatmul.mubr.f32.gmra.mrb[0].mxu0 %v818
      %v1186 = vpop.f32.mrb[0].mxu0
      %v1187 = vadd.f32 0.0, %v1186
      %v1188 = vpop.f32.mrb[0].mxu0
      %1189 = vmatprep.mubr.f32.mxu0 0.0
      %1190 = vmatmul.mubr.f32.gmra.mrb[0].mxu0 %v821
      %v1191 = vpop.f32.mrb[0].mxu0
      %v1192 = vadd.f32 0.0, %v1191
      %v1193 = vpop.f32.mrb[0].mxu0
      %1194 = vmatprep.mubr.f32.mxu0 0.0
      %1195 = vmatmul.mubr.f32.gmra.mrb[0].mxu0 %v824
      %v1196 = vpop.f32.mrb[0].mxu0
      %v1197 = vadd.f32 0.0, %v1196
      %v1198 = vpop.f32.mrb[0].mxu0
      %1199 = vmatprep.mubr.f32.mxu0 0.0
      %1200 = vmatmul.mubr.f32.gmra.mrb[0].mxu0 %v827
      %v1201 = vpop.f32.mrb[0].mxu0
      %v1202 = vadd.f32 0.0, %v1201
      %v1203 = vpop.f32.mrb[0].mxu0
      %1204 = vmatprep.mubr.f32.mxu0 0.0
      %1205 = vmatmul.mubr.f32.gmra.mrb[0].mxu0 %v830
      %v1206 = vpop.f32.mrb[0].mxu0
      %v1207 = vadd.f32 0.0, %v1206
      %v1208 = vpop.f32.mrb[0].mxu0
      %1209 = vmatprep.mubr.f32.mxu0 0.0
      %1210 = vmatmul.mubr.f32.gmra.mrb[0].mxu0 %v833
      %v1211 = vpop.f32.mrb[0].mxu0
      %v1212 = vadd.f32 0.0, %v1211
      %v1213 = vpop.f32.mrb[0].mxu0
      %1214 = vmatprep.mubr.f32.mxu0 0.0
      %1215 = vmatmul.mubr.f32.gmra.mrb[0].mxu0 %v836
      %v1216 = vpop.f32.mrb[0].mxu0
      %v1217 = vadd.f32 0.0, %v1216
      %v1218 = vpop.f32.mrb[0].mxu0
      %1219 = vmatprep.mubr.f32.mxu0 0.0
      %1220 = vmatmul.mubr.f32.gmra.mrb[0].mxu0 %v839
      %v1221 = vpop.f32.mrb[0].mxu0
      %v1222 = vadd.f32 0.0, %v1221
      %v1223 = vpop.f32.mrb[0].mxu0
      %1224 = vmatprep.mubr.f32.mxu0 0.0
      %1225 = vmatmul.mubr.f32.gmra.mrb[0].mxu0 %v842
      %v1226 = vpop.f32.mrb[0].mxu0
      %v1227 = vadd.f32 0.0, %v1226
      %v1228 = vpop.f32.mrb[0].mxu0
      %1229 = vmatprep.mubr.f32.mxu0 0.0
      %1230 = vmatmul.mubr.f32.gmra.mrb[0].mxu0 %v845
      %v1231 = vpop.f32.mrb[0].mxu0
      %v1232 = vadd.f32 0.0, %v1231
      %v1233 = vpop.f32.mrb[0].mxu0
      %1234 = vmatprep.mubr.f32.mxu0 0.0
      %1235 = vmatmul.mubr.f32.gmra.mrb[0].mxu0 %v848
      %v1236 = vpop.f32.mrb[0].mxu0
      %v1237 = vadd.f32 0.0, %v1236
      %v1238 = vpop.f32.mrb[0].mxu0
      %1239 = vmatprep.mubr.f32.mxu0 0.0
      %1240 = vmatmul.mubr.f32.gmra.mrb[0].mxu0 %v851
      %v1241 = vpop.f32.mrb[0].mxu0
      %v1242 = vadd.f32 0.0, %v1241
      %v1243 = vpop.f32.mrb[0].mxu0
      %1244 = vmatprep.mubr.f32.mxu0 0.0
      %1245 = vmatmul.mubr.f32.gmra.mrb[0].mxu0 %v854
      %v1246 = vpop.f32.mrb[0].mxu0
      %v1247 = vadd.f32 0.0, %v1246
      %v1248 = vpop.f32.mrb[0].mxu0
      %1249 = vdwg.mxu0
      %v1250 = vadd.f32 %v658, %v927
      %v1251 = vadd.f32 %v658, %v932
      %v1252 = vadd.f32 %v658, %v937
      %v1253 = vadd.f32 %v658, %v942
      %v1254 = vadd.f32 %v658, %v947
      %v1255 = vadd.f32 %v658, %v952
      %v1256 = vadd.f32 %v658, %v957
      %v1257 = vadd.f32 %v658, %v962
      %v1258 = vadd.f32 %v658, %v967
      %v1259 = vadd.f32 %v658, %v972
      %v1260 = vadd.f32 %v658, %v977
      %v1261 = vadd.f32 %v658, %v982
      %v1262 = vadd.f32 %v658, %v987
      %v1263 = vadd.f32 %v658, %v992
      %v1264 = vadd.f32 %v658, %v997
      %v1265 = vadd.f32 %v658, %v1002
      %v1266 = vadd.f32 %v658, %v1007
      %v1267 = vadd.f32 %v658, %v1012
      %v1268 = vadd.f32 %v658, %v1017
      %v1269 = vadd.f32 %v658, %v1022
      %v1270 = vadd.f32 %v658, %v1027
      %v1271 = vadd.f32 %v658, %v1032
      %v1272 = vadd.f32 %v658, %v1037
      %v1273 = vadd.f32 %v658, %v1042
      %v1274 = vadd.f32 %v658, %v1047
      %v1275 = vadd.f32 %v658, %v1052
      %v1276 = vadd.f32 %v658, %v1057
      %v1277 = vadd.f32 %v658, %v1062
      %v1278 = vadd.f32 %v658, %v1067
      %v1279 = vadd.f32 %v658, %v1072
      %v1280 = vadd.f32 %v658, %v1077
      %v1281 = vadd.f32 %v658, %v1082
      %v1282 = vadd.f32 %v658, %v1087
      %v1283 = vadd.f32 %v658, %v1092
      %v1284 = vadd.f32 %v658, %v1097
      %v1285 = vadd.f32 %v658, %v1102
      %v1286 = vadd.f32 %v658, %v1107
      %v1287 = vadd.f32 %v658, %v1112
      %v1288 = vadd.f32 %v658, %v1117
      %v1289 = vadd.f32 %v658, %v1122
      %v1290 = vadd.f32 %v658, %v1127
      %v1291 = vadd.f32 %v658, %v1132
      %v1292 = vadd.f32 %v658, %v1137
      %v1293 = vadd.f32 %v658, %v1142
      %v1294 = vadd.f32 %v658, %v1147
      %v1295 = vadd.f32 %v658, %v1152
      %v1296 = vadd.f32 %v658, %v1157
      %v1297 = vadd.f32 %v658, %v1162
      %v1298 = vadd.f32 %v658, %v1167
      %v1299 = vadd.f32 %v658, %v1172
      %v1300 = vadd.f32 %v658, %v1177
      %v1301 = vadd.f32 %v658, %v1182
      %v1302 = vadd.f32 %v658, %v1187
      %v1303 = vadd.f32 %v658, %v1192
      %v1304 = vadd.f32 %v658, %v1197
      %v1305 = vadd.f32 %v658, %v1202
      %v1306 = vadd.f32 %v658, %v1207
      %v1307 = vadd.f32 %v658, %v1212
      %v1308 = vadd.f32 %v658, %v1217
      %v1309 = vadd.f32 %v658, %v1222
      %v1310 = vadd.f32 %v658, %v1227
      %v1311 = vadd.f32 %v658, %v1232
      %v1312 = vadd.f32 %v658, %v1237
      %v1313 = vadd.f32 %v658, %v1242
      %v1314 = vadd.f32 %v658, %v1247
      %s1315 = scalar_lea.vmem %s2, 8
      %v1316 = vld [vmem:[%s1315] sm:$0x7f]
      %v1318 = vrot.slane %v585, 1
      %v1319 = vrot.slane %v586, 1
      %v1320 = vsel %vm856, %v1318, %v1319
      %v1321 = vrot.slane %v587, 1
      %v1322 = vsel %vm856, %v1319, %v1321
      %v1323 = vrot.slane %v588, 1
      %v1324 = vsel %vm856, %v1321, %v1323
      %v1325 = vrot.slane %v589, 1
      %v1326 = vsel %vm856, %v1323, %v1325
      %v1327 = vrot.slane %v590, 1
      %v1328 = vsel %vm856, %v1325, %v1327
      %v1329 = vrot.slane %v591, 1
      %v1330 = vsel %vm856, %v1327, %v1329
      %v1331 = vrot.slane %v592, 1
      %v1332 = vsel %vm856, %v1329, %v1331
      %v1333 = vrot.slane %v593, 1
      %v1334 = vsel %vm856, %v1331, %v1333
      %v1335 = vrot.slane %v594, 1
      %v1336 = vsel %vm856, %v1333, %v1335
      %v1337 = vrot.slane %v595, 1
      %v1338 = vsel %vm856, %v1335, %v1337
      %v1339 = vrot.slane %v596, 1
      %v1340 = vsel %vm856, %v1337, %v1339
      %v1341 = vrot.slane %v597, 1
      %v1342 = vsel %vm856, %v1339, %v1341
      %v1343 = vrot.slane %v598, 1
      %v1344 = vsel %vm856, %v1341, %v1343
      %v1345 = vrot.slane %v599, 1
      %v1346 = vsel %vm856, %v1343, %v1345
      %v1347 = vrot.slane %v600, 1
      %v1348 = vsel %vm856, %v1345, %v1347
      %v1349 = vrot.slane %v601, 1
      %v1350 = vsel %vm856, %v1347, %v1349
      %v1351 = vrot.slane %v602, 1
      %v1352 = vsel %vm856, %v1349, %v1351
      %v1353 = vrot.slane %v603, 1
      %v1354 = vsel %vm856, %v1351, %v1353
      %v1355 = vrot.slane %v604, 1
      %v1356 = vsel %vm856, %v1353, %v1355
      %v1357 = vrot.slane %v605, 1
      %v1358 = vsel %vm856, %v1355, %v1357
      %v1359 = vrot.slane %v606, 1
      %v1360 = vsel %vm856, %v1357, %v1359
      %v1361 = vrot.slane %v607, 1
      %v1362 = vsel %vm856, %v1359, %v1361
      %v1363 = vrot.slane %v608, 1
      %v1364 = vsel %vm856, %v1361, %v1363
      %v1365 = vrot.slane %v609, 1
      %v1366 = vsel %vm856, %v1363, %v1365
      %v1367 = vrot.slane %v610, 1
      %v1368 = vsel %vm856, %v1365, %v1367
      %v1369 = vrot.slane %v611, 1
      %v1370 = vsel %vm856, %v1367, %v1369
      %v1371 = vrot.slane %v612, 1
      %v1372 = vsel %vm856, %v1369, %v1371
      %v1373 = vrot.slane %v613, 1
      %v1374 = vsel %vm856, %v1371, %v1373
      %v1375 = vrot.slane %v614, 1
      %v1376 = vsel %vm856, %v1373, %v1375
      %v1377 = vrot.slane %v615, 1
      %v1378 = vsel %vm856, %v1375, %v1377
      %v1379 = vrot.slane %v616, 1
      %v1380 = vsel %vm856, %v1377, %v1379
      %v1381 = vrot.slane %v617, 1
      %v1382 = vsel %vm856, %v1379, %v1381
      %v1383 = vrot.slane %v618, 1
      %v1384 = vsel %vm856, %v1381, %v1383
      %v1385 = vrot.slane %v619, 1
      %v1386 = vsel %vm856, %v1383, %v1385
      %v1387 = vrot.slane %v620, 1
      %v1388 = vsel %vm856, %v1385, %v1387
      %v1389 = vrot.slane %v621, 1
      %v1390 = vsel %vm856, %v1387, %v1389
      %v1391 = vrot.slane %v622, 1
      %v1392 = vsel %vm856, %v1389, %v1391
      %v1393 = vrot.slane %v623, 1
      %v1394 = vsel %vm856, %v1391, %v1393
      %v1395 = vrot.slane %v624, 1
      %v1396 = vsel %vm856, %v1393, %v1395
      %v1397 = vrot.slane %v625, 1
      %v1398 = vsel %vm856, %v1395, %v1397
      %v1399 = vrot.slane %v626, 1
      %v1400 = vsel %vm856, %v1397, %v1399
      %v1401 = vrot.slane %v627, 1
      %v1402 = vsel %vm856, %v1399, %v1401
      %v1403 = vrot.slane %v628, 1
      %v1404 = vsel %vm856, %v1401, %v1403
      %v1405 = vrot.slane %v629, 1
      %v1406 = vsel %vm856, %v1403, %v1405
      %v1407 = vrot.slane %v630, 1
      %v1408 = vsel %vm856, %v1405, %v1407
      %v1409 = vrot.slane %v631, 1
      %v1410 = vsel %vm856, %v1407, %v1409
      %v1411 = vrot.slane %v632, 1
      %v1412 = vsel %vm856, %v1409, %v1411
      %v1413 = vrot.slane %v633, 1
      %v1414 = vsel %vm856, %v1411, %v1413
      %v1415 = vrot.slane %v634, 1
      %v1416 = vsel %vm856, %v1413, %v1415
      %v1417 = vrot.slane %v635, 1
      %v1418 = vsel %vm856, %v1415, %v1417
      %v1419 = vrot.slane %v636, 1
      %v1420 = vsel %vm856, %v1417, %v1419
      %v1421 = vrot.slane %v637, 1
      %v1422 = vsel %vm856, %v1419, %v1421
      %v1423 = vrot.slane %v638, 1
      %v1424 = vsel %vm856, %v1421, %v1423
      %v1425 = vrot.slane %v639, 1
      %v1426 = vsel %vm856, %v1423, %v1425
      %v1427 = vrot.slane %v640, 1
      %v1428 = vsel %vm856, %v1425, %v1427
      %v1429 = vrot.slane %v641, 1
      %v1430 = vsel %vm856, %v1427, %v1429
      %v1431 = vrot.slane %v642, 1
      %v1432 = vsel %vm856, %v1429, %v1431
      %v1433 = vrot.slane %v643, 1
      %v1434 = vsel %vm856, %v1431, %v1433
      %v1435 = vrot.slane %v644, 1
      %v1436 = vsel %vm856, %v1433, %v1435
      %v1437 = vrot.slane %v645, 1
      %v1438 = vsel %vm856, %v1435, %v1437
      %v1439 = vrot.slane %v646, 1
      %v1440 = vsel %vm856, %v1437, %v1439
      %v1441 = vrot.slane %v647, 1
      %v1442 = vsel %vm856, %v1439, %v1441
      %v1443 = vrot.slane %v648, 1
      %v1444 = vsel %vm856, %v1441, %v1443
      %v1445 = vrot.slane %v649, 1
      %v1446 = vsel %vm856, %v1443, %v1445
      %v1447 = vrot.slane %v650, 1
      %v1448 = vsel %vm856, %v1445, %v1447
      %v1449 = vsel %vm660, %v1320, 0
      %v1451 = vsel %vm660, %v1322, 0
      %v1453 = vsel %vm660, %v1324, 0
      %v1455 = vsel %vm660, %v1326, 0
      %v1457 = vsel %vm660, %v1328, 0
      %v1459 = vsel %vm660, %v1330, 0
      %v1461 = vsel %vm660, %v1332, 0
      %v1463 = vsel %vm660, %v1334, 0
      %v1465 = vsel %vm660, %v1336, 0
      %v1467 = vsel %vm660, %v1338, 0
      %v1469 = vsel %vm660, %v1340, 0
      %v1471 = vsel %vm660, %v1342, 0
      %v1473 = vsel %vm660, %v1344, 0
      %v1475 = vsel %vm660, %v1346, 0
      %v1477 = vsel %vm660, %v1348, 0
      %v1479 = vsel %vm660, %v1350, 0
      %v1481 = vsel %vm660, %v1352, 0
      %v1483 = vsel %vm660, %v1354, 0
      %v1485 = vsel %vm660, %v1356, 0
      %v1487 = vsel %vm660, %v1358, 0
      %v1489 = vsel %vm660, %v1360, 0
      %v1491 = vsel %vm660, %v1362, 0
      %v1493 = vsel %vm660, %v1364, 0
      %v1495 = vsel %vm660, %v1366, 0
      %v1497 = vsel %vm660, %v1368, 0
      %v1499 = vsel %vm660, %v1370, 0
      %v1501 = vsel %vm660, %v1372, 0
      %v1503 = vsel %vm660, %v1374, 0
      %v1505 = vsel %vm660, %v1376, 0
      %v1507 = vsel %vm660, %v1378, 0
      %v1509 = vsel %vm660, %v1380, 0
      %v1511 = vsel %vm660, %v1382, 0
      %v1513 = vsel %vm660, %v1384, 0
      %v1515 = vsel %vm660, %v1386, 0
      %v1517 = vsel %vm660, %v1388, 0
      %v1519 = vsel %vm660, %v1390, 0
      %v1521 = vsel %vm660, %v1392, 0
      %v1523 = vsel %vm660, %v1394, 0
      %v1525 = vsel %vm660, %v1396, 0
      %v1527 = vsel %vm660, %v1398, 0
      %v1529 = vsel %vm660, %v1400, 0
      %v1531 = vsel %vm660, %v1402, 0
      %v1533 = vsel %vm660, %v1404, 0
      %v1535 = vsel %vm660, %v1406, 0
      %v1537 = vsel %vm660, %v1408, 0
      %v1539 = vsel %vm660, %v1410, 0
      %v1541 = vsel %vm660, %v1412, 0
      %v1543 = vsel %vm660, %v1414, 0
      %v1545 = vsel %vm660, %v1416, 0
      %v1547 = vsel %vm660, %v1418, 0
      %v1549 = vsel %vm660, %v1420, 0
      %v1551 = vsel %vm660, %v1422, 0
      %v1553 = vsel %vm660, %v1424, 0
      %v1555 = vsel %vm660, %v1426, 0
      %v1557 = vsel %vm660, %v1428, 0
      %v1559 = vsel %vm660, %v1430, 0
      %v1561 = vsel %vm660, %v1432, 0
      %v1563 = vsel %vm660, %v1434, 0
      %v1565 = vsel %vm660, %v1436, 0
      %v1567 = vsel %vm660, %v1438, 0
      %v1569 = vsel %vm660, %v1440, 0
      %v1571 = vsel %vm660, %v1442, 0
      %v1573 = vsel %vm660, %v1444, 0
      %v1575 = vsel %vm660, %v1446, 0
      %v1577 = vsel %vm660, %v1448, 0
      %v1580 = vsel %vm856, %v1316, 0
      %1582 = vmatprep.subr.mxu0 0.0
      %1583 = vmatpush1.msra.mxu0 %v1580
      %1584 = vmatprep.subr.mxu0 0.0
      %1585 = vmatpush1.msra.mxu0 0.0
      %1586 = vmatprep.subr.mxu0 0.0
      %1587 = vmatpush1.msra.mxu0 0.0
      %1588 = vmatprep.subr.mxu0 0.0
      %1589 = vmatpush1.msra.mxu0 0.0
      %1590 = vmatprep.subr.mxu0 0.0
      %1591 = vmatpush1.msra.mxu0 0.0
      %1592 = vmatprep.subr.mxu0 0.0
      %1593 = vmatpush1.msra.mxu0 0.0
      %1594 = vmatprep.subr.mxu0 0.0
      %1595 = vmatpush1.msra.mxu0 0.0
      %1596 = vmatprep.subr.mxu0 0.0
      %1597 = vmatpush1.msra.mxu0 0.0
      %1598 = vmatprep.subr.mxu0 0.0
      %1599 = vmatpush1.msra.mxu0 0.0
      %1600 = vmatprep.subr.mxu0 0.0
      %1601 = vmatpush1.msra.mxu0 0.0
      %1602 = vmatprep.subr.mxu0 0.0
      %1603 = vmatpush1.msra.mxu0 0.0
      %1604 = vmatprep.subr.mxu0 0.0
      %1605 = vmatpush1.msra.mxu0 0.0
      %1606 = vmatprep.subr.mxu0 0.0
      %1607 = vmatpush1.msra.mxu0 0.0
      %1608 = vmatprep.subr.mxu0 0.0
      %1609 = vmatpush1.msra.mxu0 0.0
      %1610 = vmatprep.subr.mxu0 0.0
      %1611 = vmatpush1.msra.mxu0 0.0
      %1612 = vmatprep.subr.mxu0 0.0
      %1613 = vmatpush1.msra.mxu0 0.0
      %1614 = vmatprep.subr.mxu0 0.0
      %1615 = vmatpush1.msra.mxu0 0.0
      %1616 = vmatprep.subr.mxu0 0.0
      %1617 = vmatpush1.msra.mxu0 0.0
      %1618 = vmatprep.subr.mxu0 0.0
      %1619 = vmatpush1.msra.mxu0 0.0
      %1620 = vmatprep.subr.mxu0 0.0
      %1621 = vmatpush1.msra.mxu0 0.0
      %1622 = vmatprep.subr.mxu0 0.0
      %1623 = vmatpush1.msra.mxu0 0.0
      %1624 = vmatprep.subr.mxu0 0.0
      %1625 = vmatpush1.msra.mxu0 0.0
      %1626 = vmatprep.subr.mxu0 0.0
      %1627 = vmatpush1.msra.mxu0 0.0
      %1628 = vmatprep.subr.mxu0 0.0
      %1629 = vmatpush1.msra.mxu0 0.0
      %1630 = vmatprep.subr.mxu0 0.0
      %1631 = vmatpush1.msra.mxu0 0.0
      %1632 = vmatprep.subr.mxu0 0.0
      %1633 = vmatpush1.msra.mxu0 0.0
      %1634 = vmatprep.subr.mxu0 0.0
      %1635 = vmatpush1.msra.mxu0 0.0
      %1636 = vmatprep.subr.mxu0 0.0
      %1637 = vmatpush1.msra.mxu0 0.0
      %1638 = vmatprep.subr.mxu0 0.0
      %1639 = vmatpush1.msra.mxu0 0.0
      %1640 = vmatprep.subr.mxu0 0.0
      %1641 = vmatpush1.msra.mxu0 0.0
      %1642 = vmatprep.subr.mxu0 0.0
      %1643 = vmatpush1.msra.mxu0 0.0
      %1644 = vmatprep.subr.mxu0 0.0
      %1645 = vmatpush1.msra.mxu0 0.0
      %1646 = vmatprep.mubr.f32.mxu0 0.0
      %1647 = vmatmul.mubr.f32.gmra.mrb[0].mxu0 %v1449
      %v1648 = vpop.f32.mrb[0].mxu0
      %v1649 = vadd.f32 0.0, %v1648
      %v1650 = vpop.f32.mrb[0].mxu0
      %1651 = vmatprep.mubr.f32.mxu0 0.0
      %1652 = vmatmul.mubr.f32.gmra.mrb[0].mxu0 %v1451
      %v1653 = vpop.f32.mrb[0].mxu0
      %v1654 = vadd.f32 0.0, %v1653
      %v1655 = vpop.f32.mrb[0].mxu0
      %1656 = vmatprep.mubr.f32.mxu0 0.0
      %1657 = vmatmul.mubr.f32.gmra.mrb[0].mxu0 %v1453
      %v1658 = vpop.f32.mrb[0].mxu0
      %v1659 = vadd.f32 0.0, %v1658
      %v1660 = vpop.f32.mrb[0].mxu0
      %1661 = vmatprep.mubr.f32.mxu0 0.0
      %1662 = vmatmul.mubr.f32.gmra.mrb[0].mxu0 %v1455
      %v1663 = vpop.f32.mrb[0].mxu0
      %v1664 = vadd.f32 0.0, %v1663
      %v1665 = vpop.f32.mrb[0].mxu0
      %1666 = vmatprep.mubr.f32.mxu0 0.0
      %1667 = vmatmul.mubr.f32.gmra.mrb[0].mxu0 %v1457
      %v1668 = vpop.f32.mrb[0].mxu0
      %v1669 = vadd.f32 0.0, %v1668
      %v1670 = vpop.f32.mrb[0].mxu0
      %1671 = vmatprep.mubr.f32.mxu0 0.0
      %1672 = vmatmul.mubr.f32.gmra.mrb[0].mxu0 %v1459
      %v1673 = vpop.f32.mrb[0].mxu0
      %v1674 = vadd.f32 0.0, %v1673
      %v1675 = vpop.f32.mrb[0].mxu0
      %1676 = vmatprep.mubr.f32.mxu0 0.0
      %1677 = vmatmul.mubr.f32.gmra.mrb[0].mxu0 %v1461
      %v1678 = vpop.f32.mrb[0].mxu0
      %v1679 = vadd.f32 0.0, %v1678
      %v1680 = vpop.f32.mrb[0].mxu0
      %1681 = vmatprep.mubr.f32.mxu0 0.0
      %1682 = vmatmul.mubr.f32.gmra.mrb[0].mxu0 %v1463
      %v1683 = vpop.f32.mrb[0].mxu0
      %v1684 = vadd.f32 0.0, %v1683
      %v1685 = vpop.f32.mrb[0].mxu0
      %1686 = vmatprep.mubr.f32.mxu0 0.0
      %1687 = vmatmul.mubr.f32.gmra.mrb[0].mxu0 %v1465
      %v1688 = vpop.f32.mrb[0].mxu0
      %v1689 = vadd.f32 0.0, %v1688
      %v1690 = vpop.f32.mrb[0].mxu0
      %1691 = vmatprep.mubr.f32.mxu0 0.0
      %1692 = vmatmul.mubr.f32.gmra.mrb[0].mxu0 %v1467
      %v1693 = vpop.f32.mrb[0].mxu0
      %v1694 = vadd.f32 0.0, %v1693
      %v1695 = vpop.f32.mrb[0].mxu0
      %1696 = vmatprep.mubr.f32.mxu0 0.0
      %1697 = vmatmul.mubr.f32.gmra.mrb[0].mxu0 %v1469
      %v1698 = vpop.f32.mrb[0].mxu0
      %v1699 = vadd.f32 0.0, %v1698
      %v1700 = vpop.f32.mrb[0].mxu0
      %1701 = vmatprep.mubr.f32.mxu0 0.0
      %1702 = vmatmul.mubr.f32.gmra.mrb[0].mxu0 %v1471
      %v1703 = vpop.f32.mrb[0].mxu0
      %v1704 = vadd.f32 0.0, %v1703
      %v1705 = vpop.f32.mrb[0].mxu0
      %1706 = vmatprep.mubr.f32.mxu0 0.0
      %1707 = vmatmul.mubr.f32.gmra.mrb[0].mxu0 %v1473
      %v1708 = vpop.f32.mrb[0].mxu0
      %v1709 = vadd.f32 0.0, %v1708
      %v1710 = vpop.f32.mrb[0].mxu0
      %1711 = vmatprep.mubr.f32.mxu0 0.0
      %1712 = vmatmul.mubr.f32.gmra.mrb[0].mxu0 %v1475
      %v1713 = vpop.f32.mrb[0].mxu0
      %v1714 = vadd.f32 0.0, %v1713
      %v1715 = vpop.f32.mrb[0].mxu0
      %1716 = vmatprep.mubr.f32.mxu0 0.0
      %1717 = vmatmul.mubr.f32.gmra.mrb[0].mxu0 %v1477
      %v1718 = vpop.f32.mrb[0].mxu0
      %v1719 = vadd.f32 0.0, %v1718
      %v1720 = vpop.f32.mrb[0].mxu0
      %1721 = vmatprep.mubr.f32.mxu0 0.0
      %1722 = vmatmul.mubr.f32.gmra.mrb[0].mxu0 %v1479
      %v1723 = vpop.f32.mrb[0].mxu0
      %v1724 = vadd.f32 0.0, %v1723
      %v1725 = vpop.f32.mrb[0].mxu0
      %1726 = vmatprep.mubr.f32.mxu0 0.0
      %1727 = vmatmul.mubr.f32.gmra.mrb[0].mxu0 %v1481
      %v1728 = vpop.f32.mrb[0].mxu0
      %v1729 = vadd.f32 0.0, %v1728
      %v1730 = vpop.f32.mrb[0].mxu0
      %1731 = vmatprep.mubr.f32.mxu0 0.0
      %1732 = vmatmul.mubr.f32.gmra.mrb[0].mxu0 %v1483
      %v1733 = vpop.f32.mrb[0].mxu0
      %v1734 = vadd.f32 0.0, %v1733
      %v1735 = vpop.f32.mrb[0].mxu0
      %1736 = vmatprep.mubr.f32.mxu0 0.0
      %1737 = vmatmul.mubr.f32.gmra.mrb[0].mxu0 %v1485
      %v1738 = vpop.f32.mrb[0].mxu0
      %v1739 = vadd.f32 0.0, %v1738
      %v1740 = vpop.f32.mrb[0].mxu0
      %1741 = vmatprep.mubr.f32.mxu0 0.0
      %1742 = vmatmul.mubr.f32.gmra.mrb[0].mxu0 %v1487
      %v1743 = vpop.f32.mrb[0].mxu0
      %v1744 = vadd.f32 0.0, %v1743
      %v1745 = vpop.f32.mrb[0].mxu0
      %1746 = vmatprep.mubr.f32.mxu0 0.0
      %1747 = vmatmul.mubr.f32.gmra.mrb[0].mxu0 %v1489
      %v1748 = vpop.f32.mrb[0].mxu0
      %v1749 = vadd.f32 0.0, %v1748
      %v1750 = vpop.f32.mrb[0].mxu0
      %1751 = vmatprep.mubr.f32.mxu0 0.0
      %1752 = vmatmul.mubr.f32.gmra.mrb[0].mxu0 %v1491
      %v1753 = vpop.f32.mrb[0].mxu0
      %v1754 = vadd.f32 0.0, %v1753
      %v1755 = vpop.f32.mrb[0].mxu0
      %1756 = vmatprep.mubr.f32.mxu0 0.0
      %1757 = vmatmul.mubr.f32.gmra.mrb[0].mxu0 %v1493
      %v1758 = vpop.f32.mrb[0].mxu0
      %v1759 = vadd.f32 0.0, %v1758
      %v1760 = vpop.f32.mrb[0].mxu0
      %1761 = vmatprep.mubr.f32.mxu0 0.0
      %1762 = vmatmul.mubr.f32.gmra.mrb[0].mxu0 %v1495
      %v1763 = vpop.f32.mrb[0].mxu0
      %v1764 = vadd.f32 0.0, %v1763
      %v1765 = vpop.f32.mrb[0].mxu0
      %1766 = vmatprep.mubr.f32.mxu0 0.0
      %1767 = vmatmul.mubr.f32.gmra.mrb[0].mxu0 %v1497
      %v1768 = vpop.f32.mrb[0].mxu0
      %v1769 = vadd.f32 0.0, %v1768
      %v1770 = vpop.f32.mrb[0].mxu0
      %1771 = vmatprep.mubr.f32.mxu0 0.0
      %1772 = vmatmul.mubr.f32.gmra.mrb[0].mxu0 %v1499
      %v1773 = vpop.f32.mrb[0].mxu0
      %v1774 = vadd.f32 0.0, %v1773
      %v1775 = vpop.f32.mrb[0].mxu0
      %1776 = vmatprep.mubr.f32.mxu0 0.0
      %1777 = vmatmul.mubr.f32.gmra.mrb[0].mxu0 %v1501
      %v1778 = vpop.f32.mrb[0].mxu0
      %v1779 = vadd.f32 0.0, %v1778
      %v1780 = vpop.f32.mrb[0].mxu0
      %1781 = vmatprep.mubr.f32.mxu0 0.0
      %1782 = vmatmul.mubr.f32.gmra.mrb[0].mxu0 %v1503
      %v1783 = vpop.f32.mrb[0].mxu0
      %v1784 = vadd.f32 0.0, %v1783
      %v1785 = vpop.f32.mrb[0].mxu0
      %1786 = vmatprep.mubr.f32.mxu0 0.0
      %1787 = vmatmul.mubr.f32.gmra.mrb[0].mxu0 %v1505
      %v1788 = vpop.f32.mrb[0].mxu0
      %v1789 = vadd.f32 0.0, %v1788
      %v1790 = vpop.f32.mrb[0].mxu0
      %1791 = vmatprep.mubr.f32.mxu0 0.0
      %1792 = vmatmul.mubr.f32.gmra.mrb[0].mxu0 %v1507
      %v1793 = vpop.f32.mrb[0].mxu0
      %v1794 = vadd.f32 0.0, %v1793
      %v1795 = vpop.f32.mrb[0].mxu0
      %1796 = vmatprep.mubr.f32.mxu0 0.0
      %1797 = vmatmul.mubr.f32.gmra.mrb[0].mxu0 %v1509
      %v1798 = vpop.f32.mrb[0].mxu0
      %v1799 = vadd.f32 0.0, %v1798
      %v1800 = vpop.f32.mrb[0].mxu0
      %1801 = vmatprep.mubr.f32.mxu0 0.0
      %1802 = vmatmul.mubr.f32.gmra.mrb[0].mxu0 %v1511
      %v1803 = vpop.f32.mrb[0].mxu0
      %v1804 = vadd.f32 0.0, %v1803
      %v1805 = vpop.f32.mrb[0].mxu0
      %1806 = vmatprep.mubr.f32.mxu0 0.0
      %1807 = vmatmul.mubr.f32.gmra.mrb[0].mxu0 %v1513
      %v1808 = vpop.f32.mrb[0].mxu0
      %v1809 = vadd.f32 0.0, %v1808
      %v1810 = vpop.f32.mrb[0].mxu0
      %1811 = vmatprep.mubr.f32.mxu0 0.0
      %1812 = vmatmul.mubr.f32.gmra.mrb[0].mxu0 %v1515
      %v1813 = vpop.f32.mrb[0].mxu0
      %v1814 = vadd.f32 0.0, %v1813
      %v1815 = vpop.f32.mrb[0].mxu0
      %1816 = vmatprep.mubr.f32.mxu0 0.0
      %1817 = vmatmul.mubr.f32.gmra.mrb[0].mxu0 %v1517
      %v1818 = vpop.f32.mrb[0].mxu0
      %v1819 = vadd.f32 0.0, %v1818
      %v1820 = vpop.f32.mrb[0].mxu0
      %1821 = vmatprep.mubr.f32.mxu0 0.0
      %1822 = vmatmul.mubr.f32.gmra.mrb[0].mxu0 %v1519
      %v1823 = vpop.f32.mrb[0].mxu0
      %v1824 = vadd.f32 0.0, %v1823
      %v1825 = vpop.f32.mrb[0].mxu0
      %1826 = vmatprep.mubr.f32.mxu0 0.0
      %1827 = vmatmul.mubr.f32.gmra.mrb[0].mxu0 %v1521
      %v1828 = vpop.f32.mrb[0].mxu0
      %v1829 = vadd.f32 0.0, %v1828
      %v1830 = vpop.f32.mrb[0].mxu0
      %1831 = vmatprep.mubr.f32.mxu0 0.0
      %1832 = vmatmul.mubr.f32.gmra.mrb[0].mxu0 %v1523
      %v1833 = vpop.f32.mrb[0].mxu0
      %v1834 = vadd.f32 0.0, %v1833
      %v1835 = vpop.f32.mrb[0].mxu0
      %1836 = vmatprep.mubr.f32.mxu0 0.0
      %1837 = vmatmul.mubr.f32.gmra.mrb[0].mxu0 %v1525
      %v1838 = vpop.f32.mrb[0].mxu0
      %v1839 = vadd.f32 0.0, %v1838
      %v1840 = vpop.f32.mrb[0].mxu0
      %1841 = vmatprep.mubr.f32.mxu0 0.0
      %1842 = vmatmul.mubr.f32.gmra.mrb[0].mxu0 %v1527
      %v1843 = vpop.f32.mrb[0].mxu0
      %v1844 = vadd.f32 0.0, %v1843
      %v1845 = vpop.f32.mrb[0].mxu0
      %1846 = vmatprep.mubr.f32.mxu0 0.0
      %1847 = vmatmul.mubr.f32.gmra.mrb[0].mxu0 %v1529
      %v1848 = vpop.f32.mrb[0].mxu0
      %v1849 = vadd.f32 0.0, %v1848
      %v1850 = vpop.f32.mrb[0].mxu0
      %1851 = vmatprep.mubr.f32.mxu0 0.0
      %1852 = vmatmul.mubr.f32.gmra.mrb[0].mxu0 %v1531
      %v1853 = vpop.f32.mrb[0].mxu0
      %v1854 = vadd.f32 0.0, %v1853
      %v1855 = vpop.f32.mrb[0].mxu0
      %1856 = vmatprep.mubr.f32.mxu0 0.0
      %1857 = vmatmul.mubr.f32.gmra.mrb[0].mxu0 %v1533
      %v1858 = vpop.f32.mrb[0].mxu0
      %v1859 = vadd.f32 0.0, %v1858
      %v1860 = vpop.f32.mrb[0].mxu0
      %1861 = vmatprep.mubr.f32.mxu0 0.0
      %1862 = vmatmul.mubr.f32.gmra.mrb[0].mxu0 %v1535
      %v1863 = vpop.f32.mrb[0].mxu0
      %v1864 = vadd.f32 0.0, %v1863
      %v1865 = vpop.f32.mrb[0].mxu0
      %1866 = vmatprep.mubr.f32.mxu0 0.0
      %1867 = vmatmul.mubr.f32.gmra.mrb[0].mxu0 %v1537
      %v1868 = vpop.f32.mrb[0].mxu0
      %v1869 = vadd.f32 0.0, %v1868
      %v1870 = vpop.f32.mrb[0].mxu0
      %1871 = vmatprep.mubr.f32.mxu0 0.0
      %1872 = vmatmul.mubr.f32.gmra.mrb[0].mxu0 %v1539
      %v1873 = vpop.f32.mrb[0].mxu0
      %v1874 = vadd.f32 0.0, %v1873
      %v1875 = vpop.f32.mrb[0].mxu0
      %1876 = vmatprep.mubr.f32.mxu0 0.0
      %1877 = vmatmul.mubr.f32.gmra.mrb[0].mxu0 %v1541
      %v1878 = vpop.f32.mrb[0].mxu0
      %v1879 = vadd.f32 0.0, %v1878
      %v1880 = vpop.f32.mrb[0].mxu0
      %1881 = vmatprep.mubr.f32.mxu0 0.0
      %1882 = vmatmul.mubr.f32.gmra.mrb[0].mxu0 %v1543
      %v1883 = vpop.f32.mrb[0].mxu0
      %v1884 = vadd.f32 0.0, %v1883
      %v1885 = vpop.f32.mrb[0].mxu0
      %1886 = vmatprep.mubr.f32.mxu0 0.0
      %1887 = vmatmul.mubr.f32.gmra.mrb[0].mxu0 %v1545
      %v1888 = vpop.f32.mrb[0].mxu0
      %v1889 = vadd.f32 0.0, %v1888
      %v1890 = vpop.f32.mrb[0].mxu0
      %1891 = vmatprep.mubr.f32.mxu0 0.0
      %1892 = vmatmul.mubr.f32.gmra.mrb[0].mxu0 %v1547
      %v1893 = vpop.f32.mrb[0].mxu0
      %v1894 = vadd.f32 0.0, %v1893
      %v1895 = vpop.f32.mrb[0].mxu0
      %1896 = vmatprep.mubr.f32.mxu0 0.0
      %1897 = vmatmul.mubr.f32.gmra.mrb[0].mxu0 %v1549
      %v1898 = vpop.f32.mrb[0].mxu0
      %v1899 = vadd.f32 0.0, %v1898
      %v1900 = vpop.f32.mrb[0].mxu0
      %1901 = vmatprep.mubr.f32.mxu0 0.0
      %1902 = vmatmul.mubr.f32.gmra.mrb[0].mxu0 %v1551
      %v1903 = vpop.f32.mrb[0].mxu0
      %v1904 = vadd.f32 0.0, %v1903
      %v1905 = vpop.f32.mrb[0].mxu0
      %1906 = vmatprep.mubr.f32.mxu0 0.0
      %1907 = vmatmul.mubr.f32.gmra.mrb[0].mxu0 %v1553
      %v1908 = vpop.f32.mrb[0].mxu0
      %v1909 = vadd.f32 0.0, %v1908
      %v1910 = vpop.f32.mrb[0].mxu0
      %1911 = vmatprep.mubr.f32.mxu0 0.0
      %1912 = vmatmul.mubr.f32.gmra.mrb[0].mxu0 %v1555
      %v1913 = vpop.f32.mrb[0].mxu0
      %v1914 = vadd.f32 0.0, %v1913
      %v1915 = vpop.f32.mrb[0].mxu0
      %1916 = vmatprep.mubr.f32.mxu0 0.0
      %1917 = vmatmul.mubr.f32.gmra.mrb[0].mxu0 %v1557
      %v1918 = vpop.f32.mrb[0].mxu0
      %v1919 = vadd.f32 0.0, %v1918
      %v1920 = vpop.f32.mrb[0].mxu0
      %1921 = vmatprep.mubr.f32.mxu0 0.0
      %1922 = vmatmul.mubr.f32.gmra.mrb[0].mxu0 %v1559
      %v1923 = vpop.f32.mrb[0].mxu0
      %v1924 = vadd.f32 0.0, %v1923
      %v1925 = vpop.f32.mrb[0].mxu0
      %1926 = vmatprep.mubr.f32.mxu0 0.0
      %1927 = vmatmul.mubr.f32.gmra.mrb[0].mxu0 %v1561
      %v1928 = vpop.f32.mrb[0].mxu0
      %v1929 = vadd.f32 0.0, %v1928
      %v1930 = vpop.f32.mrb[0].mxu0
      %1931 = vmatprep.mubr.f32.mxu0 0.0
      %1932 = vmatmul.mubr.f32.gmra.mrb[0].mxu0 %v1563
      %v1933 = vpop.f32.mrb[0].mxu0
      %v1934 = vadd.f32 0.0, %v1933
      %v1935 = vpop.f32.mrb[0].mxu0
      %1936 = vmatprep.mubr.f32.mxu0 0.0
      %1937 = vmatmul.mubr.f32.gmra.mrb[0].mxu0 %v1565
      %v1938 = vpop.f32.mrb[0].mxu0
      %v1939 = vadd.f32 0.0, %v1938
      %v1940 = vpop.f32.mrb[0].mxu0
      %1941 = vmatprep.mubr.f32.mxu0 0.0
      %1942 = vmatmul.mubr.f32.gmra.mrb[0].mxu0 %v1567
      %v1943 = vpop.f32.mrb[0].mxu0
      %v1944 = vadd.f32 0.0, %v1943
      %v1945 = vpop.f32.mrb[0].mxu0
      %1946 = vmatprep.mubr.f32.mxu0 0.0
      %1947 = vmatmul.mubr.f32.gmra.mrb[0].mxu0 %v1569
      %v1948 = vpop.f32.mrb[0].mxu0
      %v1949 = vadd.f32 0.0, %v1948
      %v1950 = vpop.f32.mrb[0].mxu0
      %1951 = vmatprep.mubr.f32.mxu0 0.0
      %1952 = vmatmul.mubr.f32.gmra.mrb[0].mxu0 %v1571
      %v1953 = vpop.f32.mrb[0].mxu0
      %v1954 = vadd.f32 0.0, %v1953
      %v1955 = vpop.f32.mrb[0].mxu0
      %1956 = vmatprep.mubr.f32.mxu0 0.0
      %1957 = vmatmul.mubr.f32.gmra.mrb[0].mxu0 %v1573
      %v1958 = vpop.f32.mrb[0].mxu0
      %v1959 = vadd.f32 0.0, %v1958
      %v1960 = vpop.f32.mrb[0].mxu0
      %1961 = vmatprep.mubr.f32.mxu0 0.0
      %1962 = vmatmul.mubr.f32.gmra.mrb[0].mxu0 %v1575
      %v1963 = vpop.f32.mrb[0].mxu0
      %v1964 = vadd.f32 0.0, %v1963
      %v1965 = vpop.f32.mrb[0].mxu0
      %1966 = vmatprep.mubr.f32.mxu0 0.0
      %1967 = vmatmul.mubr.f32.gmra.mrb[0].mxu0 %v1577
      %v1968 = vpop.f32.mrb[0].mxu0
      %v1969 = vadd.f32 0.0, %v1968
      %v1970 = vpop.f32.mrb[0].mxu0
      %1971 = vdwg.mxu0
      %v1972 = vadd.f32 %v1250, %v1649
      %v1973 = vadd.f32 %v1251, %v1654
      %v1974 = vadd.f32 %v1252, %v1659
      %v1975 = vadd.f32 %v1253, %v1664
      %v1976 = vadd.f32 %v1254, %v1669
      %v1977 = vadd.f32 %v1255, %v1674
      %v1978 = vadd.f32 %v1256, %v1679
      %v1979 = vadd.f32 %v1257, %v1684
      %v1980 = vadd.f32 %v1258, %v1689
      %v1981 = vadd.f32 %v1259, %v1694
      %v1982 = vadd.f32 %v1260, %v1699
      %v1983 = vadd.f32 %v1261, %v1704
      %v1984 = vadd.f32 %v1262, %v1709
      %v1985 = vadd.f32 %v1263, %v1714
      %v1986 = vadd.f32 %v1264, %v1719
      %v1987 = vadd.f32 %v1265, %v1724
      %v1988 = vadd.f32 %v1266, %v1729
      %v1989 = vadd.f32 %v1267, %v1734
      %v1990 = vadd.f32 %v1268, %v1739
      %v1991 = vadd.f32 %v1269, %v1744
      %v1992 = vadd.f32 %v1270, %v1749
      %v1993 = vadd.f32 %v1271, %v1754
      %v1994 = vadd.f32 %v1272, %v1759
      %v1995 = vadd.f32 %v1273, %v1764
      %v1996 = vadd.f32 %v1274, %v1769
      %v1997 = vadd.f32 %v1275, %v1774
      %v1998 = vadd.f32 %v1276, %v1779
      %v1999 = vadd.f32 %v1277, %v1784
      %v2000 = vadd.f32 %v1278, %v1789
      %v2001 = vadd.f32 %v1279, %v1794
      %v2002 = vadd.f32 %v1280, %v1799
      %v2003 = vadd.f32 %v1281, %v1804
      %v2004 = vadd.f32 %v1282, %v1809
      %v2005 = vadd.f32 %v1283, %v1814
      %v2006 = vadd.f32 %v1284, %v1819
      %v2007 = vadd.f32 %v1285, %v1824
      %v2008 = vadd.f32 %v1286, %v1829
      %v2009 = vadd.f32 %v1287, %v1834
      %v2010 = vadd.f32 %v1288, %v1839
      %v2011 = vadd.f32 %v1289, %v1844
      %v2012 = vadd.f32 %v1290, %v1849
      %v2013 = vadd.f32 %v1291, %v1854
      %v2014 = vadd.f32 %v1292, %v1859
      %v2015 = vadd.f32 %v1293, %v1864
      %v2016 = vadd.f32 %v1294, %v1869
      %v2017 = vadd.f32 %v1295, %v1874
      %v2018 = vadd.f32 %v1296, %v1879
      %v2019 = vadd.f32 %v1297, %v1884
      %v2020 = vadd.f32 %v1298, %v1889
      %v2021 = vadd.f32 %v1299, %v1894
      %v2022 = vadd.f32 %v1300, %v1899
      %v2023 = vadd.f32 %v1301, %v1904
      %v2024 = vadd.f32 %v1302, %v1909
      %v2025 = vadd.f32 %v1303, %v1914
      %v2026 = vadd.f32 %v1304, %v1919
      %v2027 = vadd.f32 %v1305, %v1924
      %v2028 = vadd.f32 %v1306, %v1929
      %v2029 = vadd.f32 %v1307, %v1934
      %v2030 = vadd.f32 %v1308, %v1939
      %v2031 = vadd.f32 %v1309, %v1944
      %v2032 = vadd.f32 %v1310, %v1949
      %v2033 = vadd.f32 %v1311, %v1954
      %v2034 = vadd.f32 %v1312, %v1959
      %v2035 = vadd.f32 %v1313, %v1964
      %v2036 = vadd.f32 %v1314, %v1969
      %s2037 = scalar_lea.vmem %s2, 16
      %v2038 = vld [vmem:[%s2037] sm:$0x7f]
      %vm2039 = vcmask 1045504
      %v2040 = vrot.slane %v585, 2
      %v2041 = vrot.slane %v586, 2
      %v2042 = vsel %vm2039, %v2040, %v2041
      %v2043 = vrot.slane %v587, 2
      %v2044 = vsel %vm2039, %v2041, %v2043
      %v2045 = vrot.slane %v588, 2
      %v2046 = vsel %vm2039, %v2043, %v2045
      %v2047 = vrot.slane %v589, 2
      %v2048 = vsel %vm2039, %v2045, %v2047
      %v2049 = vrot.slane %v590, 2
      %v2050 = vsel %vm2039, %v2047, %v2049
      %v2051 = vrot.slane %v591, 2
      %v2052 = vsel %vm2039, %v2049, %v2051
      %v2053 = vrot.slane %v592, 2
      %v2054 = vsel %vm2039, %v2051, %v2053
      %v2055 = vrot.slane %v593, 2
      %v2056 = vsel %vm2039, %v2053, %v2055
      %v2057 = vrot.slane %v594, 2
      %v2058 = vsel %vm2039, %v2055, %v2057
      %v2059 = vrot.slane %v595, 2
      %v2060 = vsel %vm2039, %v2057, %v2059
      %v2061 = vrot.slane %v596, 2
      %v2062 = vsel %vm2039, %v2059, %v2061
      %v2063 = vrot.slane %v597, 2
      %v2064 = vsel %vm2039, %v2061, %v2063
      %v2065 = vrot.slane %v598, 2
      %v2066 = vsel %vm2039, %v2063, %v2065
      %v2067 = vrot.slane %v599, 2
      %v2068 = vsel %vm2039, %v2065, %v2067
      %v2069 = vrot.slane %v600, 2
      %v2070 = vsel %vm2039, %v2067, %v2069
      %v2071 = vrot.slane %v601, 2
      %v2072 = vsel %vm2039, %v2069, %v2071
      %v2073 = vrot.slane %v602, 2
      %v2074 = vsel %vm2039, %v2071, %v2073
      %v2075 = vrot.slane %v603, 2
      %v2076 = vsel %vm2039, %v2073, %v2075
      %v2077 = vrot.slane %v604, 2
      %v2078 = vsel %vm2039, %v2075, %v2077
      %v2079 = vrot.slane %v605, 2
      %v2080 = vsel %vm2039, %v2077, %v2079
      %v2081 = vrot.slane %v606, 2
      %v2082 = vsel %vm2039, %v2079, %v2081
      %v2083 = vrot.slane %v607, 2
      %v2084 = vsel %vm2039, %v2081, %v2083
      %v2085 = vrot.slane %v608, 2
      %v2086 = vsel %vm2039, %v2083, %v2085
      %v2087 = vrot.slane %v609, 2
      %v2088 = vsel %vm2039, %v2085, %v2087
      %v2089 = vrot.slane %v610, 2
      %v2090 = vsel %vm2039, %v2087, %v2089
      %v2091 = vrot.slane %v611, 2
      %v2092 = vsel %vm2039, %v2089, %v2091
      %v2093 = vrot.slane %v612, 2
      %v2094 = vsel %vm2039, %v2091, %v2093
      %v2095 = vrot.slane %v613, 2
      %v2096 = vsel %vm2039, %v2093, %v2095
      %v2097 = vrot.slane %v614, 2
      %v2098 = vsel %vm2039, %v2095, %v2097
      %v2099 = vrot.slane %v615, 2
      %v2100 = vsel %vm2039, %v2097, %v2099
      %v2101 = vrot.slane %v616, 2
      %v2102 = vsel %vm2039, %v2099, %v2101
      %v2103 = vrot.slane %v617, 2
      %v2104 = vsel %vm2039, %v2101, %v2103
      %v2105 = vrot.slane %v618, 2
      %v2106 = vsel %vm2039, %v2103, %v2105
      %v2107 = vrot.slane %v619, 2
      %v2108 = vsel %vm2039, %v2105, %v2107
      %v2109 = vrot.slane %v620, 2
      %v2110 = vsel %vm2039, %v2107, %v2109
      %v2111 = vrot.slane %v621, 2
      %v2112 = vsel %vm2039, %v2109, %v2111
      %v2113 = vrot.slane %v622, 2
      %v2114 = vsel %vm2039, %v2111, %v2113
      %v2115 = vrot.slane %v623, 2
      %v2116 = vsel %vm2039, %v2113, %v2115
      %v2117 = vrot.slane %v624, 2
      %v2118 = vsel %vm2039, %v2115, %v2117
      %v2119 = vrot.slane %v625, 2
      %v2120 = vsel %vm2039, %v2117, %v2119
      %v2121 = vrot.slane %v626, 2
      %v2122 = vsel %vm2039, %v2119, %v2121
      %v2123 = vrot.slane %v627, 2
      %v2124 = vsel %vm2039, %v2121, %v2123
      %v2125 = vrot.slane %v628, 2
      %v2126 = vsel %vm2039, %v2123, %v2125
      %v2127 = vrot.slane %v629, 2
      %v2128 = vsel %vm2039, %v2125, %v2127
      %v2129 = vrot.slane %v630, 2
      %v2130 = vsel %vm2039, %v2127, %v2129
      %v2131 = vrot.slane %v631, 2
      %v2132 = vsel %vm2039, %v2129, %v2131
      %v2133 = vrot.slane %v632, 2
      %v2134 = vsel %vm2039, %v2131, %v2133
      %v2135 = vrot.slane %v633, 2
      %v2136 = vsel %vm2039, %v2133, %v2135
      %v2137 = vrot.slane %v634, 2
      %v2138 = vsel %vm2039, %v2135, %v2137
      %v2139 = vrot.slane %v635, 2
      %v2140 = vsel %vm2039, %v2137, %v2139
      %v2141 = vrot.slane %v636, 2
      %v2142 = vsel %vm2039, %v2139, %v2141
      %v2143 = vrot.slane %v637, 2
      %v2144 = vsel %vm2039, %v2141, %v2143
      %v2145 = vrot.slane %v638, 2
      %v2146 = vsel %vm2039, %v2143, %v2145
      %v2147 = vrot.slane %v639, 2
      %v2148 = vsel %vm2039, %v2145, %v2147
      %v2149 = vrot.slane %v640, 2
      %v2150 = vsel %vm2039, %v2147, %v2149
      %v2151 = vrot.slane %v641, 2
      %v2152 = vsel %vm2039, %v2149, %v2151
      %v2153 = vrot.slane %v642, 2
      %v2154 = vsel %vm2039, %v2151, %v2153
      %v2155 = vrot.slane %v643, 2
      %v2156 = vsel %vm2039, %v2153, %v2155
      %v2157 = vrot.slane %v644, 2
      %v2158 = vsel %vm2039, %v2155, %v2157
      %v2159 = vrot.slane %v645, 2
      %v2160 = vsel %vm2039, %v2157, %v2159
      %v2161 = vrot.slane %v646, 2
      %v2162 = vsel %vm2039, %v2159, %v2161
      %v2163 = vrot.slane %v647, 2
      %v2164 = vsel %vm2039, %v2161, %v2163
      %v2165 = vrot.slane %v648, 2
      %v2166 = vsel %vm2039, %v2163, %v2165
      %v2167 = vrot.slane %v649, 2
      %v2168 = vsel %vm2039, %v2165, %v2167
      %v2169 = vrot.slane %v650, 2
      %v2170 = vsel %vm2039, %v2167, %v2169
      %v2171 = vsel %vm660, %v2042, 0
      %v2173 = vsel %vm660, %v2044, 0
      %v2175 = vsel %vm660, %v2046, 0
      %v2177 = vsel %vm660, %v2048, 0
      %v2179 = vsel %vm660, %v2050, 0
      %v2181 = vsel %vm660, %v2052, 0
      %v2183 = vsel %vm660, %v2054, 0
      %v2185 = vsel %vm660, %v2056, 0
      %v2187 = vsel %vm660, %v2058, 0
      %v2189 = vsel %vm660, %v2060, 0
      %v2191 = vsel %vm660, %v2062, 0
      %v2193 = vsel %vm660, %v2064, 0
      %v2195 = vsel %vm660, %v2066, 0
      %v2197 = vsel %vm660, %v2068, 0
      %v2199 = vsel %vm660, %v2070, 0
      %v2201 = vsel %vm660, %v2072, 0
      %v2203 = vsel %vm660, %v2074, 0
      %v2205 = vsel %vm660, %v2076, 0
      %v2207 = vsel %vm660, %v2078, 0
      %v2209 = vsel %vm660, %v2080, 0
      %v2211 = vsel %vm660, %v2082, 0
      %v2213 = vsel %vm660, %v2084, 0
      %v2215 = vsel %vm660, %v2086, 0
      %v2217 = vsel %vm660, %v2088, 0
      %v2219 = vsel %vm660, %v2090, 0
      %v2221 = vsel %vm660, %v2092, 0
      %v2223 = vsel %vm660, %v2094, 0
      %v2225 = vsel %vm660, %v2096, 0
      %v2227 = vsel %vm660, %v2098, 0
      %v2229 = vsel %vm660, %v2100, 0
      %v2231 = vsel %vm660, %v2102, 0
      %v2233 = vsel %vm660, %v2104, 0
      %v2235 = vsel %vm660, %v2106, 0
      %v2237 = vsel %vm660, %v2108, 0
      %v2239 = vsel %vm660, %v2110, 0
      %v2241 = vsel %vm660, %v2112, 0
      %v2243 = vsel %vm660, %v2114, 0
      %v2245 = vsel %vm660, %v2116, 0
      %v2247 = vsel %vm660, %v2118, 0
      %v2249 = vsel %vm660, %v2120, 0
      %v2251 = vsel %vm660, %v2122, 0
      %v2253 = vsel %vm660, %v2124, 0
      %v2255 = vsel %vm660, %v2126, 0
      %v2257 = vsel %vm660, %v2128, 0
      %v2259 = vsel %vm660, %v2130, 0
      %v2261 = vsel %vm660, %v2132, 0
      %v2263 = vsel %vm660, %v2134, 0
      %v2265 = vsel %vm660, %v2136, 0
      %v2267 = vsel %vm660, %v2138, 0
      %v2269 = vsel %vm660, %v2140, 0
      %v2271 = vsel %vm660, %v2142, 0
      %v2273 = vsel %vm660, %v2144, 0
      %v2275 = vsel %vm660, %v2146, 0
      %v2277 = vsel %vm660, %v2148, 0
      %v2279 = vsel %vm660, %v2150, 0
      %v2281 = vsel %vm660, %v2152, 0
      %v2283 = vsel %vm660, %v2154, 0
      %v2285 = vsel %vm660, %v2156, 0
      %v2287 = vsel %vm660, %v2158, 0
      %v2289 = vsel %vm660, %v2160, 0
      %v2291 = vsel %vm660, %v2162, 0
      %v2293 = vsel %vm660, %v2164, 0
      %v2295 = vsel %vm660, %v2166, 0
      %v2297 = vsel %vm660, %v2168, 0
      %v2299 = vsel %vm660, %v2170, 0
      %v2302 = vsel %vm856, %v2038, 0
      %2304 = vmatprep.subr.mxu0 0.0
      %2305 = vmatpush1.msra.mxu0 %v2302
      %2306 = vmatprep.subr.mxu0 0.0
      %2307 = vmatpush1.msra.mxu0 0.0
      %2308 = vmatprep.subr.mxu0 0.0
      %2309 = vmatpush1.msra.mxu0 0.0
      %2310 = vmatprep.subr.mxu0 0.0
      %2311 = vmatpush1.msra.mxu0 0.0
      %2312 = vmatprep.subr.mxu0 0.0
      %2313 = vmatpush1.msra.mxu0 0.0
      %2314 = vmatprep.subr.mxu0 0.0
      %2315 = vmatpush1.msra.mxu0 0.0
      %2316 = vmatprep.subr.mxu0 0.0
      %2317 = vmatpush1.msra.mxu0 0.0
      %2318 = vmatprep.subr.mxu0 0.0
      %2319 = vmatpush1.msra.mxu0 0.0
      %2320 = vmatprep.subr.mxu0 0.0
      %2321 = vmatpush1.msra.mxu0 0.0
      %2322 = vmatprep.subr.mxu0 0.0
      %2323 = vmatpush1.msra.mxu0 0.0
      %2324 = vmatprep.subr.mxu0 0.0
      %2325 = vmatpush1.msra.mxu0 0.0
      %2326 = vmatprep.subr.mxu0 0.0
      %2327 = vmatpush1.msra.mxu0 0.0
      %2328 = vmatprep.subr.mxu0 0.0
      %2329 = vmatpush1.msra.mxu0 0.0
      %2330 = vmatprep.subr.mxu0 0.0
      %2331 = vmatpush1.msra.mxu0 0.0
      %2332 = vmatprep.subr.mxu0 0.0
      %2333 = vmatpush1.msra.mxu0 0.0
      %2334 = vmatprep.subr.mxu0 0.0
      %2335 = vmatpush1.msra.mxu0 0.0
      %2336 = vmatprep.subr.mxu0 0.0
      %2337 = vmatpush1.msra.mxu0 0.0
      %2338 = vmatprep.subr.mxu0 0.0
      %2339 = vmatpush1.msra.mxu0 0.0
      %2340 = vmatprep.subr.mxu0 0.0
      %2341 = vmatpush1.msra.mxu0 0.0
      %2342 = vmatprep.subr.mxu0 0.0
      %2343 = vmatpush1.msra.mxu0 0.0
      %2344 = vmatprep.subr.mxu0 0.0
      %2345 = vmatpush1.msra.mxu0 0.0
      %2346 = vmatprep.subr.mxu0 0.0
      %2347 = vmatpush1.msra.mxu0 0.0
      %2348 = vmatprep.subr.mxu0 0.0
      %2349 = vmatpush1.msra.mxu0 0.0
      %2350 = vmatprep.subr.mxu0 0.0
      %2351 = vmatpush1.msra.mxu0 0.0
      %2352 = vmatprep.subr.mxu0 0.0
      %2353 = vmatpush1.msra.mxu0 0.0
      %2354 = vmatprep.subr.mxu0 0.0
      %2355 = vmatpush1.msra.mxu0 0.0
      %2356 = vmatprep.subr.mxu0 0.0
      %2357 = vmatpush1.msra.mxu0 0.0
      %2358 = vmatprep.subr.mxu0 0.0
      %2359 = vmatpush1.msra.mxu0 0.0
      %2360 = vmatprep.subr.mxu0 0.0
      %2361 = vmatpush1.msra.mxu0 0.0
      %2362 = vmatprep.subr.mxu0 0.0
      %2363 = vmatpush1.msra.mxu0 0.0
      %2364 = vmatprep.subr.mxu0 0.0
      %2365 = vmatpush1.msra.mxu0 0.0
      %2366 = vmatprep.subr.mxu0 0.0
      %2367 = vmatpush1.msra.mxu0 0.0
      %2368 = vmatprep.mubr.f32.mxu0 0.0
      %2369 = vmatmul.mubr.f32.gmra.mrb[0].mxu0 %v2171
      %v2370 = vpop.f32.mrb[0].mxu0
      %v2371 = vadd.f32 0.0, %v2370
      %v2372 = vpop.f32.mrb[0].mxu0
      %2373 = vmatprep.mubr.f32.mxu0 0.0
      %2374 = vmatmul.mubr.f32.gmra.mrb[0].mxu0 %v2173
      %v2375 = vpop.f32.mrb[0].mxu0
      %v2376 = vadd.f32 0.0, %v2375
      %v2377 = vpop.f32.mrb[0].mxu0
      %2378 = vmatprep.mubr.f32.mxu0 0.0
      %2379 = vmatmul.mubr.f32.gmra.mrb[0].mxu0 %v2175
      %v2380 = vpop.f32.mrb[0].mxu0
      %v2381 = vadd.f32 0.0, %v2380
      %v2382 = vpop.f32.mrb[0].mxu0
      %2383 = vmatprep.mubr.f32.mxu0 0.0
      %2384 = vmatmul.mubr.f32.gmra.mrb[0].mxu0 %v2177
      %v2385 = vpop.f32.mrb[0].mxu0
      %v2386 = vadd.f32 0.0, %v2385
      %v2387 = vpop.f32.mrb[0].mxu0
      %2388 = vmatprep.mubr.f32.mxu0 0.0
      %2389 = vmatmul.mubr.f32.gmra.mrb[0].mxu0 %v2179
      %v2390 = vpop.f32.mrb[0].mxu0
      %v2391 = vadd.f32 0.0, %v2390
      %v2392 = vpop.f32.mrb[0].mxu0
      %2393 = vmatprep.mubr.f32.mxu0 0.0
      %2394 = vmatmul.mubr.f32.gmra.mrb[0].mxu0 %v2181
      %v2395 = vpop.f32.mrb[0].mxu0
      %v2396 = vadd.f32 0.0, %v2395
      %v2397 = vpop.f32.mrb[0].mxu0
      %2398 = vmatprep.mubr.f32.mxu0 0.0
      %2399 = vmatmul.mubr.f32.gmra.mrb[0].mxu0 %v2183
      %v2400 = vpop.f32.mrb[0].mxu0
      %v2401 = vadd.f32 0.0, %v2400
      %v2402 = vpop.f32.mrb[0].mxu0
      %2403 = vmatprep.mubr.f32.mxu0 0.0
      %2404 = vmatmul.mubr.f32.gmra.mrb[0].mxu0 %v2185
      %v2405 = vpop.f32.mrb[0].mxu0
      %v2406 = vadd.f32 0.0, %v2405
      %v2407 = vpop.f32.mrb[0].mxu0
      %2408 = vmatprep.mubr.f32.mxu0 0.0
      %2409 = vmatmul.mubr.f32.gmra.mrb[0].mxu0 %v2187
      %v2410 = vpop.f32.mrb[0].mxu0
      %v2411 = vadd.f32 0.0, %v2410
      %v2412 = vpop.f32.mrb[0].mxu0
      %2413 = vmatprep.mubr.f32.mxu0 0.0
      %2414 = vmatmul.mubr.f32.gmra.mrb[0].mxu0 %v2189
      %v2415 = vpop.f32.mrb[0].mxu0
      %v2416 = vadd.f32 0.0, %v2415
      %v2417 = vpop.f32.mrb[0].mxu0
      %2418 = vmatprep.mubr.f32.mxu0 0.0
      %2419 = vmatmul.mubr.f32.gmra.mrb[0].mxu0 %v2191
      %v2420 = vpop.f32.mrb[0].mxu0
      %v2421 = vadd.f32 0.0, %v2420
      %v2422 = vpop.f32.mrb[0].mxu0
      %2423 = vmatprep.mubr.f32.mxu0 0.0
      %2424 = vmatmul.mubr.f32.gmra.mrb[0].mxu0 %v2193
      %v2425 = vpop.f32.mrb[0].mxu0
      %v2426 = vadd.f32 0.0, %v2425
      %v2427 = vpop.f32.mrb[0].mxu0
      %2428 = vmatprep.mubr.f32.mxu0 0.0
      %2429 = vmatmul.mubr.f32.gmra.mrb[0].mxu0 %v2195
      %v2430 = vpop.f32.mrb[0].mxu0
      %v2431 = vadd.f32 0.0, %v2430
      %v2432 = vpop.f32.mrb[0].mxu0
      %2433 = vmatprep.mubr.f32.mxu0 0.0
      %2434 = vmatmul.mubr.f32.gmra.mrb[0].mxu0 %v2197
      %v2435 = vpop.f32.mrb[0].mxu0
      %v2436 = vadd.f32 0.0, %v2435
      %v2437 = vpop.f32.mrb[0].mxu0
      %2438 = vmatprep.mubr.f32.mxu0 0.0
      %2439 = vmatmul.mubr.f32.gmra.mrb[0].mxu0 %v2199
      %v2440 = vpop.f32.mrb[0].mxu0
      %v2441 = vadd.f32 0.0, %v2440
      %v2442 = vpop.f32.mrb[0].mxu0
      %2443 = vmatprep.mubr.f32.mxu0 0.0
      %2444 = vmatmul.mubr.f32.gmra.mrb[0].mxu0 %v2201
      %v2445 = vpop.f32.mrb[0].mxu0
      %v2446 = vadd.f32 0.0, %v2445
      %v2447 = vpop.f32.mrb[0].mxu0
      %2448 = vmatprep.mubr.f32.mxu0 0.0
      %2449 = vmatmul.mubr.f32.gmra.mrb[0].mxu0 %v2203
      %v2450 = vpop.f32.mrb[0].mxu0
      %v2451 = vadd.f32 0.0, %v2450
      %v2452 = vpop.f32.mrb[0].mxu0
      %2453 = vmatprep.mubr.f32.mxu0 0.0
      %2454 = vmatmul.mubr.f32.gmra.mrb[0].mxu0 %v2205
      %v2455 = vpop.f32.mrb[0].mxu0
      %v2456 = vadd.f32 0.0, %v2455
      %v2457 = vpop.f32.mrb[0].mxu0
      %2458 = vmatprep.mubr.f32.mxu0 0.0
      %2459 = vmatmul.mubr.f32.gmra.mrb[0].mxu0 %v2207
      %v2460 = vpop.f32.mrb[0].mxu0
      %v2461 = vadd.f32 0.0, %v2460
      %v2462 = vpop.f32.mrb[0].mxu0
      %2463 = vmatprep.mubr.f32.mxu0 0.0
      %2464 = vmatmul.mubr.f32.gmra.mrb[0].mxu0 %v2209
      %v2465 = vpop.f32.mrb[0].mxu0
      %v2466 = vadd.f32 0.0, %v2465
      %v2467 = vpop.f32.mrb[0].mxu0
      %2468 = vmatprep.mubr.f32.mxu0 0.0
      %2469 = vmatmul.mubr.f32.gmra.mrb[0].mxu0 %v2211
      %v2470 = vpop.f32.mrb[0].mxu0
      %v2471 = vadd.f32 0.0, %v2470
      %v2472 = vpop.f32.mrb[0].mxu0
      %2473 = vmatprep.mubr.f32.mxu0 0.0
      %2474 = vmatmul.mubr.f32.gmra.mrb[0].mxu0 %v2213
      %v2475 = vpop.f32.mrb[0].mxu0
      %v2476 = vadd.f32 0.0, %v2475
      %v2477 = vpop.f32.mrb[0].mxu0
      %2478 = vmatprep.mubr.f32.mxu0 0.0
      %2479 = vmatmul.mubr.f32.gmra.mrb[0].mxu0 %v2215
      %v2480 = vpop.f32.mrb[0].mxu0
      %v2481 = vadd.f32 0.0, %v2480
      %v2482 = vpop.f32.mrb[0].mxu0
      %2483 = vmatprep.mubr.f32.mxu0 0.0
      %2484 = vmatmul.mubr.f32.gmra.mrb[0].mxu0 %v2217
      %v2485 = vpop.f32.mrb[0].mxu0
      %v2486 = vadd.f32 0.0, %v2485
      %v2487 = vpop.f32.mrb[0].mxu0
      %2488 = vmatprep.mubr.f32.mxu0 0.0
      %2489 = vmatmul.mubr.f32.gmra.mrb[0].mxu0 %v2219
      %v2490 = vpop.f32.mrb[0].mxu0
      %v2491 = vadd.f32 0.0, %v2490
      %v2492 = vpop.f32.mrb[0].mxu0
      %2493 = vmatprep.mubr.f32.mxu0 0.0
      %2494 = vmatmul.mubr.f32.gmra.mrb[0].mxu0 %v2221
      %v2495 = vpop.f32.mrb[0].mxu0
      %v2496 = vadd.f32 0.0, %v2495
      %v2497 = vpop.f32.mrb[0].mxu0
      %2498 = vmatprep.mubr.f32.mxu0 0.0
      %2499 = vmatmul.mubr.f32.gmra.mrb[0].mxu0 %v2223
      %v2500 = vpop.f32.mrb[0].mxu0
      %v2501 = vadd.f32 0.0, %v2500
      %v2502 = vpop.f32.mrb[0].mxu0
      %2503 = vmatprep.mubr.f32.mxu0 0.0
      %2504 = vmatmul.mubr.f32.gmra.mrb[0].mxu0 %v2225
      %v2505 = vpop.f32.mrb[0].mxu0
      %v2506 = vadd.f32 0.0, %v2505
      %v2507 = vpop.f32.mrb[0].mxu0
      %2508 = vmatprep.mubr.f32.mxu0 0.0
      %2509 = vmatmul.mubr.f32.gmra.mrb[0].mxu0 %v2227
      %v2510 = vpop.f32.mrb[0].mxu0
      %v2511 = vadd.f32 0.0, %v2510
      %v2512 = vpop.f32.mrb[0].mxu0
      %2513 = vmatprep.mubr.f32.mxu0 0.0
      %2514 = vmatmul.mubr.f32.gmra.mrb[0].mxu0 %v2229
      %v2515 = vpop.f32.mrb[0].mxu0
      %v2516 = vadd.f32 0.0, %v2515
      %v2517 = vpop.f32.mrb[0].mxu0
      %2518 = vmatprep.mubr.f32.mxu0 0.0
      %2519 = vmatmul.mubr.f32.gmra.mrb[0].mxu0 %v2231
      %v2520 = vpop.f32.mrb[0].mxu0
      %v2521 = vadd.f32 0.0, %v2520
      %v2522 = vpop.f32.mrb[0].mxu0
      %2523 = vmatprep.mubr.f32.mxu0 0.0
      %2524 = vmatmul.mubr.f32.gmra.mrb[0].mxu0 %v2233
      %v2525 = vpop.f32.mrb[0].mxu0
      %v2526 = vadd.f32 0.0, %v2525
      %v2527 = vpop.f32.mrb[0].mxu0
      %2528 = vmatprep.mubr.f32.mxu0 0.0
      %2529 = vmatmul.mubr.f32.gmra.mrb[0].mxu0 %v2235
      %v2530 = vpop.f32.mrb[0].mxu0
      %v2531 = vadd.f32 0.0, %v2530
      %v2532 = vpop.f32.mrb[0].mxu0
      %2533 = vmatprep.mubr.f32.mxu0 0.0
      %2534 = vmatmul.mubr.f32.gmra.mrb[0].mxu0 %v2237
      %v2535 = vpop.f32.mrb[0].mxu0
      %v2536 = vadd.f32 0.0, %v2535
      %v2537 = vpop.f32.mrb[0].mxu0
      %2538 = vmatprep.mubr.f32.mxu0 0.0
      %2539 = vmatmul.mubr.f32.gmra.mrb[0].mxu0 %v2239
      %v2540 = vpop.f32.mrb[0].mxu0
      %v2541 = vadd.f32 0.0, %v2540
      %v2542 = vpop.f32.mrb[0].mxu0
      %2543 = vmatprep.mubr.f32.mxu0 0.0
      %2544 = vmatmul.mubr.f32.gmra.mrb[0].mxu0 %v2241
      %v2545 = vpop.f32.mrb[0].mxu0
      %v2546 = vadd.f32 0.0, %v2545
      %v2547 = vpop.f32.mrb[0].mxu0
      %2548 = vmatprep.mubr.f32.mxu0 0.0
      %2549 = vmatmul.mubr.f32.gmra.mrb[0].mxu0 %v2243
      %v2550 = vpop.f32.mrb[0].mxu0
      %v2551 = vadd.f32 0.0, %v2550
      %v2552 = vpop.f32.mrb[0].mxu0
      %2553 = vmatprep.mubr.f32.mxu0 0.0
      %2554 = vmatmul.mubr.f32.gmra.mrb[0].mxu0 %v2245
      %v2555 = vpop.f32.mrb[0].mxu0
      %v2556 = vadd.f32 0.0, %v2555
      %v2557 = vpop.f32.mrb[0].mxu0
      %2558 = vmatprep.mubr.f32.mxu0 0.0
      %2559 = vmatmul.mubr.f32.gmra.mrb[0].mxu0 %v2247
      %v2560 = vpop.f32.mrb[0].mxu0
      %v2561 = vadd.f32 0.0, %v2560
      %v2562 = vpop.f32.mrb[0].mxu0
      %2563 = vmatprep.mubr.f32.mxu0 0.0
      %2564 = vmatmul.mubr.f32.gmra.mrb[0].mxu0 %v2249
      %v2565 = vpop.f32.mrb[0].mxu0
      %v2566 = vadd.f32 0.0, %v2565
      %v2567 = vpop.f32.mrb[0].mxu0
      %2568 = vmatprep.mubr.f32.mxu0 0.0
      %2569 = vmatmul.mubr.f32.gmra.mrb[0].mxu0 %v2251
      %v2570 = vpop.f32.mrb[0].mxu0
      %v2571 = vadd.f32 0.0, %v2570
      %v2572 = vpop.f32.mrb[0].mxu0
      %2573 = vmatprep.mubr.f32.mxu0 0.0
      %2574 = vmatmul.mubr.f32.gmra.mrb[0].mxu0 %v2253
      %v2575 = vpop.f32.mrb[0].mxu0
      %v2576 = vadd.f32 0.0, %v2575
      %v2577 = vpop.f32.mrb[0].mxu0
      %2578 = vmatprep.mubr.f32.mxu0 0.0
      %2579 = vmatmul.mubr.f32.gmra.mrb[0].mxu0 %v2255
      %v2580 = vpop.f32.mrb[0].mxu0
      %v2581 = vadd.f32 0.0, %v2580
      %v2582 = vpop.f32.mrb[0].mxu0
      %2583 = vmatprep.mubr.f32.mxu0 0.0
      %2584 = vmatmul.mubr.f32.gmra.mrb[0].mxu0 %v2257
      %v2585 = vpop.f32.mrb[0].mxu0
      %v2586 = vadd.f32 0.0, %v2585
      %v2587 = vpop.f32.mrb[0].mxu0
      %2588 = vmatprep.mubr.f32.mxu0 0.0
      %2589 = vmatmul.mubr.f32.gmra.mrb[0].mxu0 %v2259
      %v2590 = vpop.f32.mrb[0].mxu0
      %v2591 = vadd.f32 0.0, %v2590
      %v2592 = vpop.f32.mrb[0].mxu0
      %2593 = vmatprep.mubr.f32.mxu0 0.0
      %2594 = vmatmul.mubr.f32.gmra.mrb[0].mxu0 %v2261
      %v2595 = vpop.f32.mrb[0].mxu0
      %v2596 = vadd.f32 0.0, %v2595
      %v2597 = vpop.f32.mrb[0].mxu0
      %2598 = vmatprep.mubr.f32.mxu0 0.0
      %2599 = vmatmul.mubr.f32.gmra.mrb[0].mxu0 %v2263
      %v2600 = vpop.f32.mrb[0].mxu0
      %v2601 = vadd.f32 0.0, %v2600
      %v2602 = vpop.f32.mrb[0].mxu0
      %2603 = vmatprep.mubr.f32.mxu0 0.0
      %2604 = vmatmul.mubr.f32.gmra.mrb[0].mxu0 %v2265
      %v2605 = vpop.f32.mrb[0].mxu0
      %v2606 = vadd.f32 0.0, %v2605
      %v2607 = vpop.f32.mrb[0].mxu0
      %2608 = vmatprep.mubr.f32.mxu0 0.0
      %2609 = vmatmul.mubr.f32.gmra.mrb[0].mxu0 %v2267
      %v2610 = vpop.f32.mrb[0].mxu0
      %v2611 = vadd.f32 0.0, %v2610
      %v2612 = vpop.f32.mrb[0].mxu0
      %2613 = vmatprep.mubr.f32.mxu0 0.0
      %2614 = vmatmul.mubr.f32.gmra.mrb[0].mxu0 %v2269
      %v2615 = vpop.f32.mrb[0].mxu0
      %v2616 = vadd.f32 0.0, %v2615
      %v2617 = vpop.f32.mrb[0].mxu0
      %2618 = vmatprep.mubr.f32.mxu0 0.0
      %2619 = vmatmul.mubr.f32.gmra.mrb[0].mxu0 %v2271
      %v2620 = vpop.f32.mrb[0].mxu0
      %v2621 = vadd.f32 0.0, %v2620
      %v2622 = vpop.f32.mrb[0].mxu0
      %2623 = vmatprep.mubr.f32.mxu0 0.0
      %2624 = vmatmul.mubr.f32.gmra.mrb[0].mxu0 %v2273
      %v2625 = vpop.f32.mrb[0].mxu0
      %v2626 = vadd.f32 0.0, %v2625
      %v2627 = vpop.f32.mrb[0].mxu0
      %2628 = vmatprep.mubr.f32.mxu0 0.0
      %2629 = vmatmul.mubr.f32.gmra.mrb[0].mxu0 %v2275
      %v2630 = vpop.f32.mrb[0].mxu0
      %v2631 = vadd.f32 0.0, %v2630
      %v2632 = vpop.f32.mrb[0].mxu0
      %2633 = vmatprep.mubr.f32.mxu0 0.0
      %2634 = vmatmul.mubr.f32.gmra.mrb[0].mxu0 %v2277
      %v2635 = vpop.f32.mrb[0].mxu0
      %v2636 = vadd.f32 0.0, %v2635
      %v2637 = vpop.f32.mrb[0].mxu0
      %2638 = vmatprep.mubr.f32.mxu0 0.0
      %2639 = vmatmul.mubr.f32.gmra.mrb[0].mxu0 %v2279
      %v2640 = vpop.f32.mrb[0].mxu0
      %v2641 = vadd.f32 0.0, %v2640
      %v2642 = vpop.f32.mrb[0].mxu0
      %2643 = vmatprep.mubr.f32.mxu0 0.0
      %2644 = vmatmul.mubr.f32.gmra.mrb[0].mxu0 %v2281
      %v2645 = vpop.f32.mrb[0].mxu0
      %v2646 = vadd.f32 0.0, %v2645
      %v2647 = vpop.f32.mrb[0].mxu0
      %2648 = vmatprep.mubr.f32.mxu0 0.0
      %2649 = vmatmul.mubr.f32.gmra.mrb[0].mxu0 %v2283
      %v2650 = vpop.f32.mrb[0].mxu0
      %v2651 = vadd.f32 0.0, %v2650
      %v2652 = vpop.f32.mrb[0].mxu0
      %2653 = vmatprep.mubr.f32.mxu0 0.0
      %2654 = vmatmul.mubr.f32.gmra.mrb[0].mxu0 %v2285
      %v2655 = vpop.f32.mrb[0].mxu0
      %v2656 = vadd.f32 0.0, %v2655
      %v2657 = vpop.f32.mrb[0].mxu0
      %2658 = vmatprep.mubr.f32.mxu0 0.0
      %2659 = vmatmul.mubr.f32.gmra.mrb[0].mxu0 %v2287
      %v2660 = vpop.f32.mrb[0].mxu0
      %v2661 = vadd.f32 0.0, %v2660
      %v2662 = vpop.f32.mrb[0].mxu0
      %2663 = vmatprep.mubr.f32.mxu0 0.0
      %2664 = vmatmul.mubr.f32.gmra.mrb[0].mxu0 %v2289
      %v2665 = vpop.f32.mrb[0].mxu0
      %v2666 = vadd.f32 0.0, %v2665
      %v2667 = vpop.f32.mrb[0].mxu0
      %2668 = vmatprep.mubr.f32.mxu0 0.0
      %2669 = vmatmul.mubr.f32.gmra.mrb[0].mxu0 %v2291
      %v2670 = vpop.f32.mrb[0].mxu0
      %v2671 = vadd.f32 0.0, %v2670
      %v2672 = vpop.f32.mrb[0].mxu0
      %2673 = vmatprep.mubr.f32.mxu0 0.0
      %2674 = vmatmul.mubr.f32.gmra.mrb[0].mxu0 %v2293
      %v2675 = vpop.f32.mrb[0].mxu0
      %v2676 = vadd.f32 0.0, %v2675
      %v2677 = vpop.f32.mrb[0].mxu0
      %2678 = vmatprep.mubr.f32.mxu0 0.0
      %2679 = vmatmul.mubr.f32.gmra.mrb[0].mxu0 %v2295
      %v2680 = vpop.f32.mrb[0].mxu0
      %v2681 = vadd.f32 0.0, %v2680
      %v2682 = vpop.f32.mrb[0].mxu0
      %2683 = vmatprep.mubr.f32.mxu0 0.0
      %2684 = vmatmul.mubr.f32.gmra.mrb[0].mxu0 %v2297
      %v2685 = vpop.f32.mrb[0].mxu0
      %v2686 = vadd.f32 0.0, %v2685
      %v2687 = vpop.f32.mrb[0].mxu0
      %2688 = vmatprep.mubr.f32.mxu0 0.0
      %2689 = vmatmul.mubr.f32.gmra.mrb[0].mxu0 %v2299
      %v2690 = vpop.f32.mrb[0].mxu0
      %v2691 = vadd.f32 0.0, %v2690
      %v2692 = vpop.f32.mrb[0].mxu0
      %2693 = vdwg.mxu0
      %v2694 = vadd.f32 %v1972, %v2371
      %v2695 = vadd.f32 %v1973, %v2376
      %v2696 = vadd.f32 %v1974, %v2381
      %v2697 = vadd.f32 %v1975, %v2386
      %v2698 = vadd.f32 %v1976, %v2391
      %v2699 = vadd.f32 %v1977, %v2396
      %v2700 = vadd.f32 %v1978, %v2401
      %v2701 = vadd.f32 %v1979, %v2406
      %v2702 = vadd.f32 %v1980, %v2411
      %v2703 = vadd.f32 %v1981, %v2416
      %v2704 = vadd.f32 %v1982, %v2421
      %v2705 = vadd.f32 %v1983, %v2426
      %v2706 = vadd.f32 %v1984, %v2431
      %v2707 = vadd.f32 %v1985, %v2436
      %v2708 = vadd.f32 %v1986, %v2441
      %v2709 = vadd.f32 %v1987, %v2446
      %v2710 = vadd.f32 %v1988, %v2451
      %v2711 = vadd.f32 %v1989, %v2456
      %v2712 = vadd.f32 %v1990, %v2461
      %v2713 = vadd.f32 %v1991, %v2466
      %v2714 = vadd.f32 %v1992, %v2471
      %v2715 = vadd.f32 %v1993, %v2476
      %v2716 = vadd.f32 %v1994, %v2481
      %v2717 = vadd.f32 %v1995, %v2486
      %v2718 = vadd.f32 %v1996, %v2491
      %v2719 = vadd.f32 %v1997, %v2496
      %v2720 = vadd.f32 %v1998, %v2501
      %v2721 = vadd.f32 %v1999, %v2506
      %v2722 = vadd.f32 %v2000, %v2511
      %v2723 = vadd.f32 %v2001, %v2516
      %v2724 = vadd.f32 %v2002, %v2521
      %v2725 = vadd.f32 %v2003, %v2526
      %v2726 = vadd.f32 %v2004, %v2531
      %v2727 = vadd.f32 %v2005, %v2536
      %v2728 = vadd.f32 %v2006, %v2541
      %v2729 = vadd.f32 %v2007, %v2546
      %v2730 = vadd.f32 %v2008, %v2551
      %v2731 = vadd.f32 %v2009, %v2556
      %v2732 = vadd.f32 %v2010, %v2561
      %v2733 = vadd.f32 %v2011, %v2566
      %v2734 = vadd.f32 %v2012, %v2571
      %v2735 = vadd.f32 %v2013, %v2576
      %v2736 = vadd.f32 %v2014, %v2581
      %v2737 = vadd.f32 %v2015, %v2586
      %v2738 = vadd.f32 %v2016, %v2591
      %v2739 = vadd.f32 %v2017, %v2596
      %v2740 = vadd.f32 %v2018, %v2601
      %v2741 = vadd.f32 %v2019, %v2606
      %v2742 = vadd.f32 %v2020, %v2611
      %v2743 = vadd.f32 %v2021, %v2616
      %v2744 = vadd.f32 %v2022, %v2621
      %v2745 = vadd.f32 %v2023, %v2626
      %v2746 = vadd.f32 %v2024, %v2631
      %v2747 = vadd.f32 %v2025, %v2636
      %v2748 = vadd.f32 %v2026, %v2641
      %v2749 = vadd.f32 %v2027, %v2646
      %v2750 = vadd.f32 %v2028, %v2651
      %v2751 = vadd.f32 %v2029, %v2656
      %v2752 = vadd.f32 %v2030, %v2661
      %v2753 = vadd.f32 %v2031, %v2666
      %v2754 = vadd.f32 %v2032, %v2671
      %v2755 = vadd.f32 %v2033, %v2676
      %v2756 = vadd.f32 %v2034, %v2681
      %v2757 = vadd.f32 %v2035, %v2686
      %v2758 = vadd.f32 %v2036, %v2691
      %s2759 = scalar_lea.vmem %s2, 24
      %v2760 = vld [vmem:[%s2759] sm:$0x7f]
      %vm2761 = vcmask 1044480
      %v2762 = vrot.slane %v585, 3
      %v2763 = vrot.slane %v586, 3
      %v2764 = vsel %vm2761, %v2762, %v2763
      %v2765 = vrot.slane %v587, 3
      %v2766 = vsel %vm2761, %v2763, %v2765
      %v2767 = vrot.slane %v588, 3
      %v2768 = vsel %vm2761, %v2765, %v2767
      %v2769 = vrot.slane %v589, 3
      %v2770 = vsel %vm2761, %v2767, %v2769
      %v2771 = vrot.slane %v590, 3
      %v2772 = vsel %vm2761, %v2769, %v2771
      %v2773 = vrot.slane %v591, 3
      %v2774 = vsel %vm2761, %v2771, %v2773
      %v2775 = vrot.slane %v592, 3
      %v2776 = vsel %vm2761, %v2773, %v2775
      %v2777 = vrot.slane %v593, 3
      %v2778 = vsel %vm2761, %v2775, %v2777
      %v2779 = vrot.slane %v594, 3
      %v2780 = vsel %vm2761, %v2777, %v2779
      %v2781 = vrot.slane %v595, 3
      %v2782 = vsel %vm2761, %v2779, %v2781
      %v2783 = vrot.slane %v596, 3
      %v2784 = vsel %vm2761, %v2781, %v2783
      %v2785 = vrot.slane %v597, 3
      %v2786 = vsel %vm2761, %v2783, %v2785
      %v2787 = vrot.slane %v598, 3
      %v2788 = vsel %vm2761, %v2785, %v2787
      %v2789 = vrot.slane %v599, 3
      %v2790 = vsel %vm2761, %v2787, %v2789
      %v2791 = vrot.slane %v600, 3
      %v2792 = vsel %vm2761, %v2789, %v2791
      %v2793 = vrot.slane %v601, 3
      %v2794 = vsel %vm2761, %v2791, %v2793
      %v2795 = vrot.slane %v602, 3
      %v2796 = vsel %vm2761, %v2793, %v2795
      %v2797 = vrot.slane %v603, 3
      %v2798 = vsel %vm2761, %v2795, %v2797
      %v2799 = vrot.slane %v604, 3
      %v2800 = vsel %vm2761, %v2797, %v2799
      %v2801 = vrot.slane %v605, 3
      %v2802 = vsel %vm2761, %v2799, %v2801
      %v2803 = vrot.slane %v606, 3
      %v2804 = vsel %vm2761, %v2801, %v2803
      %v2805 = vrot.slane %v607, 3
      %v2806 = vsel %vm2761, %v2803, %v2805
      %v2807 = vrot.slane %v608, 3
      %v2808 = vsel %vm2761, %v2805, %v2807
      %v2809 = vrot.slane %v609, 3
      %v2810 = vsel %vm2761, %v2807, %v2809
      %v2811 = vrot.slane %v610, 3
      %v2812 = vsel %vm2761, %v2809, %v2811
      %v2813 = vrot.slane %v611, 3
      %v2814 = vsel %vm2761, %v2811, %v2813
      %v2815 = vrot.slane %v612, 3
      %v2816 = vsel %vm2761, %v2813, %v2815
      %v2817 = vrot.slane %v613, 3
      %v2818 = vsel %vm2761, %v2815, %v2817
      %v2819 = vrot.slane %v614, 3
      %v2820 = vsel %vm2761, %v2817, %v2819
      %v2821 = vrot.slane %v615, 3
      %v2822 = vsel %vm2761, %v2819, %v2821
      %v2823 = vrot.slane %v616, 3
      %v2824 = vsel %vm2761, %v2821, %v2823
      %v2825 = vrot.slane %v617, 3
      %v2826 = vsel %vm2761, %v2823, %v2825
      %v2827 = vrot.slane %v618, 3
      %v2828 = vsel %vm2761, %v2825, %v2827
      %v2829 = vrot.slane %v619, 3
      %v2830 = vsel %vm2761, %v2827, %v2829
      %v2831 = vrot.slane %v620, 3
      %v2832 = vsel %vm2761, %v2829, %v2831
      %v2833 = vrot.slane %v621, 3
      %v2834 = vsel %vm2761, %v2831, %v2833
      %v2835 = vrot.slane %v622, 3
      %v2836 = vsel %vm2761, %v2833, %v2835
      %v2837 = vrot.slane %v623, 3
      %v2838 = vsel %vm2761, %v2835, %v2837
      %v2839 = vrot.slane %v624, 3
      %v2840 = vsel %vm2761, %v2837, %v2839
      %v2841 = vrot.slane %v625, 3
      %v2842 = vsel %vm2761, %v2839, %v2841
      %v2843 = vrot.slane %v626, 3
      %v2844 = vsel %vm2761, %v2841, %v2843
      %v2845 = vrot.slane %v627, 3
      %v2846 = vsel %vm2761, %v2843, %v2845
      %v2847 = vrot.slane %v628, 3
      %v2848 = vsel %vm2761, %v2845, %v2847
      %v2849 = vrot.slane %v629, 3
      %v2850 = vsel %vm2761, %v2847, %v2849
      %v2851 = vrot.slane %v630, 3
      %v2852 = vsel %vm2761, %v2849, %v2851
      %v2853 = vrot.slane %v631, 3
      %v2854 = vsel %vm2761, %v2851, %v2853
      %v2855 = vrot.slane %v632, 3
      %v2856 = vsel %vm2761, %v2853, %v2855
      %v2857 = vrot.slane %v633, 3
      %v2858 = vsel %vm2761, %v2855, %v2857
      %v2859 = vrot.slane %v634, 3
      %v2860 = vsel %vm2761, %v2857, %v2859
      %v2861 = vrot.slane %v635, 3
      %v2862 = vsel %vm2761, %v2859, %v2861
      %v2863 = vrot.slane %v636, 3
      %v2864 = vsel %vm2761, %v2861, %v2863
      %v2865 = vrot.slane %v637, 3
      %v2866 = vsel %vm2761, %v2863, %v2865
      %v2867 = vrot.slane %v638, 3
      %v2868 = vsel %vm2761, %v2865, %v2867
      %v2869 = vrot.slane %v639, 3
      %v2870 = vsel %vm2761, %v2867, %v2869
      %v2871 = vrot.slane %v640, 3
      %v2872 = vsel %vm2761, %v2869, %v2871
      %v2873 = vrot.slane %v641, 3
      %v2874 = vsel %vm2761, %v2871, %v2873
      %v2875 = vrot.slane %v642, 3
      %v2876 = vsel %vm2761, %v2873, %v2875
      %v2877 = vrot.slane %v643, 3
      %v2878 = vsel %vm2761, %v2875, %v2877
      %v2879 = vrot.slane %v644, 3
      %v2880 = vsel %vm2761, %v2877, %v2879
      %v2881 = vrot.slane %v645, 3
      %v2882 = vsel %vm2761, %v2879, %v2881
      %v2883 = vrot.slane %v646, 3
      %v2884 = vsel %vm2761, %v2881, %v2883
      %v2885 = vrot.slane %v647, 3
      %v2886 = vsel %vm2761, %v2883, %v2885
      %v2887 = vrot.slane %v648, 3
      %v2888 = vsel %vm2761, %v2885, %v2887
      %v2889 = vrot.slane %v649, 3
      %v2890 = vsel %vm2761, %v2887, %v2889
      %v2891 = vrot.slane %v650, 3
      %v2892 = vsel %vm2761, %v2889, %v2891
      %v2893 = vsel %vm660, %v2764, 0
      %v2895 = vsel %vm660, %v2766, 0
      %v2897 = vsel %vm660, %v2768, 0
      %v2899 = vsel %vm660, %v2770, 0
      %v2901 = vsel %vm660, %v2772, 0
      %v2903 = vsel %vm660, %v2774, 0
      %v2905 = vsel %vm660, %v2776, 0
      %v2907 = vsel %vm660, %v2778, 0
      %v2909 = vsel %vm660, %v2780, 0
      %v2911 = vsel %vm660, %v2782, 0
      %v2913 = vsel %vm660, %v2784, 0
      %v2915 = vsel %vm660, %v2786, 0
      %v2917 = vsel %vm660, %v2788, 0
      %v2919 = vsel %vm660, %v2790, 0
      %v2921 = vsel %vm660, %v2792, 0
      %v2923 = vsel %vm660, %v2794, 0
      %v2925 = vsel %vm660, %v2796, 0
      %v2927 = vsel %vm660, %v2798, 0
      %v2929 = vsel %vm660, %v2800, 0
      %v2931 = vsel %vm660, %v2802, 0
      %v2933 = vsel %vm660, %v2804, 0
      %v2935 = vsel %vm660, %v2806, 0
      %v2937 = vsel %vm660, %v2808, 0
      %v2939 = vsel %vm660, %v2810, 0
      %v2941 = vsel %vm660, %v2812, 0
      %v2943 = vsel %vm660, %v2814, 0
      %v2945 = vsel %vm660, %v2816, 0
      %v2947 = vsel %vm660, %v2818, 0
      %v2949 = vsel %vm660, %v2820, 0
      %v2951 = vsel %vm660, %v2822, 0
      %v2953 = vsel %vm660, %v2824, 0
      %v2955 = vsel %vm660, %v2826, 0
      %v2957 = vsel %vm660, %v2828, 0
      %v2959 = vsel %vm660, %v2830, 0
      %v2961 = vsel %vm660, %v2832, 0
      %v2963 = vsel %vm660, %v2834, 0
      %v2965 = vsel %vm660, %v2836, 0
      %v2967 = vsel %vm660, %v2838, 0
      %v2969 = vsel %vm660, %v2840, 0
      %v2971 = vsel %vm660, %v2842, 0
      %v2973 = vsel %vm660, %v2844, 0
      %v2975 = vsel %vm660, %v2846, 0
      %v2977 = vsel %vm660, %v2848, 0
      %v2979 = vsel %vm660, %v2850, 0
      %v2981 = vsel %vm660, %v2852, 0
      %v2983 = vsel %vm660, %v2854, 0
      %v2985 = vsel %vm660, %v2856, 0
      %v2987 = vsel %vm660, %v2858, 0
      %v2989 = vsel %vm660, %v2860, 0
      %v2991 = vsel %vm660, %v2862, 0
      %v2993 = vsel %vm660, %v2864, 0
      %v2995 = vsel %vm660, %v2866, 0
      %v2997 = vsel %vm660, %v2868, 0
      %v2999 = vsel %vm660, %v2870, 0
      %v3001 = vsel %vm660, %v2872, 0
      %v3003 = vsel %vm660, %v2874, 0
      %v3005 = vsel %vm660, %v2876, 0
      %v3007 = vsel %vm660, %v2878, 0
      %v3009 = vsel %vm660, %v2880, 0
      %v3011 = vsel %vm660, %v2882, 0
      %v3013 = vsel %vm660, %v2884, 0
      %v3015 = vsel %vm660, %v2886, 0
      %v3017 = vsel %vm660, %v2888, 0
      %v3019 = vsel %vm660, %v2890, 0
      %v3021 = vsel %vm660, %v2892, 0
      %v3024 = vsel %vm856, %v2760, 0
      %3026 = vmatprep.subr.mxu0 0.0
      %3027 = vmatpush1.msra.mxu0 %v3024
      %3028 = vmatprep.subr.mxu0 0.0
      %3029 = vmatpush1.msra.mxu0 0.0
      %3030 = vmatprep.subr.mxu0 0.0
      %3031 = vmatpush1.msra.mxu0 0.0
      %3032 = vmatprep.subr.mxu0 0.0
      %3033 = vmatpush1.msra.mxu0 0.0
      %3034 = vmatprep.subr.mxu0 0.0
      %3035 = vmatpush1.msra.mxu0 0.0
      %3036 = vmatprep.subr.mxu0 0.0
      %3037 = vmatpush1.msra.mxu0 0.0
      %3038 = vmatprep.subr.mxu0 0.0
      %3039 = vmatpush1.msra.mxu0 0.0
      %3040 = vmatprep.subr.mxu0 0.0
      %3041 = vmatpush1.msra.mxu0 0.0
      %3042 = vmatprep.subr.mxu0 0.0
      %3043 = vmatpush1.msra.mxu0 0.0
      %3044 = vmatprep.subr.mxu0 0.0
      %3045 = vmatpush1.msra.mxu0 0.0
      %3046 = vmatprep.subr.mxu0 0.0
      %3047 = vmatpush1.msra.mxu0 0.0
      %3048 = vmatprep.subr.mxu0 0.0
      %3049 = vmatpush1.msra.mxu0 0.0
      %3050 = vmatprep.subr.mxu0 0.0
      %3051 = vmatpush1.msra.mxu0 0.0
      %3052 = vmatprep.subr.mxu0 0.0
      %3053 = vmatpush1.msra.mxu0 0.0
      %3054 = vmatprep.subr.mxu0 0.0
      %3055 = vmatpush1.msra.mxu0 0.0
      %3056 = vmatprep.subr.mxu0 0.0
      %3057 = vmatpush1.msra.mxu0 0.0
      %3058 = vmatprep.subr.mxu0 0.0
      %3059 = vmatpush1.msra.mxu0 0.0
      %3060 = vmatprep.subr.mxu0 0.0
      %3061 = vmatpush1.msra.mxu0 0.0
      %3062 = vmatprep.subr.mxu0 0.0
      %3063 = vmatpush1.msra.mxu0 0.0
      %3064 = vmatprep.subr.mxu0 0.0
      %3065 = vmatpush1.msra.mxu0 0.0
      %3066 = vmatprep.subr.mxu0 0.0
      %3067 = vmatpush1.msra.mxu0 0.0
      %3068 = vmatprep.subr.mxu0 0.0
      %3069 = vmatpush1.msra.mxu0 0.0
      %3070 = vmatprep.subr.mxu0 0.0
      %3071 = vmatpush1.msra.mxu0 0.0
      %3072 = vmatprep.subr.mxu0 0.0
      %3073 = vmatpush1.msra.mxu0 0.0
      %3074 = vmatprep.subr.mxu0 0.0
      %3075 = vmatpush1.msra.mxu0 0.0
      %3076 = vmatprep.subr.mxu0 0.0
      %3077 = vmatpush1.msra.mxu0 0.0
      %3078 = vmatprep.subr.mxu0 0.0
      %3079 = vmatpush1.msra.mxu0 0.0
      %3080 = vmatprep.subr.mxu0 0.0
      %3081 = vmatpush1.msra.mxu0 0.0
      %3082 = vmatprep.subr.mxu0 0.0
      %3083 = vmatpush1.msra.mxu0 0.0
      %3084 = vmatprep.subr.mxu0 0.0
      %3085 = vmatpush1.msra.mxu0 0.0
      %3086 = vmatprep.subr.mxu0 0.0
      %3087 = vmatpush1.msra.mxu0 0.0
      %3088 = vmatprep.subr.mxu0 0.0
      %3089 = vmatpush1.msra.mxu0 0.0
      %3090 = vmatprep.mubr.f32.mxu0 0.0
      %3091 = vmatmul.mubr.f32.gmra.mrb[0].mxu0 %v2893
      %v3092 = vpop.f32.mrb[0].mxu0
      %v3093 = vadd.f32 0.0, %v3092
      %v3094 = vpop.f32.mrb[0].mxu0
      %3095 = vmatprep.mubr.f32.mxu0 0.0
      %3096 = vmatmul.mubr.f32.gmra.mrb[0].mxu0 %v2895
      %v3097 = vpop.f32.mrb[0].mxu0
      %v3098 = vadd.f32 0.0, %v3097
      %v3099 = vpop.f32.mrb[0].mxu0
      %3100 = vmatprep.mubr.f32.mxu0 0.0
      %3101 = vmatmul.mubr.f32.gmra.mrb[0].mxu0 %v2897
      %v3102 = vpop.f32.mrb[0].mxu0
      %v3103 = vadd.f32 0.0, %v3102
      %v3104 = vpop.f32.mrb[0].mxu0
      %3105 = vmatprep.mubr.f32.mxu0 0.0
      %3106 = vmatmul.mubr.f32.gmra.mrb[0].mxu0 %v2899
      %v3107 = vpop.f32.mrb[0].mxu0
      %v3108 = vadd.f32 0.0, %v3107
      %v3109 = vpop.f32.mrb[0].mxu0
      %3110 = vmatprep.mubr.f32.mxu0 0.0
      %3111 = vmatmul.mubr.f32.gmra.mrb[0].mxu0 %v2901
      %v3112 = vpop.f32.mrb[0].mxu0
      %v3113 = vadd.f32 0.0, %v3112
      %v3114 = vpop.f32.mrb[0].mxu0
      %3115 = vmatprep.mubr.f32.mxu0 0.0
      %3116 = vmatmul.mubr.f32.gmra.mrb[0].mxu0 %v2903
      %v3117 = vpop.f32.mrb[0].mxu0
      %v3118 = vadd.f32 0.0, %v3117
      %v3119 = vpop.f32.mrb[0].mxu0
      %3120 = vmatprep.mubr.f32.mxu0 0.0
      %3121 = vmatmul.mubr.f32.gmra.mrb[0].mxu0 %v2905
      %v3122 = vpop.f32.mrb[0].mxu0
      %v3123 = vadd.f32 0.0, %v3122
      %v3124 = vpop.f32.mrb[0].mxu0
      %3125 = vmatprep.mubr.f32.mxu0 0.0
      %3126 = vmatmul.mubr.f32.gmra.mrb[0].mxu0 %v2907
      %v3127 = vpop.f32.mrb[0].mxu0
      %v3128 = vadd.f32 0.0, %v3127
      %v3129 = vpop.f32.mrb[0].mxu0
      %3130 = vmatprep.mubr.f32.mxu0 0.0
      %3131 = vmatmul.mubr.f32.gmra.mrb[0].mxu0 %v2909
      %v3132 = vpop.f32.mrb[0].mxu0
      %v3133 = vadd.f32 0.0, %v3132
      %v3134 = vpop.f32.mrb[0].mxu0
      %3135 = vmatprep.mubr.f32.mxu0 0.0
      %3136 = vmatmul.mubr.f32.gmra.mrb[0].mxu0 %v2911
      %v3137 = vpop.f32.mrb[0].mxu0
      %v3138 = vadd.f32 0.0, %v3137
      %v3139 = vpop.f32.mrb[0].mxu0
      %3140 = vmatprep.mubr.f32.mxu0 0.0
      %3141 = vmatmul.mubr.f32.gmra.mrb[0].mxu0 %v2913
      %v3142 = vpop.f32.mrb[0].mxu0
      %v3143 = vadd.f32 0.0, %v3142
      %v3144 = vpop.f32.mrb[0].mxu0
      %3145 = vmatprep.mubr.f32.mxu0 0.0
      %3146 = vmatmul.mubr.f32.gmra.mrb[0].mxu0 %v2915
      %v3147 = vpop.f32.mrb[0].mxu0
      %v3148 = vadd.f32 0.0, %v3147
      %v3149 = vpop.f32.mrb[0].mxu0
      %3150 = vmatprep.mubr.f32.mxu0 0.0
      %3151 = vmatmul.mubr.f32.gmra.mrb[0].mxu0 %v2917
      %v3152 = vpop.f32.mrb[0].mxu0
      %v3153 = vadd.f32 0.0, %v3152
      %v3154 = vpop.f32.mrb[0].mxu0
      %3155 = vmatprep.mubr.f32.mxu0 0.0
      %3156 = vmatmul.mubr.f32.gmra.mrb[0].mxu0 %v2919
      %v3157 = vpop.f32.mrb[0].mxu0
      %v3158 = vadd.f32 0.0, %v3157
      %v3159 = vpop.f32.mrb[0].mxu0
      %3160 = vmatprep.mubr.f32.mxu0 0.0
      %3161 = vmatmul.mubr.f32.gmra.mrb[0].mxu0 %v2921
      %v3162 = vpop.f32.mrb[0].mxu0
      %v3163 = vadd.f32 0.0, %v3162
      %v3164 = vpop.f32.mrb[0].mxu0
      %3165 = vmatprep.mubr.f32.mxu0 0.0
      %3166 = vmatmul.mubr.f32.gmra.mrb[0].mxu0 %v2923
      %v3167 = vpop.f32.mrb[0].mxu0
      %v3168 = vadd.f32 0.0, %v3167
      %v3169 = vpop.f32.mrb[0].mxu0
      %3170 = vmatprep.mubr.f32.mxu0 0.0
      %3171 = vmatmul.mubr.f32.gmra.mrb[0].mxu0 %v2925
      %v3172 = vpop.f32.mrb[0].mxu0
      %v3173 = vadd.f32 0.0, %v3172
      %v3174 = vpop.f32.mrb[0].mxu0
      %3175 = vmatprep.mubr.f32.mxu0 0.0
      %3176 = vmatmul.mubr.f32.gmra.mrb[0].mxu0 %v2927
      %v3177 = vpop.f32.mrb[0].mxu0
      %v3178 = vadd.f32 0.0, %v3177
      %v3179 = vpop.f32.mrb[0].mxu0
      %3180 = vmatprep.mubr.f32.mxu0 0.0
      %3181 = vmatmul.mubr.f32.gmra.mrb[0].mxu0 %v2929
      %v3182 = vpop.f32.mrb[0].mxu0
      %v3183 = vadd.f32 0.0, %v3182
      %v3184 = vpop.f32.mrb[0].mxu0
      %3185 = vmatprep.mubr.f32.mxu0 0.0
      %3186 = vmatmul.mubr.f32.gmra.mrb[0].mxu0 %v2931
      %v3187 = vpop.f32.mrb[0].mxu0
      %v3188 = vadd.f32 0.0, %v3187
      %v3189 = vpop.f32.mrb[0].mxu0
      %3190 = vmatprep.mubr.f32.mxu0 0.0
      %3191 = vmatmul.mubr.f32.gmra.mrb[0].mxu0 %v2933
      %v3192 = vpop.f32.mrb[0].mxu0
      %v3193 = vadd.f32 0.0, %v3192
      %v3194 = vpop.f32.mrb[0].mxu0
      %3195 = vmatprep.mubr.f32.mxu0 0.0
      %3196 = vmatmul.mubr.f32.gmra.mrb[0].mxu0 %v2935
      %v3197 = vpop.f32.mrb[0].mxu0
      %v3198 = vadd.f32 0.0, %v3197
      %v3199 = vpop.f32.mrb[0].mxu0
      %3200 = vmatprep.mubr.f32.mxu0 0.0
      %3201 = vmatmul.mubr.f32.gmra.mrb[0].mxu0 %v2937
      %v3202 = vpop.f32.mrb[0].mxu0
      %v3203 = vadd.f32 0.0, %v3202
      %v3204 = vpop.f32.mrb[0].mxu0
      %3205 = vmatprep.mubr.f32.mxu0 0.0
      %3206 = vmatmul.mubr.f32.gmra.mrb[0].mxu0 %v2939
      %v3207 = vpop.f32.mrb[0].mxu0
      %v3208 = vadd.f32 0.0, %v3207
      %v3209 = vpop.f32.mrb[0].mxu0
      %3210 = vmatprep.mubr.f32.mxu0 0.0
      %3211 = vmatmul.mubr.f32.gmra.mrb[0].mxu0 %v2941
      %v3212 = vpop.f32.mrb[0].mxu0
      %v3213 = vadd.f32 0.0, %v3212
      %v3214 = vpop.f32.mrb[0].mxu0
      %3215 = vmatprep.mubr.f32.mxu0 0.0
      %3216 = vmatmul.mubr.f32.gmra.mrb[0].mxu0 %v2943
      %v3217 = vpop.f32.mrb[0].mxu0
      %v3218 = vadd.f32 0.0, %v3217
      %v3219 = vpop.f32.mrb[0].mxu0
      %3220 = vmatprep.mubr.f32.mxu0 0.0
      %3221 = vmatmul.mubr.f32.gmra.mrb[0].mxu0 %v2945
      %v3222 = vpop.f32.mrb[0].mxu0
      %v3223 = vadd.f32 0.0, %v3222
      %v3224 = vpop.f32.mrb[0].mxu0
      %3225 = vmatprep.mubr.f32.mxu0 0.0
      %3226 = vmatmul.mubr.f32.gmra.mrb[0].mxu0 %v2947
      %v3227 = vpop.f32.mrb[0].mxu0
      %v3228 = vadd.f32 0.0, %v3227
      %v3229 = vpop.f32.mrb[0].mxu0
      %3230 = vmatprep.mubr.f32.mxu0 0.0
      %3231 = vmatmul.mubr.f32.gmra.mrb[0].mxu0 %v2949
      %v3232 = vpop.f32.mrb[0].mxu0
      %v3233 = vadd.f32 0.0, %v3232
      %v3234 = vpop.f32.mrb[0].mxu0
      %3235 = vmatprep.mubr.f32.mxu0 0.0
      %3236 = vmatmul.mubr.f32.gmra.mrb[0].mxu0 %v2951
      %v3237 = vpop.f32.mrb[0].mxu0
      %v3238 = vadd.f32 0.0, %v3237
      %v3239 = vpop.f32.mrb[0].mxu0
      %3240 = vmatprep.mubr.f32.mxu0 0.0
      %3241 = vmatmul.mubr.f32.gmra.mrb[0].mxu0 %v2953
      %v3242 = vpop.f32.mrb[0].mxu0
      %v3243 = vadd.f32 0.0, %v3242
      %v3244 = vpop.f32.mrb[0].mxu0
      %3245 = vmatprep.mubr.f32.mxu0 0.0
      %3246 = vmatmul.mubr.f32.gmra.mrb[0].mxu0 %v2955
      %v3247 = vpop.f32.mrb[0].mxu0
      %v3248 = vadd.f32 0.0, %v3247
      %v3249 = vpop.f32.mrb[0].mxu0
      %3250 = vmatprep.mubr.f32.mxu0 0.0
      %3251 = vmatmul.mubr.f32.gmra.mrb[0].mxu0 %v2957
      %v3252 = vpop.f32.mrb[0].mxu0
      %v3253 = vadd.f32 0.0, %v3252
      %v3254 = vpop.f32.mrb[0].mxu0
      %3255 = vmatprep.mubr.f32.mxu0 0.0
      %3256 = vmatmul.mubr.f32.gmra.mrb[0].mxu0 %v2959
      %v3257 = vpop.f32.mrb[0].mxu0
      %v3258 = vadd.f32 0.0, %v3257
      %v3259 = vpop.f32.mrb[0].mxu0
      %3260 = vmatprep.mubr.f32.mxu0 0.0
      %3261 = vmatmul.mubr.f32.gmra.mrb[0].mxu0 %v2961
      %v3262 = vpop.f32.mrb[0].mxu0
      %v3263 = vadd.f32 0.0, %v3262
      %v3264 = vpop.f32.mrb[0].mxu0
      %3265 = vmatprep.mubr.f32.mxu0 0.0
      %3266 = vmatmul.mubr.f32.gmra.mrb[0].mxu0 %v2963
      %v3267 = vpop.f32.mrb[0].mxu0
      %v3268 = vadd.f32 0.0, %v3267
      %v3269 = vpop.f32.mrb[0].mxu0
      %3270 = vmatprep.mubr.f32.mxu0 0.0
      %3271 = vmatmul.mubr.f32.gmra.mrb[0].mxu0 %v2965
      %v3272 = vpop.f32.mrb[0].mxu0
      %v3273 = vadd.f32 0.0, %v3272
      %v3274 = vpop.f32.mrb[0].mxu0
      %3275 = vmatprep.mubr.f32.mxu0 0.0
      %3276 = vmatmul.mubr.f32.gmra.mrb[0].mxu0 %v2967
      %v3277 = vpop.f32.mrb[0].mxu0
      %v3278 = vadd.f32 0.0, %v3277
      %v3279 = vpop.f32.mrb[0].mxu0
      %3280 = vmatprep.mubr.f32.mxu0 0.0
      %3281 = vmatmul.mubr.f32.gmra.mrb[0].mxu0 %v2969
      %v3282 = vpop.f32.mrb[0].mxu0
      %v3283 = vadd.f32 0.0, %v3282
      %v3284 = vpop.f32.mrb[0].mxu0
      %3285 = vmatprep.mubr.f32.mxu0 0.0
      %3286 = vmatmul.mubr.f32.gmra.mrb[0].mxu0 %v2971
      %v3287 = vpop.f32.mrb[0].mxu0
      %v3288 = vadd.f32 0.0, %v3287
      %v3289 = vpop.f32.mrb[0].mxu0
      %3290 = vmatprep.mubr.f32.mxu0 0.0
      %3291 = vmatmul.mubr.f32.gmra.mrb[0].mxu0 %v2973
      %v3292 = vpop.f32.mrb[0].mxu0
      %v3293 = vadd.f32 0.0, %v3292
      %v3294 = vpop.f32.mrb[0].mxu0
      %3295 = vmatprep.mubr.f32.mxu0 0.0
      %3296 = vmatmul.mubr.f32.gmra.mrb[0].mxu0 %v2975
      %v3297 = vpop.f32.mrb[0].mxu0
      %v3298 = vadd.f32 0.0, %v3297
      %v3299 = vpop.f32.mrb[0].mxu0
      %3300 = vmatprep.mubr.f32.mxu0 0.0
      %3301 = vmatmul.mubr.f32.gmra.mrb[0].mxu0 %v2977
      %v3302 = vpop.f32.mrb[0].mxu0
      %v3303 = vadd.f32 0.0, %v3302
      %v3304 = vpop.f32.mrb[0].mxu0
      %3305 = vmatprep.mubr.f32.mxu0 0.0
      %3306 = vmatmul.mubr.f32.gmra.mrb[0].mxu0 %v2979
      %v3307 = vpop.f32.mrb[0].mxu0
      %v3308 = vadd.f32 0.0, %v3307
      %v3309 = vpop.f32.mrb[0].mxu0
      %3310 = vmatprep.mubr.f32.mxu0 0.0
      %3311 = vmatmul.mubr.f32.gmra.mrb[0].mxu0 %v2981
      %v3312 = vpop.f32.mrb[0].mxu0
      %v3313 = vadd.f32 0.0, %v3312
      %v3314 = vpop.f32.mrb[0].mxu0
      %3315 = vmatprep.mubr.f32.mxu0 0.0
      %3316 = vmatmul.mubr.f32.gmra.mrb[0].mxu0 %v2983
      %v3317 = vpop.f32.mrb[0].mxu0
      %v3318 = vadd.f32 0.0, %v3317
      %v3319 = vpop.f32.mrb[0].mxu0
      %3320 = vmatprep.mubr.f32.mxu0 0.0
      %3321 = vmatmul.mubr.f32.gmra.mrb[0].mxu0 %v2985
      %v3322 = vpop.f32.mrb[0].mxu0
      %v3323 = vadd.f32 0.0, %v3322
      %v3324 = vpop.f32.mrb[0].mxu0
      %3325 = vmatprep.mubr.f32.mxu0 0.0
      %3326 = vmatmul.mubr.f32.gmra.mrb[0].mxu0 %v2987
      %v3327 = vpop.f32.mrb[0].mxu0
      %v3328 = vadd.f32 0.0, %v3327
      %v3329 = vpop.f32.mrb[0].mxu0
      %3330 = vmatprep.mubr.f32.mxu0 0.0
      %3331 = vmatmul.mubr.f32.gmra.mrb[0].mxu0 %v2989
      %v3332 = vpop.f32.mrb[0].mxu0
      %v3333 = vadd.f32 0.0, %v3332
      %v3334 = vpop.f32.mrb[0].mxu0
      %3335 = vmatprep.mubr.f32.mxu0 0.0
      %3336 = vmatmul.mubr.f32.gmra.mrb[0].mxu0 %v2991
      %v3337 = vpop.f32.mrb[0].mxu0
      %v3338 = vadd.f32 0.0, %v3337
      %v3339 = vpop.f32.mrb[0].mxu0
      %3340 = vmatprep.mubr.f32.mxu0 0.0
      %3341 = vmatmul.mubr.f32.gmra.mrb[0].mxu0 %v2993
      %v3342 = vpop.f32.mrb[0].mxu0
      %v3343 = vadd.f32 0.0, %v3342
      %v3344 = vpop.f32.mrb[0].mxu0
      %3345 = vmatprep.mubr.f32.mxu0 0.0
      %3346 = vmatmul.mubr.f32.gmra.mrb[0].mxu0 %v2995
      %v3347 = vpop.f32.mrb[0].mxu0
      %v3348 = vadd.f32 0.0, %v3347
      %v3349 = vpop.f32.mrb[0].mxu0
      %3350 = vmatprep.mubr.f32.mxu0 0.0
      %3351 = vmatmul.mubr.f32.gmra.mrb[0].mxu0 %v2997
      %v3352 = vpop.f32.mrb[0].mxu0
      %v3353 = vadd.f32 0.0, %v3352
      %v3354 = vpop.f32.mrb[0].mxu0
      %3355 = vmatprep.mubr.f32.mxu0 0.0
      %3356 = vmatmul.mubr.f32.gmra.mrb[0].mxu0 %v2999
      %v3357 = vpop.f32.mrb[0].mxu0
      %v3358 = vadd.f32 0.0, %v3357
      %v3359 = vpop.f32.mrb[0].mxu0
      %3360 = vmatprep.mubr.f32.mxu0 0.0
      %3361 = vmatmul.mubr.f32.gmra.mrb[0].mxu0 %v3001
      %v3362 = vpop.f32.mrb[0].mxu0
      %v3363 = vadd.f32 0.0, %v3362
      %v3364 = vpop.f32.mrb[0].mxu0
      %3365 = vmatprep.mubr.f32.mxu0 0.0
      %3366 = vmatmul.mubr.f32.gmra.mrb[0].mxu0 %v3003
      %v3367 = vpop.f32.mrb[0].mxu0
      %v3368 = vadd.f32 0.0, %v3367
      %v3369 = vpop.f32.mrb[0].mxu0
      %3370 = vmatprep.mubr.f32.mxu0 0.0
      %3371 = vmatmul.mubr.f32.gmra.mrb[0].mxu0 %v3005
      %v3372 = vpop.f32.mrb[0].mxu0
      %v3373 = vadd.f32 0.0, %v3372
      %v3374 = vpop.f32.mrb[0].mxu0
      %3375 = vmatprep.mubr.f32.mxu0 0.0
      %3376 = vmatmul.mubr.f32.gmra.mrb[0].mxu0 %v3007
      %v3377 = vpop.f32.mrb[0].mxu0
      %v3378 = vadd.f32 0.0, %v3377
      %v3379 = vpop.f32.mrb[0].mxu0
      %3380 = vmatprep.mubr.f32.mxu0 0.0
      %3381 = vmatmul.mubr.f32.gmra.mrb[0].mxu0 %v3009
      %v3382 = vpop.f32.mrb[0].mxu0
      %v3383 = vadd.f32 0.0, %v3382
      %v3384 = vpop.f32.mrb[0].mxu0
      %3385 = vmatprep.mubr.f32.mxu0 0.0
      %3386 = vmatmul.mubr.f32.gmra.mrb[0].mxu0 %v3011
      %v3387 = vpop.f32.mrb[0].mxu0
      %v3388 = vadd.f32 0.0, %v3387
      %v3389 = vpop.f32.mrb[0].mxu0
      %3390 = vmatprep.mubr.f32.mxu0 0.0
      %3391 = vmatmul.mubr.f32.gmra.mrb[0].mxu0 %v3013
      %v3392 = vpop.f32.mrb[0].mxu0
      %v3393 = vadd.f32 0.0, %v3392
      %v3394 = vpop.f32.mrb[0].mxu0
      %3395 = vmatprep.mubr.f32.mxu0 0.0
      %3396 = vmatmul.mubr.f32.gmra.mrb[0].mxu0 %v3015
      %v3397 = vpop.f32.mrb[0].mxu0
      %v3398 = vadd.f32 0.0, %v3397
      %v3399 = vpop.f32.mrb[0].mxu0
      %3400 = vmatprep.mubr.f32.mxu0 0.0
      %3401 = vmatmul.mubr.f32.gmra.mrb[0].mxu0 %v3017
      %v3402 = vpop.f32.mrb[0].mxu0
      %v3403 = vadd.f32 0.0, %v3402
      %v3404 = vpop.f32.mrb[0].mxu0
      %3405 = vmatprep.mubr.f32.mxu0 0.0
      %3406 = vmatmul.mubr.f32.gmra.mrb[0].mxu0 %v3019
      %v3407 = vpop.f32.mrb[0].mxu0
      %v3408 = vadd.f32 0.0, %v3407
      %v3409 = vpop.f32.mrb[0].mxu0
      %3410 = vmatprep.mubr.f32.mxu0 0.0
      %3411 = vmatmul.mubr.f32.gmra.mrb[0].mxu0 %v3021
      %v3412 = vpop.f32.mrb[0].mxu0
      %v3413 = vadd.f32 0.0, %v3412
      %v3414 = vpop.f32.mrb[0].mxu0
      %3415 = vdwg.mxu0
      %v3416 = vadd.f32 %v2694, %v3093
      %v3417 = vadd.f32 %v2695, %v3098
      %v3418 = vadd.f32 %v2696, %v3103
      %v3419 = vadd.f32 %v2697, %v3108
      %v3420 = vadd.f32 %v2698, %v3113
      %v3421 = vadd.f32 %v2699, %v3118
      %v3422 = vadd.f32 %v2700, %v3123
      %v3423 = vadd.f32 %v2701, %v3128
      %v3424 = vadd.f32 %v2702, %v3133
      %v3425 = vadd.f32 %v2703, %v3138
      %v3426 = vadd.f32 %v2704, %v3143
      %v3427 = vadd.f32 %v2705, %v3148
      %v3428 = vadd.f32 %v2706, %v3153
      %v3429 = vadd.f32 %v2707, %v3158
      %v3430 = vadd.f32 %v2708, %v3163
      %v3431 = vadd.f32 %v2709, %v3168
      %v3432 = vadd.f32 %v2710, %v3173
      %v3433 = vadd.f32 %v2711, %v3178
      %v3434 = vadd.f32 %v2712, %v3183
      %v3435 = vadd.f32 %v2713, %v3188
      %v3436 = vadd.f32 %v2714, %v3193
      %v3437 = vadd.f32 %v2715, %v3198
      %v3438 = vadd.f32 %v2716, %v3203
      %v3439 = vadd.f32 %v2717, %v3208
      %v3440 = vadd.f32 %v2718, %v3213
      %v3441 = vadd.f32 %v2719, %v3218
      %v3442 = vadd.f32 %v2720, %v3223
      %v3443 = vadd.f32 %v2721, %v3228
      %v3444 = vadd.f32 %v2722, %v3233
      %v3445 = vadd.f32 %v2723, %v3238
      %v3446 = vadd.f32 %v2724, %v3243
      %v3447 = vadd.f32 %v2725, %v3248
      %v3448 = vadd.f32 %v2726, %v3253
      %v3449 = vadd.f32 %v2727, %v3258
      %v3450 = vadd.f32 %v2728, %v3263
      %v3451 = vadd.f32 %v2729, %v3268
      %v3452 = vadd.f32 %v2730, %v3273
      %v3453 = vadd.f32 %v2731, %v3278
      %v3454 = vadd.f32 %v2732, %v3283
      %v3455 = vadd.f32 %v2733, %v3288
      %v3456 = vadd.f32 %v2734, %v3293
      %v3457 = vadd.f32 %v2735, %v3298
      %v3458 = vadd.f32 %v2736, %v3303
      %v3459 = vadd.f32 %v2737, %v3308
      %v3460 = vadd.f32 %v2738, %v3313
      %v3461 = vadd.f32 %v2739, %v3318
      %v3462 = vadd.f32 %v2740, %v3323
      %v3463 = vadd.f32 %v2741, %v3328
      %v3464 = vadd.f32 %v2742, %v3333
      %v3465 = vadd.f32 %v2743, %v3338
      %v3466 = vadd.f32 %v2744, %v3343
      %v3467 = vadd.f32 %v2745, %v3348
      %v3468 = vadd.f32 %v2746, %v3353
      %v3469 = vadd.f32 %v2747, %v3358
      %v3470 = vadd.f32 %v2748, %v3363
      %v3471 = vadd.f32 %v2749, %v3368
      %v3472 = vadd.f32 %v2750, %v3373
      %v3473 = vadd.f32 %v2751, %v3378
      %v3474 = vadd.f32 %v2752, %v3383
      %v3475 = vadd.f32 %v2753, %v3388
      %v3476 = vadd.f32 %v2754, %v3393
      %v3477 = vadd.f32 %v2755, %v3398
      %v3478 = vadd.f32 %v2756, %v3403
      %v3479 = vadd.f32 %v2757, %v3408
      %v3480 = vadd.f32 %v2758, %v3413
      %s3481 = scalar_lea.vmem %s2, 32
      %v3482 = vld [vmem:[%s3481] sm:$0x7f]
      %vm3483 = vcmask 1043456
      %v3484 = vrot.slane %v585, 4
      %v3485 = vrot.slane %v586, 4
      %v3486 = vsel %vm3483, %v3484, %v3485
      %v3487 = vrot.slane %v587, 4
      %v3488 = vsel %vm3483, %v3485, %v3487
      %v3489 = vrot.slane %v588, 4
      %v3490 = vsel %vm3483, %v3487, %v3489
      %v3491 = vrot.slane %v589, 4
      %v3492 = vsel %vm3483, %v3489, %v3491
      %v3493 = vrot.slane %v590, 4
      %v3494 = vsel %vm3483, %v3491, %v3493
      %v3495 = vrot.slane %v591, 4
      %v3496 = vsel %vm3483, %v3493, %v3495
      %v3497 = vrot.slane %v592, 4
      %v3498 = vsel %vm3483, %v3495, %v3497
      %v3499 = vrot.slane %v593, 4
      %v3500 = vsel %vm3483, %v3497, %v3499
      %v3501 = vrot.slane %v594, 4
      %v3502 = vsel %vm3483, %v3499, %v3501
      %v3503 = vrot.slane %v595, 4
      %v3504 = vsel %vm3483, %v3501, %v3503
      %v3505 = vrot.slane %v596, 4
      %v3506 = vsel %vm3483, %v3503, %v3505
      %v3507 = vrot.slane %v597, 4
      %v3508 = vsel %vm3483, %v3505, %v3507
      %v3509 = vrot.slane %v598, 4
      %v3510 = vsel %vm3483, %v3507, %v3509
      %v3511 = vrot.slane %v599, 4
      %v3512 = vsel %vm3483, %v3509, %v3511
      %v3513 = vrot.slane %v600, 4
      %v3514 = vsel %vm3483, %v3511, %v3513
      %v3515 = vrot.slane %v601, 4
      %v3516 = vsel %vm3483, %v3513, %v3515
      %v3517 = vrot.slane %v602, 4
      %v3518 = vsel %vm3483, %v3515, %v3517
      %v3519 = vrot.slane %v603, 4
      %v3520 = vsel %vm3483, %v3517, %v3519
      %v3521 = vrot.slane %v604, 4
      %v3522 = vsel %vm3483, %v3519, %v3521
      %v3523 = vrot.slane %v605, 4
      %v3524 = vsel %vm3483, %v3521, %v3523
      %v3525 = vrot.slane %v606, 4
      %v3526 = vsel %vm3483, %v3523, %v3525
      %v3527 = vrot.slane %v607, 4
      %v3528 = vsel %vm3483, %v3525, %v3527
      %v3529 = vrot.slane %v608, 4
      %v3530 = vsel %vm3483, %v3527, %v3529
      %v3531 = vrot.slane %v609, 4
      %v3532 = vsel %vm3483, %v3529, %v3531
      %v3533 = vrot.slane %v610, 4
      %v3534 = vsel %vm3483, %v3531, %v3533
      %v3535 = vrot.slane %v611, 4
      %v3536 = vsel %vm3483, %v3533, %v3535
      %v3537 = vrot.slane %v612, 4
      %v3538 = vsel %vm3483, %v3535, %v3537
      %v3539 = vrot.slane %v613, 4
      %v3540 = vsel %vm3483, %v3537, %v3539
      %v3541 = vrot.slane %v614, 4
      %v3542 = vsel %vm3483, %v3539, %v3541
      %v3543 = vrot.slane %v615, 4
      %v3544 = vsel %vm3483, %v3541, %v3543
      %v3545 = vrot.slane %v616, 4
      %v3546 = vsel %vm3483, %v3543, %v3545
      %v3547 = vrot.slane %v617, 4
      %v3548 = vsel %vm3483, %v3545, %v3547
      %v3549 = vrot.slane %v618, 4
      %v3550 = vsel %vm3483, %v3547, %v3549
      %v3551 = vrot.slane %v619, 4
      %v3552 = vsel %vm3483, %v3549, %v3551
      %v3553 = vrot.slane %v620, 4
      %v3554 = vsel %vm3483, %v3551, %v3553
      %v3555 = vrot.slane %v621, 4
      %v3556 = vsel %vm3483, %v3553, %v3555
      %v3557 = vrot.slane %v622, 4
      %v3558 = vsel %vm3483, %v3555, %v3557
      %v3559 = vrot.slane %v623, 4
      %v3560 = vsel %vm3483, %v3557, %v3559
      %v3561 = vrot.slane %v624, 4
      %v3562 = vsel %vm3483, %v3559, %v3561
      %v3563 = vrot.slane %v625, 4
      %v3564 = vsel %vm3483, %v3561, %v3563
      %v3565 = vrot.slane %v626, 4
      %v3566 = vsel %vm3483, %v3563, %v3565
      %v3567 = vrot.slane %v627, 4
      %v3568 = vsel %vm3483, %v3565, %v3567
      %v3569 = vrot.slane %v628, 4
      %v3570 = vsel %vm3483, %v3567, %v3569
      %v3571 = vrot.slane %v629, 4
      %v3572 = vsel %vm3483, %v3569, %v3571
      %v3573 = vrot.slane %v630, 4
      %v3574 = vsel %vm3483, %v3571, %v3573
      %v3575 = vrot.slane %v631, 4
      %v3576 = vsel %vm3483, %v3573, %v3575
      %v3577 = vrot.slane %v632, 4
      %v3578 = vsel %vm3483, %v3575, %v3577
      %v3579 = vrot.slane %v633, 4
      %v3580 = vsel %vm3483, %v3577, %v3579
      %v3581 = vrot.slane %v634, 4
      %v3582 = vsel %vm3483, %v3579, %v3581
      %v3583 = vrot.slane %v635, 4
      %v3584 = vsel %vm3483, %v3581, %v3583
      %v3585 = vrot.slane %v636, 4
      %v3586 = vsel %vm3483, %v3583, %v3585
      %v3587 = vrot.slane %v637, 4
      %v3588 = vsel %vm3483, %v3585, %v3587
      %v3589 = vrot.slane %v638, 4
      %v3590 = vsel %vm3483, %v3587, %v3589
      %v3591 = vrot.slane %v639, 4
      %v3592 = vsel %vm3483, %v3589, %v3591
      %v3593 = vrot.slane %v640, 4
      %v3594 = vsel %vm3483, %v3591, %v3593
      %v3595 = vrot.slane %v641, 4
      %v3596 = vsel %vm3483, %v3593, %v3595
      %v3597 = vrot.slane %v642, 4
      %v3598 = vsel %vm3483, %v3595, %v3597
      %v3599 = vrot.slane %v643, 4
      %v3600 = vsel %vm3483, %v3597, %v3599
      %v3601 = vrot.slane %v644, 4
      %v3602 = vsel %vm3483, %v3599, %v3601
      %v3603 = vrot.slane %v645, 4
      %v3604 = vsel %vm3483, %v3601, %v3603
      %v3605 = vrot.slane %v646, 4
      %v3606 = vsel %vm3483, %v3603, %v3605
      %v3607 = vrot.slane %v647, 4
      %v3608 = vsel %vm3483, %v3605, %v3607
      %v3609 = vrot.slane %v648, 4
      %v3610 = vsel %vm3483, %v3607, %v3609
      %v3611 = vrot.slane %v649, 4
      %v3612 = vsel %vm3483, %v3609, %v3611
      %v3613 = vrot.slane %v650, 4
      %v3614 = vsel %vm3483, %v3611, %v3613
      %v3615 = vsel %vm660, %v3486, 0
      %v3617 = vsel %vm660, %v3488, 0
      %v3619 = vsel %vm660, %v3490, 0
      %v3621 = vsel %vm660, %v3492, 0
      %v3623 = vsel %vm660, %v3494, 0
      %v3625 = vsel %vm660, %v3496, 0
      %v3627 = vsel %vm660, %v3498, 0
      %v3629 = vsel %vm660, %v3500, 0
      %v3631 = vsel %vm660, %v3502, 0
      %v3633 = vsel %vm660, %v3504, 0
      %v3635 = vsel %vm660, %v3506, 0
      %v3637 = vsel %vm660, %v3508, 0
      %v3639 = vsel %vm660, %v3510, 0
      %v3641 = vsel %vm660, %v3512, 0
      %v3643 = vsel %vm660, %v3514, 0
      %v3645 = vsel %vm660, %v3516, 0
      %v3647 = vsel %vm660, %v3518, 0
      %v3649 = vsel %vm660, %v3520, 0
      %v3651 = vsel %vm660, %v3522, 0
      %v3653 = vsel %vm660, %v3524, 0
      %v3655 = vsel %vm660, %v3526, 0
      %v3657 = vsel %vm660, %v3528, 0
      %v3659 = vsel %vm660, %v3530, 0
      %v3661 = vsel %vm660, %v3532, 0
      %v3663 = vsel %vm660, %v3534, 0
      %v3665 = vsel %vm660, %v3536, 0
      %v3667 = vsel %vm660, %v3538, 0
      %v3669 = vsel %vm660, %v3540, 0
      %v3671 = vsel %vm660, %v3542, 0
      %v3673 = vsel %vm660, %v3544, 0
      %v3675 = vsel %vm660, %v3546, 0
      %v3677 = vsel %vm660, %v3548, 0
      %v3679 = vsel %vm660, %v3550, 0
      %v3681 = vsel %vm660, %v3552, 0
      %v3683 = vsel %vm660, %v3554, 0
      %v3685 = vsel %vm660, %v3556, 0
      %v3687 = vsel %vm660, %v3558, 0
      %v3689 = vsel %vm660, %v3560, 0
      %v3691 = vsel %vm660, %v3562, 0
      %v3693 = vsel %vm660, %v3564, 0
      %v3695 = vsel %vm660, %v3566, 0
      %v3697 = vsel %vm660, %v3568, 0
      %v3699 = vsel %vm660, %v3570, 0
      %v3701 = vsel %vm660, %v3572, 0
      %v3703 = vsel %vm660, %v3574, 0
      %v3705 = vsel %vm660, %v3576, 0
      %v3707 = vsel %vm660, %v3578, 0
      %v3709 = vsel %vm660, %v3580, 0
      %v3711 = vsel %vm660, %v3582, 0
      %v3713 = vsel %vm660, %v3584, 0
      %v3715 = vsel %vm660, %v3586, 0
      %v3717 = vsel %vm660, %v3588, 0
      %v3719 = vsel %vm660, %v3590, 0
      %v3721 = vsel %vm660, %v3592, 0
      %v3723 = vsel %vm660, %v3594, 0
      %v3725 = vsel %vm660, %v3596, 0
      %v3727 = vsel %vm660, %v3598, 0
      %v3729 = vsel %vm660, %v3600, 0
      %v3731 = vsel %vm660, %v3602, 0
      %v3733 = vsel %vm660, %v3604, 0
      %v3735 = vsel %vm660, %v3606, 0
      %v3737 = vsel %vm660, %v3608, 0
      %v3739 = vsel %vm660, %v3610, 0
      %v3741 = vsel %vm660, %v3612, 0
      %v3743 = vsel %vm660, %v3614, 0
      %v3746 = vsel %vm856, %v3482, 0
      %3748 = vmatprep.subr.mxu0 0.0
      %3749 = vmatpush1.msra.mxu0 %v3746
      %3750 = vmatprep.subr.mxu0 0.0
      %3751 = vmatpush1.msra.mxu0 0.0
      %3752 = vmatprep.subr.mxu0 0.0
      %3753 = vmatpush1.msra.mxu0 0.0
      %3754 = vmatprep.subr.mxu0 0.0
      %3755 = vmatpush1.msra.mxu0 0.0
      %3756 = vmatprep.subr.mxu0 0.0
      %3757 = vmatpush1.msra.mxu0 0.0
      %3758 = vmatprep.subr.mxu0 0.0
      %3759 = vmatpush1.msra.mxu0 0.0
      %3760 = vmatprep.subr.mxu0 0.0
      %3761 = vmatpush1.msra.mxu0 0.0
      %3762 = vmatprep.subr.mxu0 0.0
      %3763 = vmatpush1.msra.mxu0 0.0
      %3764 = vmatprep.subr.mxu0 0.0
      %3765 = vmatpush1.msra.mxu0 0.0
      %3766 = vmatprep.subr.mxu0 0.0
      %3767 = vmatpush1.msra.mxu0 0.0
      %3768 = vmatprep.subr.mxu0 0.0
      %3769 = vmatpush1.msra.mxu0 0.0
      %3770 = vmatprep.subr.mxu0 0.0
      %3771 = vmatpush1.msra.mxu0 0.0
      %3772 = vmatprep.subr.mxu0 0.0
      %3773 = vmatpush1.msra.mxu0 0.0
      %3774 = vmatprep.subr.mxu0 0.0
      %3775 = vmatpush1.msra.mxu0 0.0
      %3776 = vmatprep.subr.mxu0 0.0
      %3777 = vmatpush1.msra.mxu0 0.0
      %3778 = vmatprep.subr.mxu0 0.0
      %3779 = vmatpush1.msra.mxu0 0.0
      %3780 = vmatprep.subr.mxu0 0.0
      %3781 = vmatpush1.msra.mxu0 0.0
      %3782 = vmatprep.subr.mxu0 0.0
      %3783 = vmatpush1.msra.mxu0 0.0
      %3784 = vmatprep.subr.mxu0 0.0
      %3785 = vmatpush1.msra.mxu0 0.0
      %3786 = vmatprep.subr.mxu0 0.0
      %3787 = vmatpush1.msra.mxu0 0.0
      %3788 = vmatprep.subr.mxu0 0.0
      %3789 = vmatpush1.msra.mxu0 0.0
      %3790 = vmatprep.subr.mxu0 0.0
      %3791 = vmatpush1.msra.mxu0 0.0
      %3792 = vmatprep.subr.mxu0 0.0
      %3793 = vmatpush1.msra.mxu0 0.0
      %3794 = vmatprep.subr.mxu0 0.0
      %3795 = vmatpush1.msra.mxu0 0.0
      %3796 = vmatprep.subr.mxu0 0.0
      %3797 = vmatpush1.msra.mxu0 0.0
      %3798 = vmatprep.subr.mxu0 0.0
      %3799 = vmatpush1.msra.mxu0 0.0
      %3800 = vmatprep.subr.mxu0 0.0
      %3801 = vmatpush1.msra.mxu0 0.0
      %3802 = vmatprep.subr.mxu0 0.0
      %3803 = vmatpush1.msra.mxu0 0.0
      %3804 = vmatprep.subr.mxu0 0.0
      %3805 = vmatpush1.msra.mxu0 0.0
      %3806 = vmatprep.subr.mxu0 0.0
      %3807 = vmatpush1.msra.mxu0 0.0
      %3808 = vmatprep.subr.mxu0 0.0
      %3809 = vmatpush1.msra.mxu0 0.0
      %3810 = vmatprep.subr.mxu0 0.0
      %3811 = vmatpush1.msra.mxu0 0.0
      %3812 = vmatprep.mubr.f32.mxu0 0.0
      %3813 = vmatmul.mubr.f32.gmra.mrb[0].mxu0 %v3615
      %v3814 = vpop.f32.mrb[0].mxu0
      %v3815 = vadd.f32 0.0, %v3814
      %v3816 = vpop.f32.mrb[0].mxu0
      %3817 = vmatprep.mubr.f32.mxu0 0.0
      %3818 = vmatmul.mubr.f32.gmra.mrb[0].mxu0 %v3617
      %v3819 = vpop.f32.mrb[0].mxu0
      %v3820 = vadd.f32 0.0, %v3819
      %v3821 = vpop.f32.mrb[0].mxu0
      %3822 = vmatprep.mubr.f32.mxu0 0.0
      %3823 = vmatmul.mubr.f32.gmra.mrb[0].mxu0 %v3619
      %v3824 = vpop.f32.mrb[0].mxu0
      %v3825 = vadd.f32 0.0, %v3824
      %v3826 = vpop.f32.mrb[0].mxu0
      %3827 = vmatprep.mubr.f32.mxu0 0.0
      %3828 = vmatmul.mubr.f32.gmra.mrb[0].mxu0 %v3621
      %v3829 = vpop.f32.mrb[0].mxu0
      %v3830 = vadd.f32 0.0, %v3829
      %v3831 = vpop.f32.mrb[0].mxu0
      %3832 = vmatprep.mubr.f32.mxu0 0.0
      %3833 = vmatmul.mubr.f32.gmra.mrb[0].mxu0 %v3623
      %v3834 = vpop.f32.mrb[0].mxu0
      %v3835 = vadd.f32 0.0, %v3834
      %v3836 = vpop.f32.mrb[0].mxu0
      %3837 = vmatprep.mubr.f32.mxu0 0.0
      %3838 = vmatmul.mubr.f32.gmra.mrb[0].mxu0 %v3625
      %v3839 = vpop.f32.mrb[0].mxu0
      %v3840 = vadd.f32 0.0, %v3839
      %v3841 = vpop.f32.mrb[0].mxu0
      %3842 = vmatprep.mubr.f32.mxu0 0.0
      %3843 = vmatmul.mubr.f32.gmra.mrb[0].mxu0 %v3627
      %v3844 = vpop.f32.mrb[0].mxu0
      %v3845 = vadd.f32 0.0, %v3844
      %v3846 = vpop.f32.mrb[0].mxu0
      %3847 = vmatprep.mubr.f32.mxu0 0.0
      %3848 = vmatmul.mubr.f32.gmra.mrb[0].mxu0 %v3629
      %v3849 = vpop.f32.mrb[0].mxu0
      %v3850 = vadd.f32 0.0, %v3849
      %v3851 = vpop.f32.mrb[0].mxu0
      %3852 = vmatprep.mubr.f32.mxu0 0.0
      %3853 = vmatmul.mubr.f32.gmra.mrb[0].mxu0 %v3631
      %v3854 = vpop.f32.mrb[0].mxu0
      %v3855 = vadd.f32 0.0, %v3854
      %v3856 = vpop.f32.mrb[0].mxu0
      %3857 = vmatprep.mubr.f32.mxu0 0.0
      %3858 = vmatmul.mubr.f32.gmra.mrb[0].mxu0 %v3633
      %v3859 = vpop.f32.mrb[0].mxu0
      %v3860 = vadd.f32 0.0, %v3859
      %v3861 = vpop.f32.mrb[0].mxu0
      %3862 = vmatprep.mubr.f32.mxu0 0.0
      %3863 = vmatmul.mubr.f32.gmra.mrb[0].mxu0 %v3635
      %v3864 = vpop.f32.mrb[0].mxu0
      %v3865 = vadd.f32 0.0, %v3864
      %v3866 = vpop.f32.mrb[0].mxu0
      %3867 = vmatprep.mubr.f32.mxu0 0.0
      %3868 = vmatmul.mubr.f32.gmra.mrb[0].mxu0 %v3637
      %v3869 = vpop.f32.mrb[0].mxu0
      %v3870 = vadd.f32 0.0, %v3869
      %v3871 = vpop.f32.mrb[0].mxu0
      %3872 = vmatprep.mubr.f32.mxu0 0.0
      %3873 = vmatmul.mubr.f32.gmra.mrb[0].mxu0 %v3639
      %v3874 = vpop.f32.mrb[0].mxu0
      %v3875 = vadd.f32 0.0, %v3874
      %v3876 = vpop.f32.mrb[0].mxu0
      %3877 = vmatprep.mubr.f32.mxu0 0.0
      %3878 = vmatmul.mubr.f32.gmra.mrb[0].mxu0 %v3641
      %v3879 = vpop.f32.mrb[0].mxu0
      %v3880 = vadd.f32 0.0, %v3879
      %v3881 = vpop.f32.mrb[0].mxu0
      %3882 = vmatprep.mubr.f32.mxu0 0.0
      %3883 = vmatmul.mubr.f32.gmra.mrb[0].mxu0 %v3643
      %v3884 = vpop.f32.mrb[0].mxu0
      %v3885 = vadd.f32 0.0, %v3884
      %v3886 = vpop.f32.mrb[0].mxu0
      %3887 = vmatprep.mubr.f32.mxu0 0.0
      %3888 = vmatmul.mubr.f32.gmra.mrb[0].mxu0 %v3645
      %v3889 = vpop.f32.mrb[0].mxu0
      %v3890 = vadd.f32 0.0, %v3889
      %v3891 = vpop.f32.mrb[0].mxu0
      %3892 = vmatprep.mubr.f32.mxu0 0.0
      %3893 = vmatmul.mubr.f32.gmra.mrb[0].mxu0 %v3647
      %v3894 = vpop.f32.mrb[0].mxu0
      %v3895 = vadd.f32 0.0, %v3894
      %v3896 = vpop.f32.mrb[0].mxu0
      %3897 = vmatprep.mubr.f32.mxu0 0.0
      %3898 = vmatmul.mubr.f32.gmra.mrb[0].mxu0 %v3649
      %v3899 = vpop.f32.mrb[0].mxu0
      %v3900 = vadd.f32 0.0, %v3899
      %v3901 = vpop.f32.mrb[0].mxu0
      %3902 = vmatprep.mubr.f32.mxu0 0.0
      %3903 = vmatmul.mubr.f32.gmra.mrb[0].mxu0 %v3651
      %v3904 = vpop.f32.mrb[0].mxu0
      %v3905 = vadd.f32 0.0, %v3904
      %v3906 = vpop.f32.mrb[0].mxu0
      %3907 = vmatprep.mubr.f32.mxu0 0.0
      %3908 = vmatmul.mubr.f32.gmra.mrb[0].mxu0 %v3653
      %v3909 = vpop.f32.mrb[0].mxu0
      %v3910 = vadd.f32 0.0, %v3909
      %v3911 = vpop.f32.mrb[0].mxu0
      %3912 = vmatprep.mubr.f32.mxu0 0.0
      %3913 = vmatmul.mubr.f32.gmra.mrb[0].mxu0 %v3655
      %v3914 = vpop.f32.mrb[0].mxu0
      %v3915 = vadd.f32 0.0, %v3914
      %v3916 = vpop.f32.mrb[0].mxu0
      %3917 = vmatprep.mubr.f32.mxu0 0.0
      %3918 = vmatmul.mubr.f32.gmra.mrb[0].mxu0 %v3657
      %v3919 = vpop.f32.mrb[0].mxu0
      %v3920 = vadd.f32 0.0, %v3919
      %v3921 = vpop.f32.mrb[0].mxu0
      %3922 = vmatprep.mubr.f32.mxu0 0.0
      %3923 = vmatmul.mubr.f32.gmra.mrb[0].mxu0 %v3659
      %v3924 = vpop.f32.mrb[0].mxu0
      %v3925 = vadd.f32 0.0, %v3924
      %v3926 = vpop.f32.mrb[0].mxu0
      %3927 = vmatprep.mubr.f32.mxu0 0.0
      %3928 = vmatmul.mubr.f32.gmra.mrb[0].mxu0 %v3661
      %v3929 = vpop.f32.mrb[0].mxu0
      %v3930 = vadd.f32 0.0, %v3929
      %v3931 = vpop.f32.mrb[0].mxu0
      %3932 = vmatprep.mubr.f32.mxu0 0.0
      %3933 = vmatmul.mubr.f32.gmra.mrb[0].mxu0 %v3663
      %v3934 = vpop.f32.mrb[0].mxu0
      %v3935 = vadd.f32 0.0, %v3934
      %v3936 = vpop.f32.mrb[0].mxu0
      %3937 = vmatprep.mubr.f32.mxu0 0.0
      %3938 = vmatmul.mubr.f32.gmra.mrb[0].mxu0 %v3665
      %v3939 = vpop.f32.mrb[0].mxu0
      %v3940 = vadd.f32 0.0, %v3939
      %v3941 = vpop.f32.mrb[0].mxu0
      %3942 = vmatprep.mubr.f32.mxu0 0.0
      %3943 = vmatmul.mubr.f32.gmra.mrb[0].mxu0 %v3667
      %v3944 = vpop.f32.mrb[0].mxu0
      %v3945 = vadd.f32 0.0, %v3944
      %v3946 = vpop.f32.mrb[0].mxu0
      %3947 = vmatprep.mubr.f32.mxu0 0.0
      %3948 = vmatmul.mubr.f32.gmra.mrb[0].mxu0 %v3669
      %v3949 = vpop.f32.mrb[0].mxu0
      %v3950 = vadd.f32 0.0, %v3949
      %v3951 = vpop.f32.mrb[0].mxu0
      %3952 = vmatprep.mubr.f32.mxu0 0.0
      %3953 = vmatmul.mubr.f32.gmra.mrb[0].mxu0 %v3671
      %v3954 = vpop.f32.mrb[0].mxu0
      %v3955 = vadd.f32 0.0, %v3954
      %v3956 = vpop.f32.mrb[0].mxu0
      %3957 = vmatprep.mubr.f32.mxu0 0.0
      %3958 = vmatmul.mubr.f32.gmra.mrb[0].mxu0 %v3673
      %v3959 = vpop.f32.mrb[0].mxu0
      %v3960 = vadd.f32 0.0, %v3959
      %v3961 = vpop.f32.mrb[0].mxu0
      %3962 = vmatprep.mubr.f32.mxu0 0.0
      %3963 = vmatmul.mubr.f32.gmra.mrb[0].mxu0 %v3675
      %v3964 = vpop.f32.mrb[0].mxu0
      %v3965 = vadd.f32 0.0, %v3964
      %v3966 = vpop.f32.mrb[0].mxu0
      %3967 = vmatprep.mubr.f32.mxu0 0.0
      %3968 = vmatmul.mubr.f32.gmra.mrb[0].mxu0 %v3677
      %v3969 = vpop.f32.mrb[0].mxu0
      %v3970 = vadd.f32 0.0, %v3969
      %v3971 = vpop.f32.mrb[0].mxu0
      %3972 = vmatprep.mubr.f32.mxu0 0.0
      %3973 = vmatmul.mubr.f32.gmra.mrb[0].mxu0 %v3679
      %v3974 = vpop.f32.mrb[0].mxu0
      %v3975 = vadd.f32 0.0, %v3974
      %v3976 = vpop.f32.mrb[0].mxu0
      %3977 = vmatprep.mubr.f32.mxu0 0.0
      %3978 = vmatmul.mubr.f32.gmra.mrb[0].mxu0 %v3681
      %v3979 = vpop.f32.mrb[0].mxu0
      %v3980 = vadd.f32 0.0, %v3979
      %v3981 = vpop.f32.mrb[0].mxu0
      %3982 = vmatprep.mubr.f32.mxu0 0.0
      %3983 = vmatmul.mubr.f32.gmra.mrb[0].mxu0 %v3683
      %v3984 = vpop.f32.mrb[0].mxu0
      %v3985 = vadd.f32 0.0, %v3984
      %v3986 = vpop.f32.mrb[0].mxu0
      %3987 = vmatprep.mubr.f32.mxu0 0.0
      %3988 = vmatmul.mubr.f32.gmra.mrb[0].mxu0 %v3685
      %v3989 = vpop.f32.mrb[0].mxu0
      %v3990 = vadd.f32 0.0, %v3989
      %v3991 = vpop.f32.mrb[0].mxu0
      %3992 = vmatprep.mubr.f32.mxu0 0.0
      %3993 = vmatmul.mubr.f32.gmra.mrb[0].mxu0 %v3687
      %v3994 = vpop.f32.mrb[0].mxu0
      %v3995 = vadd.f32 0.0, %v3994
      %v3996 = vpop.f32.mrb[0].mxu0
      %3997 = vmatprep.mubr.f32.mxu0 0.0
      %3998 = vmatmul.mubr.f32.gmra.mrb[0].mxu0 %v3689
      %v3999 = vpop.f32.mrb[0].mxu0
      %v4000 = vadd.f32 0.0, %v3999
      %v4001 = vpop.f32.mrb[0].mxu0
      %4002 = vmatprep.mubr.f32.mxu0 0.0
      %4003 = vmatmul.mubr.f32.gmra.mrb[0].mxu0 %v3691
      %v4004 = vpop.f32.mrb[0].mxu0
      %v4005 = vadd.f32 0.0, %v4004
      %v4006 = vpop.f32.mrb[0].mxu0
      %4007 = vmatprep.mubr.f32.mxu0 0.0
      %4008 = vmatmul.mubr.f32.gmra.mrb[0].mxu0 %v3693
      %v4009 = vpop.f32.mrb[0].mxu0
      %v4010 = vadd.f32 0.0, %v4009
      %v4011 = vpop.f32.mrb[0].mxu0
      %4012 = vmatprep.mubr.f32.mxu0 0.0
      %4013 = vmatmul.mubr.f32.gmra.mrb[0].mxu0 %v3695
      %v4014 = vpop.f32.mrb[0].mxu0
      %v4015 = vadd.f32 0.0, %v4014
      %v4016 = vpop.f32.mrb[0].mxu0
      %4017 = vmatprep.mubr.f32.mxu0 0.0
      %4018 = vmatmul.mubr.f32.gmra.mrb[0].mxu0 %v3697
      %v4019 = vpop.f32.mrb[0].mxu0
      %v4020 = vadd.f32 0.0, %v4019
      %v4021 = vpop.f32.mrb[0].mxu0
      %4022 = vmatprep.mubr.f32.mxu0 0.0
      %4023 = vmatmul.mubr.f32.gmra.mrb[0].mxu0 %v3699
      %v4024 = vpop.f32.mrb[0].mxu0
      %v4025 = vadd.f32 0.0, %v4024
      %v4026 = vpop.f32.mrb[0].mxu0
      %4027 = vmatprep.mubr.f32.mxu0 0.0
      %4028 = vmatmul.mubr.f32.gmra.mrb[0].mxu0 %v3701
      %v4029 = vpop.f32.mrb[0].mxu0
      %v4030 = vadd.f32 0.0, %v4029
      %v4031 = vpop.f32.mrb[0].mxu0
      %4032 = vmatprep.mubr.f32.mxu0 0.0
      %4033 = vmatmul.mubr.f32.gmra.mrb[0].mxu0 %v3703
      %v4034 = vpop.f32.mrb[0].mxu0
      %v4035 = vadd.f32 0.0, %v4034
      %v4036 = vpop.f32.mrb[0].mxu0
      %4037 = vmatprep.mubr.f32.mxu0 0.0
      %4038 = vmatmul.mubr.f32.gmra.mrb[0].mxu0 %v3705
      %v4039 = vpop.f32.mrb[0].mxu0
      %v4040 = vadd.f32 0.0, %v4039
      %v4041 = vpop.f32.mrb[0].mxu0
      %4042 = vmatprep.mubr.f32.mxu0 0.0
      %4043 = vmatmul.mubr.f32.gmra.mrb[0].mxu0 %v3707
      %v4044 = vpop.f32.mrb[0].mxu0
      %v4045 = vadd.f32 0.0, %v4044
      %v4046 = vpop.f32.mrb[0].mxu0
      %4047 = vmatprep.mubr.f32.mxu0 0.0
      %4048 = vmatmul.mubr.f32.gmra.mrb[0].mxu0 %v3709
      %v4049 = vpop.f32.mrb[0].mxu0
      %v4050 = vadd.f32 0.0, %v4049
      %v4051 = vpop.f32.mrb[0].mxu0
      %4052 = vmatprep.mubr.f32.mxu0 0.0
      %4053 = vmatmul.mubr.f32.gmra.mrb[0].mxu0 %v3711
      %v4054 = vpop.f32.mrb[0].mxu0
      %v4055 = vadd.f32 0.0, %v4054
      %v4056 = vpop.f32.mrb[0].mxu0
      %4057 = vmatprep.mubr.f32.mxu0 0.0
      %4058 = vmatmul.mubr.f32.gmra.mrb[0].mxu0 %v3713
      %v4059 = vpop.f32.mrb[0].mxu0
      %v4060 = vadd.f32 0.0, %v4059
      %v4061 = vpop.f32.mrb[0].mxu0
      %4062 = vmatprep.mubr.f32.mxu0 0.0
      %4063 = vmatmul.mubr.f32.gmra.mrb[0].mxu0 %v3715
      %v4064 = vpop.f32.mrb[0].mxu0
      %v4065 = vadd.f32 0.0, %v4064
      %v4066 = vpop.f32.mrb[0].mxu0
      %4067 = vmatprep.mubr.f32.mxu0 0.0
      %4068 = vmatmul.mubr.f32.gmra.mrb[0].mxu0 %v3717
      %v4069 = vpop.f32.mrb[0].mxu0
      %v4070 = vadd.f32 0.0, %v4069
      %v4071 = vpop.f32.mrb[0].mxu0
      %4072 = vmatprep.mubr.f32.mxu0 0.0
      %4073 = vmatmul.mubr.f32.gmra.mrb[0].mxu0 %v3719
      %v4074 = vpop.f32.mrb[0].mxu0
      %v4075 = vadd.f32 0.0, %v4074
      %v4076 = vpop.f32.mrb[0].mxu0
      %4077 = vmatprep.mubr.f32.mxu0 0.0
      %4078 = vmatmul.mubr.f32.gmra.mrb[0].mxu0 %v3721
      %v4079 = vpop.f32.mrb[0].mxu0
      %v4080 = vadd.f32 0.0, %v4079
      %v4081 = vpop.f32.mrb[0].mxu0
      %4082 = vmatprep.mubr.f32.mxu0 0.0
      %4083 = vmatmul.mubr.f32.gmra.mrb[0].mxu0 %v3723
      %v4084 = vpop.f32.mrb[0].mxu0
      %v4085 = vadd.f32 0.0, %v4084
      %v4086 = vpop.f32.mrb[0].mxu0
      %4087 = vmatprep.mubr.f32.mxu0 0.0
      %4088 = vmatmul.mubr.f32.gmra.mrb[0].mxu0 %v3725
      %v4089 = vpop.f32.mrb[0].mxu0
      %v4090 = vadd.f32 0.0, %v4089
      %v4091 = vpop.f32.mrb[0].mxu0
      %4092 = vmatprep.mubr.f32.mxu0 0.0
      %4093 = vmatmul.mubr.f32.gmra.mrb[0].mxu0 %v3727
      %v4094 = vpop.f32.mrb[0].mxu0
      %v4095 = vadd.f32 0.0, %v4094
      %v4096 = vpop.f32.mrb[0].mxu0
      %4097 = vmatprep.mubr.f32.mxu0 0.0
      %4098 = vmatmul.mubr.f32.gmra.mrb[0].mxu0 %v3729
      %v4099 = vpop.f32.mrb[0].mxu0
      %v4100 = vadd.f32 0.0, %v4099
      %v4101 = vpop.f32.mrb[0].mxu0
      %4102 = vmatprep.mubr.f32.mxu0 0.0
      %4103 = vmatmul.mubr.f32.gmra.mrb[0].mxu0 %v3731
      %v4104 = vpop.f32.mrb[0].mxu0
      %v4105 = vadd.f32 0.0, %v4104
      %v4106 = vpop.f32.mrb[0].mxu0
      %4107 = vmatprep.mubr.f32.mxu0 0.0
      %4108 = vmatmul.mubr.f32.gmra.mrb[0].mxu0 %v3733
      %v4109 = vpop.f32.mrb[0].mxu0
      %v4110 = vadd.f32 0.0, %v4109
      %v4111 = vpop.f32.mrb[0].mxu0
      %4112 = vmatprep.mubr.f32.mxu0 0.0
      %4113 = vmatmul.mubr.f32.gmra.mrb[0].mxu0 %v3735
      %v4114 = vpop.f32.mrb[0].mxu0
      %v4115 = vadd.f32 0.0, %v4114
      %v4116 = vpop.f32.mrb[0].mxu0
      %4117 = vmatprep.mubr.f32.mxu0 0.0
      %4118 = vmatmul.mubr.f32.gmra.mrb[0].mxu0 %v3737
      %v4119 = vpop.f32.mrb[0].mxu0
      %v4120 = vadd.f32 0.0, %v4119
      %v4121 = vpop.f32.mrb[0].mxu0
      %4122 = vmatprep.mubr.f32.mxu0 0.0
      %4123 = vmatmul.mubr.f32.gmra.mrb[0].mxu0 %v3739
      %v4124 = vpop.f32.mrb[0].mxu0
      %v4125 = vadd.f32 0.0, %v4124
      %v4126 = vpop.f32.mrb[0].mxu0
      %4127 = vmatprep.mubr.f32.mxu0 0.0
      %4128 = vmatmul.mubr.f32.gmra.mrb[0].mxu0 %v3741
      %v4129 = vpop.f32.mrb[0].mxu0
      %v4130 = vadd.f32 0.0, %v4129
      %v4131 = vpop.f32.mrb[0].mxu0
      %4132 = vmatprep.mubr.f32.mxu0 0.0
      %4133 = vmatmul.mubr.f32.gmra.mrb[0].mxu0 %v3743
      %v4134 = vpop.f32.mrb[0].mxu0
      %v4135 = vadd.f32 0.0, %v4134
      %v4136 = vpop.f32.mrb[0].mxu0
      %4137 = vdwg.mxu0
      %v4138 = vadd.f32 %v3416, %v3815
      %v4139 = vadd.f32 %v3417, %v3820
      %v4140 = vadd.f32 %v3418, %v3825
      %v4141 = vadd.f32 %v3419, %v3830
      %v4142 = vadd.f32 %v3420, %v3835
      %v4143 = vadd.f32 %v3421, %v3840
      %v4144 = vadd.f32 %v3422, %v3845
      %v4145 = vadd.f32 %v3423, %v3850
      %v4146 = vadd.f32 %v3424, %v3855
      %v4147 = vadd.f32 %v3425, %v3860
      %v4148 = vadd.f32 %v3426, %v3865
      %v4149 = vadd.f32 %v3427, %v3870
      %v4150 = vadd.f32 %v3428, %v3875
      %v4151 = vadd.f32 %v3429, %v3880
      %v4152 = vadd.f32 %v3430, %v3885
      %v4153 = vadd.f32 %v3431, %v3890
      %v4154 = vadd.f32 %v3432, %v3895
      %v4155 = vadd.f32 %v3433, %v3900
      %v4156 = vadd.f32 %v3434, %v3905
      %v4157 = vadd.f32 %v3435, %v3910
      %v4158 = vadd.f32 %v3436, %v3915
      %v4159 = vadd.f32 %v3437, %v3920
      %v4160 = vadd.f32 %v3438, %v3925
      %v4161 = vadd.f32 %v3439, %v3930
      %v4162 = vadd.f32 %v3440, %v3935
      %v4163 = vadd.f32 %v3441, %v3940
      %v4164 = vadd.f32 %v3442, %v3945
      %v4165 = vadd.f32 %v3443, %v3950
      %v4166 = vadd.f32 %v3444, %v3955
      %v4167 = vadd.f32 %v3445, %v3960
      %v4168 = vadd.f32 %v3446, %v3965
      %v4169 = vadd.f32 %v3447, %v3970
      %v4170 = vadd.f32 %v3448, %v3975
      %v4171 = vadd.f32 %v3449, %v3980
      %v4172 = vadd.f32 %v3450, %v3985
      %v4173 = vadd.f32 %v3451, %v3990
      %v4174 = vadd.f32 %v3452, %v3995
      %v4175 = vadd.f32 %v3453, %v4000
      %v4176 = vadd.f32 %v3454, %v4005
      %v4177 = vadd.f32 %v3455, %v4010
      %v4178 = vadd.f32 %v3456, %v4015
      %v4179 = vadd.f32 %v3457, %v4020
      %v4180 = vadd.f32 %v3458, %v4025
      %v4181 = vadd.f32 %v3459, %v4030
      %v4182 = vadd.f32 %v3460, %v4035
      %v4183 = vadd.f32 %v3461, %v4040
      %v4184 = vadd.f32 %v3462, %v4045
      %v4185 = vadd.f32 %v3463, %v4050
      %v4186 = vadd.f32 %v3464, %v4055
      %v4187 = vadd.f32 %v3465, %v4060
      %v4188 = vadd.f32 %v3466, %v4065
      %v4189 = vadd.f32 %v3467, %v4070
      %v4190 = vadd.f32 %v3468, %v4075
      %v4191 = vadd.f32 %v3469, %v4080
      %v4192 = vadd.f32 %v3470, %v4085
      %v4193 = vadd.f32 %v3471, %v4090
      %v4194 = vadd.f32 %v3472, %v4095
      %v4195 = vadd.f32 %v3473, %v4100
      %v4196 = vadd.f32 %v3474, %v4105
      %v4197 = vadd.f32 %v3475, %v4110
      %v4198 = vadd.f32 %v3476, %v4115
      %v4199 = vadd.f32 %v3477, %v4120
      %v4200 = vadd.f32 %v3478, %v4125
      %v4201 = vadd.f32 %v3479, %v4130
      %v4202 = vadd.f32 %v3480, %v4135
      %vm4203 = vcmask 195584
      %4204 = vst.msk [vmem:[#allocation2] sm:$0xff] %vm4203, %v4138
      %4205 = vst.msk [vmem:[#allocation2 + $0x8] sm:$0xff] %vm4203, %v4139
      %4206 = vst.msk [vmem:[#allocation2 + $0x10] sm:$0xff] %vm4203, %v4140
      %4207 = vst.msk [vmem:[#allocation2 + $0x18] sm:$0xff] %vm4203, %v4141
      %4208 = vst.msk [vmem:[#allocation2 + $0x20] sm:$0xff] %vm4203, %v4142
      %4209 = vst.msk [vmem:[#allocation2 + $0x28] sm:$0xff] %vm4203, %v4143
      %4210 = vst.msk [vmem:[#allocation2 + $0x30] sm:$0xff] %vm4203, %v4144
      %4211 = vst.msk [vmem:[#allocation2 + $0x38] sm:$0xff] %vm4203, %v4145
      %4212 = vst.msk [vmem:[#allocation2 + $0x40] sm:$0xff] %vm4203, %v4146
      %4213 = vst.msk [vmem:[#allocation2 + $0x48] sm:$0xff] %vm4203, %v4147
      %4214 = vst.msk [vmem:[#allocation2 + $0x50] sm:$0xff] %vm4203, %v4148
      %4215 = vst.msk [vmem:[#allocation2 + $0x58] sm:$0xff] %vm4203, %v4149
      %4216 = vst.msk [vmem:[#allocation2 + $0x60] sm:$0xff] %vm4203, %v4150
      %4217 = vst.msk [vmem:[#allocation2 + $0x68] sm:$0xff] %vm4203, %v4151
      %4218 = vst.msk [vmem:[#allocation2 + $0x70] sm:$0xff] %vm4203, %v4152
      %4219 = vst.msk [vmem:[#allocation2 + $0x78] sm:$0xff] %vm4203, %v4153
      %4220 = vst.msk [vmem:[#allocation2 + $0x80] sm:$0xff] %vm4203, %v4154
      %4221 = vst.msk [vmem:[#allocation2 + $0x88] sm:$0xff] %vm4203, %v4155
      %4222 = vst.msk [vmem:[#allocation2 + $0x90] sm:$0xff] %vm4203, %v4156
      %4223 = vst.msk [vmem:[#allocation2 + $0x98] sm:$0xff] %vm4203, %v4157
      %4224 = vst.msk [vmem:[#allocation2 + $0xa0] sm:$0xff] %vm4203, %v4158
      %4225 = vst.msk [vmem:[#allocation2 + $0xa8] sm:$0xff] %vm4203, %v4159
      %4226 = vst.msk [vmem:[#allocation2 + $0xb0] sm:$0xff] %vm4203, %v4160
      %4227 = vst.msk [vmem:[#allocation2 + $0xb8] sm:$0xff] %vm4203, %v4161
      %4228 = vst.msk [vmem:[#allocation2 + $0xc0] sm:$0xff] %vm4203, %v4162
      %4229 = vst.msk [vmem:[#allocation2 + $0xc8] sm:$0xff] %vm4203, %v4163
      %4230 = vst.msk [vmem:[#allocation2 + $0xd0] sm:$0xff] %vm4203, %v4164
      %4231 = vst.msk [vmem:[#allocation2 + $0xd8] sm:$0xff] %vm4203, %v4165
      %4232 = vst.msk [vmem:[#allocation2 + $0xe0] sm:$0xff] %vm4203, %v4166
      %4233 = vst.msk [vmem:[#allocation2 + $0xe8] sm:$0xff] %vm4203, %v4167
      %4234 = vst.msk [vmem:[#allocation2 + $0xf0] sm:$0xff] %vm4203, %v4168
      %4235 = vst.msk [vmem:[#allocation2 + $0xf8] sm:$0xff] %vm4203, %v4169
      %4236 = vst.msk [vmem:[#allocation2 + $0x100] sm:$0xff] %vm4203, %v4170
      %4237 = vst.msk [vmem:[#allocation2 + $0x108] sm:$0xff] %vm4203, %v4171
      %4238 = vst.msk [vmem:[#allocation2 + $0x110] sm:$0xff] %vm4203, %v4172
      %4239 = vst.msk [vmem:[#allocation2 + $0x118] sm:$0xff] %vm4203, %v4173
      %4240 = vst.msk [vmem:[#allocation2 + $0x120] sm:$0xff] %vm4203, %v4174
      %4241 = vst.msk [vmem:[#allocation2 + $0x128] sm:$0xff] %vm4203, %v4175
      %4242 = vst.msk [vmem:[#allocation2 + $0x130] sm:$0xff] %vm4203, %v4176
      %4243 = vst.msk [vmem:[#allocation2 + $0x138] sm:$0xff] %vm4203, %v4177
      %4244 = vst.msk [vmem:[#allocation2 + $0x140] sm:$0xff] %vm4203, %v4178
      %4245 = vst.msk [vmem:[#allocation2 + $0x148] sm:$0xff] %vm4203, %v4179
      %4246 = vst.msk [vmem:[#allocation2 + $0x150] sm:$0xff] %vm4203, %v4180
      %4247 = vst.msk [vmem:[#allocation2 + $0x158] sm:$0xff] %vm4203, %v4181
      %4248 = vst.msk [vmem:[#allocation2 + $0x160] sm:$0xff] %vm4203, %v4182
      %4249 = vst.msk [vmem:[#allocation2 + $0x168] sm:$0xff] %vm4203, %v4183
      %4250 = vst.msk [vmem:[#allocation2 + $0x170] sm:$0xff] %vm4203, %v4184
      %4251 = vst.msk [vmem:[#allocation2 + $0x178] sm:$0xff] %vm4203, %v4185
      %4252 = vst.msk [vmem:[#allocation2 + $0x180] sm:$0xff] %vm4203, %v4186
      %4253 = vst.msk [vmem:[#allocation2 + $0x188] sm:$0xff] %vm4203, %v4187
      %4254 = vst.msk [vmem:[#allocation2 + $0x190] sm:$0xff] %vm4203, %v4188
      %4255 = vst.msk [vmem:[#allocation2 + $0x198] sm:$0xff] %vm4203, %v4189
      %4256 = vst.msk [vmem:[#allocation2 + $0x1a0] sm:$0xff] %vm4203, %v4190
      %4257 = vst.msk [vmem:[#allocation2 + $0x1a8] sm:$0xff] %vm4203, %v4191
      %4258 = vst.msk [vmem:[#allocation2 + $0x1b0] sm:$0xff] %vm4203, %v4192
      %4259 = vst.msk [vmem:[#allocation2 + $0x1b8] sm:$0xff] %vm4203, %v4193
      %4260 = vst.msk [vmem:[#allocation2 + $0x1c0] sm:$0xff] %vm4203, %v4194
      %4261 = vst.msk [vmem:[#allocation2 + $0x1c8] sm:$0xff] %vm4203, %v4195
      %4262 = vst.msk [vmem:[#allocation2 + $0x1d0] sm:$0xff] %vm4203, %v4196
      %4263 = vst.msk [vmem:[#allocation2 + $0x1d8] sm:$0xff] %vm4203, %v4197
      %4264 = vst.msk [vmem:[#allocation2 + $0x1e0] sm:$0xff] %vm4203, %v4198
      %4265 = vst.msk [vmem:[#allocation2 + $0x1e8] sm:$0xff] %vm4203, %v4199
      %4266 = vst.msk [vmem:[#allocation2 + $0x1f0] sm:$0xff] %vm4203, %v4200
      %4267 = vst.msk [vmem:[#allocation2 + $0x1f8] sm:$0xff] %vm4203, %v4201
      %4268 = vst.msk [vmem:[#allocation2 + $0x200] sm:$0xff] %vm4203, %v4202
      %v4269 = vld [vmem:[#allocation2] ss:$5 sm:$0xff]
      %s4270 = scalar_lea.vmem [#allocation2], 40
      %v4271 = vld [vmem:[%s4270] ss:$5 sm:$0xff]
      %s4272 = scalar_lea.vmem [#allocation2], 80
      %v4273 = vld [vmem:[%s4272] ss:$5 sm:$0xff]
      %s4274 = scalar_lea.vmem [#allocation2], 120
      %v4275 = vld [vmem:[%s4274] ss:$5 sm:$0xff]
      %s4276 = scalar_lea.vmem [#allocation2], 160
      %v4277 = vld [vmem:[%s4276] ss:$5 sm:$0xff]
      %s4278 = scalar_lea.vmem [#allocation2], 200
      %v4279 = vld [vmem:[%s4278] ss:$5 sm:$0xff]
      %s4280 = scalar_lea.vmem [#allocation2], 240
      %v4281 = vld [vmem:[%s4280] ss:$5 sm:$0xff]
      %s4282 = scalar_lea.vmem [#allocation2], 280
      %v4283 = vld [vmem:[%s4282] ss:$5 sm:$0xff]
      %s4284 = scalar_lea.vmem [#allocation2], 320
      %v4285 = vld [vmem:[%s4284] ss:$5 sm:$0xff]
      %s4286 = scalar_lea.vmem [#allocation2], 360
      %v4287 = vld [vmem:[%s4286] ss:$5 sm:$0xff]
      %s4288 = scalar_lea.vmem [#allocation2], 400
      %v4289 = vld [vmem:[%s4288] ss:$5 sm:$0xff]
      %s4290 = scalar_lea.vmem [#allocation2], 440
      %v4291 = vld [vmem:[%s4290] ss:$5 sm:$0xff]
      %s4292 = scalar_lea.vmem [#allocation2], 480
      %v4293 = vld [vmem:[%s4292] ss:$5 sm:$0xff]
      %s4294 = scalar_lea.vmem [#allocation2], 1
      %v4295 = vld [vmem:[%s4294] ss:$5 sm:$0xff]
      %s4296 = scalar_lea.vmem [#allocation2], 41
      %v4297 = vld [vmem:[%s4296] ss:$5 sm:$0xff]
      %s4298 = scalar_lea.vmem [#allocation2], 81
      %v4299 = vld [vmem:[%s4298] ss:$5 sm:$0xff]
      %s4300 = scalar_lea.vmem [#allocation2], 121
      %v4301 = vld [vmem:[%s4300] ss:$5 sm:$0xff]
      %s4302 = scalar_lea.vmem [#allocation2], 161
      %v4303 = vld [vmem:[%s4302] ss:$5 sm:$0xff]
      %s4304 = scalar_lea.vmem [#allocation2], 201
      %v4305 = vld [vmem:[%s4304] ss:$5 sm:$0xff]
      %s4306 = scalar_lea.vmem [#allocation2], 241
      %v4307 = vld [vmem:[%s4306] ss:$5 sm:$0xff]
      %s4308 = scalar_lea.vmem [#allocation2], 281
      %v4309 = vld [vmem:[%s4308] ss:$5 sm:$0xff]
      %s4310 = scalar_lea.vmem [#allocation2], 321
      %v4311 = vld [vmem:[%s4310] ss:$5 sm:$0xff]
      %s4312 = scalar_lea.vmem [#allocation2], 361
      %v4313 = vld [vmem:[%s4312] ss:$5 sm:$0xff]
      %s4314 = scalar_lea.vmem [#allocation2], 401
      %v4315 = vld [vmem:[%s4314] ss:$5 sm:$0xff]
      %s4316 = scalar_lea.vmem [#allocation2], 441
      %v4317 = vld [vmem:[%s4316] ss:$5 sm:$0xff]
      %s4318 = scalar_lea.vmem [#allocation2], 481
      %v4319 = vld [vmem:[%s4318] ss:$5 sm:$0xff]
      %v4320 = vmax.f32 %v4269, %v4295
      %v4321 = vmax.f32 %v4271, %v4297
      %v4322 = vmax.f32 %v4273, %v4299
      %v4323 = vmax.f32 %v4275, %v4301
      %v4324 = vmax.f32 %v4277, %v4303
      %v4325 = vmax.f32 %v4279, %v4305
      %v4326 = vmax.f32 %v4281, %v4307
      %v4327 = vmax.f32 %v4283, %v4309
      %v4328 = vmax.f32 %v4285, %v4311
      %v4329 = vmax.f32 %v4287, %v4313
      %v4330 = vmax.f32 %v4289, %v4315
      %v4331 = vmax.f32 %v4291, %v4317
      %v4332 = vmax.f32 %v4293, %v4319
      %s4333 = scalar_lea.vmem [#allocation2], 2
      %v4334 = vld [vmem:[%s4333] ss:$5 sm:$0xff]
      %s4335 = scalar_lea.vmem [#allocation2], 42
      %v4336 = vld [vmem:[%s4335] ss:$5 sm:$0xff]
      %s4337 = scalar_lea.vmem [#allocation2], 82
      %v4338 = vld [vmem:[%s4337] ss:$5 sm:$0xff]
      %s4339 = scalar_lea.vmem [#allocation2], 122
      %v4340 = vld [vmem:[%s4339] ss:$5 sm:$0xff]
      %s4341 = scalar_lea.vmem [#allocation2], 162
      %v4342 = vld [vmem:[%s4341] ss:$5 sm:$0xff]
      %s4343 = scalar_lea.vmem [#allocation2], 202
      %v4344 = vld [vmem:[%s4343] ss:$5 sm:$0xff]
      %s4345 = scalar_lea.vmem [#allocation2], 242
      %v4346 = vld [vmem:[%s4345] ss:$5 sm:$0xff]
      %s4347 = scalar_lea.vmem [#allocation2], 282
      %v4348 = vld [vmem:[%s4347] ss:$5 sm:$0xff]
      %s4349 = scalar_lea.vmem [#allocation2], 322
      %v4350 = vld [vmem:[%s4349] ss:$5 sm:$0xff]
      %s4351 = scalar_lea.vmem [#allocation2], 362
      %v4352 = vld [vmem:[%s4351] ss:$5 sm:$0xff]
      %s4353 = scalar_lea.vmem [#allocation2], 402
      %v4354 = vld [vmem:[%s4353] ss:$5 sm:$0xff]
      %s4355 = scalar_lea.vmem [#allocation2], 442
      %v4356 = vld [vmem:[%s4355] ss:$5 sm:$0xff]
      %s4357 = scalar_lea.vmem [#allocation2], 482
      %v4358 = vld [vmem:[%s4357] ss:$5 sm:$0xff]
      %v4359 = vmax.f32 %v4320, %v4334
      %v4360 = vmax.f32 %v4321, %v4336
      %v4361 = vmax.f32 %v4322, %v4338
      %v4362 = vmax.f32 %v4323, %v4340
      %v4363 = vmax.f32 %v4324, %v4342
      %v4364 = vmax.f32 %v4325, %v4344
      %v4365 = vmax.f32 %v4326, %v4346
      %v4366 = vmax.f32 %v4327, %v4348
      %v4367 = vmax.f32 %v4328, %v4350
      %v4368 = vmax.f32 %v4329, %v4352
      %v4369 = vmax.f32 %v4330, %v4354
      %v4370 = vmax.f32 %v4331, %v4356
      %v4371 = vmax.f32 %v4332, %v4358
      %s4372 = scalar_lea.vmem [#allocation2], 3
      %v4373 = vld [vmem:[%s4372] ss:$5 sm:$0xff]
      %s4374 = scalar_lea.vmem [#allocation2], 43
      %v4375 = vld [vmem:[%s4374] ss:$5 sm:$0xff]
      %s4376 = scalar_lea.vmem [#allocation2], 83
      %v4377 = vld [vmem:[%s4376] ss:$5 sm:$0xff]
      %s4378 = scalar_lea.vmem [#allocation2], 123
      %v4379 = vld [vmem:[%s4378] ss:$5 sm:$0xff]
      %s4380 = scalar_lea.vmem [#allocation2], 163
      %v4381 = vld [vmem:[%s4380] ss:$5 sm:$0xff]
      %s4382 = scalar_lea.vmem [#allocation2], 203
      %v4383 = vld [vmem:[%s4382] ss:$5 sm:$0xff]
      %s4384 = scalar_lea.vmem [#allocation2], 243
      %v4385 = vld [vmem:[%s4384] ss:$5 sm:$0xff]
      %s4386 = scalar_lea.vmem [#allocation2], 283
      %v4387 = vld [vmem:[%s4386] ss:$5 sm:$0xff]
      %s4388 = scalar_lea.vmem [#allocation2], 323
      %v4389 = vld [vmem:[%s4388] ss:$5 sm:$0xff]
      %s4390 = scalar_lea.vmem [#allocation2], 363
      %v4391 = vld [vmem:[%s4390] ss:$5 sm:$0xff]
      %s4392 = scalar_lea.vmem [#allocation2], 403
      %v4393 = vld [vmem:[%s4392] ss:$5 sm:$0xff]
      %s4394 = scalar_lea.vmem [#allocation2], 443
      %v4395 = vld [vmem:[%s4394] ss:$5 sm:$0xff]
      %s4396 = scalar_lea.vmem [#allocation2], 483
      %v4397 = vld [vmem:[%s4396] ss:$5 sm:$0xff]
      %v4398 = vmax.f32 %v4359, %v4373
      %v4399 = vmax.f32 %v4360, %v4375
      %v4400 = vmax.f32 %v4361, %v4377
      %v4401 = vmax.f32 %v4362, %v4379
      %v4402 = vmax.f32 %v4363, %v4381
      %v4403 = vmax.f32 %v4364, %v4383
      %v4404 = vmax.f32 %v4365, %v4385
      %v4405 = vmax.f32 %v4366, %v4387
      %v4406 = vmax.f32 %v4367, %v4389
      %v4407 = vmax.f32 %v4368, %v4391
      %v4408 = vmax.f32 %v4369, %v4393
      %v4409 = vmax.f32 %v4370, %v4395
      %v4410 = vmax.f32 %v4371, %v4397
      %s4411 = scalar_lea.vmem [#allocation2], 4
      %v4412 = vld [vmem:[%s4411] ss:$5 sm:$0xff]
      %s4413 = scalar_lea.vmem [#allocation2], 44
      %v4414 = vld [vmem:[%s4413] ss:$5 sm:$0xff]
      %s4415 = scalar_lea.vmem [#allocation2], 84
      %v4416 = vld [vmem:[%s4415] ss:$5 sm:$0xff]
      %s4417 = scalar_lea.vmem [#allocation2], 124
      %v4418 = vld [vmem:[%s4417] ss:$5 sm:$0xff]
      %s4419 = scalar_lea.vmem [#allocation2], 164
      %v4420 = vld [vmem:[%s4419] ss:$5 sm:$0xff]
      %s4421 = scalar_lea.vmem [#allocation2], 204
      %v4422 = vld [vmem:[%s4421] ss:$5 sm:$0xff]
      %s4423 = scalar_lea.vmem [#allocation2], 244
      %v4424 = vld [vmem:[%s4423] ss:$5 sm:$0xff]
      %s4425 = scalar_lea.vmem [#allocation2], 284
      %v4426 = vld [vmem:[%s4425] ss:$5 sm:$0xff]
      %s4427 = scalar_lea.vmem [#allocation2], 324
      %v4428 = vld [vmem:[%s4427] ss:$5 sm:$0xff]
      %s4429 = scalar_lea.vmem [#allocation2], 364
      %v4430 = vld [vmem:[%s4429] ss:$5 sm:$0xff]
      %s4431 = scalar_lea.vmem [#allocation2], 404
      %v4432 = vld [vmem:[%s4431] ss:$5 sm:$0xff]
      %s4433 = scalar_lea.vmem [#allocation2], 444
      %v4434 = vld [vmem:[%s4433] ss:$5 sm:$0xff]
      %s4435 = scalar_lea.vmem [#allocation2], 484
      %v4436 = vld [vmem:[%s4435] ss:$5 sm:$0xff]
      %v4437 = vmax.f32 %v4398, %v4412
      %v4438 = vmax.f32 %v4399, %v4414
      %v4439 = vmax.f32 %v4400, %v4416
      %v4440 = vmax.f32 %v4401, %v4418
      %v4441 = vmax.f32 %v4402, %v4420
      %v4442 = vmax.f32 %v4403, %v4422
      %v4443 = vmax.f32 %v4404, %v4424
      %v4444 = vmax.f32 %v4405, %v4426
      %v4445 = vmax.f32 %v4406, %v4428
      %v4446 = vmax.f32 %v4407, %v4430
      %v4447 = vmax.f32 %v4408, %v4432
      %v4448 = vmax.f32 %v4409, %v4434
      %v4449 = vmax.f32 %v4410, %v4436
      %v4450 = vmax.f32 %v4437, 0.0
      %v4451 = vmax.f32 %v4438, 0.0
      %v4452 = vmax.f32 %v4439, 0.0
      %v4453 = vmax.f32 %v4440, 0.0
      %v4454 = vmax.f32 %v4441, 0.0
      %v4455 = vmax.f32 %v4442, 0.0
      %v4456 = vmax.f32 %v4443, 0.0
      %v4457 = vmax.f32 %v4444, 0.0
      %v4458 = vmax.f32 %v4445, 0.0
      %v4459 = vmax.f32 %v4446, 0.0
      %v4460 = vmax.f32 %v4447, 0.0
      %v4461 = vmax.f32 %v4448, 0.0
      %v4462 = vmax.f32 %v4449, 0.0
      %v4463 = vld [vmem:[%s5] sm:$0x1]
      %v4465 = vlaneseq
      %v4466 = vshrl.u32 %v4465, 7
      %v4467 = vsub.s32 0, %v4466
      %v4468 = vrot.slane %v4463, %v4467
      %v4470 = vadd.f32 %v4468, 0.0
      %v4471 = vld [vmem:[%s4] sm:$0xff]
      %v4472 = vld [vmem:[%s4 + $0x8] sm:$0xff]
      %v4473 = vld [vmem:[%s4 + $0x10] sm:$0xff]
      %v4475 = vsel %vm4203, %v4450, 0
      %v4478 = vsel %vm4203, %v4451, 0
      %v4481 = vsel %vm4203, %v4452, 0
      %v4484 = vsel %vm4203, %v4453, 0
      %v4487 = vsel %vm4203, %v4454, 0
      %v4490 = vsel %vm4203, %v4455, 0
      %v4493 = vsel %vm4203, %v4456, 0
      %v4496 = vsel %vm4203, %v4457, 0
      %v4499 = vsel %vm4203, %v4458, 0
      %v4502 = vsel %vm4203, %v4459, 0
      %v4505 = vsel %vm4203, %v4460, 0
      %v4508 = vsel %vm4203, %v4461, 0
      %v4511 = vsel %vm4203, %v4462, 0
      %4513 = vmatprep.subr.mxu0 0.0
      %4514 = vmatpush1.msra.mxu0 %v4471
      %4515 = vmatprep.subr.mxu0 0.0
      %4516 = vmatpush1.msra.mxu0 %v4472
      %4517 = vmatprep.subr.mxu0 0.0
      %4518 = vmatpush1.msra.mxu0 %v4473
      %4519 = vmatprep.subr.mxu0 0.0
      %4520 = vmatpush1.msra.mxu0 0.0
      %4521 = vmatprep.subr.mxu0 0.0
      %4522 = vmatpush1.msra.mxu0 0.0
      %4523 = vmatprep.subr.mxu0 0.0
      %4524 = vmatpush1.msra.mxu0 0.0
      %4525 = vmatprep.subr.mxu0 0.0
      %4526 = vmatpush1.msra.mxu0 0.0
      %4527 = vmatprep.subr.mxu0 0.0
      %4528 = vmatpush1.msra.mxu0 0.0
      %4529 = vmatprep.subr.mxu0 0.0
      %4530 = vmatpush1.msra.mxu0 0.0
      %4531 = vmatprep.subr.mxu0 0.0
      %4532 = vmatpush1.msra.mxu0 0.0
      %4533 = vmatprep.subr.mxu0 0.0
      %4534 = vmatpush1.msra.mxu0 0.0
      %4535 = vmatprep.subr.mxu0 0.0
      %4536 = vmatpush1.msra.mxu0 0.0
      %4537 = vmatprep.subr.mxu0 0.0
      %4538 = vmatpush1.msra.mxu0 0.0
      %4539 = vmatprep.subr.mxu0 0.0
      %4540 = vmatpush1.msra.mxu0 0.0
      %4541 = vmatprep.subr.mxu0 0.0
      %4542 = vmatpush1.msra.mxu0 0.0
      %4543 = vmatprep.subr.mxu0 0.0
      %4544 = vmatpush1.msra.mxu0 0.0
      %4545 = vmatprep.subr.mxu0 0.0
      %4546 = vmatpush1.msra.mxu0 0.0
      %4547 = vmatprep.subr.mxu0 0.0
      %4548 = vmatpush1.msra.mxu0 0.0
      %4549 = vmatprep.subr.mxu0 0.0
      %4550 = vmatpush1.msra.mxu0 0.0
      %4551 = vmatprep.subr.mxu0 0.0
      %4552 = vmatpush1.msra.mxu0 0.0
      %4553 = vmatprep.subr.mxu0 0.0
      %4554 = vmatpush1.msra.mxu0 0.0
      %4555 = vmatprep.subr.mxu0 0.0
      %4556 = vmatpush1.msra.mxu0 0.0
      %4557 = vmatprep.subr.mxu0 0.0
      %4558 = vmatpush1.msra.mxu0 0.0
      %4559 = vmatprep.subr.mxu0 0.0
      %4560 = vmatpush1.msra.mxu0 0.0
      %4561 = vmatprep.subr.mxu0 0.0
      %4562 = vmatpush1.msra.mxu0 0.0
      %4563 = vmatprep.subr.mxu0 0.0
      %4564 = vmatpush1.msra.mxu0 0.0
      %4565 = vmatprep.subr.mxu0 0.0
      %4566 = vmatpush1.msra.mxu0 0.0
      %4567 = vmatprep.subr.mxu0 0.0
      %4568 = vmatpush1.msra.mxu0 0.0
      %4569 = vmatprep.subr.mxu0 0.0
      %4570 = vmatpush1.msra.mxu0 0.0
      %4571 = vmatprep.subr.mxu0 0.0
      %4572 = vmatpush1.msra.mxu0 0.0
      %4573 = vmatprep.subr.mxu0 0.0
      %4574 = vmatpush1.msra.mxu0 0.0
      %4575 = vmatprep.subr.mxu0 0.0
      %4576 = vmatpush1.msra.mxu0 0.0
      %4577 = vmatprep.mubr.f32.mxu0 0.0
      %4578 = vmatmul.mubr.f32.gmra.mrb[0].mxu0 %v4475
      %v4579 = vpop.f32.mrb[0].mxu0
      %v4580 = vadd.f32 0.0, %v4579
      %v4581 = vpop.f32.mrb[0].mxu0
      %4582 = vmatprep.mubr.f32.mxu0 0.0
      %4583 = vmatmul.mubr.f32.gmra.mrb[0].mxu0 %v4478
      %v4584 = vpop.f32.mrb[0].mxu0
      %v4585 = vadd.f32 0.0, %v4584
      %v4586 = vpop.f32.mrb[0].mxu0
      %4587 = vmatprep.mubr.f32.mxu0 0.0
      %4588 = vmatmul.mubr.f32.gmra.mrb[0].mxu0 %v4481
      %v4589 = vpop.f32.mrb[0].mxu0
      %v4590 = vadd.f32 0.0, %v4589
      %v4591 = vpop.f32.mrb[0].mxu0
      %4592 = vmatprep.mubr.f32.mxu0 0.0
      %4593 = vmatmul.mubr.f32.gmra.mrb[0].mxu0 %v4484
      %v4594 = vpop.f32.mrb[0].mxu0
      %v4595 = vadd.f32 0.0, %v4594
      %v4596 = vpop.f32.mrb[0].mxu0
      %4597 = vmatprep.mubr.f32.mxu0 0.0
      %4598 = vmatmul.mubr.f32.gmra.mrb[0].mxu0 %v4487
      %v4599 = vpop.f32.mrb[0].mxu0
      %v4600 = vadd.f32 0.0, %v4599
      %v4601 = vpop.f32.mrb[0].mxu0
      %4602 = vmatprep.mubr.f32.mxu0 0.0
      %4603 = vmatmul.mubr.f32.gmra.mrb[0].mxu0 %v4490
      %v4604 = vpop.f32.mrb[0].mxu0
      %v4605 = vadd.f32 0.0, %v4604
      %v4606 = vpop.f32.mrb[0].mxu0
      %4607 = vmatprep.mubr.f32.mxu0 0.0
      %4608 = vmatmul.mubr.f32.gmra.mrb[0].mxu0 %v4493
      %v4609 = vpop.f32.mrb[0].mxu0
      %v4610 = vadd.f32 0.0, %v4609
      %v4611 = vpop.f32.mrb[0].mxu0
      %4612 = vmatprep.mubr.f32.mxu0 0.0
      %4613 = vmatmul.mubr.f32.gmra.mrb[0].mxu0 %v4496
      %v4614 = vpop.f32.mrb[0].mxu0
      %v4615 = vadd.f32 0.0, %v4614
      %v4616 = vpop.f32.mrb[0].mxu0
      %4617 = vmatprep.mubr.f32.mxu0 0.0
      %4618 = vmatmul.mubr.f32.gmra.mrb[0].mxu0 %v4499
      %v4619 = vpop.f32.mrb[0].mxu0
      %v4620 = vadd.f32 0.0, %v4619
      %v4621 = vpop.f32.mrb[0].mxu0
      %4622 = vmatprep.mubr.f32.mxu0 0.0
      %4623 = vmatmul.mubr.f32.gmra.mrb[0].mxu0 %v4502
      %v4624 = vpop.f32.mrb[0].mxu0
      %v4625 = vadd.f32 0.0, %v4624
      %v4626 = vpop.f32.mrb[0].mxu0
      %4627 = vmatprep.mubr.f32.mxu0 0.0
      %4628 = vmatmul.mubr.f32.gmra.mrb[0].mxu0 %v4505
      %v4629 = vpop.f32.mrb[0].mxu0
      %v4630 = vadd.f32 0.0, %v4629
      %v4631 = vpop.f32.mrb[0].mxu0
      %4632 = vmatprep.mubr.f32.mxu0 0.0
      %4633 = vmatmul.mubr.f32.gmra.mrb[0].mxu0 %v4508
      %v4634 = vpop.f32.mrb[0].mxu0
      %v4635 = vadd.f32 0.0, %v4634
      %v4636 = vpop.f32.mrb[0].mxu0
      %4637 = vmatprep.mubr.f32.mxu0 0.0
      %4638 = vmatmul.mubr.f32.gmra.mrb[0].mxu0 %v4511
      %v4639 = vpop.f32.mrb[0].mxu0
      %v4640 = vadd.f32 0.0, %v4639
      %v4641 = vpop.f32.mrb[0].mxu0
      %4642 = vdwg.mxu0
      %v4643 = vadd.f32 %v4470, %v4580
      %v4644 = vadd.f32 %v4470, %v4585
      %v4645 = vadd.f32 %v4470, %v4590
      %v4646 = vadd.f32 %v4470, %v4595
      %v4647 = vadd.f32 %v4470, %v4600
      %v4648 = vadd.f32 %v4470, %v4605
      %v4649 = vadd.f32 %v4470, %v4610
      %v4650 = vadd.f32 %v4470, %v4615
      %v4651 = vadd.f32 %v4470, %v4620
      %v4652 = vadd.f32 %v4470, %v4625
      %v4653 = vadd.f32 %v4470, %v4630
      %v4654 = vadd.f32 %v4470, %v4635
      %v4655 = vadd.f32 %v4470, %v4640
      %s4656 = scalar_lea.vmem %s4, 24
      %v4657 = vld [vmem:[%s4656] sm:$0xff]
      %v4658 = vld [vmem:[%s4656 + $0x8] sm:$0xff]
      %v4659 = vld [vmem:[%s4656 + $0x10] sm:$0xff]
      %v4660 = vrot.slane %v4450, 1
      %v4661 = vrot.slane %v4451, 1
      %v4662 = vsel %vm856, %v4660, %v4661
      %v4663 = vrot.slane %v4452, 1
      %v4664 = vsel %vm856, %v4661, %v4663
      %v4665 = vrot.slane %v4453, 1
      %v4666 = vsel %vm856, %v4663, %v4665
      %v4667 = vrot.slane %v4454, 1
      %v4668 = vsel %vm856, %v4665, %v4667
      %v4669 = vrot.slane %v4455, 1
      %v4670 = vsel %vm856, %v4667, %v4669
      %v4671 = vrot.slane %v4456, 1
      %v4672 = vsel %vm856, %v4669, %v4671
      %v4673 = vrot.slane %v4457, 1
      %v4674 = vsel %vm856, %v4671, %v4673
      %v4675 = vrot.slane %v4458, 1
      %v4676 = vsel %vm856, %v4673, %v4675
      %v4677 = vrot.slane %v4459, 1
      %v4678 = vsel %vm856, %v4675, %v4677
      %v4679 = vrot.slane %v4460, 1
      %v4680 = vsel %vm856, %v4677, %v4679
      %v4681 = vrot.slane %v4461, 1
      %v4682 = vsel %vm856, %v4679, %v4681
      %v4683 = vrot.slane %v4462, 1
      %v4684 = vsel %vm856, %v4681, %v4683
      %v4685 = vsel %vm4203, %v4662, 0
      %v4687 = vsel %vm4203, %v4664, 0
      %v4689 = vsel %vm4203, %v4666, 0
      %v4691 = vsel %vm4203, %v4668, 0
      %v4693 = vsel %vm4203, %v4670, 0
      %v4695 = vsel %vm4203, %v4672, 0
      %v4697 = vsel %vm4203, %v4674, 0
      %v4699 = vsel %vm4203, %v4676, 0
      %v4701 = vsel %vm4203, %v4678, 0
      %v4703 = vsel %vm4203, %v4680, 0
      %v4705 = vsel %vm4203, %v4682, 0
      %v4707 = vsel %vm4203, %v4684, 0
      %v4709 = vsel %vm4203, %v4683, 0
      %4711 = vmatprep.subr.mxu0 0.0
      %4712 = vmatpush1.msra.mxu0 %v4657
      %4713 = vmatprep.subr.mxu0 0.0
      %4714 = vmatpush1.msra.mxu0 %v4658
      %4715 = vmatprep.subr.mxu0 0.0
      %4716 = vmatpush1.msra.mxu0 %v4659
      %4717 = vmatprep.subr.mxu0 0.0
      %4718 = vmatpush1.msra.mxu0 0.0
      %4719 = vmatprep.subr.mxu0 0.0
      %4720 = vmatpush1.msra.mxu0 0.0
      %4721 = vmatprep.subr.mxu0 0.0
      %4722 = vmatpush1.msra.mxu0 0.0
      %4723 = vmatprep.subr.mxu0 0.0
      %4724 = vmatpush1.msra.mxu0 0.0
      %4725 = vmatprep.subr.mxu0 0.0
      %4726 = vmatpush1.msra.mxu0 0.0
      %4727 = vmatprep.subr.mxu0 0.0
      %4728 = vmatpush1.msra.mxu0 0.0
      %4729 = vmatprep.subr.mxu0 0.0
      %4730 = vmatpush1.msra.mxu0 0.0
      %4731 = vmatprep.subr.mxu0 0.0
      %4732 = vmatpush1.msra.mxu0 0.0
      %4733 = vmatprep.subr.mxu0 0.0
      %4734 = vmatpush1.msra.mxu0 0.0
      %4735 = vmatprep.subr.mxu0 0.0
      %4736 = vmatpush1.msra.mxu0 0.0
      %4737 = vmatprep.subr.mxu0 0.0
      %4738 = vmatpush1.msra.mxu0 0.0
      %4739 = vmatprep.subr.mxu0 0.0
      %4740 = vmatpush1.msra.mxu0 0.0
      %4741 = vmatprep.subr.mxu0 0.0
      %4742 = vmatpush1.msra.mxu0 0.0
      %4743 = vmatprep.subr.mxu0 0.0
      %4744 = vmatpush1.msra.mxu0 0.0
      %4745 = vmatprep.subr.mxu0 0.0
      %4746 = vmatpush1.msra.mxu0 0.0
      %4747 = vmatprep.subr.mxu0 0.0
      %4748 = vmatpush1.msra.mxu0 0.0
      %4749 = vmatprep.subr.mxu0 0.0
      %4750 = vmatpush1.msra.mxu0 0.0
      %4751 = vmatprep.subr.mxu0 0.0
      %4752 = vmatpush1.msra.mxu0 0.0
      %4753 = vmatprep.subr.mxu0 0.0
      %4754 = vmatpush1.msra.mxu0 0.0
      %4755 = vmatprep.subr.mxu0 0.0
      %4756 = vmatpush1.msra.mxu0 0.0
      %4757 = vmatprep.subr.mxu0 0.0
      %4758 = vmatpush1.msra.mxu0 0.0
      %4759 = vmatprep.subr.mxu0 0.0
      %4760 = vmatpush1.msra.mxu0 0.0
      %4761 = vmatprep.subr.mxu0 0.0
      %4762 = vmatpush1.msra.mxu0 0.0
      %4763 = vmatprep.subr.mxu0 0.0
      %4764 = vmatpush1.msra.mxu0 0.0
      %4765 = vmatprep.subr.mxu0 0.0
      %4766 = vmatpush1.msra.mxu0 0.0
      %4767 = vmatprep.subr.mxu0 0.0
      %4768 = vmatpush1.msra.mxu0 0.0
      %4769 = vmatprep.subr.mxu0 0.0
      %4770 = vmatpush1.msra.mxu0 0.0
      %4771 = vmatprep.subr.mxu0 0.0
      %4772 = vmatpush1.msra.mxu0 0.0
      %4773 = vmatprep.subr.mxu0 0.0
      %4774 = vmatpush1.msra.mxu0 0.0
      %4775 = vmatprep.mubr.f32.mxu0 0.0
      %4776 = vmatmul.mubr.f32.gmra.mrb[0].mxu0 %v4685
      %v4777 = vpop.f32.mrb[0].mxu0
      %v4778 = vadd.f32 0.0, %v4777
      %v4779 = vpop.f32.mrb[0].mxu0
      %4780 = vmatprep.mubr.f32.mxu0 0.0
      %4781 = vmatmul.mubr.f32.gmra.mrb[0].mxu0 %v4687
      %v4782 = vpop.f32.mrb[0].mxu0
      %v4783 = vadd.f32 0.0, %v4782
      %v4784 = vpop.f32.mrb[0].mxu0
      %4785 = vmatprep.mubr.f32.mxu0 0.0
      %4786 = vmatmul.mubr.f32.gmra.mrb[0].mxu0 %v4689
      %v4787 = vpop.f32.mrb[0].mxu0
      %v4788 = vadd.f32 0.0, %v4787
      %v4789 = vpop.f32.mrb[0].mxu0
      %4790 = vmatprep.mubr.f32.mxu0 0.0
      %4791 = vmatmul.mubr.f32.gmra.mrb[0].mxu0 %v4691
      %v4792 = vpop.f32.mrb[0].mxu0
      %v4793 = vadd.f32 0.0, %v4792
      %v4794 = vpop.f32.mrb[0].mxu0
      %4795 = vmatprep.mubr.f32.mxu0 0.0
      %4796 = vmatmul.mubr.f32.gmra.mrb[0].mxu0 %v4693
      %v4797 = vpop.f32.mrb[0].mxu0
      %v4798 = vadd.f32 0.0, %v4797
      %v4799 = vpop.f32.mrb[0].mxu0
      %4800 = vmatprep.mubr.f32.mxu0 0.0
      %4801 = vmatmul.mubr.f32.gmra.mrb[0].mxu0 %v4695
      %v4802 = vpop.f32.mrb[0].mxu0
      %v4803 = vadd.f32 0.0, %v4802
      %v4804 = vpop.f32.mrb[0].mxu0
      %4805 = vmatprep.mubr.f32.mxu0 0.0
      %4806 = vmatmul.mubr.f32.gmra.mrb[0].mxu0 %v4697
      %v4807 = vpop.f32.mrb[0].mxu0
      %v4808 = vadd.f32 0.0, %v4807
      %v4809 = vpop.f32.mrb[0].mxu0
      %4810 = vmatprep.mubr.f32.mxu0 0.0
      %4811 = vmatmul.mubr.f32.gmra.mrb[0].mxu0 %v4699
      %v4812 = vpop.f32.mrb[0].mxu0
      %v4813 = vadd.f32 0.0, %v4812
      %v4814 = vpop.f32.mrb[0].mxu0
      %4815 = vmatprep.mubr.f32.mxu0 0.0
      %4816 = vmatmul.mubr.f32.gmra.mrb[0].mxu0 %v4701
      %v4817 = vpop.f32.mrb[0].mxu0
      %v4818 = vadd.f32 0.0, %v4817
      %v4819 = vpop.f32.mrb[0].mxu0
      %4820 = vmatprep.mubr.f32.mxu0 0.0
      %4821 = vmatmul.mubr.f32.gmra.mrb[0].mxu0 %v4703
      %v4822 = vpop.f32.mrb[0].mxu0
      %v4823 = vadd.f32 0.0, %v4822
      %v4824 = vpop.f32.mrb[0].mxu0
      %4825 = vmatprep.mubr.f32.mxu0 0.0
      %4826 = vmatmul.mubr.f32.gmra.mrb[0].mxu0 %v4705
      %v4827 = vpop.f32.mrb[0].mxu0
      %v4828 = vadd.f32 0.0, %v4827
      %v4829 = vpop.f32.mrb[0].mxu0
      %4830 = vmatprep.mubr.f32.mxu0 0.0
      %4831 = vmatmul.mubr.f32.gmra.mrb[0].mxu0 %v4707
      %v4832 = vpop.f32.mrb[0].mxu0
      %v4833 = vadd.f32 0.0, %v4832
      %v4834 = vpop.f32.mrb[0].mxu0
      %4835 = vmatprep.mubr.f32.mxu0 0.0
      %4836 = vmatmul.mubr.f32.gmra.mrb[0].mxu0 %v4709
      %v4837 = vpop.f32.mrb[0].mxu0
      %v4838 = vadd.f32 0.0, %v4837
      %v4839 = vpop.f32.mrb[0].mxu0
      %4840 = vdwg.mxu0
      %v4841 = vadd.f32 %v4643, %v4778
      %v4842 = vadd.f32 %v4644, %v4783
      %v4843 = vadd.f32 %v4645, %v4788
      %v4844 = vadd.f32 %v4646, %v4793
      %v4845 = vadd.f32 %v4647, %v4798
      %v4846 = vadd.f32 %v4648, %v4803
      %v4847 = vadd.f32 %v4649, %v4808
      %v4848 = vadd.f32 %v4650, %v4813
      %v4849 = vadd.f32 %v4651, %v4818
      %v4850 = vadd.f32 %v4652, %v4823
      %v4851 = vadd.f32 %v4653, %v4828
      %v4852 = vadd.f32 %v4654, %v4833
      %v4853 = vadd.f32 %v4655, %v4838
      %s4854 = scalar_lea.vmem %s4, 48
      %v4855 = vld [vmem:[%s4854] sm:$0xff]
      %v4856 = vld [vmem:[%s4854 + $0x8] sm:$0xff]
      %v4857 = vld [vmem:[%s4854 + $0x10] sm:$0xff]
      %v4858 = vrot.slane %v4450, 2
      %v4859 = vrot.slane %v4451, 2
      %v4860 = vsel %vm2039, %v4858, %v4859
      %v4861 = vrot.slane %v4452, 2
      %v4862 = vsel %vm2039, %v4859, %v4861
      %v4863 = vrot.slane %v4453, 2
      %v4864 = vsel %vm2039, %v4861, %v4863
      %v4865 = vrot.slane %v4454, 2
      %v4866 = vsel %vm2039, %v4863, %v4865
      %v4867 = vrot.slane %v4455, 2
      %v4868 = vsel %vm2039, %v4865, %v4867
      %v4869 = vrot.slane %v4456, 2
      %v4870 = vsel %vm2039, %v4867, %v4869
      %v4871 = vrot.slane %v4457, 2
      %v4872 = vsel %vm2039, %v4869, %v4871
      %v4873 = vrot.slane %v4458, 2
      %v4874 = vsel %vm2039, %v4871, %v4873
      %v4875 = vrot.slane %v4459, 2
      %v4876 = vsel %vm2039, %v4873, %v4875
      %v4877 = vrot.slane %v4460, 2
      %v4878 = vsel %vm2039, %v4875, %v4877
      %v4879 = vrot.slane %v4461, 2
      %v4880 = vsel %vm2039, %v4877, %v4879
      %v4881 = vrot.slane %v4462, 2
      %v4882 = vsel %vm2039, %v4879, %v4881
      %v4883 = vsel %vm4203, %v4860, 0
      %v4885 = vsel %vm4203, %v4862, 0
      %v4887 = vsel %vm4203, %v4864, 0
      %v4889 = vsel %vm4203, %v4866, 0
      %v4891 = vsel %vm4203, %v4868, 0
      %v4893 = vsel %vm4203, %v4870, 0
      %v4895 = vsel %vm4203, %v4872, 0
      %v4897 = vsel %vm4203, %v4874, 0
      %v4899 = vsel %vm4203, %v4876, 0
      %v4901 = vsel %vm4203, %v4878, 0
      %v4903 = vsel %vm4203, %v4880, 0
      %v4905 = vsel %vm4203, %v4882, 0
      %v4907 = vsel %vm4203, %v4881, 0
      %4909 = vmatprep.subr.mxu0 0.0
      %4910 = vmatpush1.msra.mxu0 %v4855
      %4911 = vmatprep.subr.mxu0 0.0
      %4912 = vmatpush1.msra.mxu0 %v4856
      %4913 = vmatprep.subr.mxu0 0.0
      %4914 = vmatpush1.msra.mxu0 %v4857
      %4915 = vmatprep.subr.mxu0 0.0
      %4916 = vmatpush1.msra.mxu0 0.0
      %4917 = vmatprep.subr.mxu0 0.0
      %4918 = vmatpush1.msra.mxu0 0.0
      %4919 = vmatprep.subr.mxu0 0.0
      %4920 = vmatpush1.msra.mxu0 0.0
      %4921 = vmatprep.subr.mxu0 0.0
      %4922 = vmatpush1.msra.mxu0 0.0
      %4923 = vmatprep.subr.mxu0 0.0
      %4924 = vmatpush1.msra.mxu0 0.0
      %4925 = vmatprep.subr.mxu0 0.0
      %4926 = vmatpush1.msra.mxu0 0.0
      %4927 = vmatprep.subr.mxu0 0.0
      %4928 = vmatpush1.msra.mxu0 0.0
      %4929 = vmatprep.subr.mxu0 0.0
      %4930 = vmatpush1.msra.mxu0 0.0
      %4931 = vmatprep.subr.mxu0 0.0
      %4932 = vmatpush1.msra.mxu0 0.0
      %4933 = vmatprep.subr.mxu0 0.0
      %4934 = vmatpush1.msra.mxu0 0.0
      %4935 = vmatprep.subr.mxu0 0.0
      %4936 = vmatpush1.msra.mxu0 0.0
      %4937 = vmatprep.subr.mxu0 0.0
      %4938 = vmatpush1.msra.mxu0 0.0
      %4939 = vmatprep.subr.mxu0 0.0
      %4940 = vmatpush1.msra.mxu0 0.0
      %4941 = vmatprep.subr.mxu0 0.0
      %4942 = vmatpush1.msra.mxu0 0.0
      %4943 = vmatprep.subr.mxu0 0.0
      %4944 = vmatpush1.msra.mxu0 0.0
      %4945 = vmatprep.subr.mxu0 0.0
      %4946 = vmatpush1.msra.mxu0 0.0
      %4947 = vmatprep.subr.mxu0 0.0
      %4948 = vmatpush1.msra.mxu0 0.0
      %4949 = vmatprep.subr.mxu0 0.0
      %4950 = vmatpush1.msra.mxu0 0.0
      %4951 = vmatprep.subr.mxu0 0.0
      %4952 = vmatpush1.msra.mxu0 0.0
      %4953 = vmatprep.subr.mxu0 0.0
      %4954 = vmatpush1.msra.mxu0 0.0
      %4955 = vmatprep.subr.mxu0 0.0
      %4956 = vmatpush1.msra.mxu0 0.0
      %4957 = vmatprep.subr.mxu0 0.0
      %4958 = vmatpush1.msra.mxu0 0.0
      %4959 = vmatprep.subr.mxu0 0.0
      %4960 = vmatpush1.msra.mxu0 0.0
      %4961 = vmatprep.subr.mxu0 0.0
      %4962 = vmatpush1.msra.mxu0 0.0
      %4963 = vmatprep.subr.mxu0 0.0
      %4964 = vmatpush1.msra.mxu0 0.0
      %4965 = vmatprep.subr.mxu0 0.0
      %4966 = vmatpush1.msra.mxu0 0.0
      %4967 = vmatprep.subr.mxu0 0.0
      %4968 = vmatpush1.msra.mxu0 0.0
      %4969 = vmatprep.subr.mxu0 0.0
      %4970 = vmatpush1.msra.mxu0 0.0
      %4971 = vmatprep.subr.mxu0 0.0
      %4972 = vmatpush1.msra.mxu0 0.0
      %4973 = vmatprep.mubr.f32.mxu0 0.0
      %4974 = vmatmul.mubr.f32.gmra.mrb[0].mxu0 %v4883
      %v4975 = vpop.f32.mrb[0].mxu0
      %v4976 = vadd.f32 0.0, %v4975
      %v4977 = vpop.f32.mrb[0].mxu0
      %4978 = vmatprep.mubr.f32.mxu0 0.0
      %4979 = vmatmul.mubr.f32.gmra.mrb[0].mxu0 %v4885
      %v4980 = vpop.f32.mrb[0].mxu0
      %v4981 = vadd.f32 0.0, %v4980
      %v4982 = vpop.f32.mrb[0].mxu0
      %4983 = vmatprep.mubr.f32.mxu0 0.0
      %4984 = vmatmul.mubr.f32.gmra.mrb[0].mxu0 %v4887
      %v4985 = vpop.f32.mrb[0].mxu0
      %v4986 = vadd.f32 0.0, %v4985
      %v4987 = vpop.f32.mrb[0].mxu0
      %4988 = vmatprep.mubr.f32.mxu0 0.0
      %4989 = vmatmul.mubr.f32.gmra.mrb[0].mxu0 %v4889
      %v4990 = vpop.f32.mrb[0].mxu0
      %v4991 = vadd.f32 0.0, %v4990
      %v4992 = vpop.f32.mrb[0].mxu0
      %4993 = vmatprep.mubr.f32.mxu0 0.0
      %4994 = vmatmul.mubr.f32.gmra.mrb[0].mxu0 %v4891
      %v4995 = vpop.f32.mrb[0].mxu0
      %v4996 = vadd.f32 0.0, %v4995
      %v4997 = vpop.f32.mrb[0].mxu0
      %4998 = vmatprep.mubr.f32.mxu0 0.0
      %4999 = vmatmul.mubr.f32.gmra.mrb[0].mxu0 %v4893
      %v5000 = vpop.f32.mrb[0].mxu0
      %v5001 = vadd.f32 0.0, %v5000
      %v5002 = vpop.f32.mrb[0].mxu0
      %5003 = vmatprep.mubr.f32.mxu0 0.0
      %5004 = vmatmul.mubr.f32.gmra.mrb[0].mxu0 %v4895
      %v5005 = vpop.f32.mrb[0].mxu0
      %v5006 = vadd.f32 0.0, %v5005
      %v5007 = vpop.f32.mrb[0].mxu0
      %5008 = vmatprep.mubr.f32.mxu0 0.0
      %5009 = vmatmul.mubr.f32.gmra.mrb[0].mxu0 %v4897
      %v5010 = vpop.f32.mrb[0].mxu0
      %v5011 = vadd.f32 0.0, %v5010
      %v5012 = vpop.f32.mrb[0].mxu0
      %5013 = vmatprep.mubr.f32.mxu0 0.0
      %5014 = vmatmul.mubr.f32.gmra.mrb[0].mxu0 %v4899
      %v5015 = vpop.f32.mrb[0].mxu0
      %v5016 = vadd.f32 0.0, %v5015
      %v5017 = vpop.f32.mrb[0].mxu0
      %5018 = vmatprep.mubr.f32.mxu0 0.0
      %5019 = vmatmul.mubr.f32.gmra.mrb[0].mxu0 %v4901
      %v5020 = vpop.f32.mrb[0].mxu0
      %v5021 = vadd.f32 0.0, %v5020
      %v5022 = vpop.f32.mrb[0].mxu0
      %5023 = vmatprep.mubr.f32.mxu0 0.0
      %5024 = vmatmul.mubr.f32.gmra.mrb[0].mxu0 %v4903
      %v5025 = vpop.f32.mrb[0].mxu0
      %v5026 = vadd.f32 0.0, %v5025
      %v5027 = vpop.f32.mrb[0].mxu0
      %5028 = vmatprep.mubr.f32.mxu0 0.0
      %5029 = vmatmul.mubr.f32.gmra.mrb[0].mxu0 %v4905
      %v5030 = vpop.f32.mrb[0].mxu0
      %v5031 = vadd.f32 0.0, %v5030
      %v5032 = vpop.f32.mrb[0].mxu0
      %5033 = vmatprep.mubr.f32.mxu0 0.0
      %5034 = vmatmul.mubr.f32.gmra.mrb[0].mxu0 %v4907
      %v5035 = vpop.f32.mrb[0].mxu0
      %v5036 = vadd.f32 0.0, %v5035
      %v5037 = vpop.f32.mrb[0].mxu0
      %5038 = vdwg.mxu0
      %v5039 = vadd.f32 %v4841, %v4976
      %v5040 = vadd.f32 %v4842, %v4981
      %v5041 = vadd.f32 %v4843, %v4986
      %v5042 = vadd.f32 %v4844, %v4991
      %v5043 = vadd.f32 %v4845, %v4996
      %v5044 = vadd.f32 %v4846, %v5001
      %v5045 = vadd.f32 %v4847, %v5006
      %v5046 = vadd.f32 %v4848, %v5011
      %v5047 = vadd.f32 %v4849, %v5016
      %v5048 = vadd.f32 %v4850, %v5021
      %v5049 = vadd.f32 %v4851, %v5026
      %v5050 = vadd.f32 %v4852, %v5031
      %v5051 = vadd.f32 %v4853, %v5036
      %s5052 = scalar_lea.vmem %s4, 72
      %v5053 = vld [vmem:[%s5052] sm:$0xff]
      %v5054 = vld [vmem:[%s5052 + $0x8] sm:$0xff]
      %v5055 = vld [vmem:[%s5052 + $0x10] sm:$0xff]
      %v5056 = vrot.slane %v4450, 3
      %v5057 = vrot.slane %v4451, 3
      %v5058 = vsel %vm2761, %v5056, %v5057
      %v5059 = vrot.slane %v4452, 3
      %v5060 = vsel %vm2761, %v5057, %v5059
      %v5061 = vrot.slane %v4453, 3
      %v5062 = vsel %vm2761, %v5059, %v5061
      %v5063 = vrot.slane %v4454, 3
      %v5064 = vsel %vm2761, %v5061, %v5063
      %v5065 = vrot.slane %v4455, 3
      %v5066 = vsel %vm2761, %v5063, %v5065
      %v5067 = vrot.slane %v4456, 3
      %v5068 = vsel %vm2761, %v5065, %v5067
      %v5069 = vrot.slane %v4457, 3
      %v5070 = vsel %vm2761, %v5067, %v5069
      %v5071 = vrot.slane %v4458, 3
      %v5072 = vsel %vm2761, %v5069, %v5071
      %v5073 = vrot.slane %v4459, 3
      %v5074 = vsel %vm2761, %v5071, %v5073
      %v5075 = vrot.slane %v4460, 3
      %v5076 = vsel %vm2761, %v5073, %v5075
      %v5077 = vrot.slane %v4461, 3
      %v5078 = vsel %vm2761, %v5075, %v5077
      %v5079 = vrot.slane %v4462, 3
      %v5080 = vsel %vm2761, %v5077, %v5079
      %v5081 = vsel %vm4203, %v5058, 0
      %v5083 = vsel %vm4203, %v5060, 0
      %v5085 = vsel %vm4203, %v5062, 0
      %v5087 = vsel %vm4203, %v5064, 0
      %v5089 = vsel %vm4203, %v5066, 0
      %v5091 = vsel %vm4203, %v5068, 0
      %v5093 = vsel %vm4203, %v5070, 0
      %v5095 = vsel %vm4203, %v5072, 0
      %v5097 = vsel %vm4203, %v5074, 0
      %v5099 = vsel %vm4203, %v5076, 0
      %v5101 = vsel %vm4203, %v5078, 0
      %v5103 = vsel %vm4203, %v5080, 0
      %v5105 = vsel %vm4203, %v5079, 0
      %5107 = vmatprep.subr.mxu0 0.0
      %5108 = vmatpush1.msra.mxu0 %v5053
      %5109 = vmatprep.subr.mxu0 0.0
      %5110 = vmatpush1.msra.mxu0 %v5054
      %5111 = vmatprep.subr.mxu0 0.0
      %5112 = vmatpush1.msra.mxu0 %v5055
      %5113 = vmatprep.subr.mxu0 0.0
      %5114 = vmatpush1.msra.mxu0 0.0
      %5115 = vmatprep.subr.mxu0 0.0
      %5116 = vmatpush1.msra.mxu0 0.0
      %5117 = vmatprep.subr.mxu0 0.0
      %5118 = vmatpush1.msra.mxu0 0.0
      %5119 = vmatprep.subr.mxu0 0.0
      %5120 = vmatpush1.msra.mxu0 0.0
      %5121 = vmatprep.subr.mxu0 0.0
      %5122 = vmatpush1.msra.mxu0 0.0
      %5123 = vmatprep.subr.mxu0 0.0
      %5124 = vmatpush1.msra.mxu0 0.0
      %5125 = vmatprep.subr.mxu0 0.0
      %5126 = vmatpush1.msra.mxu0 0.0
      %5127 = vmatprep.subr.mxu0 0.0
      %5128 = vmatpush1.msra.mxu0 0.0
      %5129 = vmatprep.subr.mxu0 0.0
      %5130 = vmatpush1.msra.mxu0 0.0
      %5131 = vmatprep.subr.mxu0 0.0
      %5132 = vmatpush1.msra.mxu0 0.0
      %5133 = vmatprep.subr.mxu0 0.0
      %5134 = vmatpush1.msra.mxu0 0.0
      %5135 = vmatprep.subr.mxu0 0.0
      %5136 = vmatpush1.msra.mxu0 0.0
      %5137 = vmatprep.subr.mxu0 0.0
      %5138 = vmatpush1.msra.mxu0 0.0
      %5139 = vmatprep.subr.mxu0 0.0
      %5140 = vmatpush1.msra.mxu0 0.0
      %5141 = vmatprep.subr.mxu0 0.0
      %5142 = vmatpush1.msra.mxu0 0.0
      %5143 = vmatprep.subr.mxu0 0.0
      %5144 = vmatpush1.msra.mxu0 0.0
      %5145 = vmatprep.subr.mxu0 0.0
      %5146 = vmatpush1.msra.mxu0 0.0
      %5147 = vmatprep.subr.mxu0 0.0
      %5148 = vmatpush1.msra.mxu0 0.0
      %5149 = vmatprep.subr.mxu0 0.0
      %5150 = vmatpush1.msra.mxu0 0.0
      %5151 = vmatprep.subr.mxu0 0.0
      %5152 = vmatpush1.msra.mxu0 0.0
      %5153 = vmatprep.subr.mxu0 0.0
      %5154 = vmatpush1.msra.mxu0 0.0
      %5155 = vmatprep.subr.mxu0 0.0
      %5156 = vmatpush1.msra.mxu0 0.0
      %5157 = vmatprep.subr.mxu0 0.0
      %5158 = vmatpush1.msra.mxu0 0.0
      %5159 = vmatprep.subr.mxu0 0.0
      %5160 = vmatpush1.msra.mxu0 0.0
      %5161 = vmatprep.subr.mxu0 0.0
      %5162 = vmatpush1.msra.mxu0 0.0
      %5163 = vmatprep.subr.mxu0 0.0
      %5164 = vmatpush1.msra.mxu0 0.0
      %5165 = vmatprep.subr.mxu0 0.0
      %5166 = vmatpush1.msra.mxu0 0.0
      %5167 = vmatprep.subr.mxu0 0.0
      %5168 = vmatpush1.msra.mxu0 0.0
      %5169 = vmatprep.subr.mxu0 0.0
      %5170 = vmatpush1.msra.mxu0 0.0
      %5171 = vmatprep.mubr.f32.mxu0 0.0
      %5172 = vmatmul.mubr.f32.gmra.mrb[0].mxu0 %v5081
      %v5173 = vpop.f32.mrb[0].mxu0
      %v5174 = vadd.f32 0.0, %v5173
      %v5175 = vpop.f32.mrb[0].mxu0
      %5176 = vmatprep.mubr.f32.mxu0 0.0
      %5177 = vmatmul.mubr.f32.gmra.mrb[0].mxu0 %v5083
      %v5178 = vpop.f32.mrb[0].mxu0
      %v5179 = vadd.f32 0.0, %v5178
      %v5180 = vpop.f32.mrb[0].mxu0
      %5181 = vmatprep.mubr.f32.mxu0 0.0
      %5182 = vmatmul.mubr.f32.gmra.mrb[0].mxu0 %v5085
      %v5183 = vpop.f32.mrb[0].mxu0
      %v5184 = vadd.f32 0.0, %v5183
      %v5185 = vpop.f32.mrb[0].mxu0
      %5186 = vmatprep.mubr.f32.mxu0 0.0
      %5187 = vmatmul.mubr.f32.gmra.mrb[0].mxu0 %v5087
      %v5188 = vpop.f32.mrb[0].mxu0
      %v5189 = vadd.f32 0.0, %v5188
      %v5190 = vpop.f32.mrb[0].mxu0
      %5191 = vmatprep.mubr.f32.mxu0 0.0
      %5192 = vmatmul.mubr.f32.gmra.mrb[0].mxu0 %v5089
      %v5193 = vpop.f32.mrb[0].mxu0
      %v5194 = vadd.f32 0.0, %v5193
      %v5195 = vpop.f32.mrb[0].mxu0
      %5196 = vmatprep.mubr.f32.mxu0 0.0
      %5197 = vmatmul.mubr.f32.gmra.mrb[0].mxu0 %v5091
      %v5198 = vpop.f32.mrb[0].mxu0
      %v5199 = vadd.f32 0.0, %v5198
      %v5200 = vpop.f32.mrb[0].mxu0
      %5201 = vmatprep.mubr.f32.mxu0 0.0
      %5202 = vmatmul.mubr.f32.gmra.mrb[0].mxu0 %v5093
      %v5203 = vpop.f32.mrb[0].mxu0
      %v5204 = vadd.f32 0.0, %v5203
      %v5205 = vpop.f32.mrb[0].mxu0
      %5206 = vmatprep.mubr.f32.mxu0 0.0
      %5207 = vmatmul.mubr.f32.gmra.mrb[0].mxu0 %v5095
      %v5208 = vpop.f32.mrb[0].mxu0
      %v5209 = vadd.f32 0.0, %v5208
      %v5210 = vpop.f32.mrb[0].mxu0
      %5211 = vmatprep.mubr.f32.mxu0 0.0
      %5212 = vmatmul.mubr.f32.gmra.mrb[0].mxu0 %v5097
      %v5213 = vpop.f32.mrb[0].mxu0
      %v5214 = vadd.f32 0.0, %v5213
      %v5215 = vpop.f32.mrb[0].mxu0
      %5216 = vmatprep.mubr.f32.mxu0 0.0
      %5217 = vmatmul.mubr.f32.gmra.mrb[0].mxu0 %v5099
      %v5218 = vpop.f32.mrb[0].mxu0
      %v5219 = vadd.f32 0.0, %v5218
      %v5220 = vpop.f32.mrb[0].mxu0
      %5221 = vmatprep.mubr.f32.mxu0 0.0
      %5222 = vmatmul.mubr.f32.gmra.mrb[0].mxu0 %v5101
      %v5223 = vpop.f32.mrb[0].mxu0
      %v5224 = vadd.f32 0.0, %v5223
      %v5225 = vpop.f32.mrb[0].mxu0
      %5226 = vmatprep.mubr.f32.mxu0 0.0
      %5227 = vmatmul.mubr.f32.gmra.mrb[0].mxu0 %v5103
      %v5228 = vpop.f32.mrb[0].mxu0
      %v5229 = vadd.f32 0.0, %v5228
      %v5230 = vpop.f32.mrb[0].mxu0
      %5231 = vmatprep.mubr.f32.mxu0 0.0
      %5232 = vmatmul.mubr.f32.gmra.mrb[0].mxu0 %v5105
      %v5233 = vpop.f32.mrb[0].mxu0
      %v5234 = vadd.f32 0.0, %v5233
      %v5235 = vpop.f32.mrb[0].mxu0
      %5236 = vdwg.mxu0
      %v5237 = vadd.f32 %v5039, %v5174
      %v5238 = vadd.f32 %v5040, %v5179
      %v5239 = vadd.f32 %v5041, %v5184
      %v5240 = vadd.f32 %v5042, %v5189
      %v5241 = vadd.f32 %v5043, %v5194
      %v5242 = vadd.f32 %v5044, %v5199
      %v5243 = vadd.f32 %v5045, %v5204
      %v5244 = vadd.f32 %v5046, %v5209
      %v5245 = vadd.f32 %v5047, %v5214
      %v5246 = vadd.f32 %v5048, %v5219
      %v5247 = vadd.f32 %v5049, %v5224
      %v5248 = vadd.f32 %v5050, %v5229
      %v5249 = vadd.f32 %v5051, %v5234
      %s5250 = scalar_lea.vmem %s4, 96
      %v5251 = vld [vmem:[%s5250] sm:$0xff]
      %v5252 = vld [vmem:[%s5250 + $0x8] sm:$0xff]
      %v5253 = vld [vmem:[%s5250 + $0x10] sm:$0xff]
      %v5254 = vrot.slane %v4450, 4
      %v5255 = vrot.slane %v4451, 4
      %v5256 = vsel %vm3483, %v5254, %v5255
      %v5257 = vrot.slane %v4452, 4
      %v5258 = vsel %vm3483, %v5255, %v5257
      %v5259 = vrot.slane %v4453, 4
      %v5260 = vsel %vm3483, %v5257, %v5259
      %v5261 = vrot.slane %v4454, 4
      %v5262 = vsel %vm3483, %v5259, %v5261
      %v5263 = vrot.slane %v4455, 4
      %v5264 = vsel %vm3483, %v5261, %v5263
      %v5265 = vrot.slane %v4456, 4
      %v5266 = vsel %vm3483, %v5263, %v5265
      %v5267 = vrot.slane %v4457, 4
      %v5268 = vsel %vm3483, %v5265, %v5267
      %v5269 = vrot.slane %v4458, 4
      %v5270 = vsel %vm3483, %v5267, %v5269
      %v5271 = vrot.slane %v4459, 4
      %v5272 = vsel %vm3483, %v5269, %v5271
      %v5273 = vrot.slane %v4460, 4
      %v5274 = vsel %vm3483, %v5271, %v5273
      %v5275 = vrot.slane %v4461, 4
      %v5276 = vsel %vm3483, %v5273, %v5275
      %v5277 = vrot.slane %v4462, 4
      %v5278 = vsel %vm3483, %v5275, %v5277
      %v5279 = vsel %vm4203, %v5256, 0
      %v5281 = vsel %vm4203, %v5258, 0
      %v5283 = vsel %vm4203, %v5260, 0
      %v5285 = vsel %vm4203, %v5262, 0
      %v5287 = vsel %vm4203, %v5264, 0
      %v5289 = vsel %vm4203, %v5266, 0
      %v5291 = vsel %vm4203, %v5268, 0
      %v5293 = vsel %vm4203, %v5270, 0
      %v5295 = vsel %vm4203, %v5272, 0
      %v5297 = vsel %vm4203, %v5274, 0
      %v5299 = vsel %vm4203, %v5276, 0
      %v5301 = vsel %vm4203, %v5278, 0
      %v5303 = vsel %vm4203, %v5277, 0
      %5305 = vmatprep.subr.mxu0 0.0
      %5306 = vmatpush1.msra.mxu0 %v5251
      %5307 = vmatprep.subr.mxu0 0.0
      %5308 = vmatpush1.msra.mxu0 %v5252
      %5309 = vmatprep.subr.mxu0 0.0
      %5310 = vmatpush1.msra.mxu0 %v5253
      %5311 = vmatprep.subr.mxu0 0.0
      %5312 = vmatpush1.msra.mxu0 0.0
      %5313 = vmatprep.subr.mxu0 0.0
      %5314 = vmatpush1.msra.mxu0 0.0
      %5315 = vmatprep.subr.mxu0 0.0
      %5316 = vmatpush1.msra.mxu0 0.0
      %5317 = vmatprep.subr.mxu0 0.0
      %5318 = vmatpush1.msra.mxu0 0.0
      %5319 = vmatprep.subr.mxu0 0.0
      %5320 = vmatpush1.msra.mxu0 0.0
      %5321 = vmatprep.subr.mxu0 0.0
      %5322 = vmatpush1.msra.mxu0 0.0
      %5323 = vmatprep.subr.mxu0 0.0
      %5324 = vmatpush1.msra.mxu0 0.0
      %5325 = vmatprep.subr.mxu0 0.0
      %5326 = vmatpush1.msra.mxu0 0.0
      %5327 = vmatprep.subr.mxu0 0.0
      %5328 = vmatpush1.msra.mxu0 0.0
      %5329 = vmatprep.subr.mxu0 0.0
      %5330 = vmatpush1.msra.mxu0 0.0
      %5331 = vmatprep.subr.mxu0 0.0
      %5332 = vmatpush1.msra.mxu0 0.0
      %5333 = vmatprep.subr.mxu0 0.0
      %5334 = vmatpush1.msra.mxu0 0.0
      %5335 = vmatprep.subr.mxu0 0.0
      %5336 = vmatpush1.msra.mxu0 0.0
      %5337 = vmatprep.subr.mxu0 0.0
      %5338 = vmatpush1.msra.mxu0 0.0
      %5339 = vmatprep.subr.mxu0 0.0
      %5340 = vmatpush1.msra.mxu0 0.0
      %5341 = vmatprep.subr.mxu0 0.0
      %5342 = vmatpush1.msra.mxu0 0.0
      %5343 = vmatprep.subr.mxu0 0.0
      %5344 = vmatpush1.msra.mxu0 0.0
      %5345 = vmatprep.subr.mxu0 0.0
      %5346 = vmatpush1.msra.mxu0 0.0
      %5347 = vmatprep.subr.mxu0 0.0
      %5348 = vmatpush1.msra.mxu0 0.0
      %5349 = vmatprep.subr.mxu0 0.0
      %5350 = vmatpush1.msra.mxu0 0.0
      %5351 = vmatprep.subr.mxu0 0.0
      %5352 = vmatpush1.msra.mxu0 0.0
      %5353 = vmatprep.subr.mxu0 0.0
      %5354 = vmatpush1.msra.mxu0 0.0
      %5355 = vmatprep.subr.mxu0 0.0
      %5356 = vmatpush1.msra.mxu0 0.0
      %5357 = vmatprep.subr.mxu0 0.0
      %5358 = vmatpush1.msra.mxu0 0.0
      %5359 = vmatprep.subr.mxu0 0.0
      %5360 = vmatpush1.msra.mxu0 0.0
      %5361 = vmatprep.subr.mxu0 0.0
      %5362 = vmatpush1.msra.mxu0 0.0
      %5363 = vmatprep.subr.mxu0 0.0
      %5364 = vmatpush1.msra.mxu0 0.0
      %5365 = vmatprep.subr.mxu0 0.0
      %5366 = vmatpush1.msra.mxu0 0.0
      %5367 = vmatprep.subr.mxu0 0.0
      %5368 = vmatpush1.msra.mxu0 0.0
      %5369 = vmatprep.mubr.f32.mxu0 0.0
      %5370 = vmatmul.mubr.f32.gmra.mrb[0].mxu0 %v5279
      %v5371 = vpop.f32.mrb[0].mxu0
      %v5372 = vadd.f32 0.0, %v5371
      %v5373 = vpop.f32.mrb[0].mxu0
      %5374 = vmatprep.mubr.f32.mxu0 0.0
      %5375 = vmatmul.mubr.f32.gmra.mrb[0].mxu0 %v5281
      %v5376 = vpop.f32.mrb[0].mxu0
      %v5377 = vadd.f32 0.0, %v5376
      %v5378 = vpop.f32.mrb[0].mxu0
      %5379 = vmatprep.mubr.f32.mxu0 0.0
      %5380 = vmatmul.mubr.f32.gmra.mrb[0].mxu0 %v5283
      %v5381 = vpop.f32.mrb[0].mxu0
      %v5382 = vadd.f32 0.0, %v5381
      %v5383 = vpop.f32.mrb[0].mxu0
      %5384 = vmatprep.mubr.f32.mxu0 0.0
      %5385 = vmatmul.mubr.f32.gmra.mrb[0].mxu0 %v5285
      %v5386 = vpop.f32.mrb[0].mxu0
      %v5387 = vadd.f32 0.0, %v5386
      %v5388 = vpop.f32.mrb[0].mxu0
      %5389 = vmatprep.mubr.f32.mxu0 0.0
      %5390 = vmatmul.mubr.f32.gmra.mrb[0].mxu0 %v5287
      %v5391 = vpop.f32.mrb[0].mxu0
      %v5392 = vadd.f32 0.0, %v5391
      %v5393 = vpop.f32.mrb[0].mxu0
      %5394 = vmatprep.mubr.f32.mxu0 0.0
      %5395 = vmatmul.mubr.f32.gmra.mrb[0].mxu0 %v5289
      %v5396 = vpop.f32.mrb[0].mxu0
      %v5397 = vadd.f32 0.0, %v5396
      %v5398 = vpop.f32.mrb[0].mxu0
      %5399 = vmatprep.mubr.f32.mxu0 0.0
      %5400 = vmatmul.mubr.f32.gmra.mrb[0].mxu0 %v5291
      %v5401 = vpop.f32.mrb[0].mxu0
      %v5402 = vadd.f32 0.0, %v5401
      %v5403 = vpop.f32.mrb[0].mxu0
      %5404 = vmatprep.mubr.f32.mxu0 0.0
      %5405 = vmatmul.mubr.f32.gmra.mrb[0].mxu0 %v5293
      %v5406 = vpop.f32.mrb[0].mxu0
      %v5407 = vadd.f32 0.0, %v5406
      %v5408 = vpop.f32.mrb[0].mxu0
      %5409 = vmatprep.mubr.f32.mxu0 0.0
      %5410 = vmatmul.mubr.f32.gmra.mrb[0].mxu0 %v5295
      %v5411 = vpop.f32.mrb[0].mxu0
      %v5412 = vadd.f32 0.0, %v5411
      %v5413 = vpop.f32.mrb[0].mxu0
      %5414 = vmatprep.mubr.f32.mxu0 0.0
      %5415 = vmatmul.mubr.f32.gmra.mrb[0].mxu0 %v5297
      %v5416 = vpop.f32.mrb[0].mxu0
      %v5417 = vadd.f32 0.0, %v5416
      %v5418 = vpop.f32.mrb[0].mxu0
      %5419 = vmatprep.mubr.f32.mxu0 0.0
      %5420 = vmatmul.mubr.f32.gmra.mrb[0].mxu0 %v5299
      %v5421 = vpop.f32.mrb[0].mxu0
      %v5422 = vadd.f32 0.0, %v5421
      %v5423 = vpop.f32.mrb[0].mxu0
      %5424 = vmatprep.mubr.f32.mxu0 0.0
      %5425 = vmatmul.mubr.f32.gmra.mrb[0].mxu0 %v5301
      %v5426 = vpop.f32.mrb[0].mxu0
      %v5427 = vadd.f32 0.0, %v5426
      %v5428 = vpop.f32.mrb[0].mxu0
      %5429 = vmatprep.mubr.f32.mxu0 0.0
      %5430 = vmatmul.mubr.f32.gmra.mrb[0].mxu0 %v5303
      %v5431 = vpop.f32.mrb[0].mxu0
      %v5432 = vadd.f32 0.0, %v5431
      %v5433 = vpop.f32.mrb[0].mxu0
      %5434 = vdwg.mxu0
      %v5435 = vadd.f32 %v5237, %v5372
      %v5436 = vadd.f32 %v5238, %v5377
      %v5437 = vadd.f32 %v5239, %v5382
      %v5438 = vadd.f32 %v5240, %v5387
      %v5439 = vadd.f32 %v5241, %v5392
      %v5440 = vadd.f32 %v5242, %v5397
      %v5441 = vadd.f32 %v5243, %v5402
      %v5442 = vadd.f32 %v5244, %v5407
      %v5443 = vadd.f32 %v5245, %v5412
      %v5444 = vadd.f32 %v5246, %v5417
      %v5445 = vadd.f32 %v5247, %v5422
      %v5446 = vadd.f32 %v5248, %v5427
      %v5447 = vadd.f32 %v5249, %v5432
      %vm5448 = vcmask 244736
      %5449 = vst.msk [vmem:[#allocation3] sm:$0xff] %vm5448, %v5435
      %5450 = vst.msk [vmem:[#allocation3 + $0x8] sm:$0xff] %vm5448, %v5436
      %5451 = vst.msk [vmem:[#allocation3 + $0x10] sm:$0xff] %vm5448, %v5437
      %5452 = vst.msk [vmem:[#allocation3 + $0x18] sm:$0xff] %vm5448, %v5438
      %5453 = vst.msk [vmem:[#allocation3 + $0x20] sm:$0xff] %vm5448, %v5439
      %5454 = vst.msk [vmem:[#allocation3 + $0x28] sm:$0xff] %vm5448, %v5440
      %5455 = vst.msk [vmem:[#allocation3 + $0x30] sm:$0xff] %vm5448, %v5441
      %5456 = vst.msk [vmem:[#allocation3 + $0x38] sm:$0xff] %vm5448, %v5442
      %5457 = vst.msk [vmem:[#allocation3 + $0x40] sm:$0xff] %vm5448, %v5443
      %5458 = vst.msk [vmem:[#allocation3 + $0x48] sm:$0xff] %vm5448, %v5444
      %5459 = vst.msk [vmem:[#allocation3 + $0x50] sm:$0xff] %vm5448, %v5445
      %5460 = vst.msk [vmem:[#allocation3 + $0x58] sm:$0xff] %vm5448, %v5446
      %vm5461 = vcmask 240640
      %5462 = vst.msk [vmem:[#allocation3 + $0x60] sm:$0xf] %vm5461, %v5447
      %v5463 = vld [vmem:[#allocation3] ss:$5 sm:$0xff]
      %s5464 = scalar_lea.vmem [#allocation3], 40
      %v5465 = vld [vmem:[%s5464] ss:$5 sm:$0xff]
      %s5466 = scalar_lea.vmem [#allocation3], 80
      %v5467 = vld [vmem:[%s5466] ss:$5 sm:$0xf]
      %s5468 = scalar_lea.vmem [#allocation3], 1
      %v5469 = vld [vmem:[%s5468] ss:$5 sm:$0xff]
      %s5470 = scalar_lea.vmem [#allocation3], 41
      %v5471 = vld [vmem:[%s5470] ss:$5 sm:$0xff]
      %s5472 = scalar_lea.vmem [#allocation3], 81
      %v5473 = vld [vmem:[%s5472] ss:$5 sm:$0xf]
      %v5474 = vmax.f32 %v5463, %v5469
      %v5475 = vmax.f32 %v5465, %v5471
      %v5476 = vmax.f32 %v5467, %v5473
      %s5477 = scalar_lea.vmem [#allocation3], 2
      %v5478 = vld [vmem:[%s5477] ss:$5 sm:$0xff]
      %s5479 = scalar_lea.vmem [#allocation3], 42
      %v5480 = vld [vmem:[%s5479] ss:$5 sm:$0xff]
      %s5481 = scalar_lea.vmem [#allocation3], 82
      %v5482 = vld [vmem:[%s5481] ss:$5 sm:$0xf]
      %v5483 = vmax.f32 %v5474, %v5478
      %v5484 = vmax.f32 %v5475, %v5480
      %v5485 = vmax.f32 %v5476, %v5482
      %s5486 = scalar_lea.vmem [#allocation3], 3
      %v5487 = vld [vmem:[%s5486] ss:$5 sm:$0xff]
      %s5488 = scalar_lea.vmem [#allocation3], 43
      %v5489 = vld [vmem:[%s5488] ss:$5 sm:$0xff]
      %s5490 = scalar_lea.vmem [#allocation3], 83
      %v5491 = vld [vmem:[%s5490] ss:$5 sm:$0xf]
      %v5492 = vmax.f32 %v5483, %v5487
      %v5493 = vmax.f32 %v5484, %v5489
      %v5494 = vmax.f32 %v5485, %v5491
      %s5495 = scalar_lea.vmem [#allocation3], 4
      %v5496 = vld [vmem:[%s5495] ss:$5 sm:$0xff]
      %s5497 = scalar_lea.vmem [#allocation3], 44
      %v5498 = vld [vmem:[%s5497] ss:$5 sm:$0xff]
      %s5499 = scalar_lea.vmem [#allocation3], 84
      %v5500 = vld [vmem:[%s5499] ss:$5 sm:$0xf]
      %v5501 = vmax.f32 %v5492, %v5496
      %v5502 = vmax.f32 %v5493, %v5498
      %v5503 = vmax.f32 %v5494, %v5500
      %v5504 = vmax.f32 %v5501, 0.0
      %v5505 = vmax.f32 %v5502, 0.0
      %v5506 = vmax.f32 %v5503, 0.0
      %5510 = vrot.lane.b32.xlu0 %v5504, 118
      %v5511 = vpop.permute.xlu0 %5510
      %5512 = vrot.lane.b32.xlu0 %v5505, 118
      %v5513 = vpop.permute.xlu0 %5512
      %5514 = vrot.lane.b32.xlu0 %v5506, 118
      %v5515 = vpop.permute.xlu0 %5514
      %v5519 = vmax.f32 %v5504, %v5511
      %v5520 = vmax.f32 %v5505, %v5513
      %v5521 = vmax.f32 %v5506, %v5515
      %5522 = vrot.lane.b32.xlu0 %v5504, 108
      %v5523 = vpop.permute.xlu0 %5522
      %5524 = vrot.lane.b32.xlu0 %v5505, 108
      %v5525 = vpop.permute.xlu0 %5524
      %5526 = vrot.lane.b32.xlu0 %v5506, 108
      %v5527 = vpop.permute.xlu0 %5526
      %v5531 = vmax.f32 %v5519, %v5523
      %v5532 = vmax.f32 %v5520, %v5525
      %v5533 = vmax.f32 %v5521, %v5527
      %v5534 = vld [vmem:[%s6] sm:$0xff]
      %v5535 = vld [vmem:[%s6 + $0x8] sm:$0xff]
      %v5536 = vld [vmem:[%s6 + $0x10] sm:$0x3]
      %v5537 = vld [vmem:[%s6 + $0x18] sm:$0x3]
      %v5538 = vld [vmem:[%s8] sm:$0x3]
      %v5540 = vlaneseq
      %v5541 = vshrl.u32 %v5540, 7
      %v5542 = vsub.s32 0, %v5541
      %v5543 = vrot.slane %v5538, %v5542
      %v5544 = vlaneseq
      %v5545 = vshrl.u32 %v5544, 7
      %v5546 = vsub.s32 1, %v5545
      %v5547 = vrot.slane %v5538, %v5546
      %vm5550 = vcmask 80896
      %v5552 = vsel %vm5550, %v5531, 0
      %v5555 = vsel %vm5550, %v5532, 0
      %v5558 = vsel %vm5550, %v5533, 0
      %vm5560 = vcmask 1041408
      %v5562 = vsel %vm5560, %v5536, 0
      %v5565 = vsel %vm5560, %v5537, 0
      %5567 = vmatprep.subr.mxu0 %v5535
      %5568 = vmatpush1.msra.mxu0 %v5534
      %5569 = vmatprep.subr.mxu0 %v5565
      %5570 = vmatpush1.msra.mxu0 %v5562
      %5571 = vmatprep.subr.mxu0 0.0
      %5572 = vmatpush1.msra.mxu0 0.0
      %5573 = vmatprep.subr.mxu0 0.0
      %5574 = vmatpush1.msra.mxu0 0.0
      %5575 = vmatprep.subr.mxu0 0.0
      %5576 = vmatpush1.msra.mxu0 0.0
      %5577 = vmatprep.subr.mxu0 0.0
      %5578 = vmatpush1.msra.mxu0 0.0
      %5579 = vmatprep.subr.mxu0 0.0
      %5580 = vmatpush1.msra.mxu0 0.0
      %5581 = vmatprep.subr.mxu0 0.0
      %5582 = vmatpush1.msra.mxu0 0.0
      %5583 = vmatprep.subr.mxu0 0.0
      %5584 = vmatpush1.msra.mxu0 0.0
      %5585 = vmatprep.subr.mxu0 0.0
      %5586 = vmatpush1.msra.mxu0 0.0
      %5587 = vmatprep.subr.mxu0 0.0
      %5588 = vmatpush1.msra.mxu0 0.0
      %5589 = vmatprep.subr.mxu0 0.0
      %5590 = vmatpush1.msra.mxu0 0.0
      %5591 = vmatprep.subr.mxu0 0.0
      %5592 = vmatpush1.msra.mxu0 0.0
      %5593 = vmatprep.subr.mxu0 0.0
      %5594 = vmatpush1.msra.mxu0 0.0
      %5595 = vmatprep.subr.mxu0 0.0
      %5596 = vmatpush1.msra.mxu0 0.0
      %5597 = vmatprep.subr.mxu0 0.0
      %5598 = vmatpush1.msra.mxu0 0.0
      %5599 = vmatprep.subr.mxu0 0.0
      %5600 = vmatpush1.msra.mxu0 0.0
      %5601 = vmatprep.subr.mxu0 0.0
      %5602 = vmatpush1.msra.mxu0 0.0
      %5603 = vmatprep.subr.mxu0 0.0
      %5604 = vmatpush1.msra.mxu0 0.0
      %5605 = vmatprep.subr.mxu0 0.0
      %5606 = vmatpush1.msra.mxu0 0.0
      %5607 = vmatprep.subr.mxu0 0.0
      %5608 = vmatpush1.msra.mxu0 0.0
      %5609 = vmatprep.subr.mxu0 0.0
      %5610 = vmatpush1.msra.mxu0 0.0
      %5611 = vmatprep.subr.mxu0 0.0
      %5612 = vmatpush1.msra.mxu0 0.0
      %5613 = vmatprep.subr.mxu0 0.0
      %5614 = vmatpush1.msra.mxu0 0.0
      %5615 = vmatprep.subr.mxu0 0.0
      %5616 = vmatpush1.msra.mxu0 0.0
      %5617 = vmatprep.subr.mxu0 0.0
      %5618 = vmatpush1.msra.mxu0 0.0
      %5619 = vmatprep.subr.mxu0 0.0
      %5620 = vmatpush1.msra.mxu0 0.0
      %5621 = vmatprep.subr.mxu0 0.0
      %5622 = vmatpush1.msra.mxu0 0.0
      %5623 = vmatprep.subr.mxu0 0.0
      %5624 = vmatpush1.msra.mxu0 0.0
      %5625 = vmatprep.subr.mxu0 0.0
      %5626 = vmatpush1.msra.mxu0 0.0
      %5627 = vmatprep.subr.mxu0 0.0
      %5628 = vmatpush1.msra.mxu0 0.0
      %5629 = vmatprep.subr.mxu0 0.0
      %5630 = vmatpush1.msra.mxu0 0.0
      %5631 = vmatprep.mubr.f32.mxu0 0.0
      %5632 = vmatmul.mubr.f32.gmra.mrb[0].mxu0 %v5552
      %v5633 = vpop.f32.mrb[0].mxu0
      %v5634 = vadd.f32 %v5543, %v5633
      %v5635 = vpop.f32.mrb[0].mxu0
      %v5636 = vadd.f32 %v5547, %v5635
      %5637 = vmatprep.mubr.f32.mxu0 0.0
      %5638 = vmatmul.mubr.f32.gmra.mrb[0].mxu0 %v5555
      %v5639 = vpop.f32.mrb[0].mxu0
      %v5640 = vadd.f32 %v5543, %v5639
      %v5641 = vpop.f32.mrb[0].mxu0
      %v5642 = vadd.f32 %v5547, %v5641
      %5643 = vmatprep.mubr.f32.mxu0 0.0
      %5644 = vmatmul.mubr.f32.gmra.mrb[0].mxu0 %v5558
      %v5645 = vpop.f32.mrb[0].mxu0
      %v5646 = vadd.f32 %v5543, %v5645
      %v5647 = vpop.f32.mrb[0].mxu0
      %v5648 = vadd.f32 %v5547, %v5647
      %5649 = vdwg.mxu0
      %v5650 = vld [vmem:[%s7] sm:$0xff]
      %v5651 = vld [vmem:[%s7 + $0x8] sm:$0xff]
      %v5652 = vld [vmem:[%s7 + $0x10] sm:$0xff]
      %v5653 = vld [vmem:[%s7 + $0x18] sm:$0xff]
      %v5654 = vld [vmem:[%s7 + $0x20] sm:$0xff]
      %v5655 = vld [vmem:[%s7 + $0x28] sm:$0xff]
      %v5656 = vld [vmem:[%s7 + $0x30] sm:$0xff]
      %v5657 = vld [vmem:[%s7 + $0x38] sm:$0xff]
      %v5658 = vld [vmem:[%s7 + $0x40] sm:$0xff]
      %v5659 = vld [vmem:[%s7 + $0x48] sm:$0xff]
      %v5660 = vld [vmem:[%s7 + $0x50] sm:$0xff]
      %v5661 = vld [vmem:[%s7 + $0x58] sm:$0xff]
      %v5662 = vld [vmem:[%s7 + $0x60] sm:$0xff]
      %v5663 = vld [vmem:[%s7 + $0x68] sm:$0xff]
      %v5664 = vld [vmem:[%s7 + $0x70] sm:$0xff]
      %v5665 = vld [vmem:[%s7 + $0x78] sm:$0xff]
      %vm5666 = vcmask 523264
      %v5668 = vsel %vm5666, 0.0, 0
      %5670 = vmatprep.subr.mxu0 %v5651
      %5671 = vmatpush1.msra.mxu0 %v5650
      %5672 = vmatprep.subr.mxu0 %v5653
      %5673 = vmatpush1.msra.mxu0 %v5652
      %5674 = vmatprep.subr.mxu0 %v5655
      %5675 = vmatpush1.msra.mxu0 %v5654
      %5676 = vmatprep.subr.mxu0 %v5657
      %5677 = vmatpush1.msra.mxu0 %v5656
      %5678 = vmatprep.subr.mxu0 %v5659
      %5679 = vmatpush1.msra.mxu0 %v5658
      %5680 = vmatprep.subr.mxu0 %v5661
      %5681 = vmatpush1.msra.mxu0 %v5660
      %5682 = vmatprep.subr.mxu0 %v5663
      %5683 = vmatpush1.msra.mxu0 %v5662
      %5684 = vmatprep.subr.mxu0 %v5665
      %5685 = vmatpush1.msra.mxu0 %v5664
      %5686 = vmatprep.subr.mxu0 0.0
      %5687 = vmatpush1.msra.mxu0 0.0
      %5688 = vmatprep.subr.mxu0 0.0
      %5689 = vmatpush1.msra.mxu0 0.0
      %5690 = vmatprep.subr.mxu0 0.0
      %5691 = vmatpush1.msra.mxu0 0.0
      %5692 = vmatprep.subr.mxu0 0.0
      %5693 = vmatpush1.msra.mxu0 0.0
      %5694 = vmatprep.subr.mxu0 0.0
      %5695 = vmatpush1.msra.mxu0 0.0
      %5696 = vmatprep.subr.mxu0 0.0
      %5697 = vmatpush1.msra.mxu0 0.0
      %5698 = vmatprep.subr.mxu0 0.0
      %5699 = vmatpush1.msra.mxu0 0.0
      %5700 = vmatprep.subr.mxu0 0.0
      %5701 = vmatpush1.msra.mxu0 0.0
      %5702 = vmatprep.subr.mxu0 0.0
      %5703 = vmatpush1.msra.mxu0 0.0
      %5704 = vmatprep.subr.mxu0 0.0
      %5705 = vmatpush1.msra.mxu0 0.0
      %5706 = vmatprep.subr.mxu0 0.0
      %5707 = vmatpush1.msra.mxu0 0.0
      %5708 = vmatprep.subr.mxu0 0.0
      %5709 = vmatpush1.msra.mxu0 0.0
      %5710 = vmatprep.subr.mxu0 0.0
      %5711 = vmatpush1.msra.mxu0 0.0
      %5712 = vmatprep.subr.mxu0 0.0
      %5713 = vmatpush1.msra.mxu0 0.0
      %5714 = vmatprep.subr.mxu0 0.0
      %5715 = vmatpush1.msra.mxu0 0.0
      %5716 = vmatprep.subr.mxu0 0.0
      %5717 = vmatpush1.msra.mxu0 0.0
      %5718 = vmatprep.subr.mxu0 0.0
      %5719 = vmatpush1.msra.mxu0 0.0
      %5720 = vmatprep.subr.mxu0 0.0
      %5721 = vmatpush1.msra.mxu0 0.0
      %5722 = vmatprep.subr.mxu0 0.0
      %5723 = vmatpush1.msra.mxu0 0.0
      %5724 = vmatprep.subr.mxu0 0.0
      %5725 = vmatpush1.msra.mxu0 0.0
      %5726 = vmatprep.subr.mxu0 0.0
      %5727 = vmatpush1.msra.mxu0 0.0
      %5728 = vmatprep.subr.mxu0 0.0
      %5729 = vmatpush1.msra.mxu0 0.0
      %5730 = vmatprep.subr.mxu0 0.0
      %5731 = vmatpush1.msra.mxu0 0.0
      %5732 = vmatprep.subr.mxu0 0.0
      %5733 = vmatpush1.msra.mxu0 0.0
      %5734 = vmatprep.mubr.f32.mxu0 0.0
      %5735 = vmatmul.mubr.f32.gmra.mrb[0].mxu0 %v5668
      %v5736 = vpop.f32.mrb[0].mxu0
      %v5737 = vadd.f32 0.0, %v5736
      %v5738 = vpop.f32.mrb[0].mxu0
      %v5739 = vadd.f32 0.0, %v5738
      %5740 = vdwg.mxu0
      %v5741 = vadd.f32 %v5634, %v5737
      %v5742 = vadd.f32 %v5636, %v5739
      %v5743 = vsub.f32 0.0, %v5741
      %v5744 = vmul.f32 %v5743, 1.442695
      %v5745 = vpow.pop %v5744
      %v5746 = vadd.f32 %v5745, 1.0
      %v5747 = vrcp.pop %v5746
      %v5748 = vtanh.pop %v5742
      %v5749 = vsub.f32 0.0, %v5742
      %v5750 = vmul.f32 %v5749, 1.442695
      %v5751 = vpow.pop %v5750
      %v5752 = vadd.f32 %v5751, 1.0
      %v5753 = vrcp.pop %v5752
      %v5754 = vmul.f32 %v5747, 0.0
      %v5755 = vmul.f32 %v5747, %v5748
      %5757 = vrot.lane.b32.xlu0 %v5755, 64
      %v5758 = vpop.permute.xlu0 %5757
      %v5760 = vadd.f32 %v5754, %v5758
      %v5761 = vtanh.pop %v5760
      %v5762 = vmul.f32 %v5753, %v5761
      %v5763 = vld [vmem:[%s9] sm:$0xff]
      %v5764 = vld [vmem:[%s9 + $0x8] sm:$0xff]
      %v5765 = vld [vmem:[%s9 + $0x10] sm:$0xff]
      %v5766 = vld [vmem:[%s9 + $0x18] sm:$0xff]
      %v5767 = vld [vmem:[%s9 + $0x20] sm:$0xff]
      %v5768 = vld [vmem:[%s9 + $0x28] sm:$0xff]
      %v5769 = vld [vmem:[%s9 + $0x30] sm:$0xff]
      %v5770 = vld [vmem:[%s9 + $0x38] sm:$0xff]
      %5772 = vrot.lane.b32.xlu0 %v5762, 64
      %v5773 = vpop.permute.xlu0 %5772
      %v5774 = vsel %vm5666, %v5773, 0
      %5776 = vmatprep.subr.mxu0 %v5651
      %5777 = vmatpush1.msra.mxu0 %v5650
      %5778 = vmatprep.subr.mxu0 %v5653
      %5779 = vmatpush1.msra.mxu0 %v5652
      %5780 = vmatprep.subr.mxu0 %v5655
      %5781 = vmatpush1.msra.mxu0 %v5654
      %5782 = vmatprep.subr.mxu0 %v5657
      %5783 = vmatpush1.msra.mxu0 %v5656
      %5784 = vmatprep.subr.mxu0 %v5659
      %5785 = vmatpush1.msra.mxu0 %v5658
      %5786 = vmatprep.subr.mxu0 %v5661
      %5787 = vmatpush1.msra.mxu0 %v5660
      %5788 = vmatprep.subr.mxu0 %v5663
      %5789 = vmatpush1.msra.mxu0 %v5662
      %5790 = vmatprep.subr.mxu0 %v5665
      %5791 = vmatpush1.msra.mxu0 %v5664
      %5792 = vmatprep.subr.mxu0 0.0
      %5793 = vmatpush1.msra.mxu0 0.0
      %5794 = vmatprep.subr.mxu0 0.0
      %5795 = vmatpush1.msra.mxu0 0.0
      %5796 = vmatprep.subr.mxu0 0.0
      %5797 = vmatpush1.msra.mxu0 0.0
      %5798 = vmatprep.subr.mxu0 0.0
      %5799 = vmatpush1.msra.mxu0 0.0
      %5800 = vmatprep.subr.mxu0 0.0
      %5801 = vmatpush1.msra.mxu0 0.0
      %5802 = vmatprep.subr.mxu0 0.0
      %5803 = vmatpush1.msra.mxu0 0.0
      %5804 = vmatprep.subr.mxu0 0.0
      %5805 = vmatpush1.msra.mxu0 0.0
      %5806 = vmatprep.subr.mxu0 0.0
      %5807 = vmatpush1.msra.mxu0 0.0
      %5808 = vmatprep.subr.mxu0 0.0
      %5809 = vmatpush1.msra.mxu0 0.0
      %5810 = vmatprep.subr.mxu0 0.0
      %5811 = vmatpush1.msra.mxu0 0.0
      %5812 = vmatprep.subr.mxu0 0.0
      %5813 = vmatpush1.msra.mxu0 0.0
      %5814 = vmatprep.subr.mxu0 0.0
      %5815 = vmatpush1.msra.mxu0 0.0
      %5816 = vmatprep.subr.mxu0 0.0
      %5817 = vmatpush1.msra.mxu0 0.0
      %5818 = vmatprep.subr.mxu0 0.0
      %5819 = vmatpush1.msra.mxu0 0.0
      %5820 = vmatprep.subr.mxu0 0.0
      %5821 = vmatpush1.msra.mxu0 0.0
      %5822 = vmatprep.subr.mxu0 0.0
      %5823 = vmatpush1.msra.mxu0 0.0
      %5824 = vmatprep.subr.mxu0 0.0
      %5825 = vmatpush1.msra.mxu0 0.0
      %5826 = vmatprep.subr.mxu0 0.0
      %5827 = vmatpush1.msra.mxu0 0.0
      %5828 = vmatprep.subr.mxu0 0.0
      %5829 = vmatpush1.msra.mxu0 0.0
      %5830 = vmatprep.subr.mxu0 0.0
      %5831 = vmatpush1.msra.mxu0 0.0
      %5832 = vmatprep.subr.mxu0 0.0
      %5833 = vmatpush1.msra.mxu0 0.0
      %5834 = vmatprep.subr.mxu0 0.0
      %5835 = vmatpush1.msra.mxu0 0.0
      %5836 = vmatprep.subr.mxu0 0.0
      %5837 = vmatpush1.msra.mxu0 0.0
      %5838 = vmatprep.subr.mxu0 0.0
      %5839 = vmatpush1.msra.mxu0 0.0
      %5840 = vmatprep.mubr.f32.mxu0 0.0
      %5841 = vmatmul.mubr.f32.gmra.mrb[0].mxu0 %v5774
      %v5842 = vpop.f32.mrb[0].mxu0
      %v5843 = vadd.f32 0.0, %v5842
      %v5844 = vpop.f32.mrb[0].mxu0
      %v5845 = vadd.f32 0.0, %v5844
      %5846 = vdwg.mxu0
      %v5849 = vrot.slane %v5843, 7
      %v5850 = vrot.slane %v5845, 7
      %v5853 = vadd.f32 %v5634, %v5849
      %v5854 = vadd.f32 %v5636, %v5850
      %v5855 = vsub.f32 0.0, %v5853
      %v5856 = vmul.f32 %v5855, 1.442695
      %v5857 = vpow.pop %v5856
      %v5858 = vadd.f32 %v5857, 1.0
      %v5859 = vrcp.pop %v5858
      %v5860 = vtanh.pop %v5854
      %v5861 = vsub.f32 0.0, %v5854
      %v5862 = vmul.f32 %v5861, 1.442695
      %v5863 = vpow.pop %v5862
      %v5864 = vadd.f32 %v5863, 1.0
      %v5865 = vrcp.pop %v5864
      %v5867 = vrot.slane %v5760, 7
      %v5869 = vmul.f32 %v5859, %v5867
      %v5870 = vmul.f32 %v5859, %v5860
      %5872 = vrot.lane.b32.xlu0 %v5870, 64
      %v5873 = vpop.permute.xlu0 %5872
      %v5875 = vadd.f32 %v5869, %v5873
      %v5876 = vtanh.pop %v5875
      %v5877 = vmul.f32 %v5865, %v5876
      %v5878 = vld [vmem:[%s9 + $0x40] sm:$0xff]
      %v5879 = vld [vmem:[%s9 + $0x48] sm:$0xff]
      %v5880 = vld [vmem:[%s9 + $0x50] sm:$0xff]
      %v5881 = vld [vmem:[%s9 + $0x58] sm:$0xff]
      %v5882 = vld [vmem:[%s9 + $0x60] sm:$0xff]
      %v5883 = vld [vmem:[%s9 + $0x68] sm:$0xff]
      %v5884 = vld [vmem:[%s9 + $0x70] sm:$0xff]
      %v5885 = vld [vmem:[%s9 + $0x78] sm:$0xff]
      %v5887 = vrot.slane %v5877, 1
      %5888 = vrot.lane.b32.xlu0 %v5887, 64
      %v5889 = vpop.permute.xlu0 %5888
      %v5890 = vsel %vm5666, %v5889, 0
      %5892 = vmatprep.subr.mxu0 0.0
      %5893 = vmatpush1.msra.mxu0 %v5878
      %5894 = vmatprep.subr.mxu0 0.0
      %5895 = vmatpush1.msra.mxu0 %v5879
      %5896 = vmatprep.subr.mxu0 0.0
      %5897 = vmatpush1.msra.mxu0 %v5880
      %5898 = vmatprep.subr.mxu0 0.0
      %5899 = vmatpush1.msra.mxu0 %v5881
      %5900 = vmatprep.subr.mxu0 0.0
      %5901 = vmatpush1.msra.mxu0 %v5882
      %5902 = vmatprep.subr.mxu0 0.0
      %5903 = vmatpush1.msra.mxu0 %v5883
      %5904 = vmatprep.subr.mxu0 0.0
      %5905 = vmatpush1.msra.mxu0 %v5884
      %5906 = vmatprep.subr.mxu0 0.0
      %5907 = vmatpush1.msra.mxu0 %v5885
      %5908 = vmatprep.subr.mxu0 0.0
      %5909 = vmatpush1.msra.mxu0 0.0
      %5910 = vmatprep.subr.mxu0 0.0
      %5911 = vmatpush1.msra.mxu0 0.0
      %5912 = vmatprep.subr.mxu0 0.0
      %5913 = vmatpush1.msra.mxu0 0.0
      %5914 = vmatprep.subr.mxu0 0.0
      %5915 = vmatpush1.msra.mxu0 0.0
      %5916 = vmatprep.subr.mxu0 0.0
      %5917 = vmatpush1.msra.mxu0 0.0
      %5918 = vmatprep.subr.mxu0 0.0
      %5919 = vmatpush1.msra.mxu0 0.0
      %5920 = vmatprep.subr.mxu0 0.0
      %5921 = vmatpush1.msra.mxu0 0.0
      %5922 = vmatprep.subr.mxu0 0.0
      %5923 = vmatpush1.msra.mxu0 0.0
      %5924 = vmatprep.subr.mxu0 0.0
      %5925 = vmatpush1.msra.mxu0 0.0
      %5926 = vmatprep.subr.mxu0 0.0
      %5927 = vmatpush1.msra.mxu0 0.0
      %5928 = vmatprep.subr.mxu0 0.0
      %5929 = vmatpush1.msra.mxu0 0.0
      %5930 = vmatprep.subr.mxu0 0.0
      %5931 = vmatpush1.msra.mxu0 0.0
      %5932 = vmatprep.subr.mxu0 0.0
      %5933 = vmatpush1.msra.mxu0 0.0
      %5934 = vmatprep.subr.mxu0 0.0
      %5935 = vmatpush1.msra.mxu0 0.0
      %5936 = vmatprep.subr.mxu0 0.0
      %5937 = vmatpush1.msra.mxu0 0.0
      %5938 = vmatprep.subr.mxu0 0.0
      %5939 = vmatpush1.msra.mxu0 0.0
      %5940 = vmatprep.subr.mxu0 0.0
      %5941 = vmatpush1.msra.mxu0 0.0
      %5942 = vmatprep.subr.mxu0 0.0
      %5943 = vmatpush1.msra.mxu0 0.0
      %5944 = vmatprep.subr.mxu0 0.0
      %5945 = vmatpush1.msra.mxu0 0.0
      %5946 = vmatprep.subr.mxu0 0.0
      %5947 = vmatpush1.msra.mxu0 0.0
      %5948 = vmatprep.subr.mxu0 0.0
      %5949 = vmatpush1.msra.mxu0 0.0
      %5950 = vmatprep.subr.mxu0 0.0
      %5951 = vmatpush1.msra.mxu0 0.0
      %5952 = vmatprep.subr.mxu0 0.0
      %5953 = vmatpush1.msra.mxu0 0.0
      %5954 = vmatprep.subr.mxu0 0.0
      %5955 = vmatpush1.msra.mxu0 0.0
      %5956 = vmatprep.mubr.f32.mxu0 0.0
      %5957 = vmatmul.mubr.f32.gmra.mrb[0].mxu0 %v5890
      %v5958 = vpop.f32.mrb[0].mxu0
      %v5959 = vadd.f32 0.0, %v5958
      %v5960 = vpop.f32.mrb[0].mxu0
      %5961 = vdwg.mxu0
      %5962 = vmatprep.subr.mxu0 0.0
      %5963 = vmatpush1.msra.mxu0 %v5763
      %5964 = vmatprep.subr.mxu0 0.0
      %5965 = vmatpush1.msra.mxu0 %v5764
      %5966 = vmatprep.subr.mxu0 0.0
      %5967 = vmatpush1.msra.mxu0 %v5765
      %5968 = vmatprep.subr.mxu0 0.0
      %5969 = vmatpush1.msra.mxu0 %v5766
      %5970 = vmatprep.subr.mxu0 0.0
      %5971 = vmatpush1.msra.mxu0 %v5767
      %5972 = vmatprep.subr.mxu0 0.0
      %5973 = vmatpush1.msra.mxu0 %v5768
      %5974 = vmatprep.subr.mxu0 0.0
      %5975 = vmatpush1.msra.mxu0 %v5769
      %5976 = vmatprep.subr.mxu0 0.0
      %5977 = vmatpush1.msra.mxu0 %v5770
      %5978 = vmatprep.subr.mxu0 0.0
      %5979 = vmatpush1.msra.mxu0 0.0
      %5980 = vmatprep.subr.mxu0 0.0
      %5981 = vmatpush1.msra.mxu0 0.0
      %5982 = vmatprep.subr.mxu0 0.0
      %5983 = vmatpush1.msra.mxu0 0.0
      %5984 = vmatprep.subr.mxu0 0.0
      %5985 = vmatpush1.msra.mxu0 0.0
      %5986 = vmatprep.subr.mxu0 0.0
      %5987 = vmatpush1.msra.mxu0 0.0
      %5988 = vmatprep.subr.mxu0 0.0
      %5989 = vmatpush1.msra.mxu0 0.0
      %5990 = vmatprep.subr.mxu0 0.0
      %5991 = vmatpush1.msra.mxu0 0.0
      %5992 = vmatprep.subr.mxu0 0.0
      %5993 = vmatpush1.msra.mxu0 0.0
      %5994 = vmatprep.subr.mxu0 0.0
      %5995 = vmatpush1.msra.mxu0 0.0
      %5996 = vmatprep.subr.mxu0 0.0
      %5997 = vmatpush1.msra.mxu0 0.0
      %5998 = vmatprep.subr.mxu0 0.0
      %5999 = vmatpush1.msra.mxu0 0.0
      %6000 = vmatprep.subr.mxu0 0.0
      %6001 = vmatpush1.msra.mxu0 0.0
      %6002 = vmatprep.subr.mxu0 0.0
      %6003 = vmatpush1.msra.mxu0 0.0
      %6004 = vmatprep.subr.mxu0 0.0
      %6005 = vmatpush1.msra.mxu0 0.0
      %6006 = vmatprep.subr.mxu0 0.0
      %6007 = vmatpush1.msra.mxu0 0.0
      %6008 = vmatprep.subr.mxu0 0.0
      %6009 = vmatpush1.msra.mxu0 0.0
      %6010 = vmatprep.subr.mxu0 0.0
      %6011 = vmatpush1.msra.mxu0 0.0
      %6012 = vmatprep.subr.mxu0 0.0
      %6013 = vmatpush1.msra.mxu0 0.0
      %6014 = vmatprep.subr.mxu0 0.0
      %6015 = vmatpush1.msra.mxu0 0.0
      %6016 = vmatprep.subr.mxu0 0.0
      %6017 = vmatpush1.msra.mxu0 0.0
      %6018 = vmatprep.subr.mxu0 0.0
      %6019 = vmatpush1.msra.mxu0 0.0
      %6020 = vmatprep.subr.mxu0 0.0
      %6021 = vmatpush1.msra.mxu0 0.0
      %6022 = vmatprep.subr.mxu0 0.0
      %6023 = vmatpush1.msra.mxu0 0.0
      %6024 = vmatprep.subr.mxu0 0.0
      %6025 = vmatpush1.msra.mxu0 0.0
      %6026 = vmatprep.mubr.f32.mxu0 0.0
      %6027 = vmatmul.mubr.f32.gmra.mrb[0].mxu0 %v5774
      %v6028 = vpop.f32.mrb[0].mxu0
      %v6029 = vadd.f32 %v5959, %v6028
      %v6030 = vpop.f32.mrb[0].mxu0
      %6031 = vdwg.mxu0
      %6032 = vmatprep.subr.mxu0 %v5651
      %6033 = vmatpush1.msra.mxu0 %v5650
      %6034 = vmatprep.subr.mxu0 %v5653
      %6035 = vmatpush1.msra.mxu0 %v5652
      %6036 = vmatprep.subr.mxu0 %v5655
      %6037 = vmatpush1.msra.mxu0 %v5654
      %6038 = vmatprep.subr.mxu0 %v5657
      %6039 = vmatpush1.msra.mxu0 %v5656
      %6040 = vmatprep.subr.mxu0 %v5659
      %6041 = vmatpush1.msra.mxu0 %v5658
      %6042 = vmatprep.subr.mxu0 %v5661
      %6043 = vmatpush1.msra.mxu0 %v5660
      %6044 = vmatprep.subr.mxu0 %v5663
      %6045 = vmatpush1.msra.mxu0 %v5662
      %6046 = vmatprep.subr.mxu0 %v5665
      %6047 = vmatpush1.msra.mxu0 %v5664
      %6048 = vmatprep.subr.mxu0 0.0
      %6049 = vmatpush1.msra.mxu0 0.0
      %6050 = vmatprep.subr.mxu0 0.0
      %6051 = vmatpush1.msra.mxu0 0.0
      %6052 = vmatprep.subr.mxu0 0.0
      %6053 = vmatpush1.msra.mxu0 0.0
      %6054 = vmatprep.subr.mxu0 0.0
      %6055 = vmatpush1.msra.mxu0 0.0
      %6056 = vmatprep.subr.mxu0 0.0
      %6057 = vmatpush1.msra.mxu0 0.0
      %6058 = vmatprep.subr.mxu0 0.0
      %6059 = vmatpush1.msra.mxu0 0.0
      %6060 = vmatprep.subr.mxu0 0.0
      %6061 = vmatpush1.msra.mxu0 0.0
      %6062 = vmatprep.subr.mxu0 0.0
      %6063 = vmatpush1.msra.mxu0 0.0
      %6064 = vmatprep.subr.mxu0 0.0
      %6065 = vmatpush1.msra.mxu0 0.0
      %6066 = vmatprep.subr.mxu0 0.0
      %6067 = vmatpush1.msra.mxu0 0.0
      %6068 = vmatprep.subr.mxu0 0.0
      %6069 = vmatpush1.msra.mxu0 0.0
      %6070 = vmatprep.subr.mxu0 0.0
      %6071 = vmatpush1.msra.mxu0 0.0
      %6072 = vmatprep.subr.mxu0 0.0
      %6073 = vmatpush1.msra.mxu0 0.0
      %6074 = vmatprep.subr.mxu0 0.0
      %6075 = vmatpush1.msra.mxu0 0.0
      %6076 = vmatprep.subr.mxu0 0.0
      %6077 = vmatpush1.msra.mxu0 0.0
      %6078 = vmatprep.subr.mxu0 0.0
      %6079 = vmatpush1.msra.mxu0 0.0
      %6080 = vmatprep.subr.mxu0 0.0
      %6081 = vmatpush1.msra.mxu0 0.0
      %6082 = vmatprep.subr.mxu0 0.0
      %6083 = vmatpush1.msra.mxu0 0.0
      %6084 = vmatprep.subr.mxu0 0.0
      %6085 = vmatpush1.msra.mxu0 0.0
      %6086 = vmatprep.subr.mxu0 0.0
      %6087 = vmatpush1.msra.mxu0 0.0
      %6088 = vmatprep.subr.mxu0 0.0
      %6089 = vmatpush1.msra.mxu0 0.0
      %6090 = vmatprep.subr.mxu0 0.0
      %6091 = vmatpush1.msra.mxu0 0.0
      %6092 = vmatprep.subr.mxu0 0.0
      %6093 = vmatpush1.msra.mxu0 0.0
      %6094 = vmatprep.subr.mxu0 0.0
      %6095 = vmatpush1.msra.mxu0 0.0
      %6096 = vmatprep.mubr.f32.mxu0 0.0
      %6097 = vmatmul.mubr.f32.gmra.mrb[0].mxu0 %v5890
      %v6098 = vpop.f32.mrb[0].mxu0
      %v6099 = vadd.f32 0.0, %v6098
      %v6100 = vpop.f32.mrb[0].mxu0
      %v6101 = vadd.f32 0.0, %v6100
      %6102 = vdwg.mxu0
      %v6105 = vrot.slane %v6099, 6
      %v6106 = vrot.slane %v6101, 6
      %v6109 = vadd.f32 %v5634, %v6105
      %v6110 = vadd.f32 %v5636, %v6106
      %v6111 = vsub.f32 0.0, %v6109
      %v6112 = vmul.f32 %v6111, 1.442695
      %v6113 = vpow.pop %v6112
      %v6114 = vadd.f32 %v6113, 1.0
      %v6115 = vrcp.pop %v6114
      %v6116 = vtanh.pop %v6110
      %v6117 = vsub.f32 0.0, %v6110
      %v6118 = vmul.f32 %v6117, 1.442695
      %v6119 = vpow.pop %v6118
      %v6120 = vadd.f32 %v6119, 1.0
      %v6121 = vrcp.pop %v6120
      %v6123 = vrot.slane %v5875, 7
      %v6125 = vmul.f32 %v6115, %v6123
      %v6126 = vmul.f32 %v6115, %v6116
      %6128 = vrot.lane.b32.xlu0 %v6126, 64
      %v6129 = vpop.permute.xlu0 %6128
      %v6131 = vadd.f32 %v6125, %v6129
      %v6132 = vtanh.pop %v6131
      %v6133 = vmul.f32 %v6121, %v6132
      %v6134 = vld [vmem:[%s9 + $0x80] sm:$0xff]
      %v6135 = vld [vmem:[%s9 + $0x88] sm:$0xff]
      %v6136 = vld [vmem:[%s9 + $0x90] sm:$0xff]
      %v6137 = vld [vmem:[%s9 + $0x98] sm:$0xff]
      %v6138 = vld [vmem:[%s9 + $0xa0] sm:$0xff]
      %v6139 = vld [vmem:[%s9 + $0xa8] sm:$0xff]
      %v6140 = vld [vmem:[%s9 + $0xb0] sm:$0xff]
      %v6141 = vld [vmem:[%s9 + $0xb8] sm:$0xff]
      %v6143 = vrot.slane %v6133, 2
      %6144 = vrot.lane.b32.xlu0 %v6143, 64
      %v6145 = vpop.permute.xlu0 %6144
      %v6146 = vsel %vm5666, %v6145, 0
      %6148 = vmatprep.subr.mxu0 0.0
      %6149 = vmatpush1.msra.mxu0 %v6134
      %6150 = vmatprep.subr.mxu0 0.0
      %6151 = vmatpush1.msra.mxu0 %v6135
      %6152 = vmatprep.subr.mxu0 0.0
      %6153 = vmatpush1.msra.mxu0 %v6136
      %6154 = vmatprep.subr.mxu0 0.0
      %6155 = vmatpush1.msra.mxu0 %v6137
      %6156 = vmatprep.subr.mxu0 0.0
      %6157 = vmatpush1.msra.mxu0 %v6138
      %6158 = vmatprep.subr.mxu0 0.0
      %6159 = vmatpush1.msra.mxu0 %v6139
      %6160 = vmatprep.subr.mxu0 0.0
      %6161 = vmatpush1.msra.mxu0 %v6140
      %6162 = vmatprep.subr.mxu0 0.0
      %6163 = vmatpush1.msra.mxu0 %v6141
      %6164 = vmatprep.subr.mxu0 0.0
      %6165 = vmatpush1.msra.mxu0 0.0
      %6166 = vmatprep.subr.mxu0 0.0
      %6167 = vmatpush1.msra.mxu0 0.0
      %6168 = vmatprep.subr.mxu0 0.0
      %6169 = vmatpush1.msra.mxu0 0.0
      %6170 = vmatprep.subr.mxu0 0.0
      %6171 = vmatpush1.msra.mxu0 0.0
      %6172 = vmatprep.subr.mxu0 0.0
      %6173 = vmatpush1.msra.mxu0 0.0
      %6174 = vmatprep.subr.mxu0 0.0
      %6175 = vmatpush1.msra.mxu0 0.0
      %6176 = vmatprep.subr.mxu0 0.0
      %6177 = vmatpush1.msra.mxu0 0.0
      %6178 = vmatprep.subr.mxu0 0.0
      %6179 = vmatpush1.msra.mxu0 0.0
      %6180 = vmatprep.subr.mxu0 0.0
      %6181 = vmatpush1.msra.mxu0 0.0
      %6182 = vmatprep.subr.mxu0 0.0
      %6183 = vmatpush1.msra.mxu0 0.0
      %6184 = vmatprep.subr.mxu0 0.0
      %6185 = vmatpush1.msra.mxu0 0.0
      %6186 = vmatprep.subr.mxu0 0.0
      %6187 = vmatpush1.msra.mxu0 0.0
      %6188 = vmatprep.subr.mxu0 0.0
      %6189 = vmatpush1.msra.mxu0 0.0
      %6190 = vmatprep.subr.mxu0 0.0
      %6191 = vmatpush1.msra.mxu0 0.0
      %6192 = vmatprep.subr.mxu0 0.0
      %6193 = vmatpush1.msra.mxu0 0.0
      %6194 = vmatprep.subr.mxu0 0.0
      %6195 = vmatpush1.msra.mxu0 0.0
      %6196 = vmatprep.subr.mxu0 0.0
      %6197 = vmatpush1.msra.mxu0 0.0
      %6198 = vmatprep.subr.mxu0 0.0
      %6199 = vmatpush1.msra.mxu0 0.0
      %6200 = vmatprep.subr.mxu0 0.0
      %6201 = vmatpush1.msra.mxu0 0.0
      %6202 = vmatprep.subr.mxu0 0.0
      %6203 = vmatpush1.msra.mxu0 0.0
      %6204 = vmatprep.subr.mxu0 0.0
      %6205 = vmatpush1.msra.mxu0 0.0
      %6206 = vmatprep.subr.mxu0 0.0
      %6207 = vmatpush1.msra.mxu0 0.0
      %6208 = vmatprep.subr.mxu0 0.0
      %6209 = vmatpush1.msra.mxu0 0.0
      %6210 = vmatprep.subr.mxu0 0.0
      %6211 = vmatpush1.msra.mxu0 0.0
      %6212 = vmatprep.mubr.f32.mxu0 0.0
      %6213 = vmatmul.mubr.f32.gmra.mrb[0].mxu0 %v6146
      %v6214 = vpop.f32.mrb[0].mxu0
      %v6215 = vadd.f32 0.0, %v6214
      %v6216 = vpop.f32.mrb[0].mxu0
      %6217 = vdwg.mxu0
      %v6218 = vadd.f32 %v6029, %v6215
      %6219 = vmatprep.subr.mxu0 %v5651
      %6220 = vmatpush1.msra.mxu0 %v5650
      %6221 = vmatprep.subr.mxu0 %v5653
      %6222 = vmatpush1.msra.mxu0 %v5652
      %6223 = vmatprep.subr.mxu0 %v5655
      %6224 = vmatpush1.msra.mxu0 %v5654
      %6225 = vmatprep.subr.mxu0 %v5657
      %6226 = vmatpush1.msra.mxu0 %v5656
      %6227 = vmatprep.subr.mxu0 %v5659
      %6228 = vmatpush1.msra.mxu0 %v5658
      %6229 = vmatprep.subr.mxu0 %v5661
      %6230 = vmatpush1.msra.mxu0 %v5660
      %6231 = vmatprep.subr.mxu0 %v5663
      %6232 = vmatpush1.msra.mxu0 %v5662
      %6233 = vmatprep.subr.mxu0 %v5665
      %6234 = vmatpush1.msra.mxu0 %v5664
      %6235 = vmatprep.subr.mxu0 0.0
      %6236 = vmatpush1.msra.mxu0 0.0
      %6237 = vmatprep.subr.mxu0 0.0
      %6238 = vmatpush1.msra.mxu0 0.0
      %6239 = vmatprep.subr.mxu0 0.0
      %6240 = vmatpush1.msra.mxu0 0.0
      %6241 = vmatprep.subr.mxu0 0.0
      %6242 = vmatpush1.msra.mxu0 0.0
      %6243 = vmatprep.subr.mxu0 0.0
      %6244 = vmatpush1.msra.mxu0 0.0
      %6245 = vmatprep.subr.mxu0 0.0
      %6246 = vmatpush1.msra.mxu0 0.0
      %6247 = vmatprep.subr.mxu0 0.0
      %6248 = vmatpush1.msra.mxu0 0.0
      %6249 = vmatprep.subr.mxu0 0.0
      %6250 = vmatpush1.msra.mxu0 0.0
      %6251 = vmatprep.subr.mxu0 0.0
      %6252 = vmatpush1.msra.mxu0 0.0
      %6253 = vmatprep.subr.mxu0 0.0
      %6254 = vmatpush1.msra.mxu0 0.0
      %6255 = vmatprep.subr.mxu0 0.0
      %6256 = vmatpush1.msra.mxu0 0.0
      %6257 = vmatprep.subr.mxu0 0.0
      %6258 = vmatpush1.msra.mxu0 0.0
      %6259 = vmatprep.subr.mxu0 0.0
      %6260 = vmatpush1.msra.mxu0 0.0
      %6261 = vmatprep.subr.mxu0 0.0
      %6262 = vmatpush1.msra.mxu0 0.0
      %6263 = vmatprep.subr.mxu0 0.0
      %6264 = vmatpush1.msra.mxu0 0.0
      %6265 = vmatprep.subr.mxu0 0.0
      %6266 = vmatpush1.msra.mxu0 0.0
      %6267 = vmatprep.subr.mxu0 0.0
      %6268 = vmatpush1.msra.mxu0 0.0
      %6269 = vmatprep.subr.mxu0 0.0
      %6270 = vmatpush1.msra.mxu0 0.0
      %6271 = vmatprep.subr.mxu0 0.0
      %6272 = vmatpush1.msra.mxu0 0.0
      %6273 = vmatprep.subr.mxu0 0.0
      %6274 = vmatpush1.msra.mxu0 0.0
      %6275 = vmatprep.subr.mxu0 0.0
      %6276 = vmatpush1.msra.mxu0 0.0
      %6277 = vmatprep.subr.mxu0 0.0
      %6278 = vmatpush1.msra.mxu0 0.0
      %6279 = vmatprep.subr.mxu0 0.0
      %6280 = vmatpush1.msra.mxu0 0.0
      %6281 = vmatprep.subr.mxu0 0.0
      %6282 = vmatpush1.msra.mxu0 0.0
      %6283 = vmatprep.mubr.f32.mxu0 0.0
      %6284 = vmatmul.mubr.f32.gmra.mrb[0].mxu0 %v6146
      %v6285 = vpop.f32.mrb[0].mxu0
      %v6286 = vadd.f32 0.0, %v6285
      %v6287 = vpop.f32.mrb[0].mxu0
      %v6288 = vadd.f32 0.0, %v6287
      %6289 = vdwg.mxu0
      %v6292 = vrot.slane %v6286, 5
      %v6293 = vrot.slane %v6288, 5
      %v6296 = vadd.f32 %v5634, %v6292
      %v6297 = vadd.f32 %v5636, %v6293
      %v6298 = vsub.f32 0.0, %v6296
      %v6299 = vmul.f32 %v6298, 1.442695
      %v6300 = vpow.pop %v6299
      %v6301 = vadd.f32 %v6300, 1.0
      %v6302 = vrcp.pop %v6301
      %v6303 = vtanh.pop %v6297
      %v6304 = vsub.f32 0.0, %v6297
      %v6305 = vmul.f32 %v6304, 1.442695
      %v6306 = vpow.pop %v6305
      %v6307 = vadd.f32 %v6306, 1.0
      %v6308 = vrcp.pop %v6307
      %v6310 = vrot.slane %v6131, 7
      %v6312 = vmul.f32 %v6302, %v6310
      %v6313 = vmul.f32 %v6302, %v6303
      %6315 = vrot.lane.b32.xlu0 %v6313, 64
      %v6316 = vpop.permute.xlu0 %6315
      %v6318 = vadd.f32 %v6312, %v6316
      %v6319 = vtanh.pop %v6318
      %v6320 = vmul.f32 %v6308, %v6319
      %v6321 = vld [vmem:[%s9 + $0xc0] sm:$0xff]
      %v6322 = vld [vmem:[%s9 + $0xc8] sm:$0xff]
      %v6323 = vld [vmem:[%s9 + $0xd0] sm:$0xff]
      %v6324 = vld [vmem:[%s9 + $0xd8] sm:$0xff]
      %v6325 = vld [vmem:[%s9 + $0xe0] sm:$0xff]
      %v6326 = vld [vmem:[%s9 + $0xe8] sm:$0xff]
      %v6327 = vld [vmem:[%s9 + $0xf0] sm:$0xff]
      %v6328 = vld [vmem:[%s9 + $0xf8] sm:$0xff]
      %v6330 = vrot.slane %v6320, 3
      %6331 = vrot.lane.b32.xlu0 %v6330, 64
      %v6332 = vpop.permute.xlu0 %6331
      %v6333 = vsel %vm5666, %v6332, 0
      %6335 = vmatprep.subr.mxu0 0.0
      %6336 = vmatpush1.msra.mxu0 %v6321
      %6337 = vmatprep.subr.mxu0 0.0
      %6338 = vmatpush1.msra.mxu0 %v6322
      %6339 = vmatprep.subr.mxu0 0.0
      %6340 = vmatpush1.msra.mxu0 %v6323
      %6341 = vmatprep.subr.mxu0 0.0
      %6342 = vmatpush1.msra.mxu0 %v6324
      %6343 = vmatprep.subr.mxu0 0.0
      %6344 = vmatpush1.msra.mxu0 %v6325
      %6345 = vmatprep.subr.mxu0 0.0
      %6346 = vmatpush1.msra.mxu0 %v6326
      %6347 = vmatprep.subr.mxu0 0.0
      %6348 = vmatpush1.msra.mxu0 %v6327
      %6349 = vmatprep.subr.mxu0 0.0
      %6350 = vmatpush1.msra.mxu0 %v6328
      %6351 = vmatprep.subr.mxu0 0.0
      %6352 = vmatpush1.msra.mxu0 0.0
      %6353 = vmatprep.subr.mxu0 0.0
      %6354 = vmatpush1.msra.mxu0 0.0
      %6355 = vmatprep.subr.mxu0 0.0
      %6356 = vmatpush1.msra.mxu0 0.0
      %6357 = vmatprep.subr.mxu0 0.0
      %6358 = vmatpush1.msra.mxu0 0.0
      %6359 = vmatprep.subr.mxu0 0.0
      %6360 = vmatpush1.msra.mxu0 0.0
      %6361 = vmatprep.subr.mxu0 0.0
      %6362 = vmatpush1.msra.mxu0 0.0
      %6363 = vmatprep.subr.mxu0 0.0
      %6364 = vmatpush1.msra.mxu0 0.0
      %6365 = vmatprep.subr.mxu0 0.0
      %6366 = vmatpush1.msra.mxu0 0.0
      %6367 = vmatprep.subr.mxu0 0.0
      %6368 = vmatpush1.msra.mxu0 0.0
      %6369 = vmatprep.subr.mxu0 0.0
      %6370 = vmatpush1.msra.mxu0 0.0
      %6371 = vmatprep.subr.mxu0 0.0
      %6372 = vmatpush1.msra.mxu0 0.0
      %6373 = vmatprep.subr.mxu0 0.0
      %6374 = vmatpush1.msra.mxu0 0.0
      %6375 = vmatprep.subr.mxu0 0.0
      %6376 = vmatpush1.msra.mxu0 0.0
      %6377 = vmatprep.subr.mxu0 0.0
      %6378 = vmatpush1.msra.mxu0 0.0
      %6379 = vmatprep.subr.mxu0 0.0
      %6380 = vmatpush1.msra.mxu0 0.0
      %6381 = vmatprep.subr.mxu0 0.0
      %6382 = vmatpush1.msra.mxu0 0.0
      %6383 = vmatprep.subr.mxu0 0.0
      %6384 = vmatpush1.msra.mxu0 0.0
      %6385 = vmatprep.subr.mxu0 0.0
      %6386 = vmatpush1.msra.mxu0 0.0
      %6387 = vmatprep.subr.mxu0 0.0
      %6388 = vmatpush1.msra.mxu0 0.0
      %6389 = vmatprep.subr.mxu0 0.0
      %6390 = vmatpush1.msra.mxu0 0.0
      %6391 = vmatprep.subr.mxu0 0.0
      %6392 = vmatpush1.msra.mxu0 0.0
      %6393 = vmatprep.subr.mxu0 0.0
      %6394 = vmatpush1.msra.mxu0 0.0
      %6395 = vmatprep.subr.mxu0 0.0
      %6396 = vmatpush1.msra.mxu0 0.0
      %6397 = vmatprep.subr.mxu0 0.0
      %6398 = vmatpush1.msra.mxu0 0.0
      %6399 = vmatprep.mubr.f32.mxu0 0.0
      %6400 = vmatmul.mubr.f32.gmra.mrb[0].mxu0 %v6333
      %v6401 = vpop.f32.mrb[0].mxu0
      %v6402 = vadd.f32 0.0, %v6401
      %v6403 = vpop.f32.mrb[0].mxu0
      %6404 = vdwg.mxu0
      %v6405 = vadd.f32 %v6218, %v6402
      %6406 = vmatprep.subr.mxu0 %v5651
      %6407 = vmatpush1.msra.mxu0 %v5650
      %6408 = vmatprep.subr.mxu0 %v5653
      %6409 = vmatpush1.msra.mxu0 %v5652
      %6410 = vmatprep.subr.mxu0 %v5655
      %6411 = vmatpush1.msra.mxu0 %v5654
      %6412 = vmatprep.subr.mxu0 %v5657
      %6413 = vmatpush1.msra.mxu0 %v5656
      %6414 = vmatprep.subr.mxu0 %v5659
      %6415 = vmatpush1.msra.mxu0 %v5658
      %6416 = vmatprep.subr.mxu0 %v5661
      %6417 = vmatpush1.msra.mxu0 %v5660
      %6418 = vmatprep.subr.mxu0 %v5663
      %6419 = vmatpush1.msra.mxu0 %v5662
      %6420 = vmatprep.subr.mxu0 %v5665
      %6421 = vmatpush1.msra.mxu0 %v5664
      %6422 = vmatprep.subr.mxu0 0.0
      %6423 = vmatpush1.msra.mxu0 0.0
      %6424 = vmatprep.subr.mxu0 0.0
      %6425 = vmatpush1.msra.mxu0 0.0
      %6426 = vmatprep.subr.mxu0 0.0
      %6427 = vmatpush1.msra.mxu0 0.0
      %6428 = vmatprep.subr.mxu0 0.0
      %6429 = vmatpush1.msra.mxu0 0.0
      %6430 = vmatprep.subr.mxu0 0.0
      %6431 = vmatpush1.msra.mxu0 0.0
      %6432 = vmatprep.subr.mxu0 0.0
      %6433 = vmatpush1.msra.mxu0 0.0
      %6434 = vmatprep.subr.mxu0 0.0
      %6435 = vmatpush1.msra.mxu0 0.0
      %6436 = vmatprep.subr.mxu0 0.0
      %6437 = vmatpush1.msra.mxu0 0.0
      %6438 = vmatprep.subr.mxu0 0.0
      %6439 = vmatpush1.msra.mxu0 0.0
      %6440 = vmatprep.subr.mxu0 0.0
      %6441 = vmatpush1.msra.mxu0 0.0
      %6442 = vmatprep.subr.mxu0 0.0
      %6443 = vmatpush1.msra.mxu0 0.0
      %6444 = vmatprep.subr.mxu0 0.0
      %6445 = vmatpush1.msra.mxu0 0.0
      %6446 = vmatprep.subr.mxu0 0.0
      %6447 = vmatpush1.msra.mxu0 0.0
      %6448 = vmatprep.subr.mxu0 0.0
      %6449 = vmatpush1.msra.mxu0 0.0
      %6450 = vmatprep.subr.mxu0 0.0
      %6451 = vmatpush1.msra.mxu0 0.0
      %6452 = vmatprep.subr.mxu0 0.0
      %6453 = vmatpush1.msra.mxu0 0.0
      %6454 = vmatprep.subr.mxu0 0.0
      %6455 = vmatpush1.msra.mxu0 0.0
      %6456 = vmatprep.subr.mxu0 0.0
      %6457 = vmatpush1.msra.mxu0 0.0
      %6458 = vmatprep.subr.mxu0 0.0
      %6459 = vmatpush1.msra.mxu0 0.0
      %6460 = vmatprep.subr.mxu0 0.0
      %6461 = vmatpush1.msra.mxu0 0.0
      %6462 = vmatprep.subr.mxu0 0.0
      %6463 = vmatpush1.msra.mxu0 0.0
      %6464 = vmatprep.subr.mxu0 0.0
      %6465 = vmatpush1.msra.mxu0 0.0
      %6466 = vmatprep.subr.mxu0 0.0
      %6467 = vmatpush1.msra.mxu0 0.0
      %6468 = vmatprep.subr.mxu0 0.0
      %6469 = vmatpush1.msra.mxu0 0.0
      %6470 = vmatprep.mubr.f32.mxu0 0.0
      %6471 = vmatmul.mubr.f32.gmra.mrb[0].mxu0 %v6333
      %v6472 = vpop.f32.mrb[0].mxu0
      %v6473 = vadd.f32 0.0, %v6472
      %v6474 = vpop.f32.mrb[0].mxu0
      %v6475 = vadd.f32 0.0, %v6474
      %6476 = vdwg.mxu0
      %v6479 = vrot.slane %v6473, 4
      %v6480 = vrot.slane %v6475, 4
      %v6483 = vadd.f32 %v5634, %v6479
      %v6484 = vadd.f32 %v5636, %v6480
      %v6485 = vsub.f32 0.0, %v6483
      %v6486 = vmul.f32 %v6485, 1.442695
      %v6487 = vpow.pop %v6486
      %v6488 = vadd.f32 %v6487, 1.0
      %v6489 = vrcp.pop %v6488
      %v6490 = vtanh.pop %v6484
      %v6491 = vsub.f32 0.0, %v6484
      %v6492 = vmul.f32 %v6491, 1.442695
      %v6493 = vpow.pop %v6492
      %v6494 = vadd.f32 %v6493, 1.0
      %v6495 = vrcp.pop %v6494
      %v6497 = vrot.slane %v6318, 7
      %v6499 = vmul.f32 %v6489, %v6497
      %v6500 = vmul.f32 %v6489, %v6490
      %6502 = vrot.lane.b32.xlu0 %v6500, 64
      %v6503 = vpop.permute.xlu0 %6502
      %v6505 = vadd.f32 %v6499, %v6503
      %v6506 = vtanh.pop %v6505
      %v6507 = vmul.f32 %v6495, %v6506
      %v6508 = vld [vmem:[%s9 + $0x100] sm:$0xff]
      %v6509 = vld [vmem:[%s9 + $0x108] sm:$0xff]
      %v6510 = vld [vmem:[%s9 + $0x110] sm:$0xff]
      %v6511 = vld [vmem:[%s9 + $0x118] sm:$0xff]
      %v6512 = vld [vmem:[%s9 + $0x120] sm:$0xff]
      %v6513 = vld [vmem:[%s9 + $0x128] sm:$0xff]
      %v6514 = vld [vmem:[%s9 + $0x130] sm:$0xff]
      %v6515 = vld [vmem:[%s9 + $0x138] sm:$0xff]
      %v6517 = vrot.slane %v6507, 4
      %6518 = vrot.lane.b32.xlu0 %v6517, 64
      %v6519 = vpop.permute.xlu0 %6518
      %v6520 = vsel %vm5666, %v6519, 0
      %6522 = vmatprep.subr.mxu0 0.0
      %6523 = vmatpush1.msra.mxu0 %v6508
      %6524 = vmatprep.subr.mxu0 0.0
      %6525 = vmatpush1.msra.mxu0 %v6509
      %6526 = vmatprep.subr.mxu0 0.0
      %6527 = vmatpush1.msra.mxu0 %v6510
      %6528 = vmatprep.subr.mxu0 0.0
      %6529 = vmatpush1.msra.mxu0 %v6511
      %6530 = vmatprep.subr.mxu0 0.0
      %6531 = vmatpush1.msra.mxu0 %v6512
      %6532 = vmatprep.subr.mxu0 0.0
      %6533 = vmatpush1.msra.mxu0 %v6513
      %6534 = vmatprep.subr.mxu0 0.0
      %6535 = vmatpush1.msra.mxu0 %v6514
      %6536 = vmatprep.subr.mxu0 0.0
      %6537 = vmatpush1.msra.mxu0 %v6515
      %6538 = vmatprep.subr.mxu0 0.0
      %6539 = vmatpush1.msra.mxu0 0.0
      %6540 = vmatprep.subr.mxu0 0.0
      %6541 = vmatpush1.msra.mxu0 0.0
      %6542 = vmatprep.subr.mxu0 0.0
      %6543 = vmatpush1.msra.mxu0 0.0
      %6544 = vmatprep.subr.mxu0 0.0
      %6545 = vmatpush1.msra.mxu0 0.0
      %6546 = vmatprep.subr.mxu0 0.0
      %6547 = vmatpush1.msra.mxu0 0.0
      %6548 = vmatprep.subr.mxu0 0.0
      %6549 = vmatpush1.msra.mxu0 0.0
      %6550 = vmatprep.subr.mxu0 0.0
      %6551 = vmatpush1.msra.mxu0 0.0
      %6552 = vmatprep.subr.mxu0 0.0
      %6553 = vmatpush1.msra.mxu0 0.0
      %6554 = vmatprep.subr.mxu0 0.0
      %6555 = vmatpush1.msra.mxu0 0.0
      %6556 = vmatprep.subr.mxu0 0.0
      %6557 = vmatpush1.msra.mxu0 0.0
      %6558 = vmatprep.subr.mxu0 0.0
      %6559 = vmatpush1.msra.mxu0 0.0
      %6560 = vmatprep.subr.mxu0 0.0
      %6561 = vmatpush1.msra.mxu0 0.0
      %6562 = vmatprep.subr.mxu0 0.0
      %6563 = vmatpush1.msra.mxu0 0.0
      %6564 = vmatprep.subr.mxu0 0.0
      %6565 = vmatpush1.msra.mxu0 0.0
      %6566 = vmatprep.subr.mxu0 0.0
      %6567 = vmatpush1.msra.mxu0 0.0
      %6568 = vmatprep.subr.mxu0 0.0
      %6569 = vmatpush1.msra.mxu0 0.0
      %6570 = vmatprep.subr.mxu0 0.0
      %6571 = vmatpush1.msra.mxu0 0.0
      %6572 = vmatprep.subr.mxu0 0.0
      %6573 = vmatpush1.msra.mxu0 0.0
      %6574 = vmatprep.subr.mxu0 0.0
      %6575 = vmatpush1.msra.mxu0 0.0
      %6576 = vmatprep.subr.mxu0 0.0
      %6577 = vmatpush1.msra.mxu0 0.0
      %6578 = vmatprep.subr.mxu0 0.0
      %6579 = vmatpush1.msra.mxu0 0.0
      %6580 = vmatprep.subr.mxu0 0.0
      %6581 = vmatpush1.msra.mxu0 0.0
      %6582 = vmatprep.subr.mxu0 0.0
      %6583 = vmatpush1.msra.mxu0 0.0
      %6584 = vmatprep.subr.mxu0 0.0
      %6585 = vmatpush1.msra.mxu0 0.0
      %6586 = vmatprep.mubr.f32.mxu0 0.0
      %6587 = vmatmul.mubr.f32.gmra.mrb[0].mxu0 %v6520
      %v6588 = vpop.f32.mrb[0].mxu0
      %v6589 = vadd.f32 0.0, %v6588
      %v6590 = vpop.f32.mrb[0].mxu0
      %6591 = vdwg.mxu0
      %v6592 = vadd.f32 %v6405, %v6589
      %6593 = vmatprep.subr.mxu0 %v5651
      %6594 = vmatpush1.msra.mxu0 %v5650
      %6595 = vmatprep.subr.mxu0 %v5653
      %6596 = vmatpush1.msra.mxu0 %v5652
      %6597 = vmatprep.subr.mxu0 %v5655
      %6598 = vmatpush1.msra.mxu0 %v5654
      %6599 = vmatprep.subr.mxu0 %v5657
      %6600 = vmatpush1.msra.mxu0 %v5656
      %6601 = vmatprep.subr.mxu0 %v5659
      %6602 = vmatpush1.msra.mxu0 %v5658
      %6603 = vmatprep.subr.mxu0 %v5661
      %6604 = vmatpush1.msra.mxu0 %v5660
      %6605 = vmatprep.subr.mxu0 %v5663
      %6606 = vmatpush1.msra.mxu0 %v5662
      %6607 = vmatprep.subr.mxu0 %v5665
      %6608 = vmatpush1.msra.mxu0 %v5664
      %6609 = vmatprep.subr.mxu0 0.0
      %6610 = vmatpush1.msra.mxu0 0.0
      %6611 = vmatprep.subr.mxu0 0.0
      %6612 = vmatpush1.msra.mxu0 0.0
      %6613 = vmatprep.subr.mxu0 0.0
      %6614 = vmatpush1.msra.mxu0 0.0
      %6615 = vmatprep.subr.mxu0 0.0
      %6616 = vmatpush1.msra.mxu0 0.0
      %6617 = vmatprep.subr.mxu0 0.0
      %6618 = vmatpush1.msra.mxu0 0.0
      %6619 = vmatprep.subr.mxu0 0.0
      %6620 = vmatpush1.msra.mxu0 0.0
      %6621 = vmatprep.subr.mxu0 0.0
      %6622 = vmatpush1.msra.mxu0 0.0
      %6623 = vmatprep.subr.mxu0 0.0
      %6624 = vmatpush1.msra.mxu0 0.0
      %6625 = vmatprep.subr.mxu0 0.0
      %6626 = vmatpush1.msra.mxu0 0.0
      %6627 = vmatprep.subr.mxu0 0.0
      %6628 = vmatpush1.msra.mxu0 0.0
      %6629 = vmatprep.subr.mxu0 0.0
      %6630 = vmatpush1.msra.mxu0 0.0
      %6631 = vmatprep.subr.mxu0 0.0
      %6632 = vmatpush1.msra.mxu0 0.0
      %6633 = vmatprep.subr.mxu0 0.0
      %6634 = vmatpush1.msra.mxu0 0.0
      %6635 = vmatprep.subr.mxu0 0.0
      %6636 = vmatpush1.msra.mxu0 0.0
      %6637 = vmatprep.subr.mxu0 0.0
      %6638 = vmatpush1.msra.mxu0 0.0
      %6639 = vmatprep.subr.mxu0 0.0
      %6640 = vmatpush1.msra.mxu0 0.0
      %6641 = vmatprep.subr.mxu0 0.0
      %6642 = vmatpush1.msra.mxu0 0.0
      %6643 = vmatprep.subr.mxu0 0.0
      %6644 = vmatpush1.msra.mxu0 0.0
      %6645 = vmatprep.subr.mxu0 0.0
      %6646 = vmatpush1.msra.mxu0 0.0
      %6647 = vmatprep.subr.mxu0 0.0
      %6648 = vmatpush1.msra.mxu0 0.0
      %6649 = vmatprep.subr.mxu0 0.0
      %6650 = vmatpush1.msra.mxu0 0.0
      %6651 = vmatprep.subr.mxu0 0.0
      %6652 = vmatpush1.msra.mxu0 0.0
      %6653 = vmatprep.subr.mxu0 0.0
      %6654 = vmatpush1.msra.mxu0 0.0
      %6655 = vmatprep.subr.mxu0 0.0
      %6656 = vmatpush1.msra.mxu0 0.0
      %6657 = vmatprep.mubr.f32.mxu0 0.0
      %6658 = vmatmul.mubr.f32.gmra.mrb[0].mxu0 %v6520
      %v6659 = vpop.f32.mrb[0].mxu0
      %v6660 = vadd.f32 0.0, %v6659
      %v6661 = vpop.f32.mrb[0].mxu0
      %v6662 = vadd.f32 0.0, %v6661
      %6663 = vdwg.mxu0
      %v6666 = vrot.slane %v6660, 3
      %v6667 = vrot.slane %v6662, 3
      %v6670 = vadd.f32 %v5634, %v6666
      %v6671 = vadd.f32 %v5636, %v6667
      %v6672 = vsub.f32 0.0, %v6670
      %v6673 = vmul.f32 %v6672, 1.442695
      %v6674 = vpow.pop %v6673
      %v6675 = vadd.f32 %v6674, 1.0
      %v6676 = vrcp.pop %v6675
      %v6677 = vtanh.pop %v6671
      %v6678 = vsub.f32 0.0, %v6671
      %v6679 = vmul.f32 %v6678, 1.442695
      %v6680 = vpow.pop %v6679
      %v6681 = vadd.f32 %v6680, 1.0
      %v6682 = vrcp.pop %v6681
      %v6684 = vrot.slane %v6505, 7
      %v6686 = vmul.f32 %v6676, %v6684
      %v6687 = vmul.f32 %v6676, %v6677
      %6689 = vrot.lane.b32.xlu0 %v6687, 64
      %v6690 = vpop.permute.xlu0 %6689
      %v6692 = vadd.f32 %v6686, %v6690
      %v6693 = vtanh.pop %v6692
      %v6694 = vmul.f32 %v6682, %v6693
      %v6695 = vld [vmem:[%s9 + $0x140] sm:$0xff]
      %v6696 = vld [vmem:[%s9 + $0x148] sm:$0xff]
      %v6697 = vld [vmem:[%s9 + $0x150] sm:$0xff]
      %v6698 = vld [vmem:[%s9 + $0x158] sm:$0xff]
      %v6699 = vld [vmem:[%s9 + $0x160] sm:$0xff]
      %v6700 = vld [vmem:[%s9 + $0x168] sm:$0xff]
      %v6701 = vld [vmem:[%s9 + $0x170] sm:$0xff]
      %v6702 = vld [vmem:[%s9 + $0x178] sm:$0xff]
      %v6704 = vrot.slane %v6694, 5
      %6705 = vrot.lane.b32.xlu0 %v6704, 64
      %v6706 = vpop.permute.xlu0 %6705
      %v6707 = vsel %vm5666, %v6706, 0
      %6709 = vmatprep.subr.mxu0 0.0
      %6710 = vmatpush1.msra.mxu0 %v6695
      %6711 = vmatprep.subr.mxu0 0.0
      %6712 = vmatpush1.msra.mxu0 %v6696
      %6713 = vmatprep.subr.mxu0 0.0
      %6714 = vmatpush1.msra.mxu0 %v6697
      %6715 = vmatprep.subr.mxu0 0.0
      %6716 = vmatpush1.msra.mxu0 %v6698
      %6717 = vmatprep.subr.mxu0 0.0
      %6718 = vmatpush1.msra.mxu0 %v6699
      %6719 = vmatprep.subr.mxu0 0.0
      %6720 = vmatpush1.msra.mxu0 %v6700
      %6721 = vmatprep.subr.mxu0 0.0
      %6722 = vmatpush1.msra.mxu0 %v6701
      %6723 = vmatprep.subr.mxu0 0.0
      %6724 = vmatpush1.msra.mxu0 %v6702
      %6725 = vmatprep.subr.mxu0 0.0
      %6726 = vmatpush1.msra.mxu0 0.0
      %6727 = vmatprep.subr.mxu0 0.0
      %6728 = vmatpush1.msra.mxu0 0.0
      %6729 = vmatprep.subr.mxu0 0.0
      %6730 = vmatpush1.msra.mxu0 0.0
      %6731 = vmatprep.subr.mxu0 0.0
      %6732 = vmatpush1.msra.mxu0 0.0
      %6733 = vmatprep.subr.mxu0 0.0
      %6734 = vmatpush1.msra.mxu0 0.0
      %6735 = vmatprep.subr.mxu0 0.0
      %6736 = vmatpush1.msra.mxu0 0.0
      %6737 = vmatprep.subr.mxu0 0.0
      %6738 = vmatpush1.msra.mxu0 0.0
      %6739 = vmatprep.subr.mxu0 0.0
      %6740 = vmatpush1.msra.mxu0 0.0
      %6741 = vmatprep.subr.mxu0 0.0
      %6742 = vmatpush1.msra.mxu0 0.0
      %6743 = vmatprep.subr.mxu0 0.0
      %6744 = vmatpush1.msra.mxu0 0.0
      %6745 = vmatprep.subr.mxu0 0.0
      %6746 = vmatpush1.msra.mxu0 0.0
      %6747 = vmatprep.subr.mxu0 0.0
      %6748 = vmatpush1.msra.mxu0 0.0
      %6749 = vmatprep.subr.mxu0 0.0
      %6750 = vmatpush1.msra.mxu0 0.0
      %6751 = vmatprep.subr.mxu0 0.0
      %6752 = vmatpush1.msra.mxu0 0.0
      %6753 = vmatprep.subr.mxu0 0.0
      %6754 = vmatpush1.msra.mxu0 0.0
      %6755 = vmatprep.subr.mxu0 0.0
      %6756 = vmatpush1.msra.mxu0 0.0
      %6757 = vmatprep.subr.mxu0 0.0
      %6758 = vmatpush1.msra.mxu0 0.0
      %6759 = vmatprep.subr.mxu0 0.0
      %6760 = vmatpush1.msra.mxu0 0.0
      %6761 = vmatprep.subr.mxu0 0.0
      %6762 = vmatpush1.msra.mxu0 0.0
      %6763 = vmatprep.subr.mxu0 0.0
      %6764 = vmatpush1.msra.mxu0 0.0
      %6765 = vmatprep.subr.mxu0 0.0
      %6766 = vmatpush1.msra.mxu0 0.0
      %6767 = vmatprep.subr.mxu0 0.0
      %6768 = vmatpush1.msra.mxu0 0.0
      %6769 = vmatprep.subr.mxu0 0.0
      %6770 = vmatpush1.msra.mxu0 0.0
      %6771 = vmatprep.subr.mxu0 0.0
      %6772 = vmatpush1.msra.mxu0 0.0
      %6773 = vmatprep.mubr.f32.mxu0 0.0
      %6774 = vmatmul.mubr.f32.gmra.mrb[0].mxu0 %v6707
      %v6775 = vpop.f32.mrb[0].mxu0
      %v6776 = vadd.f32 0.0, %v6775
      %v6777 = vpop.f32.mrb[0].mxu0
      %6778 = vdwg.mxu0
      %v6779 = vadd.f32 %v6592, %v6776
      %6780 = vmatprep.subr.mxu0 %v5651
      %6781 = vmatpush1.msra.mxu0 %v5650
      %6782 = vmatprep.subr.mxu0 %v5653
      %6783 = vmatpush1.msra.mxu0 %v5652
      %6784 = vmatprep.subr.mxu0 %v5655
      %6785 = vmatpush1.msra.mxu0 %v5654
      %6786 = vmatprep.subr.mxu0 %v5657
      %6787 = vmatpush1.msra.mxu0 %v5656
      %6788 = vmatprep.subr.mxu0 %v5659
      %6789 = vmatpush1.msra.mxu0 %v5658
      %6790 = vmatprep.subr.mxu0 %v5661
      %6791 = vmatpush1.msra.mxu0 %v5660
      %6792 = vmatprep.subr.mxu0 %v5663
      %6793 = vmatpush1.msra.mxu0 %v5662
      %6794 = vmatprep.subr.mxu0 %v5665
      %6795 = vmatpush1.msra.mxu0 %v5664
      %6796 = vmatprep.subr.mxu0 0.0
      %6797 = vmatpush1.msra.mxu0 0.0
      %6798 = vmatprep.subr.mxu0 0.0
      %6799 = vmatpush1.msra.mxu0 0.0
      %6800 = vmatprep.subr.mxu0 0.0
      %6801 = vmatpush1.msra.mxu0 0.0
      %6802 = vmatprep.subr.mxu0 0.0
      %6803 = vmatpush1.msra.mxu0 0.0
      %6804 = vmatprep.subr.mxu0 0.0
      %6805 = vmatpush1.msra.mxu0 0.0
      %6806 = vmatprep.subr.mxu0 0.0
      %6807 = vmatpush1.msra.mxu0 0.0
      %6808 = vmatprep.subr.mxu0 0.0
      %6809 = vmatpush1.msra.mxu0 0.0
      %6810 = vmatprep.subr.mxu0 0.0
      %6811 = vmatpush1.msra.mxu0 0.0
      %6812 = vmatprep.subr.mxu0 0.0
      %6813 = vmatpush1.msra.mxu0 0.0
      %6814 = vmatprep.subr.mxu0 0.0
      %6815 = vmatpush1.msra.mxu0 0.0
      %6816 = vmatprep.subr.mxu0 0.0
      %6817 = vmatpush1.msra.mxu0 0.0
      %6818 = vmatprep.subr.mxu0 0.0
      %6819 = vmatpush1.msra.mxu0 0.0
      %6820 = vmatprep.subr.mxu0 0.0
      %6821 = vmatpush1.msra.mxu0 0.0
      %6822 = vmatprep.subr.mxu0 0.0
      %6823 = vmatpush1.msra.mxu0 0.0
      %6824 = vmatprep.subr.mxu0 0.0
      %6825 = vmatpush1.msra.mxu0 0.0
      %6826 = vmatprep.subr.mxu0 0.0
      %6827 = vmatpush1.msra.mxu0 0.0
      %6828 = vmatprep.subr.mxu0 0.0
      %6829 = vmatpush1.msra.mxu0 0.0
      %6830 = vmatprep.subr.mxu0 0.0
      %6831 = vmatpush1.msra.mxu0 0.0
      %6832 = vmatprep.subr.mxu0 0.0
      %6833 = vmatpush1.msra.mxu0 0.0
      %6834 = vmatprep.subr.mxu0 0.0
      %6835 = vmatpush1.msra.mxu0 0.0
      %6836 = vmatprep.subr.mxu0 0.0
      %6837 = vmatpush1.msra.mxu0 0.0
      %6838 = vmatprep.subr.mxu0 0.0
      %6839 = vmatpush1.msra.mxu0 0.0
      %6840 = vmatprep.subr.mxu0 0.0
      %6841 = vmatpush1.msra.mxu0 0.0
      %6842 = vmatprep.subr.mxu0 0.0
      %6843 = vmatpush1.msra.mxu0 0.0
      %6844 = vmatprep.mubr.f32.mxu0 0.0
      %6845 = vmatmul.mubr.f32.gmra.mrb[0].mxu0 %v6707
      %v6846 = vpop.f32.mrb[0].mxu0
      %v6847 = vadd.f32 0.0, %v6846
      %v6848 = vpop.f32.mrb[0].mxu0
      %v6849 = vadd.f32 0.0, %v6848
      %6850 = vdwg.mxu0
      %v6853 = vrot.slane %v6847, 2
      %v6854 = vrot.slane %v6849, 2
      %v6857 = vadd.f32 %v5634, %v6853
      %v6858 = vadd.f32 %v5636, %v6854
      %v6859 = vsub.f32 0.0, %v6857
      %v6860 = vmul.f32 %v6859, 1.442695
      %v6861 = vpow.pop %v6860
      %v6862 = vadd.f32 %v6861, 1.0
      %v6863 = vrcp.pop %v6862
      %v6864 = vtanh.pop %v6858
      %v6865 = vsub.f32 0.0, %v6858
      %v6866 = vmul.f32 %v6865, 1.442695
      %v6867 = vpow.pop %v6866
      %v6868 = vadd.f32 %v6867, 1.0
      %v6869 = vrcp.pop %v6868
      %v6871 = vrot.slane %v6692, 7
      %v6873 = vmul.f32 %v6863, %v6871
      %v6874 = vmul.f32 %v6863, %v6864
      %6876 = vrot.lane.b32.xlu0 %v6874, 64
      %v6877 = vpop.permute.xlu0 %6876
      %v6879 = vadd.f32 %v6873, %v6877
      %v6880 = vtanh.pop %v6879
      %v6881 = vmul.f32 %v6869, %v6880
      %v6882 = vld [vmem:[%s9 + $0x180] sm:$0xff]
      %v6883 = vld [vmem:[%s9 + $0x188] sm:$0xff]
      %v6884 = vld [vmem:[%s9 + $0x190] sm:$0xff]
      %v6885 = vld [vmem:[%s9 + $0x198] sm:$0xff]
      %v6886 = vld [vmem:[%s9 + $0x1a0] sm:$0xff]
      %v6887 = vld [vmem:[%s9 + $0x1a8] sm:$0xff]
      %v6888 = vld [vmem:[%s9 + $0x1b0] sm:$0xff]
      %v6889 = vld [vmem:[%s9 + $0x1b8] sm:$0xff]
      %v6891 = vrot.slane %v6881, 6
      %6892 = vrot.lane.b32.xlu0 %v6891, 64
      %v6893 = vpop.permute.xlu0 %6892
      %v6894 = vsel %vm5666, %v6893, 0
      %6896 = vmatprep.subr.mxu0 0.0
      %6897 = vmatpush1.msra.mxu0 %v6882
      %6898 = vmatprep.subr.mxu0 0.0
      %6899 = vmatpush1.msra.mxu0 %v6883
      %6900 = vmatprep.subr.mxu0 0.0
      %6901 = vmatpush1.msra.mxu0 %v6884
      %6902 = vmatprep.subr.mxu0 0.0
      %6903 = vmatpush1.msra.mxu0 %v6885
      %6904 = vmatprep.subr.mxu0 0.0
      %6905 = vmatpush1.msra.mxu0 %v6886
      %6906 = vmatprep.subr.mxu0 0.0
      %6907 = vmatpush1.msra.mxu0 %v6887
      %6908 = vmatprep.subr.mxu0 0.0
      %6909 = vmatpush1.msra.mxu0 %v6888
      %6910 = vmatprep.subr.mxu0 0.0
      %6911 = vmatpush1.msra.mxu0 %v6889
      %6912 = vmatprep.subr.mxu0 0.0
      %6913 = vmatpush1.msra.mxu0 0.0
      %6914 = vmatprep.subr.mxu0 0.0
      %6915 = vmatpush1.msra.mxu0 0.0
      %6916 = vmatprep.subr.mxu0 0.0
      %6917 = vmatpush1.msra.mxu0 0.0
      %6918 = vmatprep.subr.mxu0 0.0
      %6919 = vmatpush1.msra.mxu0 0.0
      %6920 = vmatprep.subr.mxu0 0.0
      %6921 = vmatpush1.msra.mxu0 0.0
      %6922 = vmatprep.subr.mxu0 0.0
      %6923 = vmatpush1.msra.mxu0 0.0
      %6924 = vmatprep.subr.mxu0 0.0
      %6925 = vmatpush1.msra.mxu0 0.0
      %6926 = vmatprep.subr.mxu0 0.0
      %6927 = vmatpush1.msra.mxu0 0.0
      %6928 = vmatprep.subr.mxu0 0.0
      %6929 = vmatpush1.msra.mxu0 0.0
      %6930 = vmatprep.subr.mxu0 0.0
      %6931 = vmatpush1.msra.mxu0 0.0
      %6932 = vmatprep.subr.mxu0 0.0
      %6933 = vmatpush1.msra.mxu0 0.0
      %6934 = vmatprep.subr.mxu0 0.0
      %6935 = vmatpush1.msra.mxu0 0.0
      %6936 = vmatprep.subr.mxu0 0.0
      %6937 = vmatpush1.msra.mxu0 0.0
      %6938 = vmatprep.subr.mxu0 0.0
      %6939 = vmatpush1.msra.mxu0 0.0
      %6940 = vmatprep.subr.mxu0 0.0
      %6941 = vmatpush1.msra.mxu0 0.0
      %6942 = vmatprep.subr.mxu0 0.0
      %6943 = vmatpush1.msra.mxu0 0.0
      %6944 = vmatprep.subr.mxu0 0.0
      %6945 = vmatpush1.msra.mxu0 0.0
      %6946 = vmatprep.subr.mxu0 0.0
      %6947 = vmatpush1.msra.mxu0 0.0
      %6948 = vmatprep.subr.mxu0 0.0
      %6949 = vmatpush1.msra.mxu0 0.0
      %6950 = vmatprep.subr.mxu0 0.0
      %6951 = vmatpush1.msra.mxu0 0.0
      %6952 = vmatprep.subr.mxu0 0.0
      %6953 = vmatpush1.msra.mxu0 0.0
      %6954 = vmatprep.subr.mxu0 0.0
      %6955 = vmatpush1.msra.mxu0 0.0
      %6956 = vmatprep.subr.mxu0 0.0
      %6957 = vmatpush1.msra.mxu0 0.0
      %6958 = vmatprep.subr.mxu0 0.0
      %6959 = vmatpush1.msra.mxu0 0.0
      %6960 = vmatprep.mubr.f32.mxu0 0.0
      %6961 = vmatmul.mubr.f32.gmra.mrb[0].mxu0 %v6894
      %v6962 = vpop.f32.mrb[0].mxu0
      %v6963 = vadd.f32 0.0, %v6962
      %v6964 = vpop.f32.mrb[0].mxu0
      %6965 = vdwg.mxu0
      %v6966 = vadd.f32 %v6779, %v6963
      %6967 = vmatprep.subr.mxu0 %v5651
      %6968 = vmatpush1.msra.mxu0 %v5650
      %6969 = vmatprep.subr.mxu0 %v5653
      %6970 = vmatpush1.msra.mxu0 %v5652
      %6971 = vmatprep.subr.mxu0 %v5655
      %6972 = vmatpush1.msra.mxu0 %v5654
      %6973 = vmatprep.subr.mxu0 %v5657
      %6974 = vmatpush1.msra.mxu0 %v5656
      %6975 = vmatprep.subr.mxu0 %v5659
      %6976 = vmatpush1.msra.mxu0 %v5658
      %6977 = vmatprep.subr.mxu0 %v5661
      %6978 = vmatpush1.msra.mxu0 %v5660
      %6979 = vmatprep.subr.mxu0 %v5663
      %6980 = vmatpush1.msra.mxu0 %v5662
      %6981 = vmatprep.subr.mxu0 %v5665
      %6982 = vmatpush1.msra.mxu0 %v5664
      %6983 = vmatprep.subr.mxu0 0.0
      %6984 = vmatpush1.msra.mxu0 0.0
      %6985 = vmatprep.subr.mxu0 0.0
      %6986 = vmatpush1.msra.mxu0 0.0
      %6987 = vmatprep.subr.mxu0 0.0
      %6988 = vmatpush1.msra.mxu0 0.0
      %6989 = vmatprep.subr.mxu0 0.0
      %6990 = vmatpush1.msra.mxu0 0.0
      %6991 = vmatprep.subr.mxu0 0.0
      %6992 = vmatpush1.msra.mxu0 0.0
      %6993 = vmatprep.subr.mxu0 0.0
      %6994 = vmatpush1.msra.mxu0 0.0
      %6995 = vmatprep.subr.mxu0 0.0
      %6996 = vmatpush1.msra.mxu0 0.0
      %6997 = vmatprep.subr.mxu0 0.0
      %6998 = vmatpush1.msra.mxu0 0.0
      %6999 = vmatprep.subr.mxu0 0.0
      %7000 = vmatpush1.msra.mxu0 0.0
      %7001 = vmatprep.subr.mxu0 0.0
      %7002 = vmatpush1.msra.mxu0 0.0
      %7003 = vmatprep.subr.mxu0 0.0
      %7004 = vmatpush1.msra.mxu0 0.0
      %7005 = vmatprep.subr.mxu0 0.0
      %7006 = vmatpush1.msra.mxu0 0.0
      %7007 = vmatprep.subr.mxu0 0.0
      %7008 = vmatpush1.msra.mxu0 0.0
      %7009 = vmatprep.subr.mxu0 0.0
      %7010 = vmatpush1.msra.mxu0 0.0
      %7011 = vmatprep.subr.mxu0 0.0
      %7012 = vmatpush1.msra.mxu0 0.0
      %7013 = vmatprep.subr.mxu0 0.0
      %7014 = vmatpush1.msra.mxu0 0.0
      %7015 = vmatprep.subr.mxu0 0.0
      %7016 = vmatpush1.msra.mxu0 0.0
      %7017 = vmatprep.subr.mxu0 0.0
      %7018 = vmatpush1.msra.mxu0 0.0
      %7019 = vmatprep.subr.mxu0 0.0
      %7020 = vmatpush1.msra.mxu0 0.0
      %7021 = vmatprep.subr.mxu0 0.0
      %7022 = vmatpush1.msra.mxu0 0.0
      %7023 = vmatprep.subr.mxu0 0.0
      %7024 = vmatpush1.msra.mxu0 0.0
      %7025 = vmatprep.subr.mxu0 0.0
      %7026 = vmatpush1.msra.mxu0 0.0
      %7027 = vmatprep.subr.mxu0 0.0
      %7028 = vmatpush1.msra.mxu0 0.0
      %7029 = vmatprep.subr.mxu0 0.0
      %7030 = vmatpush1.msra.mxu0 0.0
      %7031 = vmatprep.mubr.f32.mxu0 0.0
      %7032 = vmatmul.mubr.f32.gmra.mrb[0].mxu0 %v6894
      %v7033 = vpop.f32.mrb[0].mxu0
      %v7034 = vadd.f32 0.0, %v7033
      %v7035 = vpop.f32.mrb[0].mxu0
      %v7036 = vadd.f32 0.0, %v7035
      %7037 = vdwg.mxu0
      %v7040 = vrot.slane %v7034, 1
      %v7041 = vrot.slane %v7036, 1
      %v7044 = vadd.f32 %v5634, %v7040
      %v7045 = vadd.f32 %v5636, %v7041
      %v7046 = vsub.f32 0.0, %v7044
      %v7047 = vmul.f32 %v7046, 1.442695
      %v7048 = vpow.pop %v7047
      %v7049 = vadd.f32 %v7048, 1.0
      %v7050 = vrcp.pop %v7049
      %v7051 = vtanh.pop %v7045
      %v7052 = vsub.f32 0.0, %v7045
      %v7053 = vmul.f32 %v7052, 1.442695
      %v7054 = vpow.pop %v7053
      %v7055 = vadd.f32 %v7054, 1.0
      %v7056 = vrcp.pop %v7055
      %v7058 = vrot.slane %v6879, 7
      %v7060 = vmul.f32 %v7050, %v7058
      %v7061 = vmul.f32 %v7050, %v7051
      %7063 = vrot.lane.b32.xlu0 %v7061, 64
      %v7064 = vpop.permute.xlu0 %7063
      %v7066 = vadd.f32 %v7060, %v7064
      %v7067 = vtanh.pop %v7066
      %v7068 = vmul.f32 %v7056, %v7067
      %v7069 = vld [vmem:[%s9 + $0x1c0] sm:$0xff]
      %v7070 = vld [vmem:[%s9 + $0x1c8] sm:$0xff]
      %v7071 = vld [vmem:[%s9 + $0x1d0] sm:$0xff]
      %v7072 = vld [vmem:[%s9 + $0x1d8] sm:$0xff]
      %v7073 = vld [vmem:[%s9 + $0x1e0] sm:$0xff]
      %v7074 = vld [vmem:[%s9 + $0x1e8] sm:$0xff]
      %v7075 = vld [vmem:[%s9 + $0x1f0] sm:$0xff]
      %v7076 = vld [vmem:[%s9 + $0x1f8] sm:$0xff]
      %v7078 = vrot.slane %v7068, 7
      %7079 = vrot.lane.b32.xlu0 %v7078, 64
      %v7080 = vpop.permute.xlu0 %7079
      %v7081 = vsel %vm5666, %v7080, 0
      %7083 = vmatprep.subr.mxu0 0.0
      %7084 = vmatpush1.msra.mxu0 %v7069
      %7085 = vmatprep.subr.mxu0 0.0
      %7086 = vmatpush1.msra.mxu0 %v7070
      %7087 = vmatprep.subr.mxu0 0.0
      %7088 = vmatpush1.msra.mxu0 %v7071
      %7089 = vmatprep.subr.mxu0 0.0
      %7090 = vmatpush1.msra.mxu0 %v7072
      %7091 = vmatprep.subr.mxu0 0.0
      %7092 = vmatpush1.msra.mxu0 %v7073
      %7093 = vmatprep.subr.mxu0 0.0
      %7094 = vmatpush1.msra.mxu0 %v7074
      %7095 = vmatprep.subr.mxu0 0.0
      %7096 = vmatpush1.msra.mxu0 %v7075
      %7097 = vmatprep.subr.mxu0 0.0
      %7098 = vmatpush1.msra.mxu0 %v7076
      %7099 = vmatprep.subr.mxu0 0.0
      %7100 = vmatpush1.msra.mxu0 0.0
      %7101 = vmatprep.subr.mxu0 0.0
      %7102 = vmatpush1.msra.mxu0 0.0
      %7103 = vmatprep.subr.mxu0 0.0
      %7104 = vmatpush1.msra.mxu0 0.0
      %7105 = vmatprep.subr.mxu0 0.0
      %7106 = vmatpush1.msra.mxu0 0.0
      %7107 = vmatprep.subr.mxu0 0.0
      %7108 = vmatpush1.msra.mxu0 0.0
      %7109 = vmatprep.subr.mxu0 0.0
      %7110 = vmatpush1.msra.mxu0 0.0
      %7111 = vmatprep.subr.mxu0 0.0
      %7112 = vmatpush1.msra.mxu0 0.0
      %7113 = vmatprep.subr.mxu0 0.0
      %7114 = vmatpush1.msra.mxu0 0.0
      %7115 = vmatprep.subr.mxu0 0.0
      %7116 = vmatpush1.msra.mxu0 0.0
      %7117 = vmatprep.subr.mxu0 0.0
      %7118 = vmatpush1.msra.mxu0 0.0
      %7119 = vmatprep.subr.mxu0 0.0
      %7120 = vmatpush1.msra.mxu0 0.0
      %7121 = vmatprep.subr.mxu0 0.0
      %7122 = vmatpush1.msra.mxu0 0.0
      %7123 = vmatprep.subr.mxu0 0.0
      %7124 = vmatpush1.msra.mxu0 0.0
      %7125 = vmatprep.subr.mxu0 0.0
      %7126 = vmatpush1.msra.mxu0 0.0
      %7127 = vmatprep.subr.mxu0 0.0
      %7128 = vmatpush1.msra.mxu0 0.0
      %7129 = vmatprep.subr.mxu0 0.0
      %7130 = vmatpush1.msra.mxu0 0.0
      %7131 = vmatprep.subr.mxu0 0.0
      %7132 = vmatpush1.msra.mxu0 0.0
      %7133 = vmatprep.subr.mxu0 0.0
      %7134 = vmatpush1.msra.mxu0 0.0
      %7135 = vmatprep.subr.mxu0 0.0
      %7136 = vmatpush1.msra.mxu0 0.0
      %7137 = vmatprep.subr.mxu0 0.0
      %7138 = vmatpush1.msra.mxu0 0.0
      %7139 = vmatprep.subr.mxu0 0.0
      %7140 = vmatpush1.msra.mxu0 0.0
      %7141 = vmatprep.subr.mxu0 0.0
      %7142 = vmatpush1.msra.mxu0 0.0
      %7143 = vmatprep.subr.mxu0 0.0
      %7144 = vmatpush1.msra.mxu0 0.0
      %7145 = vmatprep.subr.mxu0 0.0
      %7146 = vmatpush1.msra.mxu0 0.0
      %7147 = vmatprep.mubr.f32.mxu0 0.0
      %7148 = vmatmul.mubr.f32.gmra.mrb[0].mxu0 %v7081
      %v7149 = vpop.f32.mrb[0].mxu0
      %v7150 = vadd.f32 0.0, %v7149
      %v7151 = vpop.f32.mrb[0].mxu0
      %7152 = vdwg.mxu0
      %v7153 = vadd.f32 %v6966, %v7150
      %7154 = vmatprep.subr.mxu0 %v5651
      %7155 = vmatpush1.msra.mxu0 %v5650
      %7156 = vmatprep.subr.mxu0 %v5653
      %7157 = vmatpush1.msra.mxu0 %v5652
      %7158 = vmatprep.subr.mxu0 %v5655
      %7159 = vmatpush1.msra.mxu0 %v5654
      %7160 = vmatprep.subr.mxu0 %v5657
      %7161 = vmatpush1.msra.mxu0 %v5656
      %7162 = vmatprep.subr.mxu0 %v5659
      %7163 = vmatpush1.msra.mxu0 %v5658
      %7164 = vmatprep.subr.mxu0 %v5661
      %7165 = vmatpush1.msra.mxu0 %v5660
      %7166 = vmatprep.subr.mxu0 %v5663
      %7167 = vmatpush1.msra.mxu0 %v5662
      %7168 = vmatprep.subr.mxu0 %v5665
      %7169 = vmatpush1.msra.mxu0 %v5664
      %7170 = vmatprep.subr.mxu0 0.0
      %7171 = vmatpush1.msra.mxu0 0.0
      %7172 = vmatprep.subr.mxu0 0.0
      %7173 = vmatpush1.msra.mxu0 0.0
      %7174 = vmatprep.subr.mxu0 0.0
      %7175 = vmatpush1.msra.mxu0 0.0
      %7176 = vmatprep.subr.mxu0 0.0
      %7177 = vmatpush1.msra.mxu0 0.0
      %7178 = vmatprep.subr.mxu0 0.0
      %7179 = vmatpush1.msra.mxu0 0.0
      %7180 = vmatprep.subr.mxu0 0.0
      %7181 = vmatpush1.msra.mxu0 0.0
      %7182 = vmatprep.subr.mxu0 0.0
      %7183 = vmatpush1.msra.mxu0 0.0
      %7184 = vmatprep.subr.mxu0 0.0
      %7185 = vmatpush1.msra.mxu0 0.0
      %7186 = vmatprep.subr.mxu0 0.0
      %7187 = vmatpush1.msra.mxu0 0.0
      %7188 = vmatprep.subr.mxu0 0.0
      %7189 = vmatpush1.msra.mxu0 0.0
      %7190 = vmatprep.subr.mxu0 0.0
      %7191 = vmatpush1.msra.mxu0 0.0
      %7192 = vmatprep.subr.mxu0 0.0
      %7193 = vmatpush1.msra.mxu0 0.0
      %7194 = vmatprep.subr.mxu0 0.0
      %7195 = vmatpush1.msra.mxu0 0.0
      %7196 = vmatprep.subr.mxu0 0.0
      %7197 = vmatpush1.msra.mxu0 0.0
      %7198 = vmatprep.subr.mxu0 0.0
      %7199 = vmatpush1.msra.mxu0 0.0
      %7200 = vmatprep.subr.mxu0 0.0
      %7201 = vmatpush1.msra.mxu0 0.0
      %7202 = vmatprep.subr.mxu0 0.0
      %7203 = vmatpush1.msra.mxu0 0.0
      %7204 = vmatprep.subr.mxu0 0.0
      %7205 = vmatpush1.msra.mxu0 0.0
      %7206 = vmatprep.subr.mxu0 0.0
      %7207 = vmatpush1.msra.mxu0 0.0
      %7208 = vmatprep.subr.mxu0 0.0
      %7209 = vmatpush1.msra.mxu0 0.0
      %7210 = vmatprep.subr.mxu0 0.0
      %7211 = vmatpush1.msra.mxu0 0.0
      %7212 = vmatprep.subr.mxu0 0.0
      %7213 = vmatpush1.msra.mxu0 0.0
      %7214 = vmatprep.subr.mxu0 0.0
      %7215 = vmatpush1.msra.mxu0 0.0
      %7216 = vmatprep.subr.mxu0 0.0
      %7217 = vmatpush1.msra.mxu0 0.0
      %7218 = vmatprep.mubr.f32.mxu0 0.0
      %7219 = vmatmul.mubr.f32.gmra.mrb[0].mxu0 %v7081
      %v7220 = vpop.f32.mrb[0].mxu0
      %v7221 = vadd.f32 0.0, %v7220
      %v7222 = vpop.f32.mrb[0].mxu0
      %v7223 = vadd.f32 0.0, %v7222
      %7224 = vdwg.mxu0
      %v7225 = vadd.f32 %v5640, %v7221
      %v7226 = vadd.f32 %v5642, %v7223
      %v7227 = vsub.f32 0.0, %v7225
      %v7228 = vmul.f32 %v7227, 1.442695
      %v7229 = vpow.pop %v7228
      %v7230 = vadd.f32 %v7229, 1.0
      %v7231 = vrcp.pop %v7230
      %v7232 = vtanh.pop %v7226
      %v7233 = vsub.f32 0.0, %v7226
      %v7234 = vmul.f32 %v7233, 1.442695
      %v7235 = vpow.pop %v7234
      %v7236 = vadd.f32 %v7235, 1.0
      %v7237 = vrcp.pop %v7236
      %v7239 = vrot.slane %v7066, 7
      %v7241 = vmul.f32 %v7231, %v7239
      %v7242 = vmul.f32 %v7231, %v7232
      %7244 = vrot.lane.b32.xlu0 %v7242, 64
      %v7245 = vpop.permute.xlu0 %7244
      %v7247 = vadd.f32 %v7241, %v7245
      %v7248 = vtanh.pop %v7247
      %v7249 = vmul.f32 %v7237, %v7248
      %v7250 = vld [vmem:[%s9 + $0x200] sm:$0xff]
      %v7251 = vld [vmem:[%s9 + $0x208] sm:$0xff]
      %v7252 = vld [vmem:[%s9 + $0x210] sm:$0xff]
      %v7253 = vld [vmem:[%s9 + $0x218] sm:$0xff]
      %v7254 = vld [vmem:[%s9 + $0x220] sm:$0xff]
      %v7255 = vld [vmem:[%s9 + $0x228] sm:$0xff]
      %v7256 = vld [vmem:[%s9 + $0x230] sm:$0xff]
      %v7257 = vld [vmem:[%s9 + $0x238] sm:$0xff]
      %7259 = vrot.lane.b32.xlu0 %v7249, 64
      %v7260 = vpop.permute.xlu0 %7259
      %v7261 = vsel %vm5666, %v7260, 0
      %7263 = vmatprep.subr.mxu0 0.0
      %7264 = vmatpush1.msra.mxu0 %v7250
      %7265 = vmatprep.subr.mxu0 0.0
      %7266 = vmatpush1.msra.mxu0 %v7251
      %7267 = vmatprep.subr.mxu0 0.0
      %7268 = vmatpush1.msra.mxu0 %v7252
      %7269 = vmatprep.subr.mxu0 0.0
      %7270 = vmatpush1.msra.mxu0 %v7253
      %7271 = vmatprep.subr.mxu0 0.0
      %7272 = vmatpush1.msra.mxu0 %v7254
      %7273 = vmatprep.subr.mxu0 0.0
      %7274 = vmatpush1.msra.mxu0 %v7255
      %7275 = vmatprep.subr.mxu0 0.0
      %7276 = vmatpush1.msra.mxu0 %v7256
      %7277 = vmatprep.subr.mxu0 0.0
      %7278 = vmatpush1.msra.mxu0 %v7257
      %7279 = vmatprep.subr.mxu0 0.0
      %7280 = vmatpush1.msra.mxu0 0.0
      %7281 = vmatprep.subr.mxu0 0.0
      %7282 = vmatpush1.msra.mxu0 0.0
      %7283 = vmatprep.subr.mxu0 0.0
      %7284 = vmatpush1.msra.mxu0 0.0
      %7285 = vmatprep.subr.mxu0 0.0
      %7286 = vmatpush1.msra.mxu0 0.0
      %7287 = vmatprep.subr.mxu0 0.0
      %7288 = vmatpush1.msra.mxu0 0.0
      %7289 = vmatprep.subr.mxu0 0.0
      %7290 = vmatpush1.msra.mxu0 0.0
      %7291 = vmatprep.subr.mxu0 0.0
      %7292 = vmatpush1.msra.mxu0 0.0
      %7293 = vmatprep.subr.mxu0 0.0
      %7294 = vmatpush1.msra.mxu0 0.0
      %7295 = vmatprep.subr.mxu0 0.0
      %7296 = vmatpush1.msra.mxu0 0.0
      %7297 = vmatprep.subr.mxu0 0.0
      %7298 = vmatpush1.msra.mxu0 0.0
      %7299 = vmatprep.subr.mxu0 0.0
      %7300 = vmatpush1.msra.mxu0 0.0
      %7301 = vmatprep.subr.mxu0 0.0
      %7302 = vmatpush1.msra.mxu0 0.0
      %7303 = vmatprep.subr.mxu0 0.0
      %7304 = vmatpush1.msra.mxu0 0.0
      %7305 = vmatprep.subr.mxu0 0.0
      %7306 = vmatpush1.msra.mxu0 0.0
      %7307 = vmatprep.subr.mxu0 0.0
      %7308 = vmatpush1.msra.mxu0 0.0
      %7309 = vmatprep.subr.mxu0 0.0
      %7310 = vmatpush1.msra.mxu0 0.0
      %7311 = vmatprep.subr.mxu0 0.0
      %7312 = vmatpush1.msra.mxu0 0.0
      %7313 = vmatprep.subr.mxu0 0.0
      %7314 = vmatpush1.msra.mxu0 0.0
      %7315 = vmatprep.subr.mxu0 0.0
      %7316 = vmatpush1.msra.mxu0 0.0
      %7317 = vmatprep.subr.mxu0 0.0
      %7318 = vmatpush1.msra.mxu0 0.0
      %7319 = vmatprep.subr.mxu0 0.0
      %7320 = vmatpush1.msra.mxu0 0.0
      %7321 = vmatprep.subr.mxu0 0.0
      %7322 = vmatpush1.msra.mxu0 0.0
      %7323 = vmatprep.subr.mxu0 0.0
      %7324 = vmatpush1.msra.mxu0 0.0
      %7325 = vmatprep.subr.mxu0 0.0
      %7326 = vmatpush1.msra.mxu0 0.0
      %7327 = vmatprep.mubr.f32.mxu0 0.0
      %7328 = vmatmul.mubr.f32.gmra.mrb[0].mxu0 %v7261
      %v7329 = vpop.f32.mrb[0].mxu0
      %v7330 = vadd.f32 0.0, %v7329
      %v7331 = vpop.f32.mrb[0].mxu0
      %7332 = vdwg.mxu0
      %v7333 = vadd.f32 %v7153, %v7330
      %7334 = vmatprep.subr.mxu0 %v5651
      %7335 = vmatpush1.msra.mxu0 %v5650
      %7336 = vmatprep.subr.mxu0 %v5653
      %7337 = vmatpush1.msra.mxu0 %v5652
      %7338 = vmatprep.subr.mxu0 %v5655
      %7339 = vmatpush1.msra.mxu0 %v5654
      %7340 = vmatprep.subr.mxu0 %v5657
      %7341 = vmatpush1.msra.mxu0 %v5656
      %7342 = vmatprep.subr.mxu0 %v5659
      %7343 = vmatpush1.msra.mxu0 %v5658
      %7344 = vmatprep.subr.mxu0 %v5661
      %7345 = vmatpush1.msra.mxu0 %v5660
      %7346 = vmatprep.subr.mxu0 %v5663
      %7347 = vmatpush1.msra.mxu0 %v5662
      %7348 = vmatprep.subr.mxu0 %v5665
      %7349 = vmatpush1.msra.mxu0 %v5664
      %7350 = vmatprep.subr.mxu0 0.0
      %7351 = vmatpush1.msra.mxu0 0.0
      %7352 = vmatprep.subr.mxu0 0.0
      %7353 = vmatpush1.msra.mxu0 0.0
      %7354 = vmatprep.subr.mxu0 0.0
      %7355 = vmatpush1.msra.mxu0 0.0
      %7356 = vmatprep.subr.mxu0 0.0
      %7357 = vmatpush1.msra.mxu0 0.0
      %7358 = vmatprep.subr.mxu0 0.0
      %7359 = vmatpush1.msra.mxu0 0.0
      %7360 = vmatprep.subr.mxu0 0.0
      %7361 = vmatpush1.msra.mxu0 0.0
      %7362 = vmatprep.subr.mxu0 0.0
      %7363 = vmatpush1.msra.mxu0 0.0
      %7364 = vmatprep.subr.mxu0 0.0
      %7365 = vmatpush1.msra.mxu0 0.0
      %7366 = vmatprep.subr.mxu0 0.0
      %7367 = vmatpush1.msra.mxu0 0.0
      %7368 = vmatprep.subr.mxu0 0.0
      %7369 = vmatpush1.msra.mxu0 0.0
      %7370 = vmatprep.subr.mxu0 0.0
      %7371 = vmatpush1.msra.mxu0 0.0
      %7372 = vmatprep.subr.mxu0 0.0
      %7373 = vmatpush1.msra.mxu0 0.0
      %7374 = vmatprep.subr.mxu0 0.0
      %7375 = vmatpush1.msra.mxu0 0.0
      %7376 = vmatprep.subr.mxu0 0.0
      %7377 = vmatpush1.msra.mxu0 0.0
      %7378 = vmatprep.subr.mxu0 0.0
      %7379 = vmatpush1.msra.mxu0 0.0
      %7380 = vmatprep.subr.mxu0 0.0
      %7381 = vmatpush1.msra.mxu0 0.0
      %7382 = vmatprep.subr.mxu0 0.0
      %7383 = vmatpush1.msra.mxu0 0.0
      %7384 = vmatprep.subr.mxu0 0.0
      %7385 = vmatpush1.msra.mxu0 0.0
      %7386 = vmatprep.subr.mxu0 0.0
      %7387 = vmatpush1.msra.mxu0 0.0
      %7388 = vmatprep.subr.mxu0 0.0
      %7389 = vmatpush1.msra.mxu0 0.0
      %7390 = vmatprep.subr.mxu0 0.0
      %7391 = vmatpush1.msra.mxu0 0.0
      %7392 = vmatprep.subr.mxu0 0.0
      %7393 = vmatpush1.msra.mxu0 0.0
      %7394 = vmatprep.subr.mxu0 0.0
      %7395 = vmatpush1.msra.mxu0 0.0
      %7396 = vmatprep.subr.mxu0 0.0
      %7397 = vmatpush1.msra.mxu0 0.0
      %7398 = vmatprep.mubr.f32.mxu0 0.0
      %7399 = vmatmul.mubr.f32.gmra.mrb[0].mxu0 %v7261
      %v7400 = vpop.f32.mrb[0].mxu0
      %v7401 = vadd.f32 0.0, %v7400
      %v7402 = vpop.f32.mrb[0].mxu0
      %v7403 = vadd.f32 0.0, %v7402
      %7404 = vdwg.mxu0
      %v7407 = vrot.slane %v7401, 7
      %v7408 = vrot.slane %v7403, 7
      %v7411 = vadd.f32 %v5640, %v7407
      %v7412 = vadd.f32 %v5642, %v7408
      %v7413 = vsub.f32 0.0, %v7411
      %v7414 = vmul.f32 %v7413, 1.442695
      %v7415 = vpow.pop %v7414
      %v7416 = vadd.f32 %v7415, 1.0
      %v7417 = vrcp.pop %v7416
      %v7418 = vtanh.pop %v7412
      %v7419 = vsub.f32 0.0, %v7412
      %v7420 = vmul.f32 %v7419, 1.442695
      %v7421 = vpow.pop %v7420
      %v7422 = vadd.f32 %v7421, 1.0
      %v7423 = vrcp.pop %v7422
      %v7425 = vrot.slane %v7247, 7
      %v7427 = vmul.f32 %v7417, %v7425
      %v7428 = vmul.f32 %v7417, %v7418
      %7430 = vrot.lane.b32.xlu0 %v7428, 64
      %v7431 = vpop.permute.xlu0 %7430
      %v7433 = vadd.f32 %v7427, %v7431
      %v7434 = vtanh.pop %v7433
      %v7435 = vmul.f32 %v7423, %v7434
      %v7436 = vld [vmem:[%s9 + $0x240] sm:$0xff]
      %v7437 = vld [vmem:[%s9 + $0x248] sm:$0xff]
      %v7438 = vld [vmem:[%s9 + $0x250] sm:$0xff]
      %v7439 = vld [vmem:[%s9 + $0x258] sm:$0xff]
      %v7440 = vld [vmem:[%s9 + $0x260] sm:$0xff]
      %v7441 = vld [vmem:[%s9 + $0x268] sm:$0xff]
      %v7442 = vld [vmem:[%s9 + $0x270] sm:$0xff]
      %v7443 = vld [vmem:[%s9 + $0x278] sm:$0xff]
      %v7445 = vrot.slane %v7435, 1
      %7446 = vrot.lane.b32.xlu0 %v7445, 64
      %v7447 = vpop.permute.xlu0 %7446
      %v7448 = vsel %vm5666, %v7447, 0
      %7450 = vmatprep.subr.mxu0 0.0
      %7451 = vmatpush1.msra.mxu0 %v7436
      %7452 = vmatprep.subr.mxu0 0.0
      %7453 = vmatpush1.msra.mxu0 %v7437
      %7454 = vmatprep.subr.mxu0 0.0
      %7455 = vmatpush1.msra.mxu0 %v7438
      %7456 = vmatprep.subr.mxu0 0.0
      %7457 = vmatpush1.msra.mxu0 %v7439
      %7458 = vmatprep.subr.mxu0 0.0
      %7459 = vmatpush1.msra.mxu0 %v7440
      %7460 = vmatprep.subr.mxu0 0.0
      %7461 = vmatpush1.msra.mxu0 %v7441
      %7462 = vmatprep.subr.mxu0 0.0
      %7463 = vmatpush1.msra.mxu0 %v7442
      %7464 = vmatprep.subr.mxu0 0.0
      %7465 = vmatpush1.msra.mxu0 %v7443
      %7466 = vmatprep.subr.mxu0 0.0
      %7467 = vmatpush1.msra.mxu0 0.0
      %7468 = vmatprep.subr.mxu0 0.0
      %7469 = vmatpush1.msra.mxu0 0.0
      %7470 = vmatprep.subr.mxu0 0.0
      %7471 = vmatpush1.msra.mxu0 0.0
      %7472 = vmatprep.subr.mxu0 0.0
      %7473 = vmatpush1.msra.mxu0 0.0
      %7474 = vmatprep.subr.mxu0 0.0
      %7475 = vmatpush1.msra.mxu0 0.0
      %7476 = vmatprep.subr.mxu0 0.0
      %7477 = vmatpush1.msra.mxu0 0.0
      %7478 = vmatprep.subr.mxu0 0.0
      %7479 = vmatpush1.msra.mxu0 0.0
      %7480 = vmatprep.subr.mxu0 0.0
      %7481 = vmatpush1.msra.mxu0 0.0
      %7482 = vmatprep.subr.mxu0 0.0
      %7483 = vmatpush1.msra.mxu0 0.0
      %7484 = vmatprep.subr.mxu0 0.0
      %7485 = vmatpush1.msra.mxu0 0.0
      %7486 = vmatprep.subr.mxu0 0.0
      %7487 = vmatpush1.msra.mxu0 0.0
      %7488 = vmatprep.subr.mxu0 0.0
      %7489 = vmatpush1.msra.mxu0 0.0
      %7490 = vmatprep.subr.mxu0 0.0
      %7491 = vmatpush1.msra.mxu0 0.0
      %7492 = vmatprep.subr.mxu0 0.0
      %7493 = vmatpush1.msra.mxu0 0.0
      %7494 = vmatprep.subr.mxu0 0.0
      %7495 = vmatpush1.msra.mxu0 0.0
      %7496 = vmatprep.subr.mxu0 0.0
      %7497 = vmatpush1.msra.mxu0 0.0
      %7498 = vmatprep.subr.mxu0 0.0
      %7499 = vmatpush1.msra.mxu0 0.0
      %7500 = vmatprep.subr.mxu0 0.0
      %7501 = vmatpush1.msra.mxu0 0.0
      %7502 = vmatprep.subr.mxu0 0.0
      %7503 = vmatpush1.msra.mxu0 0.0
      %7504 = vmatprep.subr.mxu0 0.0
      %7505 = vmatpush1.msra.mxu0 0.0
      %7506 = vmatprep.subr.mxu0 0.0
      %7507 = vmatpush1.msra.mxu0 0.0
      %7508 = vmatprep.subr.mxu0 0.0
      %7509 = vmatpush1.msra.mxu0 0.0
      %7510 = vmatprep.subr.mxu0 0.0
      %7511 = vmatpush1.msra.mxu0 0.0
      %7512 = vmatprep.subr.mxu0 0.0
      %7513 = vmatpush1.msra.mxu0 0.0
      %7514 = vmatprep.mubr.f32.mxu0 0.0
      %7515 = vmatmul.mubr.f32.gmra.mrb[0].mxu0 %v7448
      %v7516 = vpop.f32.mrb[0].mxu0
      %v7517 = vadd.f32 0.0, %v7516
      %v7518 = vpop.f32.mrb[0].mxu0
      %7519 = vdwg.mxu0
      %v7520 = vadd.f32 %v7333, %v7517
      %7521 = vmatprep.subr.mxu0 %v5651
      %7522 = vmatpush1.msra.mxu0 %v5650
      %7523 = vmatprep.subr.mxu0 %v5653
      %7524 = vmatpush1.msra.mxu0 %v5652
      %7525 = vmatprep.subr.mxu0 %v5655
      %7526 = vmatpush1.msra.mxu0 %v5654
      %7527 = vmatprep.subr.mxu0 %v5657
      %7528 = vmatpush1.msra.mxu0 %v5656
      %7529 = vmatprep.subr.mxu0 %v5659
      %7530 = vmatpush1.msra.mxu0 %v5658
      %7531 = vmatprep.subr.mxu0 %v5661
      %7532 = vmatpush1.msra.mxu0 %v5660
      %7533 = vmatprep.subr.mxu0 %v5663
      %7534 = vmatpush1.msra.mxu0 %v5662
      %7535 = vmatprep.subr.mxu0 %v5665
      %7536 = vmatpush1.msra.mxu0 %v5664
      %7537 = vmatprep.subr.mxu0 0.0
      %7538 = vmatpush1.msra.mxu0 0.0
      %7539 = vmatprep.subr.mxu0 0.0
      %7540 = vmatpush1.msra.mxu0 0.0
      %7541 = vmatprep.subr.mxu0 0.0
      %7542 = vmatpush1.msra.mxu0 0.0
      %7543 = vmatprep.subr.mxu0 0.0
      %7544 = vmatpush1.msra.mxu0 0.0
      %7545 = vmatprep.subr.mxu0 0.0
      %7546 = vmatpush1.msra.mxu0 0.0
      %7547 = vmatprep.subr.mxu0 0.0
      %7548 = vmatpush1.msra.mxu0 0.0
      %7549 = vmatprep.subr.mxu0 0.0
      %7550 = vmatpush1.msra.mxu0 0.0
      %7551 = vmatprep.subr.mxu0 0.0
      %7552 = vmatpush1.msra.mxu0 0.0
      %7553 = vmatprep.subr.mxu0 0.0
      %7554 = vmatpush1.msra.mxu0 0.0
      %7555 = vmatprep.subr.mxu0 0.0
      %7556 = vmatpush1.msra.mxu0 0.0
      %7557 = vmatprep.subr.mxu0 0.0
      %7558 = vmatpush1.msra.mxu0 0.0
      %7559 = vmatprep.subr.mxu0 0.0
      %7560 = vmatpush1.msra.mxu0 0.0
      %7561 = vmatprep.subr.mxu0 0.0
      %7562 = vmatpush1.msra.mxu0 0.0
      %7563 = vmatprep.subr.mxu0 0.0
      %7564 = vmatpush1.msra.mxu0 0.0
      %7565 = vmatprep.subr.mxu0 0.0
      %7566 = vmatpush1.msra.mxu0 0.0
      %7567 = vmatprep.subr.mxu0 0.0
      %7568 = vmatpush1.msra.mxu0 0.0
      %7569 = vmatprep.subr.mxu0 0.0
      %7570 = vmatpush1.msra.mxu0 0.0
      %7571 = vmatprep.subr.mxu0 0.0
      %7572 = vmatpush1.msra.mxu0 0.0
      %7573 = vmatprep.subr.mxu0 0.0
      %7574 = vmatpush1.msra.mxu0 0.0
      %7575 = vmatprep.subr.mxu0 0.0
      %7576 = vmatpush1.msra.mxu0 0.0
      %7577 = vmatprep.subr.mxu0 0.0
      %7578 = vmatpush1.msra.mxu0 0.0
      %7579 = vmatprep.subr.mxu0 0.0
      %7580 = vmatpush1.msra.mxu0 0.0
      %7581 = vmatprep.subr.mxu0 0.0
      %7582 = vmatpush1.msra.mxu0 0.0
      %7583 = vmatprep.subr.mxu0 0.0
      %7584 = vmatpush1.msra.mxu0 0.0
      %7585 = vmatprep.mubr.f32.mxu0 0.0
      %7586 = vmatmul.mubr.f32.gmra.mrb[0].mxu0 %v7448
      %v7587 = vpop.f32.mrb[0].mxu0
      %v7588 = vadd.f32 0.0, %v7587
      %v7589 = vpop.f32.mrb[0].mxu0
      %v7590 = vadd.f32 0.0, %v7589
      %7591 = vdwg.mxu0
      %v7594 = vrot.slane %v7588, 6
      %v7595 = vrot.slane %v7590, 6
      %v7598 = vadd.f32 %v5640, %v7594
      %v7599 = vadd.f32 %v5642, %v7595
      %v7600 = vsub.f32 0.0, %v7598
      %v7601 = vmul.f32 %v7600, 1.442695
      %v7602 = vpow.pop %v7601
      %v7603 = vadd.f32 %v7602, 1.0
      %v7604 = vrcp.pop %v7603
      %v7605 = vtanh.pop %v7599
      %v7606 = vsub.f32 0.0, %v7599
      %v7607 = vmul.f32 %v7606, 1.442695
      %v7608 = vpow.pop %v7607
      %v7609 = vadd.f32 %v7608, 1.0
      %v7610 = vrcp.pop %v7609
      %v7612 = vrot.slane %v7433, 7
      %v7614 = vmul.f32 %v7604, %v7612
      %v7615 = vmul.f32 %v7604, %v7605
      %7617 = vrot.lane.b32.xlu0 %v7615, 64
      %v7618 = vpop.permute.xlu0 %7617
      %v7620 = vadd.f32 %v7614, %v7618
      %v7621 = vtanh.pop %v7620
      %v7622 = vmul.f32 %v7610, %v7621
      %v7623 = vld [vmem:[%s9 + $0x280] sm:$0xff]
      %v7624 = vld [vmem:[%s9 + $0x288] sm:$0xff]
      %v7625 = vld [vmem:[%s9 + $0x290] sm:$0xff]
      %v7626 = vld [vmem:[%s9 + $0x298] sm:$0xff]
      %v7627 = vld [vmem:[%s9 + $0x2a0] sm:$0xff]
      %v7628 = vld [vmem:[%s9 + $0x2a8] sm:$0xff]
      %v7629 = vld [vmem:[%s9 + $0x2b0] sm:$0xff]
      %v7630 = vld [vmem:[%s9 + $0x2b8] sm:$0xff]
      %v7632 = vrot.slane %v7622, 2
      %7633 = vrot.lane.b32.xlu0 %v7632, 64
      %v7634 = vpop.permute.xlu0 %7633
      %v7635 = vsel %vm5666, %v7634, 0
      %7637 = vmatprep.subr.mxu0 0.0
      %7638 = vmatpush1.msra.mxu0 %v7623
      %7639 = vmatprep.subr.mxu0 0.0
      %7640 = vmatpush1.msra.mxu0 %v7624
      %7641 = vmatprep.subr.mxu0 0.0
      %7642 = vmatpush1.msra.mxu0 %v7625
      %7643 = vmatprep.subr.mxu0 0.0
      %7644 = vmatpush1.msra.mxu0 %v7626
      %7645 = vmatprep.subr.mxu0 0.0
      %7646 = vmatpush1.msra.mxu0 %v7627
      %7647 = vmatprep.subr.mxu0 0.0
      %7648 = vmatpush1.msra.mxu0 %v7628
      %7649 = vmatprep.subr.mxu0 0.0
      %7650 = vmatpush1.msra.mxu0 %v7629
      %7651 = vmatprep.subr.mxu0 0.0
      %7652 = vmatpush1.msra.mxu0 %v7630
      %7653 = vmatprep.subr.mxu0 0.0
      %7654 = vmatpush1.msra.mxu0 0.0
      %7655 = vmatprep.subr.mxu0 0.0
      %7656 = vmatpush1.msra.mxu0 0.0
      %7657 = vmatprep.subr.mxu0 0.0
      %7658 = vmatpush1.msra.mxu0 0.0
      %7659 = vmatprep.subr.mxu0 0.0
      %7660 = vmatpush1.msra.mxu0 0.0
      %7661 = vmatprep.subr.mxu0 0.0
      %7662 = vmatpush1.msra.mxu0 0.0
      %7663 = vmatprep.subr.mxu0 0.0
      %7664 = vmatpush1.msra.mxu0 0.0
      %7665 = vmatprep.subr.mxu0 0.0
      %7666 = vmatpush1.msra.mxu0 0.0
      %7667 = vmatprep.subr.mxu0 0.0
      %7668 = vmatpush1.msra.mxu0 0.0
      %7669 = vmatprep.subr.mxu0 0.0
      %7670 = vmatpush1.msra.mxu0 0.0
      %7671 = vmatprep.subr.mxu0 0.0
      %7672 = vmatpush1.msra.mxu0 0.0
      %7673 = vmatprep.subr.mxu0 0.0
      %7674 = vmatpush1.msra.mxu0 0.0
      %7675 = vmatprep.subr.mxu0 0.0
      %7676 = vmatpush1.msra.mxu0 0.0
      %7677 = vmatprep.subr.mxu0 0.0
      %7678 = vmatpush1.msra.mxu0 0.0
      %7679 = vmatprep.subr.mxu0 0.0
      %7680 = vmatpush1.msra.mxu0 0.0
      %7681 = vmatprep.subr.mxu0 0.0
      %7682 = vmatpush1.msra.mxu0 0.0
      %7683 = vmatprep.subr.mxu0 0.0
      %7684 = vmatpush1.msra.mxu0 0.0
      %7685 = vmatprep.subr.mxu0 0.0
      %7686 = vmatpush1.msra.mxu0 0.0
      %7687 = vmatprep.subr.mxu0 0.0
      %7688 = vmatpush1.msra.mxu0 0.0
      %7689 = vmatprep.subr.mxu0 0.0
      %7690 = vmatpush1.msra.mxu0 0.0
      %7691 = vmatprep.subr.mxu0 0.0
      %7692 = vmatpush1.msra.mxu0 0.0
      %7693 = vmatprep.subr.mxu0 0.0
      %7694 = vmatpush1.msra.mxu0 0.0
      %7695 = vmatprep.subr.mxu0 0.0
      %7696 = vmatpush1.msra.mxu0 0.0
      %7697 = vmatprep.subr.mxu0 0.0
      %7698 = vmatpush1.msra.mxu0 0.0
      %7699 = vmatprep.subr.mxu0 0.0
      %7700 = vmatpush1.msra.mxu0 0.0
      %7701 = vmatprep.mubr.f32.mxu0 0.0
      %7702 = vmatmul.mubr.f32.gmra.mrb[0].mxu0 %v7635
      %v7703 = vpop.f32.mrb[0].mxu0
      %v7704 = vadd.f32 0.0, %v7703
      %v7705 = vpop.f32.mrb[0].mxu0
      %7706 = vdwg.mxu0
      %v7707 = vadd.f32 %v7520, %v7704
      %7708 = vmatprep.subr.mxu0 %v5651
      %7709 = vmatpush1.msra.mxu0 %v5650
      %7710 = vmatprep.subr.mxu0 %v5653
      %7711 = vmatpush1.msra.mxu0 %v5652
      %7712 = vmatprep.subr.mxu0 %v5655
      %7713 = vmatpush1.msra.mxu0 %v5654
      %7714 = vmatprep.subr.mxu0 %v5657
      %7715 = vmatpush1.msra.mxu0 %v5656
      %7716 = vmatprep.subr.mxu0 %v5659
      %7717 = vmatpush1.msra.mxu0 %v5658
      %7718 = vmatprep.subr.mxu0 %v5661
      %7719 = vmatpush1.msra.mxu0 %v5660
      %7720 = vmatprep.subr.mxu0 %v5663
      %7721 = vmatpush1.msra.mxu0 %v5662
      %7722 = vmatprep.subr.mxu0 %v5665
      %7723 = vmatpush1.msra.mxu0 %v5664
      %7724 = vmatprep.subr.mxu0 0.0
      %7725 = vmatpush1.msra.mxu0 0.0
      %7726 = vmatprep.subr.mxu0 0.0
      %7727 = vmatpush1.msra.mxu0 0.0
      %7728 = vmatprep.subr.mxu0 0.0
      %7729 = vmatpush1.msra.mxu0 0.0
      %7730 = vmatprep.subr.mxu0 0.0
      %7731 = vmatpush1.msra.mxu0 0.0
      %7732 = vmatprep.subr.mxu0 0.0
      %7733 = vmatpush1.msra.mxu0 0.0
      %7734 = vmatprep.subr.mxu0 0.0
      %7735 = vmatpush1.msra.mxu0 0.0
      %7736 = vmatprep.subr.mxu0 0.0
      %7737 = vmatpush1.msra.mxu0 0.0
      %7738 = vmatprep.subr.mxu0 0.0
      %7739 = vmatpush1.msra.mxu0 0.0
      %7740 = vmatprep.subr.mxu0 0.0
      %7741 = vmatpush1.msra.mxu0 0.0
      %7742 = vmatprep.subr.mxu0 0.0
      %7743 = vmatpush1.msra.mxu0 0.0
      %7744 = vmatprep.subr.mxu0 0.0
      %7745 = vmatpush1.msra.mxu0 0.0
      %7746 = vmatprep.subr.mxu0 0.0
      %7747 = vmatpush1.msra.mxu0 0.0
      %7748 = vmatprep.subr.mxu0 0.0
      %7749 = vmatpush1.msra.mxu0 0.0
      %7750 = vmatprep.subr.mxu0 0.0
      %7751 = vmatpush1.msra.mxu0 0.0
      %7752 = vmatprep.subr.mxu0 0.0
      %7753 = vmatpush1.msra.mxu0 0.0
      %7754 = vmatprep.subr.mxu0 0.0
      %7755 = vmatpush1.msra.mxu0 0.0
      %7756 = vmatprep.subr.mxu0 0.0
      %7757 = vmatpush1.msra.mxu0 0.0
      %7758 = vmatprep.subr.mxu0 0.0
      %7759 = vmatpush1.msra.mxu0 0.0
      %7760 = vmatprep.subr.mxu0 0.0
      %7761 = vmatpush1.msra.mxu0 0.0
      %7762 = vmatprep.subr.mxu0 0.0
      %7763 = vmatpush1.msra.mxu0 0.0
      %7764 = vmatprep.subr.mxu0 0.0
      %7765 = vmatpush1.msra.mxu0 0.0
      %7766 = vmatprep.subr.mxu0 0.0
      %7767 = vmatpush1.msra.mxu0 0.0
      %7768 = vmatprep.subr.mxu0 0.0
      %7769 = vmatpush1.msra.mxu0 0.0
      %7770 = vmatprep.subr.mxu0 0.0
      %7771 = vmatpush1.msra.mxu0 0.0
      %7772 = vmatprep.mubr.f32.mxu0 0.0
      %7773 = vmatmul.mubr.f32.gmra.mrb[0].mxu0 %v7635
      %v7774 = vpop.f32.mrb[0].mxu0
      %v7775 = vadd.f32 0.0, %v7774
      %v7776 = vpop.f32.mrb[0].mxu0
      %v7777 = vadd.f32 0.0, %v7776
      %7778 = vdwg.mxu0
      %v7781 = vrot.slane %v7775, 5
      %v7782 = vrot.slane %v7777, 5
      %v7785 = vadd.f32 %v5640, %v7781
      %v7786 = vadd.f32 %v5642, %v7782
      %v7787 = vsub.f32 0.0, %v7785
      %v7788 = vmul.f32 %v7787, 1.442695
      %v7789 = vpow.pop %v7788
      %v7790 = vadd.f32 %v7789, 1.0
      %v7791 = vrcp.pop %v7790
      %v7792 = vtanh.pop %v7786
      %v7793 = vsub.f32 0.0, %v7786
      %v7794 = vmul.f32 %v7793, 1.442695
      %v7795 = vpow.pop %v7794
      %v7796 = vadd.f32 %v7795, 1.0
      %v7797 = vrcp.pop %v7796
      %v7799 = vrot.slane %v7620, 7
      %v7801 = vmul.f32 %v7791, %v7799
      %v7802 = vmul.f32 %v7791, %v7792
      %7804 = vrot.lane.b32.xlu0 %v7802, 64
      %v7805 = vpop.permute.xlu0 %7804
      %v7807 = vadd.f32 %v7801, %v7805
      %v7808 = vtanh.pop %v7807
      %v7809 = vmul.f32 %v7797, %v7808
      %v7810 = vld [vmem:[%s9 + $0x2c0] sm:$0xff]
      %v7811 = vld [vmem:[%s9 + $0x2c8] sm:$0xff]
      %v7812 = vld [vmem:[%s9 + $0x2d0] sm:$0xff]
      %v7813 = vld [vmem:[%s9 + $0x2d8] sm:$0xff]
      %v7814 = vld [vmem:[%s9 + $0x2e0] sm:$0xff]
      %v7815 = vld [vmem:[%s9 + $0x2e8] sm:$0xff]
      %v7816 = vld [vmem:[%s9 + $0x2f0] sm:$0xff]
      %v7817 = vld [vmem:[%s9 + $0x2f8] sm:$0xff]
      %v7819 = vrot.slane %v7809, 3
      %7820 = vrot.lane.b32.xlu0 %v7819, 64
      %v7821 = vpop.permute.xlu0 %7820
      %v7822 = vsel %vm5666, %v7821, 0
      %7824 = vmatprep.subr.mxu0 0.0
      %7825 = vmatpush1.msra.mxu0 %v7810
      %7826 = vmatprep.subr.mxu0 0.0
      %7827 = vmatpush1.msra.mxu0 %v7811
      %7828 = vmatprep.subr.mxu0 0.0
      %7829 = vmatpush1.msra.mxu0 %v7812
      %7830 = vmatprep.subr.mxu0 0.0
      %7831 = vmatpush1.msra.mxu0 %v7813
      %7832 = vmatprep.subr.mxu0 0.0
      %7833 = vmatpush1.msra.mxu0 %v7814
      %7834 = vmatprep.subr.mxu0 0.0
      %7835 = vmatpush1.msra.mxu0 %v7815
      %7836 = vmatprep.subr.mxu0 0.0
      %7837 = vmatpush1.msra.mxu0 %v7816
      %7838 = vmatprep.subr.mxu0 0.0
      %7839 = vmatpush1.msra.mxu0 %v7817
      %7840 = vmatprep.subr.mxu0 0.0
      %7841 = vmatpush1.msra.mxu0 0.0
      %7842 = vmatprep.subr.mxu0 0.0
      %7843 = vmatpush1.msra.mxu0 0.0
      %7844 = vmatprep.subr.mxu0 0.0
      %7845 = vmatpush1.msra.mxu0 0.0
      %7846 = vmatprep.subr.mxu0 0.0
      %7847 = vmatpush1.msra.mxu0 0.0
      %7848 = vmatprep.subr.mxu0 0.0
      %7849 = vmatpush1.msra.mxu0 0.0
      %7850 = vmatprep.subr.mxu0 0.0
      %7851 = vmatpush1.msra.mxu0 0.0
      %7852 = vmatprep.subr.mxu0 0.0
      %7853 = vmatpush1.msra.mxu0 0.0
      %7854 = vmatprep.subr.mxu0 0.0
      %7855 = vmatpush1.msra.mxu0 0.0
      %7856 = vmatprep.subr.mxu0 0.0
      %7857 = vmatpush1.msra.mxu0 0.0
      %7858 = vmatprep.subr.mxu0 0.0
      %7859 = vmatpush1.msra.mxu0 0.0
      %7860 = vmatprep.subr.mxu0 0.0
      %7861 = vmatpush1.msra.mxu0 0.0
      %7862 = vmatprep.subr.mxu0 0.0
      %7863 = vmatpush1.msra.mxu0 0.0
      %7864 = vmatprep.subr.mxu0 0.0
      %7865 = vmatpush1.msra.mxu0 0.0
      %7866 = vmatprep.subr.mxu0 0.0
      %7867 = vmatpush1.msra.mxu0 0.0
      %7868 = vmatprep.subr.mxu0 0.0
      %7869 = vmatpush1.msra.mxu0 0.0
      %7870 = vmatprep.subr.mxu0 0.0
      %7871 = vmatpush1.msra.mxu0 0.0
      %7872 = vmatprep.subr.mxu0 0.0
      %7873 = vmatpush1.msra.mxu0 0.0
      %7874 = vmatprep.subr.mxu0 0.0
      %7875 = vmatpush1.msra.mxu0 0.0
      %7876 = vmatprep.subr.mxu0 0.0
      %7877 = vmatpush1.msra.mxu0 0.0
      %7878 = vmatprep.subr.mxu0 0.0
      %7879 = vmatpush1.msra.mxu0 0.0
      %7880 = vmatprep.subr.mxu0 0.0
      %7881 = vmatpush1.msra.mxu0 0.0
      %7882 = vmatprep.subr.mxu0 0.0
      %7883 = vmatpush1.msra.mxu0 0.0
      %7884 = vmatprep.subr.mxu0 0.0
      %7885 = vmatpush1.msra.mxu0 0.0
      %7886 = vmatprep.subr.mxu0 0.0
      %7887 = vmatpush1.msra.mxu0 0.0
      %7888 = vmatprep.mubr.f32.mxu0 0.0
      %7889 = vmatmul.mubr.f32.gmra.mrb[0].mxu0 %v7822
      %v7890 = vpop.f32.mrb[0].mxu0
      %v7891 = vadd.f32 0.0, %v7890
      %v7892 = vpop.f32.mrb[0].mxu0
      %7893 = vdwg.mxu0
      %v7894 = vadd.f32 %v7707, %v7891
      %7895 = vmatprep.subr.mxu0 %v5651
      %7896 = vmatpush1.msra.mxu0 %v5650
      %7897 = vmatprep.subr.mxu0 %v5653
      %7898 = vmatpush1.msra.mxu0 %v5652
      %7899 = vmatprep.subr.mxu0 %v5655
      %7900 = vmatpush1.msra.mxu0 %v5654
      %7901 = vmatprep.subr.mxu0 %v5657
      %7902 = vmatpush1.msra.mxu0 %v5656
      %7903 = vmatprep.subr.mxu0 %v5659
      %7904 = vmatpush1.msra.mxu0 %v5658
      %7905 = vmatprep.subr.mxu0 %v5661
      %7906 = vmatpush1.msra.mxu0 %v5660
      %7907 = vmatprep.subr.mxu0 %v5663
      %7908 = vmatpush1.msra.mxu0 %v5662
      %7909 = vmatprep.subr.mxu0 %v5665
      %7910 = vmatpush1.msra.mxu0 %v5664
      %7911 = vmatprep.subr.mxu0 0.0
      %7912 = vmatpush1.msra.mxu0 0.0
      %7913 = vmatprep.subr.mxu0 0.0
      %7914 = vmatpush1.msra.mxu0 0.0
      %7915 = vmatprep.subr.mxu0 0.0
      %7916 = vmatpush1.msra.mxu0 0.0
      %7917 = vmatprep.subr.mxu0 0.0
      %7918 = vmatpush1.msra.mxu0 0.0
      %7919 = vmatprep.subr.mxu0 0.0
      %7920 = vmatpush1.msra.mxu0 0.0
      %7921 = vmatprep.subr.mxu0 0.0
      %7922 = vmatpush1.msra.mxu0 0.0
      %7923 = vmatprep.subr.mxu0 0.0
      %7924 = vmatpush1.msra.mxu0 0.0
      %7925 = vmatprep.subr.mxu0 0.0
      %7926 = vmatpush1.msra.mxu0 0.0
      %7927 = vmatprep.subr.mxu0 0.0
      %7928 = vmatpush1.msra.mxu0 0.0
      %7929 = vmatprep.subr.mxu0 0.0
      %7930 = vmatpush1.msra.mxu0 0.0
      %7931 = vmatprep.subr.mxu0 0.0
      %7932 = vmatpush1.msra.mxu0 0.0
      %7933 = vmatprep.subr.mxu0 0.0
      %7934 = vmatpush1.msra.mxu0 0.0
      %7935 = vmatprep.subr.mxu0 0.0
      %7936 = vmatpush1.msra.mxu0 0.0
      %7937 = vmatprep.subr.mxu0 0.0
      %7938 = vmatpush1.msra.mxu0 0.0
      %7939 = vmatprep.subr.mxu0 0.0
      %7940 = vmatpush1.msra.mxu0 0.0
      %7941 = vmatprep.subr.mxu0 0.0
      %7942 = vmatpush1.msra.mxu0 0.0
      %7943 = vmatprep.subr.mxu0 0.0
      %7944 = vmatpush1.msra.mxu0 0.0
      %7945 = vmatprep.subr.mxu0 0.0
      %7946 = vmatpush1.msra.mxu0 0.0
      %7947 = vmatprep.subr.mxu0 0.0
      %7948 = vmatpush1.msra.mxu0 0.0
      %7949 = vmatprep.subr.mxu0 0.0
      %7950 = vmatpush1.msra.mxu0 0.0
      %7951 = vmatprep.subr.mxu0 0.0
      %7952 = vmatpush1.msra.mxu0 0.0
      %7953 = vmatprep.subr.mxu0 0.0
      %7954 = vmatpush1.msra.mxu0 0.0
      %7955 = vmatprep.subr.mxu0 0.0
      %7956 = vmatpush1.msra.mxu0 0.0
      %7957 = vmatprep.subr.mxu0 0.0
      %7958 = vmatpush1.msra.mxu0 0.0
      %7959 = vmatprep.mubr.f32.mxu0 0.0
      %7960 = vmatmul.mubr.f32.gmra.mrb[0].mxu0 %v7822
      %v7961 = vpop.f32.mrb[0].mxu0
      %v7962 = vadd.f32 0.0, %v7961
      %v7963 = vpop.f32.mrb[0].mxu0
      %v7964 = vadd.f32 0.0, %v7963
      %7965 = vdwg.mxu0
      %v7968 = vrot.slane %v7962, 4
      %v7969 = vrot.slane %v7964, 4
      %v7972 = vadd.f32 %v5640, %v7968
      %v7973 = vadd.f32 %v5642, %v7969
      %v7974 = vsub.f32 0.0, %v7972
      %v7975 = vmul.f32 %v7974, 1.442695
      %v7976 = vpow.pop %v7975
      %v7977 = vadd.f32 %v7976, 1.0
      %v7978 = vrcp.pop %v7977
      %v7979 = vtanh.pop %v7973
      %v7980 = vsub.f32 0.0, %v7973
      %v7981 = vmul.f32 %v7980, 1.442695
      %v7982 = vpow.pop %v7981
      %v7983 = vadd.f32 %v7982, 1.0
      %v7984 = vrcp.pop %v7983
      %v7986 = vrot.slane %v7807, 7
      %v7988 = vmul.f32 %v7978, %v7986
      %v7989 = vmul.f32 %v7978, %v7979
      %7991 = vrot.lane.b32.xlu0 %v7989, 64
      %v7992 = vpop.permute.xlu0 %7991
      %v7994 = vadd.f32 %v7988, %v7992
      %v7995 = vtanh.pop %v7994
      %v7996 = vmul.f32 %v7984, %v7995
      %v7997 = vld [vmem:[%s9 + $0x300] sm:$0xff]
      %v7998 = vld [vmem:[%s9 + $0x308] sm:$0xff]
      %v7999 = vld [vmem:[%s9 + $0x310] sm:$0xff]
      %v8000 = vld [vmem:[%s9 + $0x318] sm:$0xff]
      %v8001 = vld [vmem:[%s9 + $0x320] sm:$0xff]
      %v8002 = vld [vmem:[%s9 + $0x328] sm:$0xff]
      %v8003 = vld [vmem:[%s9 + $0x330] sm:$0xff]
      %v8004 = vld [vmem:[%s9 + $0x338] sm:$0xff]
      %v8006 = vrot.slane %v7996, 4
      %8007 = vrot.lane.b32.xlu0 %v8006, 64
      %v8008 = vpop.permute.xlu0 %8007
      %v8009 = vsel %vm5666, %v8008, 0
      %8011 = vmatprep.subr.mxu0 0.0
      %8012 = vmatpush1.msra.mxu0 %v7997
      %8013 = vmatprep.subr.mxu0 0.0
      %8014 = vmatpush1.msra.mxu0 %v7998
      %8015 = vmatprep.subr.mxu0 0.0
      %8016 = vmatpush1.msra.mxu0 %v7999
      %8017 = vmatprep.subr.mxu0 0.0
      %8018 = vmatpush1.msra.mxu0 %v8000
      %8019 = vmatprep.subr.mxu0 0.0
      %8020 = vmatpush1.msra.mxu0 %v8001
      %8021 = vmatprep.subr.mxu0 0.0
      %8022 = vmatpush1.msra.mxu0 %v8002
      %8023 = vmatprep.subr.mxu0 0.0
      %8024 = vmatpush1.msra.mxu0 %v8003
      %8025 = vmatprep.subr.mxu0 0.0
      %8026 = vmatpush1.msra.mxu0 %v8004
      %8027 = vmatprep.subr.mxu0 0.0
      %8028 = vmatpush1.msra.mxu0 0.0
      %8029 = vmatprep.subr.mxu0 0.0
      %8030 = vmatpush1.msra.mxu0 0.0
      %8031 = vmatprep.subr.mxu0 0.0
      %8032 = vmatpush1.msra.mxu0 0.0
      %8033 = vmatprep.subr.mxu0 0.0
      %8034 = vmatpush1.msra.mxu0 0.0
      %8035 = vmatprep.subr.mxu0 0.0
      %8036 = vmatpush1.msra.mxu0 0.0
      %8037 = vmatprep.subr.mxu0 0.0
      %8038 = vmatpush1.msra.mxu0 0.0
      %8039 = vmatprep.subr.mxu0 0.0
      %8040 = vmatpush1.msra.mxu0 0.0
      %8041 = vmatprep.subr.mxu0 0.0
      %8042 = vmatpush1.msra.mxu0 0.0
      %8043 = vmatprep.subr.mxu0 0.0
      %8044 = vmatpush1.msra.mxu0 0.0
      %8045 = vmatprep.subr.mxu0 0.0
      %8046 = vmatpush1.msra.mxu0 0.0
      %8047 = vmatprep.subr.mxu0 0.0
      %8048 = vmatpush1.msra.mxu0 0.0
      %8049 = vmatprep.subr.mxu0 0.0
      %8050 = vmatpush1.msra.mxu0 0.0
      %8051 = vmatprep.subr.mxu0 0.0
      %8052 = vmatpush1.msra.mxu0 0.0
      %8053 = vmatprep.subr.mxu0 0.0
      %8054 = vmatpush1.msra.mxu0 0.0
      %8055 = vmatprep.subr.mxu0 0.0
      %8056 = vmatpush1.msra.mxu0 0.0
      %8057 = vmatprep.subr.mxu0 0.0
      %8058 = vmatpush1.msra.mxu0 0.0
      %8059 = vmatprep.subr.mxu0 0.0
      %8060 = vmatpush1.msra.mxu0 0.0
      %8061 = vmatprep.subr.mxu0 0.0
      %8062 = vmatpush1.msra.mxu0 0.0
      %8063 = vmatprep.subr.mxu0 0.0
      %8064 = vmatpush1.msra.mxu0 0.0
      %8065 = vmatprep.subr.mxu0 0.0
      %8066 = vmatpush1.msra.mxu0 0.0
      %8067 = vmatprep.subr.mxu0 0.0
      %8068 = vmatpush1.msra.mxu0 0.0
      %8069 = vmatprep.subr.mxu0 0.0
      %8070 = vmatpush1.msra.mxu0 0.0
      %8071 = vmatprep.subr.mxu0 0.0
      %8072 = vmatpush1.msra.mxu0 0.0
      %8073 = vmatprep.subr.mxu0 0.0
      %8074 = vmatpush1.msra.mxu0 0.0
      %8075 = vmatprep.mubr.f32.mxu0 0.0
      %8076 = vmatmul.mubr.f32.gmra.mrb[0].mxu0 %v8009
      %v8077 = vpop.f32.mrb[0].mxu0
      %v8078 = vadd.f32 0.0, %v8077
      %v8079 = vpop.f32.mrb[0].mxu0
      %8080 = vdwg.mxu0
      %v8081 = vadd.f32 %v7894, %v8078
      %8082 = vmatprep.subr.mxu0 %v5651
      %8083 = vmatpush1.msra.mxu0 %v5650
      %8084 = vmatprep.subr.mxu0 %v5653
      %8085 = vmatpush1.msra.mxu0 %v5652
      %8086 = vmatprep.subr.mxu0 %v5655
      %8087 = vmatpush1.msra.mxu0 %v5654
      %8088 = vmatprep.subr.mxu0 %v5657
      %8089 = vmatpush1.msra.mxu0 %v5656
      %8090 = vmatprep.subr.mxu0 %v5659
      %8091 = vmatpush1.msra.mxu0 %v5658
      %8092 = vmatprep.subr.mxu0 %v5661
      %8093 = vmatpush1.msra.mxu0 %v5660
      %8094 = vmatprep.subr.mxu0 %v5663
      %8095 = vmatpush1.msra.mxu0 %v5662
      %8096 = vmatprep.subr.mxu0 %v5665
      %8097 = vmatpush1.msra.mxu0 %v5664
      %8098 = vmatprep.subr.mxu0 0.0
      %8099 = vmatpush1.msra.mxu0 0.0
      %8100 = vmatprep.subr.mxu0 0.0
      %8101 = vmatpush1.msra.mxu0 0.0
      %8102 = vmatprep.subr.mxu0 0.0
      %8103 = vmatpush1.msra.mxu0 0.0
      %8104 = vmatprep.subr.mxu0 0.0
      %8105 = vmatpush1.msra.mxu0 0.0
      %8106 = vmatprep.subr.mxu0 0.0
      %8107 = vmatpush1.msra.mxu0 0.0
      %8108 = vmatprep.subr.mxu0 0.0
      %8109 = vmatpush1.msra.mxu0 0.0
      %8110 = vmatprep.subr.mxu0 0.0
      %8111 = vmatpush1.msra.mxu0 0.0
      %8112 = vmatprep.subr.mxu0 0.0
      %8113 = vmatpush1.msra.mxu0 0.0
      %8114 = vmatprep.subr.mxu0 0.0
      %8115 = vmatpush1.msra.mxu0 0.0
      %8116 = vmatprep.subr.mxu0 0.0
      %8117 = vmatpush1.msra.mxu0 0.0
      %8118 = vmatprep.subr.mxu0 0.0
      %8119 = vmatpush1.msra.mxu0 0.0
      %8120 = vmatprep.subr.mxu0 0.0
      %8121 = vmatpush1.msra.mxu0 0.0
      %8122 = vmatprep.subr.mxu0 0.0
      %8123 = vmatpush1.msra.mxu0 0.0
      %8124 = vmatprep.subr.mxu0 0.0
      %8125 = vmatpush1.msra.mxu0 0.0
      %8126 = vmatprep.subr.mxu0 0.0
      %8127 = vmatpush1.msra.mxu0 0.0
      %8128 = vmatprep.subr.mxu0 0.0
      %8129 = vmatpush1.msra.mxu0 0.0
      %8130 = vmatprep.subr.mxu0 0.0
      %8131 = vmatpush1.msra.mxu0 0.0
      %8132 = vmatprep.subr.mxu0 0.0
      %8133 = vmatpush1.msra.mxu0 0.0
      %8134 = vmatprep.subr.mxu0 0.0
      %8135 = vmatpush1.msra.mxu0 0.0
      %8136 = vmatprep.subr.mxu0 0.0
      %8137 = vmatpush1.msra.mxu0 0.0
      %8138 = vmatprep.subr.mxu0 0.0
      %8139 = vmatpush1.msra.mxu0 0.0
      %8140 = vmatprep.subr.mxu0 0.0
      %8141 = vmatpush1.msra.mxu0 0.0
      %8142 = vmatprep.subr.mxu0 0.0
      %8143 = vmatpush1.msra.mxu0 0.0
      %8144 = vmatprep.subr.mxu0 0.0
      %8145 = vmatpush1.msra.mxu0 0.0
      %8146 = vmatprep.mubr.f32.mxu0 0.0
      %8147 = vmatmul.mubr.f32.gmra.mrb[0].mxu0 %v8009
      %v8148 = vpop.f32.mrb[0].mxu0
      %v8149 = vadd.f32 0.0, %v8148
      %v8150 = vpop.f32.mrb[0].mxu0
      %v8151 = vadd.f32 0.0, %v8150
      %8152 = vdwg.mxu0
      %v8155 = vrot.slane %v8149, 3
      %v8156 = vrot.slane %v8151, 3
      %v8159 = vadd.f32 %v5640, %v8155
      %v8160 = vadd.f32 %v5642, %v8156
      %v8161 = vsub.f32 0.0, %v8159
      %v8162 = vmul.f32 %v8161, 1.442695
      %v8163 = vpow.pop %v8162
      %v8164 = vadd.f32 %v8163, 1.0
      %v8165 = vrcp.pop %v8164
      %v8166 = vtanh.pop %v8160
      %v8167 = vsub.f32 0.0, %v8160
      %v8168 = vmul.f32 %v8167, 1.442695
      %v8169 = vpow.pop %v8168
      %v8170 = vadd.f32 %v8169, 1.0
      %v8171 = vrcp.pop %v8170
      %v8173 = vrot.slane %v7994, 7
      %v8175 = vmul.f32 %v8165, %v8173
      %v8176 = vmul.f32 %v8165, %v8166
      %8178 = vrot.lane.b32.xlu0 %v8176, 64
      %v8179 = vpop.permute.xlu0 %8178
      %v8181 = vadd.f32 %v8175, %v8179
      %v8182 = vtanh.pop %v8181
      %v8183 = vmul.f32 %v8171, %v8182
      %v8184 = vld [vmem:[%s9 + $0x340] sm:$0xff]
      %v8185 = vld [vmem:[%s9 + $0x348] sm:$0xff]
      %v8186 = vld [vmem:[%s9 + $0x350] sm:$0xff]
      %v8187 = vld [vmem:[%s9 + $0x358] sm:$0xff]
      %v8188 = vld [vmem:[%s9 + $0x360] sm:$0xff]
      %v8189 = vld [vmem:[%s9 + $0x368] sm:$0xff]
      %v8190 = vld [vmem:[%s9 + $0x370] sm:$0xff]
      %v8191 = vld [vmem:[%s9 + $0x378] sm:$0xff]
      %v8193 = vrot.slane %v8183, 5
      %8194 = vrot.lane.b32.xlu0 %v8193, 64
      %v8195 = vpop.permute.xlu0 %8194
      %v8196 = vsel %vm5666, %v8195, 0
      %8198 = vmatprep.subr.mxu0 0.0
      %8199 = vmatpush1.msra.mxu0 %v8184
      %8200 = vmatprep.subr.mxu0 0.0
      %8201 = vmatpush1.msra.mxu0 %v8185
      %8202 = vmatprep.subr.mxu0 0.0
      %8203 = vmatpush1.msra.mxu0 %v8186
      %8204 = vmatprep.subr.mxu0 0.0
      %8205 = vmatpush1.msra.mxu0 %v8187
      %8206 = vmatprep.subr.mxu0 0.0
      %8207 = vmatpush1.msra.mxu0 %v8188
      %8208 = vmatprep.subr.mxu0 0.0
      %8209 = vmatpush1.msra.mxu0 %v8189
      %8210 = vmatprep.subr.mxu0 0.0
      %8211 = vmatpush1.msra.mxu0 %v8190
      %8212 = vmatprep.subr.mxu0 0.0
      %8213 = vmatpush1.msra.mxu0 %v8191
      %8214 = vmatprep.subr.mxu0 0.0
      %8215 = vmatpush1.msra.mxu0 0.0
      %8216 = vmatprep.subr.mxu0 0.0
      %8217 = vmatpush1.msra.mxu0 0.0
      %8218 = vmatprep.subr.mxu0 0.0
      %8219 = vmatpush1.msra.mxu0 0.0
      %8220 = vmatprep.subr.mxu0 0.0
      %8221 = vmatpush1.msra.mxu0 0.0
      %8222 = vmatprep.subr.mxu0 0.0
      %8223 = vmatpush1.msra.mxu0 0.0
      %8224 = vmatprep.subr.mxu0 0.0
      %8225 = vmatpush1.msra.mxu0 0.0
      %8226 = vmatprep.subr.mxu0 0.0
      %8227 = vmatpush1.msra.mxu0 0.0
      %8228 = vmatprep.subr.mxu0 0.0
      %8229 = vmatpush1.msra.mxu0 0.0
      %8230 = vmatprep.subr.mxu0 0.0
      %8231 = vmatpush1.msra.mxu0 0.0
      %8232 = vmatprep.subr.mxu0 0.0
      %8233 = vmatpush1.msra.mxu0 0.0
      %8234 = vmatprep.subr.mxu0 0.0
      %8235 = vmatpush1.msra.mxu0 0.0
      %8236 = vmatprep.subr.mxu0 0.0
      %8237 = vmatpush1.msra.mxu0 0.0
      %8238 = vmatprep.subr.mxu0 0.0
      %8239 = vmatpush1.msra.mxu0 0.0
      %8240 = vmatprep.subr.mxu0 0.0
      %8241 = vmatpush1.msra.mxu0 0.0
      %8242 = vmatprep.subr.mxu0 0.0
      %8243 = vmatpush1.msra.mxu0 0.0
      %8244 = vmatprep.subr.mxu0 0.0
      %8245 = vmatpush1.msra.mxu0 0.0
      %8246 = vmatprep.subr.mxu0 0.0
      %8247 = vmatpush1.msra.mxu0 0.0
      %8248 = vmatprep.subr.mxu0 0.0
      %8249 = vmatpush1.msra.mxu0 0.0
      %8250 = vmatprep.subr.mxu0 0.0
      %8251 = vmatpush1.msra.mxu0 0.0
      %8252 = vmatprep.subr.mxu0 0.0
      %8253 = vmatpush1.msra.mxu0 0.0
      %8254 = vmatprep.subr.mxu0 0.0
      %8255 = vmatpush1.msra.mxu0 0.0
      %8256 = vmatprep.subr.mxu0 0.0
      %8257 = vmatpush1.msra.mxu0 0.0
      %8258 = vmatprep.subr.mxu0 0.0
      %8259 = vmatpush1.msra.mxu0 0.0
      %8260 = vmatprep.subr.mxu0 0.0
      %8261 = vmatpush1.msra.mxu0 0.0
      %8262 = vmatprep.mubr.f32.mxu0 0.0
      %8263 = vmatmul.mubr.f32.gmra.mrb[0].mxu0 %v8196
      %v8264 = vpop.f32.mrb[0].mxu0
      %v8265 = vadd.f32 0.0, %v8264
      %v8266 = vpop.f32.mrb[0].mxu0
      %8267 = vdwg.mxu0
      %v8268 = vadd.f32 %v8081, %v8265
      %8269 = vmatprep.subr.mxu0 %v5651
      %8270 = vmatpush1.msra.mxu0 %v5650
      %8271 = vmatprep.subr.mxu0 %v5653
      %8272 = vmatpush1.msra.mxu0 %v5652
      %8273 = vmatprep.subr.mxu0 %v5655
      %8274 = vmatpush1.msra.mxu0 %v5654
      %8275 = vmatprep.subr.mxu0 %v5657
      %8276 = vmatpush1.msra.mxu0 %v5656
      %8277 = vmatprep.subr.mxu0 %v5659
      %8278 = vmatpush1.msra.mxu0 %v5658
      %8279 = vmatprep.subr.mxu0 %v5661
      %8280 = vmatpush1.msra.mxu0 %v5660
      %8281 = vmatprep.subr.mxu0 %v5663
      %8282 = vmatpush1.msra.mxu0 %v5662
      %8283 = vmatprep.subr.mxu0 %v5665
      %8284 = vmatpush1.msra.mxu0 %v5664
      %8285 = vmatprep.subr.mxu0 0.0
      %8286 = vmatpush1.msra.mxu0 0.0
      %8287 = vmatprep.subr.mxu0 0.0
      %8288 = vmatpush1.msra.mxu0 0.0
      %8289 = vmatprep.subr.mxu0 0.0
      %8290 = vmatpush1.msra.mxu0 0.0
      %8291 = vmatprep.subr.mxu0 0.0
      %8292 = vmatpush1.msra.mxu0 0.0
      %8293 = vmatprep.subr.mxu0 0.0
      %8294 = vmatpush1.msra.mxu0 0.0
      %8295 = vmatprep.subr.mxu0 0.0
      %8296 = vmatpush1.msra.mxu0 0.0
      %8297 = vmatprep.subr.mxu0 0.0
      %8298 = vmatpush1.msra.mxu0 0.0
      %8299 = vmatprep.subr.mxu0 0.0
      %8300 = vmatpush1.msra.mxu0 0.0
      %8301 = vmatprep.subr.mxu0 0.0
      %8302 = vmatpush1.msra.mxu0 0.0
      %8303 = vmatprep.subr.mxu0 0.0
      %8304 = vmatpush1.msra.mxu0 0.0
      %8305 = vmatprep.subr.mxu0 0.0
      %8306 = vmatpush1.msra.mxu0 0.0
      %8307 = vmatprep.subr.mxu0 0.0
      %8308 = vmatpush1.msra.mxu0 0.0
      %8309 = vmatprep.subr.mxu0 0.0
      %8310 = vmatpush1.msra.mxu0 0.0
      %8311 = vmatprep.subr.mxu0 0.0
      %8312 = vmatpush1.msra.mxu0 0.0
      %8313 = vmatprep.subr.mxu0 0.0
      %8314 = vmatpush1.msra.mxu0 0.0
      %8315 = vmatprep.subr.mxu0 0.0
      %8316 = vmatpush1.msra.mxu0 0.0
      %8317 = vmatprep.subr.mxu0 0.0
      %8318 = vmatpush1.msra.mxu0 0.0
      %8319 = vmatprep.subr.mxu0 0.0
      %8320 = vmatpush1.msra.mxu0 0.0
      %8321 = vmatprep.subr.mxu0 0.0
      %8322 = vmatpush1.msra.mxu0 0.0
      %8323 = vmatprep.subr.mxu0 0.0
      %8324 = vmatpush1.msra.mxu0 0.0
      %8325 = vmatprep.subr.mxu0 0.0
      %8326 = vmatpush1.msra.mxu0 0.0
      %8327 = vmatprep.subr.mxu0 0.0
      %8328 = vmatpush1.msra.mxu0 0.0
      %8329 = vmatprep.subr.mxu0 0.0
      %8330 = vmatpush1.msra.mxu0 0.0
      %8331 = vmatprep.subr.mxu0 0.0
      %8332 = vmatpush1.msra.mxu0 0.0
      %8333 = vmatprep.mubr.f32.mxu0 0.0
      %8334 = vmatmul.mubr.f32.gmra.mrb[0].mxu0 %v8196
      %v8335 = vpop.f32.mrb[0].mxu0
      %v8336 = vadd.f32 0.0, %v8335
      %v8337 = vpop.f32.mrb[0].mxu0
      %v8338 = vadd.f32 0.0, %v8337
      %8339 = vdwg.mxu0
      %v8342 = vrot.slane %v8336, 2
      %v8343 = vrot.slane %v8338, 2
      %v8346 = vadd.f32 %v5640, %v8342
      %v8347 = vadd.f32 %v5642, %v8343
      %v8348 = vsub.f32 0.0, %v8346
      %v8349 = vmul.f32 %v8348, 1.442695
      %v8350 = vpow.pop %v8349
      %v8351 = vadd.f32 %v8350, 1.0
      %v8352 = vrcp.pop %v8351
      %v8353 = vtanh.pop %v8347
      %v8354 = vsub.f32 0.0, %v8347
      %v8355 = vmul.f32 %v8354, 1.442695
      %v8356 = vpow.pop %v8355
      %v8357 = vadd.f32 %v8356, 1.0
      %v8358 = vrcp.pop %v8357
      %v8360 = vrot.slane %v8181, 7
      %v8362 = vmul.f32 %v8352, %v8360
      %v8363 = vmul.f32 %v8352, %v8353
      %8365 = vrot.lane.b32.xlu0 %v8363, 64
      %v8366 = vpop.permute.xlu0 %8365
      %v8368 = vadd.f32 %v8362, %v8366
      %v8369 = vtanh.pop %v8368
      %v8370 = vmul.f32 %v8358, %v8369
      %v8371 = vld [vmem:[%s9 + $0x380] sm:$0xff]
      %v8372 = vld [vmem:[%s9 + $0x388] sm:$0xff]
      %v8373 = vld [vmem:[%s9 + $0x390] sm:$0xff]
      %v8374 = vld [vmem:[%s9 + $0x398] sm:$0xff]
      %v8375 = vld [vmem:[%s9 + $0x3a0] sm:$0xff]
      %v8376 = vld [vmem:[%s9 + $0x3a8] sm:$0xff]
      %v8377 = vld [vmem:[%s9 + $0x3b0] sm:$0xff]
      %v8378 = vld [vmem:[%s9 + $0x3b8] sm:$0xff]
      %v8380 = vrot.slane %v8370, 6
      %8381 = vrot.lane.b32.xlu0 %v8380, 64
      %v8382 = vpop.permute.xlu0 %8381
      %v8383 = vsel %vm5666, %v8382, 0
      %8385 = vmatprep.subr.mxu0 0.0
      %8386 = vmatpush1.msra.mxu0 %v8371
      %8387 = vmatprep.subr.mxu0 0.0
      %8388 = vmatpush1.msra.mxu0 %v8372
      %8389 = vmatprep.subr.mxu0 0.0
      %8390 = vmatpush1.msra.mxu0 %v8373
      %8391 = vmatprep.subr.mxu0 0.0
      %8392 = vmatpush1.msra.mxu0 %v8374
      %8393 = vmatprep.subr.mxu0 0.0
      %8394 = vmatpush1.msra.mxu0 %v8375
      %8395 = vmatprep.subr.mxu0 0.0
      %8396 = vmatpush1.msra.mxu0 %v8376
      %8397 = vmatprep.subr.mxu0 0.0
      %8398 = vmatpush1.msra.mxu0 %v8377
      %8399 = vmatprep.subr.mxu0 0.0
      %8400 = vmatpush1.msra.mxu0 %v8378
      %8401 = vmatprep.subr.mxu0 0.0
      %8402 = vmatpush1.msra.mxu0 0.0
      %8403 = vmatprep.subr.mxu0 0.0
      %8404 = vmatpush1.msra.mxu0 0.0
      %8405 = vmatprep.subr.mxu0 0.0
      %8406 = vmatpush1.msra.mxu0 0.0
      %8407 = vmatprep.subr.mxu0 0.0
      %8408 = vmatpush1.msra.mxu0 0.0
      %8409 = vmatprep.subr.mxu0 0.0
      %8410 = vmatpush1.msra.mxu0 0.0
      %8411 = vmatprep.subr.mxu0 0.0
      %8412 = vmatpush1.msra.mxu0 0.0
      %8413 = vmatprep.subr.mxu0 0.0
      %8414 = vmatpush1.msra.mxu0 0.0
      %8415 = vmatprep.subr.mxu0 0.0
      %8416 = vmatpush1.msra.mxu0 0.0
      %8417 = vmatprep.subr.mxu0 0.0
      %8418 = vmatpush1.msra.mxu0 0.0
      %8419 = vmatprep.subr.mxu0 0.0
      %8420 = vmatpush1.msra.mxu0 0.0
      %8421 = vmatprep.subr.mxu0 0.0
      %8422 = vmatpush1.msra.mxu0 0.0
      %8423 = vmatprep.subr.mxu0 0.0
      %8424 = vmatpush1.msra.mxu0 0.0
      %8425 = vmatprep.subr.mxu0 0.0
      %8426 = vmatpush1.msra.mxu0 0.0
      %8427 = vmatprep.subr.mxu0 0.0
      %8428 = vmatpush1.msra.mxu0 0.0
      %8429 = vmatprep.subr.mxu0 0.0
      %8430 = vmatpush1.msra.mxu0 0.0
      %8431 = vmatprep.subr.mxu0 0.0
      %8432 = vmatpush1.msra.mxu0 0.0
      %8433 = vmatprep.subr.mxu0 0.0
      %8434 = vmatpush1.msra.mxu0 0.0
      %8435 = vmatprep.subr.mxu0 0.0
      %8436 = vmatpush1.msra.mxu0 0.0
      %8437 = vmatprep.subr.mxu0 0.0
      %8438 = vmatpush1.msra.mxu0 0.0
      %8439 = vmatprep.subr.mxu0 0.0
      %8440 = vmatpush1.msra.mxu0 0.0
      %8441 = vmatprep.subr.mxu0 0.0
      %8442 = vmatpush1.msra.mxu0 0.0
      %8443 = vmatprep.subr.mxu0 0.0
      %8444 = vmatpush1.msra.mxu0 0.0
      %8445 = vmatprep.subr.mxu0 0.0
      %8446 = vmatpush1.msra.mxu0 0.0
      %8447 = vmatprep.subr.mxu0 0.0
      %8448 = vmatpush1.msra.mxu0 0.0
      %8449 = vmatprep.mubr.f32.mxu0 0.0
      %8450 = vmatmul.mubr.f32.gmra.mrb[0].mxu0 %v8383
      %v8451 = vpop.f32.mrb[0].mxu0
      %v8452 = vadd.f32 0.0, %v8451
      %v8453 = vpop.f32.mrb[0].mxu0
      %8454 = vdwg.mxu0
      %v8455 = vadd.f32 %v8268, %v8452
      %8456 = vmatprep.subr.mxu0 %v5651
      %8457 = vmatpush1.msra.mxu0 %v5650
      %8458 = vmatprep.subr.mxu0 %v5653
      %8459 = vmatpush1.msra.mxu0 %v5652
      %8460 = vmatprep.subr.mxu0 %v5655
      %8461 = vmatpush1.msra.mxu0 %v5654
      %8462 = vmatprep.subr.mxu0 %v5657
      %8463 = vmatpush1.msra.mxu0 %v5656
      %8464 = vmatprep.subr.mxu0 %v5659
      %8465 = vmatpush1.msra.mxu0 %v5658
      %8466 = vmatprep.subr.mxu0 %v5661
      %8467 = vmatpush1.msra.mxu0 %v5660
      %8468 = vmatprep.subr.mxu0 %v5663
      %8469 = vmatpush1.msra.mxu0 %v5662
      %8470 = vmatprep.subr.mxu0 %v5665
      %8471 = vmatpush1.msra.mxu0 %v5664
      %8472 = vmatprep.subr.mxu0 0.0
      %8473 = vmatpush1.msra.mxu0 0.0
      %8474 = vmatprep.subr.mxu0 0.0
      %8475 = vmatpush1.msra.mxu0 0.0
      %8476 = vmatprep.subr.mxu0 0.0
      %8477 = vmatpush1.msra.mxu0 0.0
      %8478 = vmatprep.subr.mxu0 0.0
      %8479 = vmatpush1.msra.mxu0 0.0
      %8480 = vmatprep.subr.mxu0 0.0
      %8481 = vmatpush1.msra.mxu0 0.0
      %8482 = vmatprep.subr.mxu0 0.0
      %8483 = vmatpush1.msra.mxu0 0.0
      %8484 = vmatprep.subr.mxu0 0.0
      %8485 = vmatpush1.msra.mxu0 0.0
      %8486 = vmatprep.subr.mxu0 0.0
      %8487 = vmatpush1.msra.mxu0 0.0
      %8488 = vmatprep.subr.mxu0 0.0
      %8489 = vmatpush1.msra.mxu0 0.0
      %8490 = vmatprep.subr.mxu0 0.0
      %8491 = vmatpush1.msra.mxu0 0.0
      %8492 = vmatprep.subr.mxu0 0.0
      %8493 = vmatpush1.msra.mxu0 0.0
      %8494 = vmatprep.subr.mxu0 0.0
      %8495 = vmatpush1.msra.mxu0 0.0
      %8496 = vmatprep.subr.mxu0 0.0
      %8497 = vmatpush1.msra.mxu0 0.0
      %8498 = vmatprep.subr.mxu0 0.0
      %8499 = vmatpush1.msra.mxu0 0.0
      %8500 = vmatprep.subr.mxu0 0.0
      %8501 = vmatpush1.msra.mxu0 0.0
      %8502 = vmatprep.subr.mxu0 0.0
      %8503 = vmatpush1.msra.mxu0 0.0
      %8504 = vmatprep.subr.mxu0 0.0
      %8505 = vmatpush1.msra.mxu0 0.0
      %8506 = vmatprep.subr.mxu0 0.0
      %8507 = vmatpush1.msra.mxu0 0.0
      %8508 = vmatprep.subr.mxu0 0.0
      %8509 = vmatpush1.msra.mxu0 0.0
      %8510 = vmatprep.subr.mxu0 0.0
      %8511 = vmatpush1.msra.mxu0 0.0
      %8512 = vmatprep.subr.mxu0 0.0
      %8513 = vmatpush1.msra.mxu0 0.0
      %8514 = vmatprep.subr.mxu0 0.0
      %8515 = vmatpush1.msra.mxu0 0.0
      %8516 = vmatprep.subr.mxu0 0.0
      %8517 = vmatpush1.msra.mxu0 0.0
      %8518 = vmatprep.subr.mxu0 0.0
      %8519 = vmatpush1.msra.mxu0 0.0
      %8520 = vmatprep.mubr.f32.mxu0 0.0
      %8521 = vmatmul.mubr.f32.gmra.mrb[0].mxu0 %v8383
      %v8522 = vpop.f32.mrb[0].mxu0
      %v8523 = vadd.f32 0.0, %v8522
      %v8524 = vpop.f32.mrb[0].mxu0
      %v8525 = vadd.f32 0.0, %v8524
      %8526 = vdwg.mxu0
      %v8529 = vrot.slane %v8523, 1
      %v8530 = vrot.slane %v8525, 1
      %v8533 = vadd.f32 %v5640, %v8529
      %v8534 = vadd.f32 %v5642, %v8530
      %v8535 = vsub.f32 0.0, %v8533
      %v8536 = vmul.f32 %v8535, 1.442695
      %v8537 = vpow.pop %v8536
      %v8538 = vadd.f32 %v8537, 1.0
      %v8539 = vrcp.pop %v8538
      %v8540 = vtanh.pop %v8534
      %v8541 = vsub.f32 0.0, %v8534
      %v8542 = vmul.f32 %v8541, 1.442695
      %v8543 = vpow.pop %v8542
      %v8544 = vadd.f32 %v8543, 1.0
      %v8545 = vrcp.pop %v8544
      %v8547 = vrot.slane %v8368, 7
      %v8549 = vmul.f32 %v8539, %v8547
      %v8550 = vmul.f32 %v8539, %v8540
      %8552 = vrot.lane.b32.xlu0 %v8550, 64
      %v8553 = vpop.permute.xlu0 %8552
      %v8555 = vadd.f32 %v8549, %v8553
      %v8556 = vtanh.pop %v8555
      %v8557 = vmul.f32 %v8545, %v8556
      %v8558 = vld [vmem:[%s9 + $0x3c0] sm:$0xff]
      %v8559 = vld [vmem:[%s9 + $0x3c8] sm:$0xff]
      %v8560 = vld [vmem:[%s9 + $0x3d0] sm:$0xff]
      %v8561 = vld [vmem:[%s9 + $0x3d8] sm:$0xff]
      %v8562 = vld [vmem:[%s9 + $0x3e0] sm:$0xff]
      %v8563 = vld [vmem:[%s9 + $0x3e8] sm:$0xff]
      %v8564 = vld [vmem:[%s9 + $0x3f0] sm:$0xff]
      %v8565 = vld [vmem:[%s9 + $0x3f8] sm:$0xff]
      %v8567 = vrot.slane %v8557, 7
      %8568 = vrot.lane.b32.xlu0 %v8567, 64
      %v8569 = vpop.permute.xlu0 %8568
      %v8570 = vsel %vm5666, %v8569, 0
      %8572 = vmatprep.subr.mxu0 0.0
      %8573 = vmatpush1.msra.mxu0 %v8558
      %8574 = vmatprep.subr.mxu0 0.0
      %8575 = vmatpush1.msra.mxu0 %v8559
      %8576 = vmatprep.subr.mxu0 0.0
      %8577 = vmatpush1.msra.mxu0 %v8560
      %8578 = vmatprep.subr.mxu0 0.0
      %8579 = vmatpush1.msra.mxu0 %v8561
      %8580 = vmatprep.subr.mxu0 0.0
      %8581 = vmatpush1.msra.mxu0 %v8562
      %8582 = vmatprep.subr.mxu0 0.0
      %8583 = vmatpush1.msra.mxu0 %v8563
      %8584 = vmatprep.subr.mxu0 0.0
      %8585 = vmatpush1.msra.mxu0 %v8564
      %8586 = vmatprep.subr.mxu0 0.0
      %8587 = vmatpush1.msra.mxu0 %v8565
      %8588 = vmatprep.subr.mxu0 0.0
      %8589 = vmatpush1.msra.mxu0 0.0
      %8590 = vmatprep.subr.mxu0 0.0
      %8591 = vmatpush1.msra.mxu0 0.0
      %8592 = vmatprep.subr.mxu0 0.0
      %8593 = vmatpush1.msra.mxu0 0.0
      %8594 = vmatprep.subr.mxu0 0.0
      %8595 = vmatpush1.msra.mxu0 0.0
      %8596 = vmatprep.subr.mxu0 0.0
      %8597 = vmatpush1.msra.mxu0 0.0
      %8598 = vmatprep.subr.mxu0 0.0
      %8599 = vmatpush1.msra.mxu0 0.0
      %8600 = vmatprep.subr.mxu0 0.0
      %8601 = vmatpush1.msra.mxu0 0.0
      %8602 = vmatprep.subr.mxu0 0.0
      %8603 = vmatpush1.msra.mxu0 0.0
      %8604 = vmatprep.subr.mxu0 0.0
      %8605 = vmatpush1.msra.mxu0 0.0
      %8606 = vmatprep.subr.mxu0 0.0
      %8607 = vmatpush1.msra.mxu0 0.0
      %8608 = vmatprep.subr.mxu0 0.0
      %8609 = vmatpush1.msra.mxu0 0.0
      %8610 = vmatprep.subr.mxu0 0.0
      %8611 = vmatpush1.msra.mxu0 0.0
      %8612 = vmatprep.subr.mxu0 0.0
      %8613 = vmatpush1.msra.mxu0 0.0
      %8614 = vmatprep.subr.mxu0 0.0
      %8615 = vmatpush1.msra.mxu0 0.0
      %8616 = vmatprep.subr.mxu0 0.0
      %8617 = vmatpush1.msra.mxu0 0.0
      %8618 = vmatprep.subr.mxu0 0.0
      %8619 = vmatpush1.msra.mxu0 0.0
      %8620 = vmatprep.subr.mxu0 0.0
      %8621 = vmatpush1.msra.mxu0 0.0
      %8622 = vmatprep.subr.mxu0 0.0
      %8623 = vmatpush1.msra.mxu0 0.0
      %8624 = vmatprep.subr.mxu0 0.0
      %8625 = vmatpush1.msra.mxu0 0.0
      %8626 = vmatprep.subr.mxu0 0.0
      %8627 = vmatpush1.msra.mxu0 0.0
      %8628 = vmatprep.subr.mxu0 0.0
      %8629 = vmatpush1.msra.mxu0 0.0
      %8630 = vmatprep.subr.mxu0 0.0
      %8631 = vmatpush1.msra.mxu0 0.0
      %8632 = vmatprep.subr.mxu0 0.0
      %8633 = vmatpush1.msra.mxu0 0.0
      %8634 = vmatprep.subr.mxu0 0.0
      %8635 = vmatpush1.msra.mxu0 0.0
      %8636 = vmatprep.mubr.f32.mxu0 0.0
      %8637 = vmatmul.mubr.f32.gmra.mrb[0].mxu0 %v8570
      %v8638 = vpop.f32.mrb[0].mxu0
      %v8639 = vadd.f32 0.0, %v8638
      %v8640 = vpop.f32.mrb[0].mxu0
      %8641 = vdwg.mxu0
      %v8642 = vadd.f32 %v8455, %v8639
      %8643 = vmatprep.subr.mxu0 %v5651
      %8644 = vmatpush1.msra.mxu0 %v5650
      %8645 = vmatprep.subr.mxu0 %v5653
      %8646 = vmatpush1.msra.mxu0 %v5652
      %8647 = vmatprep.subr.mxu0 %v5655
      %8648 = vmatpush1.msra.mxu0 %v5654
      %8649 = vmatprep.subr.mxu0 %v5657
      %8650 = vmatpush1.msra.mxu0 %v5656
      %8651 = vmatprep.subr.mxu0 %v5659
      %8652 = vmatpush1.msra.mxu0 %v5658
      %8653 = vmatprep.subr.mxu0 %v5661
      %8654 = vmatpush1.msra.mxu0 %v5660
      %8655 = vmatprep.subr.mxu0 %v5663
      %8656 = vmatpush1.msra.mxu0 %v5662
      %8657 = vmatprep.subr.mxu0 %v5665
      %8658 = vmatpush1.msra.mxu0 %v5664
      %8659 = vmatprep.subr.mxu0 0.0
      %8660 = vmatpush1.msra.mxu0 0.0
      %8661 = vmatprep.subr.mxu0 0.0
      %8662 = vmatpush1.msra.mxu0 0.0
      %8663 = vmatprep.subr.mxu0 0.0
      %8664 = vmatpush1.msra.mxu0 0.0
      %8665 = vmatprep.subr.mxu0 0.0
      %8666 = vmatpush1.msra.mxu0 0.0
      %8667 = vmatprep.subr.mxu0 0.0
      %8668 = vmatpush1.msra.mxu0 0.0
      %8669 = vmatprep.subr.mxu0 0.0
      %8670 = vmatpush1.msra.mxu0 0.0
      %8671 = vmatprep.subr.mxu0 0.0
      %8672 = vmatpush1.msra.mxu0 0.0
      %8673 = vmatprep.subr.mxu0 0.0
      %8674 = vmatpush1.msra.mxu0 0.0
      %8675 = vmatprep.subr.mxu0 0.0
      %8676 = vmatpush1.msra.mxu0 0.0
      %8677 = vmatprep.subr.mxu0 0.0
      %8678 = vmatpush1.msra.mxu0 0.0
      %8679 = vmatprep.subr.mxu0 0.0
      %8680 = vmatpush1.msra.mxu0 0.0
      %8681 = vmatprep.subr.mxu0 0.0
      %8682 = vmatpush1.msra.mxu0 0.0
      %8683 = vmatprep.subr.mxu0 0.0
      %8684 = vmatpush1.msra.mxu0 0.0
      %8685 = vmatprep.subr.mxu0 0.0
      %8686 = vmatpush1.msra.mxu0 0.0
      %8687 = vmatprep.subr.mxu0 0.0
      %8688 = vmatpush1.msra.mxu0 0.0
      %8689 = vmatprep.subr.mxu0 0.0
      %8690 = vmatpush1.msra.mxu0 0.0
      %8691 = vmatprep.subr.mxu0 0.0
      %8692 = vmatpush1.msra.mxu0 0.0
      %8693 = vmatprep.subr.mxu0 0.0
      %8694 = vmatpush1.msra.mxu0 0.0
      %8695 = vmatprep.subr.mxu0 0.0
      %8696 = vmatpush1.msra.mxu0 0.0
      %8697 = vmatprep.subr.mxu0 0.0
      %8698 = vmatpush1.msra.mxu0 0.0
      %8699 = vmatprep.subr.mxu0 0.0
      %8700 = vmatpush1.msra.mxu0 0.0
      %8701 = vmatprep.subr.mxu0 0.0
      %8702 = vmatpush1.msra.mxu0 0.0
      %8703 = vmatprep.subr.mxu0 0.0
      %8704 = vmatpush1.msra.mxu0 0.0
      %8705 = vmatprep.subr.mxu0 0.0
      %8706 = vmatpush1.msra.mxu0 0.0
      %8707 = vmatprep.mubr.f32.mxu0 0.0
      %8708 = vmatmul.mubr.f32.gmra.mrb[0].mxu0 %v8570
      %v8709 = vpop.f32.mrb[0].mxu0
      %v8710 = vadd.f32 0.0, %v8709
      %v8711 = vpop.f32.mrb[0].mxu0
      %v8712 = vadd.f32 0.0, %v8711
      %8713 = vdwg.mxu0
      %v8714 = vadd.f32 %v5646, %v8710
      %v8715 = vadd.f32 %v5648, %v8712
      %v8716 = vsub.f32 0.0, %v8714
      %v8717 = vmul.f32 %v8716, 1.442695
      %v8718 = vpow.pop %v8717
      %v8719 = vadd.f32 %v8718, 1.0
      %v8720 = vrcp.pop %v8719
      %v8721 = vtanh.pop %v8715
      %v8722 = vsub.f32 0.0, %v8715
      %v8723 = vmul.f32 %v8722, 1.442695
      %v8724 = vpow.pop %v8723
      %v8725 = vadd.f32 %v8724, 1.0
      %v8726 = vrcp.pop %v8725
      %v8728 = vrot.slane %v8555, 7
      %v8730 = vmul.f32 %v8720, %v8728
      %v8731 = vmul.f32 %v8720, %v8721
      %8733 = vrot.lane.b32.xlu0 %v8731, 64
      %v8734 = vpop.permute.xlu0 %8733
      %v8736 = vadd.f32 %v8730, %v8734
      %v8737 = vtanh.pop %v8736
      %v8738 = vmul.f32 %v8726, %v8737
      %v8739 = vld [vmem:[%s9 + $0x400] sm:$0xff]
      %v8740 = vld [vmem:[%s9 + $0x408] sm:$0xff]
      %v8741 = vld [vmem:[%s9 + $0x410] sm:$0xff]
      %v8742 = vld [vmem:[%s9 + $0x418] sm:$0xff]
      %v8743 = vld [vmem:[%s9 + $0x420] sm:$0xff]
      %v8744 = vld [vmem:[%s9 + $0x428] sm:$0xff]
      %v8745 = vld [vmem:[%s9 + $0x430] sm:$0xff]
      %v8746 = vld [vmem:[%s9 + $0x438] sm:$0xff]
      %8748 = vrot.lane.b32.xlu0 %v8738, 64
      %v8749 = vpop.permute.xlu0 %8748
      %v8750 = vsel %vm5666, %v8749, 0
      %8752 = vmatprep.subr.mxu0 0.0
      %8753 = vmatpush1.msra.mxu0 %v8739
      %8754 = vmatprep.subr.mxu0 0.0
      %8755 = vmatpush1.msra.mxu0 %v8740
      %8756 = vmatprep.subr.mxu0 0.0
      %8757 = vmatpush1.msra.mxu0 %v8741
      %8758 = vmatprep.subr.mxu0 0.0
      %8759 = vmatpush1.msra.mxu0 %v8742
      %8760 = vmatprep.subr.mxu0 0.0
      %8761 = vmatpush1.msra.mxu0 %v8743
      %8762 = vmatprep.subr.mxu0 0.0
      %8763 = vmatpush1.msra.mxu0 %v8744
      %8764 = vmatprep.subr.mxu0 0.0
      %8765 = vmatpush1.msra.mxu0 %v8745
      %8766 = vmatprep.subr.mxu0 0.0
      %8767 = vmatpush1.msra.mxu0 %v8746
      %8768 = vmatprep.subr.mxu0 0.0
      %8769 = vmatpush1.msra.mxu0 0.0
      %8770 = vmatprep.subr.mxu0 0.0
      %8771 = vmatpush1.msra.mxu0 0.0
      %8772 = vmatprep.subr.mxu0 0.0
      %8773 = vmatpush1.msra.mxu0 0.0
      %8774 = vmatprep.subr.mxu0 0.0
      %8775 = vmatpush1.msra.mxu0 0.0
      %8776 = vmatprep.subr.mxu0 0.0
      %8777 = vmatpush1.msra.mxu0 0.0
      %8778 = vmatprep.subr.mxu0 0.0
      %8779 = vmatpush1.msra.mxu0 0.0
      %8780 = vmatprep.subr.mxu0 0.0
      %8781 = vmatpush1.msra.mxu0 0.0
      %8782 = vmatprep.subr.mxu0 0.0
      %8783 = vmatpush1.msra.mxu0 0.0
      %8784 = vmatprep.subr.mxu0 0.0
      %8785 = vmatpush1.msra.mxu0 0.0
      %8786 = vmatprep.subr.mxu0 0.0
      %8787 = vmatpush1.msra.mxu0 0.0
      %8788 = vmatprep.subr.mxu0 0.0
      %8789 = vmatpush1.msra.mxu0 0.0
      %8790 = vmatprep.subr.mxu0 0.0
      %8791 = vmatpush1.msra.mxu0 0.0
      %8792 = vmatprep.subr.mxu0 0.0
      %8793 = vmatpush1.msra.mxu0 0.0
      %8794 = vmatprep.subr.mxu0 0.0
      %8795 = vmatpush1.msra.mxu0 0.0
      %8796 = vmatprep.subr.mxu0 0.0
      %8797 = vmatpush1.msra.mxu0 0.0
      %8798 = vmatprep.subr.mxu0 0.0
      %8799 = vmatpush1.msra.mxu0 0.0
      %8800 = vmatprep.subr.mxu0 0.0
      %8801 = vmatpush1.msra.mxu0 0.0
      %8802 = vmatprep.subr.mxu0 0.0
      %8803 = vmatpush1.msra.mxu0 0.0
      %8804 = vmatprep.subr.mxu0 0.0
      %8805 = vmatpush1.msra.mxu0 0.0
      %8806 = vmatprep.subr.mxu0 0.0
      %8807 = vmatpush1.msra.mxu0 0.0
      %8808 = vmatprep.subr.mxu0 0.0
      %8809 = vmatpush1.msra.mxu0 0.0
      %8810 = vmatprep.subr.mxu0 0.0
      %8811 = vmatpush1.msra.mxu0 0.0
      %8812 = vmatprep.subr.mxu0 0.0
      %8813 = vmatpush1.msra.mxu0 0.0
      %8814 = vmatprep.subr.mxu0 0.0
      %8815 = vmatpush1.msra.mxu0 0.0
      %8816 = vmatprep.mubr.f32.mxu0 0.0
      %8817 = vmatmul.mubr.f32.gmra.mrb[0].mxu0 %v8750
      %v8818 = vpop.f32.mrb[0].mxu0
      %v8819 = vadd.f32 0.0, %v8818
      %v8820 = vpop.f32.mrb[0].mxu0
      %8821 = vdwg.mxu0
      %v8822 = vadd.f32 %v8642, %v8819
      %8823 = vmatprep.subr.mxu0 %v5651
      %8824 = vmatpush1.msra.mxu0 %v5650
      %8825 = vmatprep.subr.mxu0 %v5653
      %8826 = vmatpush1.msra.mxu0 %v5652
      %8827 = vmatprep.subr.mxu0 %v5655
      %8828 = vmatpush1.msra.mxu0 %v5654
      %8829 = vmatprep.subr.mxu0 %v5657
      %8830 = vmatpush1.msra.mxu0 %v5656
      %8831 = vmatprep.subr.mxu0 %v5659
      %8832 = vmatpush1.msra.mxu0 %v5658
      %8833 = vmatprep.subr.mxu0 %v5661
      %8834 = vmatpush1.msra.mxu0 %v5660
      %8835 = vmatprep.subr.mxu0 %v5663
      %8836 = vmatpush1.msra.mxu0 %v5662
      %8837 = vmatprep.subr.mxu0 %v5665
      %8838 = vmatpush1.msra.mxu0 %v5664
      %8839 = vmatprep.subr.mxu0 0.0
      %8840 = vmatpush1.msra.mxu0 0.0
      %8841 = vmatprep.subr.mxu0 0.0
      %8842 = vmatpush1.msra.mxu0 0.0
      %8843 = vmatprep.subr.mxu0 0.0
      %8844 = vmatpush1.msra.mxu0 0.0
      %8845 = vmatprep.subr.mxu0 0.0
      %8846 = vmatpush1.msra.mxu0 0.0
      %8847 = vmatprep.subr.mxu0 0.0
      %8848 = vmatpush1.msra.mxu0 0.0
      %8849 = vmatprep.subr.mxu0 0.0
      %8850 = vmatpush1.msra.mxu0 0.0
      %8851 = vmatprep.subr.mxu0 0.0
      %8852 = vmatpush1.msra.mxu0 0.0
      %8853 = vmatprep.subr.mxu0 0.0
      %8854 = vmatpush1.msra.mxu0 0.0
      %8855 = vmatprep.subr.mxu0 0.0
      %8856 = vmatpush1.msra.mxu0 0.0
      %8857 = vmatprep.subr.mxu0 0.0
      %8858 = vmatpush1.msra.mxu0 0.0
      %8859 = vmatprep.subr.mxu0 0.0
      %8860 = vmatpush1.msra.mxu0 0.0
      %8861 = vmatprep.subr.mxu0 0.0
      %8862 = vmatpush1.msra.mxu0 0.0
      %8863 = vmatprep.subr.mxu0 0.0
      %8864 = vmatpush1.msra.mxu0 0.0
      %8865 = vmatprep.subr.mxu0 0.0
      %8866 = vmatpush1.msra.mxu0 0.0
      %8867 = vmatprep.subr.mxu0 0.0
      %8868 = vmatpush1.msra.mxu0 0.0
      %8869 = vmatprep.subr.mxu0 0.0
      %8870 = vmatpush1.msra.mxu0 0.0
      %8871 = vmatprep.subr.mxu0 0.0
      %8872 = vmatpush1.msra.mxu0 0.0
      %8873 = vmatprep.subr.mxu0 0.0
      %8874 = vmatpush1.msra.mxu0 0.0
      %8875 = vmatprep.subr.mxu0 0.0
      %8876 = vmatpush1.msra.mxu0 0.0
      %8877 = vmatprep.subr.mxu0 0.0
      %8878 = vmatpush1.msra.mxu0 0.0
      %8879 = vmatprep.subr.mxu0 0.0
      %8880 = vmatpush1.msra.mxu0 0.0
      %8881 = vmatprep.subr.mxu0 0.0
      %8882 = vmatpush1.msra.mxu0 0.0
      %8883 = vmatprep.subr.mxu0 0.0
      %8884 = vmatpush1.msra.mxu0 0.0
      %8885 = vmatprep.subr.mxu0 0.0
      %8886 = vmatpush1.msra.mxu0 0.0
      %8887 = vmatprep.mubr.f32.mxu0 0.0
      %8888 = vmatmul.mubr.f32.gmra.mrb[0].mxu0 %v8750
      %v8889 = vpop.f32.mrb[0].mxu0
      %v8890 = vadd.f32 0.0, %v8889
      %v8891 = vpop.f32.mrb[0].mxu0
      %v8892 = vadd.f32 0.0, %v8891
      %8893 = vdwg.mxu0
      %v8896 = vrot.slane %v8890, 7
      %v8897 = vrot.slane %v8892, 7
      %v8900 = vadd.f32 %v5646, %v8896
      %v8901 = vadd.f32 %v5648, %v8897
      %v8902 = vsub.f32 0.0, %v8900
      %v8903 = vmul.f32 %v8902, 1.442695
      %v8904 = vpow.pop %v8903
      %v8905 = vadd.f32 %v8904, 1.0
      %v8906 = vrcp.pop %v8905
      %v8907 = vtanh.pop %v8901
      %v8908 = vsub.f32 0.0, %v8901
      %v8909 = vmul.f32 %v8908, 1.442695
      %v8910 = vpow.pop %v8909
      %v8911 = vadd.f32 %v8910, 1.0
      %v8912 = vrcp.pop %v8911
      %v8914 = vrot.slane %v8736, 7
      %v8916 = vmul.f32 %v8906, %v8914
      %v8917 = vmul.f32 %v8906, %v8907
      %8919 = vrot.lane.b32.xlu0 %v8917, 64
      %v8920 = vpop.permute.xlu0 %8919
      %v8922 = vadd.f32 %v8916, %v8920
      %v8923 = vtanh.pop %v8922
      %v8924 = vmul.f32 %v8912, %v8923
      %v8925 = vld [vmem:[%s9 + $0x440] sm:$0xff]
      %v8926 = vld [vmem:[%s9 + $0x448] sm:$0xff]
      %v8927 = vld [vmem:[%s9 + $0x450] sm:$0xff]
      %v8928 = vld [vmem:[%s9 + $0x458] sm:$0xff]
      %v8929 = vld [vmem:[%s9 + $0x460] sm:$0xff]
      %v8930 = vld [vmem:[%s9 + $0x468] sm:$0xff]
      %v8931 = vld [vmem:[%s9 + $0x470] sm:$0xff]
      %v8932 = vld [vmem:[%s9 + $0x478] sm:$0xff]
      %v8934 = vrot.slane %v8924, 1
      %8935 = vrot.lane.b32.xlu0 %v8934, 64
      %v8936 = vpop.permute.xlu0 %8935
      %v8937 = vsel %vm5666, %v8936, 0
      %8939 = vmatprep.subr.mxu0 0.0
      %8940 = vmatpush1.msra.mxu0 %v8925
      %8941 = vmatprep.subr.mxu0 0.0
      %8942 = vmatpush1.msra.mxu0 %v8926
      %8943 = vmatprep.subr.mxu0 0.0
      %8944 = vmatpush1.msra.mxu0 %v8927
      %8945 = vmatprep.subr.mxu0 0.0
      %8946 = vmatpush1.msra.mxu0 %v8928
      %8947 = vmatprep.subr.mxu0 0.0
      %8948 = vmatpush1.msra.mxu0 %v8929
      %8949 = vmatprep.subr.mxu0 0.0
      %8950 = vmatpush1.msra.mxu0 %v8930
      %8951 = vmatprep.subr.mxu0 0.0
      %8952 = vmatpush1.msra.mxu0 %v8931
      %8953 = vmatprep.subr.mxu0 0.0
      %8954 = vmatpush1.msra.mxu0 %v8932
      %8955 = vmatprep.subr.mxu0 0.0
      %8956 = vmatpush1.msra.mxu0 0.0
      %8957 = vmatprep.subr.mxu0 0.0
      %8958 = vmatpush1.msra.mxu0 0.0
      %8959 = vmatprep.subr.mxu0 0.0
      %8960 = vmatpush1.msra.mxu0 0.0
      %8961 = vmatprep.subr.mxu0 0.0
      %8962 = vmatpush1.msra.mxu0 0.0
      %8963 = vmatprep.subr.mxu0 0.0
      %8964 = vmatpush1.msra.mxu0 0.0
      %8965 = vmatprep.subr.mxu0 0.0
      %8966 = vmatpush1.msra.mxu0 0.0
      %8967 = vmatprep.subr.mxu0 0.0
      %8968 = vmatpush1.msra.mxu0 0.0
      %8969 = vmatprep.subr.mxu0 0.0
      %8970 = vmatpush1.msra.mxu0 0.0
      %8971 = vmatprep.subr.mxu0 0.0
      %8972 = vmatpush1.msra.mxu0 0.0
      %8973 = vmatprep.subr.mxu0 0.0
      %8974 = vmatpush1.msra.mxu0 0.0
      %8975 = vmatprep.subr.mxu0 0.0
      %8976 = vmatpush1.msra.mxu0 0.0
      %8977 = vmatprep.subr.mxu0 0.0
      %8978 = vmatpush1.msra.mxu0 0.0
      %8979 = vmatprep.subr.mxu0 0.0
      %8980 = vmatpush1.msra.mxu0 0.0
      %8981 = vmatprep.subr.mxu0 0.0
      %8982 = vmatpush1.msra.mxu0 0.0
      %8983 = vmatprep.subr.mxu0 0.0
      %8984 = vmatpush1.msra.mxu0 0.0
      %8985 = vmatprep.subr.mxu0 0.0
      %8986 = vmatpush1.msra.mxu0 0.0
      %8987 = vmatprep.subr.mxu0 0.0
      %8988 = vmatpush1.msra.mxu0 0.0
      %8989 = vmatprep.subr.mxu0 0.0
      %8990 = vmatpush1.msra.mxu0 0.0
      %8991 = vmatprep.subr.mxu0 0.0
      %8992 = vmatpush1.msra.mxu0 0.0
      %8993 = vmatprep.subr.mxu0 0.0
      %8994 = vmatpush1.msra.mxu0 0.0
      %8995 = vmatprep.subr.mxu0 0.0
      %8996 = vmatpush1.msra.mxu0 0.0
      %8997 = vmatprep.subr.mxu0 0.0
      %8998 = vmatpush1.msra.mxu0 0.0
      %8999 = vmatprep.subr.mxu0 0.0
      %9000 = vmatpush1.msra.mxu0 0.0
      %9001 = vmatprep.subr.mxu0 0.0
      %9002 = vmatpush1.msra.mxu0 0.0
      %9003 = vmatprep.mubr.f32.mxu0 0.0
      %9004 = vmatmul.mubr.f32.gmra.mrb[0].mxu0 %v8937
      %v9005 = vpop.f32.mrb[0].mxu0
      %v9006 = vadd.f32 0.0, %v9005
      %v9007 = vpop.f32.mrb[0].mxu0
      %9008 = vdwg.mxu0
      %v9009 = vadd.f32 %v8822, %v9006
      %9010 = vmatprep.subr.mxu0 %v5651
      %9011 = vmatpush1.msra.mxu0 %v5650
      %9012 = vmatprep.subr.mxu0 %v5653
      %9013 = vmatpush1.msra.mxu0 %v5652
      %9014 = vmatprep.subr.mxu0 %v5655
      %9015 = vmatpush1.msra.mxu0 %v5654
      %9016 = vmatprep.subr.mxu0 %v5657
      %9017 = vmatpush1.msra.mxu0 %v5656
      %9018 = vmatprep.subr.mxu0 %v5659
      %9019 = vmatpush1.msra.mxu0 %v5658
      %9020 = vmatprep.subr.mxu0 %v5661
      %9021 = vmatpush1.msra.mxu0 %v5660
      %9022 = vmatprep.subr.mxu0 %v5663
      %9023 = vmatpush1.msra.mxu0 %v5662
      %9024 = vmatprep.subr.mxu0 %v5665
      %9025 = vmatpush1.msra.mxu0 %v5664
      %9026 = vmatprep.subr.mxu0 0.0
      %9027 = vmatpush1.msra.mxu0 0.0
      %9028 = vmatprep.subr.mxu0 0.0
      %9029 = vmatpush1.msra.mxu0 0.0
      %9030 = vmatprep.subr.mxu0 0.0
      %9031 = vmatpush1.msra.mxu0 0.0
      %9032 = vmatprep.subr.mxu0 0.0
      %9033 = vmatpush1.msra.mxu0 0.0
      %9034 = vmatprep.subr.mxu0 0.0
      %9035 = vmatpush1.msra.mxu0 0.0
      %9036 = vmatprep.subr.mxu0 0.0
      %9037 = vmatpush1.msra.mxu0 0.0
      %9038 = vmatprep.subr.mxu0 0.0
      %9039 = vmatpush1.msra.mxu0 0.0
      %9040 = vmatprep.subr.mxu0 0.0
      %9041 = vmatpush1.msra.mxu0 0.0
      %9042 = vmatprep.subr.mxu0 0.0
      %9043 = vmatpush1.msra.mxu0 0.0
      %9044 = vmatprep.subr.mxu0 0.0
      %9045 = vmatpush1.msra.mxu0 0.0
      %9046 = vmatprep.subr.mxu0 0.0
      %9047 = vmatpush1.msra.mxu0 0.0
      %9048 = vmatprep.subr.mxu0 0.0
      %9049 = vmatpush1.msra.mxu0 0.0
      %9050 = vmatprep.subr.mxu0 0.0
      %9051 = vmatpush1.msra.mxu0 0.0
      %9052 = vmatprep.subr.mxu0 0.0
      %9053 = vmatpush1.msra.mxu0 0.0
      %9054 = vmatprep.subr.mxu0 0.0
      %9055 = vmatpush1.msra.mxu0 0.0
      %9056 = vmatprep.subr.mxu0 0.0
      %9057 = vmatpush1.msra.mxu0 0.0
      %9058 = vmatprep.subr.mxu0 0.0
      %9059 = vmatpush1.msra.mxu0 0.0
      %9060 = vmatprep.subr.mxu0 0.0
      %9061 = vmatpush1.msra.mxu0 0.0
      %9062 = vmatprep.subr.mxu0 0.0
      %9063 = vmatpush1.msra.mxu0 0.0
      %9064 = vmatprep.subr.mxu0 0.0
      %9065 = vmatpush1.msra.mxu0 0.0
      %9066 = vmatprep.subr.mxu0 0.0
      %9067 = vmatpush1.msra.mxu0 0.0
      %9068 = vmatprep.subr.mxu0 0.0
      %9069 = vmatpush1.msra.mxu0 0.0
      %9070 = vmatprep.subr.mxu0 0.0
      %9071 = vmatpush1.msra.mxu0 0.0
      %9072 = vmatprep.subr.mxu0 0.0
      %9073 = vmatpush1.msra.mxu0 0.0
      %9074 = vmatprep.mubr.f32.mxu0 0.0
      %9075 = vmatmul.mubr.f32.gmra.mrb[0].mxu0 %v8937
      %v9076 = vpop.f32.mrb[0].mxu0
      %v9077 = vadd.f32 0.0, %v9076
      %v9078 = vpop.f32.mrb[0].mxu0
      %v9079 = vadd.f32 0.0, %v9078
      %9080 = vdwg.mxu0
      %v9083 = vrot.slane %v9077, 6
      %v9084 = vrot.slane %v9079, 6
      %v9087 = vadd.f32 %v5646, %v9083
      %v9088 = vadd.f32 %v5648, %v9084
      %v9089 = vsub.f32 0.0, %v9087
      %v9090 = vmul.f32 %v9089, 1.442695
      %v9091 = vpow.pop %v9090
      %v9092 = vadd.f32 %v9091, 1.0
      %v9093 = vrcp.pop %v9092
      %v9094 = vtanh.pop %v9088
      %v9095 = vsub.f32 0.0, %v9088
      %v9096 = vmul.f32 %v9095, 1.442695
      %v9097 = vpow.pop %v9096
      %v9098 = vadd.f32 %v9097, 1.0
      %v9099 = vrcp.pop %v9098
      %v9101 = vrot.slane %v8922, 7
      %v9103 = vmul.f32 %v9093, %v9101
      %v9104 = vmul.f32 %v9093, %v9094
      %9106 = vrot.lane.b32.xlu0 %v9104, 64
      %v9107 = vpop.permute.xlu0 %9106
      %v9109 = vadd.f32 %v9103, %v9107
      %v9110 = vtanh.pop %v9109
      %v9111 = vmul.f32 %v9099, %v9110
      %v9112 = vld [vmem:[%s9 + $0x480] sm:$0xff]
      %v9113 = vld [vmem:[%s9 + $0x488] sm:$0xff]
      %v9114 = vld [vmem:[%s9 + $0x490] sm:$0xff]
      %v9115 = vld [vmem:[%s9 + $0x498] sm:$0xff]
      %v9116 = vld [vmem:[%s9 + $0x4a0] sm:$0xff]
      %v9117 = vld [vmem:[%s9 + $0x4a8] sm:$0xff]
      %v9118 = vld [vmem:[%s9 + $0x4b0] sm:$0xff]
      %v9119 = vld [vmem:[%s9 + $0x4b8] sm:$0xff]
      %v9121 = vrot.slane %v9111, 2
      %9122 = vrot.lane.b32.xlu0 %v9121, 64
      %v9123 = vpop.permute.xlu0 %9122
      %v9124 = vsel %vm5666, %v9123, 0
      %9126 = vmatprep.subr.mxu0 0.0
      %9127 = vmatpush1.msra.mxu0 %v9112
      %9128 = vmatprep.subr.mxu0 0.0
      %9129 = vmatpush1.msra.mxu0 %v9113
      %9130 = vmatprep.subr.mxu0 0.0
      %9131 = vmatpush1.msra.mxu0 %v9114
      %9132 = vmatprep.subr.mxu0 0.0
      %9133 = vmatpush1.msra.mxu0 %v9115
      %9134 = vmatprep.subr.mxu0 0.0
      %9135 = vmatpush1.msra.mxu0 %v9116
      %9136 = vmatprep.subr.mxu0 0.0
      %9137 = vmatpush1.msra.mxu0 %v9117
      %9138 = vmatprep.subr.mxu0 0.0
      %9139 = vmatpush1.msra.mxu0 %v9118
      %9140 = vmatprep.subr.mxu0 0.0
      %9141 = vmatpush1.msra.mxu0 %v9119
      %9142 = vmatprep.subr.mxu0 0.0
      %9143 = vmatpush1.msra.mxu0 0.0
      %9144 = vmatprep.subr.mxu0 0.0
      %9145 = vmatpush1.msra.mxu0 0.0
      %9146 = vmatprep.subr.mxu0 0.0
      %9147 = vmatpush1.msra.mxu0 0.0
      %9148 = vmatprep.subr.mxu0 0.0
      %9149 = vmatpush1.msra.mxu0 0.0
      %9150 = vmatprep.subr.mxu0 0.0
      %9151 = vmatpush1.msra.mxu0 0.0
      %9152 = vmatprep.subr.mxu0 0.0
      %9153 = vmatpush1.msra.mxu0 0.0
      %9154 = vmatprep.subr.mxu0 0.0
      %9155 = vmatpush1.msra.mxu0 0.0
      %9156 = vmatprep.subr.mxu0 0.0
      %9157 = vmatpush1.msra.mxu0 0.0
      %9158 = vmatprep.subr.mxu0 0.0
      %9159 = vmatpush1.msra.mxu0 0.0
      %9160 = vmatprep.subr.mxu0 0.0
      %9161 = vmatpush1.msra.mxu0 0.0
      %9162 = vmatprep.subr.mxu0 0.0
      %9163 = vmatpush1.msra.mxu0 0.0
      %9164 = vmatprep.subr.mxu0 0.0
      %9165 = vmatpush1.msra.mxu0 0.0
      %9166 = vmatprep.subr.mxu0 0.0
      %9167 = vmatpush1.msra.mxu0 0.0
      %9168 = vmatprep.subr.mxu0 0.0
      %9169 = vmatpush1.msra.mxu0 0.0
      %9170 = vmatprep.subr.mxu0 0.0
      %9171 = vmatpush1.msra.mxu0 0.0
      %9172 = vmatprep.subr.mxu0 0.0
      %9173 = vmatpush1.msra.mxu0 0.0
      %9174 = vmatprep.subr.mxu0 0.0
      %9175 = vmatpush1.msra.mxu0 0.0
      %9176 = vmatprep.subr.mxu0 0.0
      %9177 = vmatpush1.msra.mxu0 0.0
      %9178 = vmatprep.subr.mxu0 0.0
      %9179 = vmatpush1.msra.mxu0 0.0
      %9180 = vmatprep.subr.mxu0 0.0
      %9181 = vmatpush1.msra.mxu0 0.0
      %9182 = vmatprep.subr.mxu0 0.0
      %9183 = vmatpush1.msra.mxu0 0.0
      %9184 = vmatprep.subr.mxu0 0.0
      %9185 = vmatpush1.msra.mxu0 0.0
      %9186 = vmatprep.subr.mxu0 0.0
      %9187 = vmatpush1.msra.mxu0 0.0
      %9188 = vmatprep.subr.mxu0 0.0
      %9189 = vmatpush1.msra.mxu0 0.0
      %9190 = vmatprep.mubr.f32.mxu0 0.0
      %9191 = vmatmul.mubr.f32.gmra.mrb[0].mxu0 %v9124
      %v9192 = vpop.f32.mrb[0].mxu0
      %v9193 = vadd.f32 0.0, %v9192
      %v9194 = vpop.f32.mrb[0].mxu0
      %9195 = vdwg.mxu0
      %v9196 = vadd.f32 %v9009, %v9193
      %9197 = vmatprep.subr.mxu0 %v5651
      %9198 = vmatpush1.msra.mxu0 %v5650
      %9199 = vmatprep.subr.mxu0 %v5653
      %9200 = vmatpush1.msra.mxu0 %v5652
      %9201 = vmatprep.subr.mxu0 %v5655
      %9202 = vmatpush1.msra.mxu0 %v5654
      %9203 = vmatprep.subr.mxu0 %v5657
      %9204 = vmatpush1.msra.mxu0 %v5656
      %9205 = vmatprep.subr.mxu0 %v5659
      %9206 = vmatpush1.msra.mxu0 %v5658
      %9207 = vmatprep.subr.mxu0 %v5661
      %9208 = vmatpush1.msra.mxu0 %v5660
      %9209 = vmatprep.subr.mxu0 %v5663
      %9210 = vmatpush1.msra.mxu0 %v5662
      %9211 = vmatprep.subr.mxu0 %v5665
      %9212 = vmatpush1.msra.mxu0 %v5664
      %9213 = vmatprep.subr.mxu0 0.0
      %9214 = vmatpush1.msra.mxu0 0.0
      %9215 = vmatprep.subr.mxu0 0.0
      %9216 = vmatpush1.msra.mxu0 0.0
      %9217 = vmatprep.subr.mxu0 0.0
      %9218 = vmatpush1.msra.mxu0 0.0
      %9219 = vmatprep.subr.mxu0 0.0
      %9220 = vmatpush1.msra.mxu0 0.0
      %9221 = vmatprep.subr.mxu0 0.0
      %9222 = vmatpush1.msra.mxu0 0.0
      %9223 = vmatprep.subr.mxu0 0.0
      %9224 = vmatpush1.msra.mxu0 0.0
      %9225 = vmatprep.subr.mxu0 0.0
      %9226 = vmatpush1.msra.mxu0 0.0
      %9227 = vmatprep.subr.mxu0 0.0
      %9228 = vmatpush1.msra.mxu0 0.0
      %9229 = vmatprep.subr.mxu0 0.0
      %9230 = vmatpush1.msra.mxu0 0.0
      %9231 = vmatprep.subr.mxu0 0.0
      %9232 = vmatpush1.msra.mxu0 0.0
      %9233 = vmatprep.subr.mxu0 0.0
      %9234 = vmatpush1.msra.mxu0 0.0
      %9235 = vmatprep.subr.mxu0 0.0
      %9236 = vmatpush1.msra.mxu0 0.0
      %9237 = vmatprep.subr.mxu0 0.0
      %9238 = vmatpush1.msra.mxu0 0.0
      %9239 = vmatprep.subr.mxu0 0.0
      %9240 = vmatpush1.msra.mxu0 0.0
      %9241 = vmatprep.subr.mxu0 0.0
      %9242 = vmatpush1.msra.mxu0 0.0
      %9243 = vmatprep.subr.mxu0 0.0
      %9244 = vmatpush1.msra.mxu0 0.0
      %9245 = vmatprep.subr.mxu0 0.0
      %9246 = vmatpush1.msra.mxu0 0.0
      %9247 = vmatprep.subr.mxu0 0.0
      %9248 = vmatpush1.msra.mxu0 0.0
      %9249 = vmatprep.subr.mxu0 0.0
      %9250 = vmatpush1.msra.mxu0 0.0
      %9251 = vmatprep.subr.mxu0 0.0
      %9252 = vmatpush1.msra.mxu0 0.0
      %9253 = vmatprep.subr.mxu0 0.0
      %9254 = vmatpush1.msra.mxu0 0.0
      %9255 = vmatprep.subr.mxu0 0.0
      %9256 = vmatpush1.msra.mxu0 0.0
      %9257 = vmatprep.subr.mxu0 0.0
      %9258 = vmatpush1.msra.mxu0 0.0
      %9259 = vmatprep.subr.mxu0 0.0
      %9260 = vmatpush1.msra.mxu0 0.0
      %9261 = vmatprep.mubr.f32.mxu0 0.0
      %9262 = vmatmul.mubr.f32.gmra.mrb[0].mxu0 %v9124
      %v9263 = vpop.f32.mrb[0].mxu0
      %v9264 = vadd.f32 0.0, %v9263
      %v9265 = vpop.f32.mrb[0].mxu0
      %v9266 = vadd.f32 0.0, %v9265
      %9267 = vdwg.mxu0
      %v9270 = vrot.slane %v9264, 5
      %v9271 = vrot.slane %v9266, 5
      %v9274 = vadd.f32 %v5646, %v9270
      %v9275 = vadd.f32 %v5648, %v9271
      %v9276 = vsub.f32 0.0, %v9274
      %v9277 = vmul.f32 %v9276, 1.442695
      %v9278 = vpow.pop %v9277
      %v9279 = vadd.f32 %v9278, 1.0
      %v9280 = vrcp.pop %v9279
      %v9281 = vtanh.pop %v9275
      %v9282 = vsub.f32 0.0, %v9275
      %v9283 = vmul.f32 %v9282, 1.442695
      %v9284 = vpow.pop %v9283
      %v9285 = vadd.f32 %v9284, 1.0
      %v9286 = vrcp.pop %v9285
      %v9288 = vrot.slane %v9109, 7
      %v9290 = vmul.f32 %v9280, %v9288
      %v9291 = vmul.f32 %v9280, %v9281
      %9293 = vrot.lane.b32.xlu0 %v9291, 64
      %v9294 = vpop.permute.xlu0 %9293
      %v9296 = vadd.f32 %v9290, %v9294
      %v9297 = vtanh.pop %v9296
      %v9298 = vmul.f32 %v9286, %v9297
      %v9299 = vld [vmem:[%s9 + $0x4c0] sm:$0xff]
      %v9300 = vld [vmem:[%s9 + $0x4c8] sm:$0xff]
      %v9301 = vld [vmem:[%s9 + $0x4d0] sm:$0xff]
      %v9302 = vld [vmem:[%s9 + $0x4d8] sm:$0xff]
      %v9303 = vld [vmem:[%s9 + $0x4e0] sm:$0xff]
      %v9304 = vld [vmem:[%s9 + $0x4e8] sm:$0xff]
      %v9305 = vld [vmem:[%s9 + $0x4f0] sm:$0xff]
      %v9306 = vld [vmem:[%s9 + $0x4f8] sm:$0xff]
      %v9308 = vrot.slane %v9298, 3
      %9309 = vrot.lane.b32.xlu0 %v9308, 64
      %v9310 = vpop.permute.xlu0 %9309
      %v9311 = vsel %vm5666, %v9310, 0
      %9313 = vmatprep.subr.mxu0 0.0
      %9314 = vmatpush1.msra.mxu0 %v9299
      %9315 = vmatprep.subr.mxu0 0.0
      %9316 = vmatpush1.msra.mxu0 %v9300
      %9317 = vmatprep.subr.mxu0 0.0
      %9318 = vmatpush1.msra.mxu0 %v9301
      %9319 = vmatprep.subr.mxu0 0.0
      %9320 = vmatpush1.msra.mxu0 %v9302
      %9321 = vmatprep.subr.mxu0 0.0
      %9322 = vmatpush1.msra.mxu0 %v9303
      %9323 = vmatprep.subr.mxu0 0.0
      %9324 = vmatpush1.msra.mxu0 %v9304
      %9325 = vmatprep.subr.mxu0 0.0
      %9326 = vmatpush1.msra.mxu0 %v9305
      %9327 = vmatprep.subr.mxu0 0.0
      %9328 = vmatpush1.msra.mxu0 %v9306
      %9329 = vmatprep.subr.mxu0 0.0
      %9330 = vmatpush1.msra.mxu0 0.0
      %9331 = vmatprep.subr.mxu0 0.0
      %9332 = vmatpush1.msra.mxu0 0.0
      %9333 = vmatprep.subr.mxu0 0.0
      %9334 = vmatpush1.msra.mxu0 0.0
      %9335 = vmatprep.subr.mxu0 0.0
      %9336 = vmatpush1.msra.mxu0 0.0
      %9337 = vmatprep.subr.mxu0 0.0
      %9338 = vmatpush1.msra.mxu0 0.0
      %9339 = vmatprep.subr.mxu0 0.0
      %9340 = vmatpush1.msra.mxu0 0.0
      %9341 = vmatprep.subr.mxu0 0.0
      %9342 = vmatpush1.msra.mxu0 0.0
      %9343 = vmatprep.subr.mxu0 0.0
      %9344 = vmatpush1.msra.mxu0 0.0
      %9345 = vmatprep.subr.mxu0 0.0
      %9346 = vmatpush1.msra.mxu0 0.0
      %9347 = vmatprep.subr.mxu0 0.0
      %9348 = vmatpush1.msra.mxu0 0.0
      %9349 = vmatprep.subr.mxu0 0.0
      %9350 = vmatpush1.msra.mxu0 0.0
      %9351 = vmatprep.subr.mxu0 0.0
      %9352 = vmatpush1.msra.mxu0 0.0
      %9353 = vmatprep.subr.mxu0 0.0
      %9354 = vmatpush1.msra.mxu0 0.0
      %9355 = vmatprep.subr.mxu0 0.0
      %9356 = vmatpush1.msra.mxu0 0.0
      %9357 = vmatprep.subr.mxu0 0.0
      %9358 = vmatpush1.msra.mxu0 0.0
      %9359 = vmatprep.subr.mxu0 0.0
      %9360 = vmatpush1.msra.mxu0 0.0
      %9361 = vmatprep.subr.mxu0 0.0
      %9362 = vmatpush1.msra.mxu0 0.0
      %9363 = vmatprep.subr.mxu0 0.0
      %9364 = vmatpush1.msra.mxu0 0.0
      %9365 = vmatprep.subr.mxu0 0.0
      %9366 = vmatpush1.msra.mxu0 0.0
      %9367 = vmatprep.subr.mxu0 0.0
      %9368 = vmatpush1.msra.mxu0 0.0
      %9369 = vmatprep.subr.mxu0 0.0
      %9370 = vmatpush1.msra.mxu0 0.0
      %9371 = vmatprep.subr.mxu0 0.0
      %9372 = vmatpush1.msra.mxu0 0.0
      %9373 = vmatprep.subr.mxu0 0.0
      %9374 = vmatpush1.msra.mxu0 0.0
      %9375 = vmatprep.subr.mxu0 0.0
      %9376 = vmatpush1.msra.mxu0 0.0
      %9377 = vmatprep.mubr.f32.mxu0 0.0
      %9378 = vmatmul.mubr.f32.gmra.mrb[0].mxu0 %v9311
      %v9379 = vpop.f32.mrb[0].mxu0
      %v9380 = vadd.f32 0.0, %v9379
      %v9381 = vpop.f32.mrb[0].mxu0
      %9382 = vdwg.mxu0
      %v9383 = vadd.f32 %v9196, %v9380
      %v9384 = vld [vmem:[%s10] sm:$0x1]
      %v9385 = vadd.f32 %v9383, %v9384
      %v9386 = vmax.f32 %v9385, 0.0
      %v9387 = vld [vmem:[%s11] sm:$0xff]
      %v9388 = vld [vmem:[%s11 + $0x8] sm:$0xff]
      %v9389 = vld [vmem:[%s11 + $0x10] sm:$0xff]
      %v9390 = vld [vmem:[%s11 + $0x18] sm:$0xff]
      %v9391 = vld [vmem:[%s11 + $0x20] sm:$0xff]
      %v9392 = vld [vmem:[%s11 + $0x28] sm:$0xff]
      %v9393 = vld [vmem:[%s11 + $0x30] sm:$0xff]
      %v9394 = vld [vmem:[%s11 + $0x38] sm:$0xff]
      %v9395 = vld [vmem:[%s11 + $0x40] sm:$0x3f]
      %v9396 = vld [vmem:[#allocation4] sm:$0x1]
      %vm9397 = vcmask 572416
      %v9399 = vsel %vm9397, %v9386, 0
      %v9402 = vsel %vm2039, %v9395, 0
      %9404 = vmatprep.subr.mxu0 0.0
      %9405 = vmatpush1.msra.mxu0 %v9387
      %9406 = vmatprep.subr.mxu0 0.0
      %9407 = vmatpush1.msra.mxu0 %v9388
      %9408 = vmatprep.subr.mxu0 0.0
      %9409 = vmatpush1.msra.mxu0 %v9389
      %9410 = vmatprep.subr.mxu0 0.0
      %9411 = vmatpush1.msra.mxu0 %v9390
      %9412 = vmatprep.subr.mxu0 0.0
      %9413 = vmatpush1.msra.mxu0 %v9391
      %9414 = vmatprep.subr.mxu0 0.0
      %9415 = vmatpush1.msra.mxu0 %v9392
      %9416 = vmatprep.subr.mxu0 0.0
      %9417 = vmatpush1.msra.mxu0 %v9393
      %9418 = vmatprep.subr.mxu0 0.0
      %9419 = vmatpush1.msra.mxu0 %v9394
      %9420 = vmatprep.subr.mxu0 0.0
      %9421 = vmatpush1.msra.mxu0 %v9402
      %9422 = vmatprep.subr.mxu0 0.0
      %9423 = vmatpush1.msra.mxu0 0.0
      %9424 = vmatprep.subr.mxu0 0.0
      %9425 = vmatpush1.msra.mxu0 0.0
      %9426 = vmatprep.subr.mxu0 0.0
      %9427 = vmatpush1.msra.mxu0 0.0
      %9428 = vmatprep.subr.mxu0 0.0
      %9429 = vmatpush1.msra.mxu0 0.0
      %9430 = vmatprep.subr.mxu0 0.0
      %9431 = vmatpush1.msra.mxu0 0.0
      %9432 = vmatprep.subr.mxu0 0.0
      %9433 = vmatpush1.msra.mxu0 0.0
      %9434 = vmatprep.subr.mxu0 0.0
      %9435 = vmatpush1.msra.mxu0 0.0
      %9436 = vmatprep.subr.mxu0 0.0
      %9437 = vmatpush1.msra.mxu0 0.0
      %9438 = vmatprep.subr.mxu0 0.0
      %9439 = vmatpush1.msra.mxu0 0.0
      %9440 = vmatprep.subr.mxu0 0.0
      %9441 = vmatpush1.msra.mxu0 0.0
      %9442 = vmatprep.subr.mxu0 0.0
      %9443 = vmatpush1.msra.mxu0 0.0
      %9444 = vmatprep.subr.mxu0 0.0
      %9445 = vmatpush1.msra.mxu0 0.0
      %9446 = vmatprep.subr.mxu0 0.0
      %9447 = vmatpush1.msra.mxu0 0.0
      %9448 = vmatprep.subr.mxu0 0.0
      %9449 = vmatpush1.msra.mxu0 0.0
      %9450 = vmatprep.subr.mxu0 0.0
      %9451 = vmatpush1.msra.mxu0 0.0
      %9452 = vmatprep.subr.mxu0 0.0
      %9453 = vmatpush1.msra.mxu0 0.0
      %9454 = vmatprep.subr.mxu0 0.0
      %9455 = vmatpush1.msra.mxu0 0.0
      %9456 = vmatprep.subr.mxu0 0.0
      %9457 = vmatpush1.msra.mxu0 0.0
      %9458 = vmatprep.subr.mxu0 0.0
      %9459 = vmatpush1.msra.mxu0 0.0
      %9460 = vmatprep.subr.mxu0 0.0
      %9461 = vmatpush1.msra.mxu0 0.0
      %9462 = vmatprep.subr.mxu0 0.0
      %9463 = vmatpush1.msra.mxu0 0.0
      %9464 = vmatprep.subr.mxu0 0.0
      %9465 = vmatpush1.msra.mxu0 0.0
      %9466 = vmatprep.subr.mxu0 0.0
      %9467 = vmatpush1.msra.mxu0 0.0
      %9468 = vmatprep.mubr.f32.mxu0 0.0
      %9469 = vmatmul.mubr.f32.gmra.mrb[0].mxu0 %v9399
      %v9470 = vpop.f32.mrb[0].mxu0
      %v9471 = vadd.f32 %v9396, %v9470
      %v9472 = vpop.f32.mrb[0].mxu0
      %9473 = vdwg.mxu0
      %vm9474 = vcmask 0
      %9475 = vst.msk [vmem:[%s438] sm:$0x1] %vm9474, %v9471
      %p9476 = scmp.lt.s32.totalorder %s26, 1
      %s9477 = scalar_select %p9476, %s26, 1
      %s9478 = scalar_lea.vmem %s13, %s9477
      // Predicated region
      $region73: #{convlstm_forward.1} parent=71 // pred_check
        %p9479 = pneg %p322
      $region74: #{convlstm_forward.1} parent=71 // pred_check_branch
        %9481 = sbr.rel (%p9479) target = $region76
      $region75: #{convlstm_forward.1} parent=71 // pred_region
        _
      $region76: #{convlstm_forward.1} parent=71 // pred_fallthru
        _
    $region72: #{convlstm_forward.1} parent=5 // pred_fallthru
      _
    %p9482 = scmp.le.s32.totalorder 2, %s21
    // Predicated region
    $region77: #{convlstm_forward.1} parent=5 // pred_check
      %p9483 = pneg %p9482
    $region78: #{convlstm_forward.1} parent=5 // pred_check_branch
      %9485 = sbr.rel (%p9483) target = $region80
    $region79: #{convlstm_forward.1} parent=5 // pred_region
      %s9486 = ssub.s32 %s21, 2
      // Predicated region
      $region81: #{convlstm_forward.1} parent=79 // pred_check
        %p9487 = pneg %p328
      $region82: #{convlstm_forward.1} parent=79 // pred_check_branch
        %9489 = sbr.rel (%p9487) target = $region84
      $region83: #{convlstm_forward.1} parent=79 // pred_region
        %p9490 = scmp.lt.s32.totalorder %s27, 1
        %s9491 = scalar_select %p9490, %s27, 1
        %s9492 = scalar_lea.vmem %s13, %s9491
      $region84: #{convlstm_forward.1} parent=79 // pred_fallthru
        _
    $region80: #{convlstm_forward.1} parent=5 // pred_fallthru
      _
  $region6: #{convlstm_forward.1} parent=0 // loop_footer
    %s25 = sadd.s32 1, %s21
  $region7: #{convlstm_forward.1} parent=0 // loop_footer_branch
    %20 = sbr.rel target = $region3
  $region8: #{convlstm_forward.1} parent=0 // loop_exit
    _

</llo_original>
